<compile_context>
chip_gen: v5e
topology: v5e:2x2
jax: 0.10.0
libtpu: 0.0.40
codegen_flags: <defaults>
</compile_context>

<pallas_src>
import jax
import jax.numpy as jnp
from jax import lax
from jax.experimental import pallas as pl
from jax.experimental.pallas import tpu as pltpu

_VMEM_LIMIT = 32 * 1024 * 1024   # explicit scoped-VMEM budget (v7x-safe)


# -----------------------------------------------------------------------------
# small helpers
# -----------------------------------------------------------------------------
def _round_up(x, m):
    return ((x + m - 1) // m) * m


def _batch_tile(n, target):
    """Pick a batch-tile size and padded batch so all blocks satisfy the
    (8, 128) rule: either the block covers the full dim, or (for 2-D mask /
    output blocks) the sublane-mapped dim is a multiple of 8."""
    if n <= target:
        return n, n
    bt = max(8, (target // 8) * 8)
    return bt, _round_up(n, bt)


def _pad_rows(x, n):
    if x.shape[0] == n:
        return x
    return jnp.pad(x, ((0, n - x.shape[0]),) + ((0, 0),) * (x.ndim - 1))


# -----------------------------------------------------------------------------
# LSTM encoder kernel (single layer, unidirectional, batch_first)
# gridded over batch tiles; hoisted input projection; fori_loop recurrence
# -----------------------------------------------------------------------------
def _lstm_kernel(x_ref, wih_ref, whh_ref, b_ref, m_ref, out_ref, xw_ref):
    Bt, S, Fin = x_ref.shape
    Hp = out_ref.shape[2]

    # Hoisted input projection: ONE (Bt*S, Fin) @ (Fin, 4Hp) matmul covers every
    # timestep of this tile, so the recurrence only does h @ W_hh per step.
    x2 = x_ref[...].reshape(Bt * S, Fin)                       # bf16
    xw_ref[...] = (jnp.dot(x2, wih_ref[...],
                           preferred_element_type=jnp.float32)
                   + b_ref[...]).reshape(Bt, S, 4 * Hp)

    whh = whh_ref[...]                                          # bf16 (Hp, 4Hp)

    def step(t, carry):
        h, c = carry                                            # f32 (Bt, Hp)
        gates = (xw_ref[:, pl.ds(t, 1), :].reshape(Bt, 4 * Hp)
                 + jnp.dot(h.astype(jnp.bfloat16), whh,
                           preferred_element_type=jnp.float32))
        # Hp is a multiple of 128 -> these slices are lane-aligned.
        i = jax.nn.sigmoid(gates[:, 0 * Hp:1 * Hp])
        f = jax.nn.sigmoid(gates[:, 1 * Hp:2 * Hp])
        g = jnp.tanh(gates[:, 2 * Hp:3 * Hp])
        o = jax.nn.sigmoid(gates[:, 3 * Hp:4 * Hp])
        c = f * c + i * g
        h = o * jnp.tanh(c)
        # pack_padded/pad_packed emulation: zero outputs at t >= length[b]
        m_t = m_ref[:, pl.ds(t, 1), :].reshape(Bt, 1)
        out_ref[:, pl.ds(t, 1), :] = (h * m_t).astype(out_ref.dtype).reshape(Bt, 1, Hp)
        return h, c

    h0 = jnp.zeros((Bt, Hp), jnp.float32)
    c0 = jnp.zeros((Bt, Hp), jnp.float32)
    lax.fori_loop(0, S, step, (h0, c0), unroll=min(S, 8))


def lstm_pallas(x, w_ih, w_hh, b, tmask, Hp, *, bt_target=16):
    N, S, Fin = x.shape
    bt, n_pad = _batch_tile(N, bt_target)
    x = _pad_rows(x, n_pad)
    tmask = _pad_rows(tmask, n_pad)

    cost = pl.CostEstimate(
        flops=int(2 * n_pad * S * 4 * Hp * (Fin + Hp)),
        transcendentals=int(4 * n_pad * S * Hp),
        bytes_accessed=int(x.size * 2 + n_pad * S * Hp * 2 + tmask.size * 4
                           + (w_ih.size + w_hh.size) * 2 + b.size * 4),
    )
    out = pl.pallas_call(
        _lstm_kernel,
        out_shape=jax.ShapeDtypeStruct((n_pad, S, Hp), jnp.bfloat16),
        grid=(n_pad // bt,),
        in_specs=[
            pl.BlockSpec((bt, S, Fin), lambda i: (i, 0, 0)),
            pl.BlockSpec((Fin, 4 * Hp), lambda i: (0, 0)),
            pl.BlockSpec((Hp, 4 * Hp), lambda i: (0, 0)),
            pl.BlockSpec((1, 4 * Hp), lambda i: (0, 0)),
            pl.BlockSpec((bt, S, 1), lambda i: (i, 0, 0)),
        ],
        out_specs=pl.BlockSpec((bt, S, Hp), lambda i: (i, 0, 0)),
        scratch_shapes=[pltpu.VMEM((bt, S, 4 * Hp), jnp.float32)],
        compiler_params=pltpu.CompilerParams(
            dimension_semantics=("parallel",),
            vmem_limit_bytes=_VMEM_LIMIT),
        cost_estimate=cost,
    )(x, w_ih, w_hh, b, tmask)
    return out[:N]


# -----------------------------------------------------------------------------
# SoftmaxAttention kernel: Bt batch rows per grid step, batched einsums,
# masks passed once as (Bt, S) blocks and broadcast in-kernel.
# -----------------------------------------------------------------------------
def _masked_softmax(x, mask):
    # Matches PyTorch masked_softmax: softmax(x * mask) -> * mask -> / (sum + 1e-13)
    xm = x * mask
    xm = xm - jnp.max(xm, axis=-1, keepdims=True)
    e = jnp.exp(xm)
    sm = e * pl.reciprocal(jnp.sum(e, axis=-1, keepdims=True), approx=True)
    r = sm * mask
    return r * pl.reciprocal(jnp.sum(r, axis=-1, keepdims=True) + 1e-13, approx=True)


def _attn_kernel(q1_ref, q2_ref, m1_ref, m2_ref, a1_ref, a2_ref):
    q1 = q1_ref[...]                      # (Bt, S, Hp) bf16
    q2 = q2_ref[...]
    m1 = m1_ref[...]                      # (Bt, S) f32
    m2 = m2_ref[...]

    sim12 = jnp.einsum('bqh,bkh->bqk', q1, q2, preferred_element_type=jnp.float32)
    sim21 = jnp.einsum('bkh,bqh->bkq', q2, q1, preferred_element_type=jnp.float32)

    attn12 = _masked_softmax(sim12, m2[:, None, :])
    attn21 = _masked_softmax(sim21, m1[:, None, :])

    a1 = jnp.einsum('bqk,bkh->bqh', attn12.astype(jnp.bfloat16), q2,
                    preferred_element_type=jnp.float32)
    a2 = jnp.einsum('bqk,bkh->bqh', attn21.astype(jnp.bfloat16), q1,
                    preferred_element_type=jnp.float32)
    a1_ref[...] = (a1 * m1[:, :, None]).astype(a1_ref.dtype)
    a2_ref[...] = (a2 * m2[:, :, None]).astype(a2_ref.dtype)


def attention_pallas(q1_enc, q2_enc, mask1, mask2, *, bt_target=16):
    B, S, Hp = q1_enc.shape
    bt, n_pad = _batch_tile(B, bt_target)
    q1_enc = _pad_rows(q1_enc, n_pad)
    q2_enc = _pad_rows(q2_enc, n_pad)
    mask1 = _pad_rows(mask1, n_pad)
    mask2 = _pad_rows(mask2, n_pad)

    cost = pl.CostEstimate(
        flops=int(8 * n_pad * S * S * Hp),
        transcendentals=int(2 * n_pad * S * S),
        bytes_accessed=int(4 * n_pad * S * Hp * 2 + 2 * n_pad * S * 4),
    )
    a1, a2 = pl.pallas_call(
        _attn_kernel,
        out_shape=(jax.ShapeDtypeStruct((n_pad, S, Hp), jnp.bfloat16),
                   jax.ShapeDtypeStruct((n_pad, S, Hp), jnp.bfloat16)),
        grid=(n_pad // bt,),
        in_specs=[
            pl.BlockSpec((bt, S, Hp), lambda i: (i, 0, 0)),
            pl.BlockSpec((bt, S, Hp), lambda i: (i, 0, 0)),
            pl.BlockSpec((bt, S), lambda i: (i, 0)),
            pl.BlockSpec((bt, S), lambda i: (i, 0)),
        ],
        out_specs=(pl.BlockSpec((bt, S, Hp), lambda i: (i, 0, 0)),
                   pl.BlockSpec((bt, S, Hp), lambda i: (i, 0, 0))),
        compiler_params=pltpu.CompilerParams(
            dimension_semantics=("parallel",),
            vmem_limit_bytes=_VMEM_LIMIT),
        cost_estimate=cost,
    )(q1_enc, q2_enc, mask1, mask2)
    return a1[:B], a2[:B]


# -----------------------------------------------------------------------------
# Projection kernel: ReLU(concat([e, a, e-a, e*a]) @ W + b) with the concat
# eliminated via weight folding and the e / a terms fused into one K=2Hp matmul:
#   [e | a] @ [W0+W2 ; W1-W2] + (e*a) @ W3 + b
# -----------------------------------------------------------------------------
def _proj_kernel(e_ref, a_ref, wea_ref, wm_ref, b_ref, o_ref):
    Bt, S, Hp = e_ref.shape
    e = e_ref[...].reshape(Bt * S, Hp)          # bf16
    a = a_ref[...].reshape(Bt * S, Hp)          # bf16
    ea = jnp.concatenate([e, a], axis=-1)       # (Bt*S, 2Hp), lane-aligned concat
    out = (jnp.dot(ea, wea_ref[...], preferred_element_type=jnp.float32)
           + jnp.dot(e * a, wm_ref[...], preferred_element_type=jnp.float32)
           + b_ref[...])
    o_ref[...] = jnp.maximum(out, 0.0).reshape(Bt, S, Hp).astype(o_ref.dtype)


def projection_pallas(enc, aligned, w_ea, w_m, b, *, bt_target=32):
    N, S, Hp = enc.shape
    bt, n_pad = _batch_tile(N, bt_target)
    enc = _pad_rows(enc, n_pad)
    aligned = _pad_rows(aligned, n_pad)

    out = pl.pallas_call(
        _proj_kernel,
        out_shape=jax.ShapeDtypeStruct((n_pad, S, Hp), jnp.bfloat16),
        grid=(n_pad // bt,),
        in_specs=[
            pl.BlockSpec((bt, S, Hp), lambda i: (i, 0, 0)),
            pl.BlockSpec((bt, S, Hp), lambda i: (i, 0, 0)),
            pl.BlockSpec((2 * Hp, Hp), lambda i: (0, 0)),
            pl.BlockSpec((Hp, Hp), lambda i: (0, 0)),
            pl.BlockSpec((1, Hp), lambda i: (0, 0)),
        ],
        out_specs=pl.BlockSpec((bt, S, Hp), lambda i: (i, 0, 0)),
        compiler_params=pltpu.CompilerParams(
            dimension_semantics=("parallel",),
            vmem_limit_bytes=_VMEM_LIMIT),
    )(enc, aligned, w_ea, w_m, b)
    return out[:N]


# -----------------------------------------------------------------------------
# Fused masked avg/max pooling + merged concat + classifier MLP (dropout p=0),
# gridded over batch tiles.  Classifier layer 1 is folded per pooled chunk.
# -----------------------------------------------------------------------------
def _pool_clf_kernel(c1_ref, m1_ref, c2_ref, m2_ref,
                     wa1_ref, wx1_ref, wa2_ref, wx2_ref, b1_ref,
                     w2_ref, b2_ref, w3_ref, b3_ref, o_ref):
    def pools(c_ref, m_ref):
        c = c_ref[...].astype(jnp.float32)                     # (Bt, S, Hp)
        m = m_ref[...]                                         # (Bt, S, 1) f32
        cm = c * m
        # TODO(synk): PyTorch divides by sum(mask) directly (NaN on all-masked
        # rows); we guard with 1e-13 so padded batch rows stay finite.
        inv = pl.reciprocal(jnp.maximum(jnp.sum(m, axis=1), 1e-13), approx=True)
        avg = jnp.sum(cm, axis=1) * inv                        # (Bt, Hp)
        mx = jnp.max(cm + (-10000000.0) * (1.0 - m), axis=1)   # replace_masked(-1e7)
        return avg.astype(jnp.bfloat16), mx.astype(jnp.bfloat16)

    q1_avg, q1_max = pools(c1_ref, m1_ref)
    q2_avg, q2_max = pools(c2_ref, m2_ref)

    h = (jnp.dot(q1_avg, wa1_ref[...], preferred_element_type=jnp.float32)
         + jnp.dot(q1_max, wx1_ref[...], preferred_element_type=jnp.float32)
         + jnp.dot(q2_avg, wa2_ref[...], preferred_element_type=jnp.float32)
         + jnp.dot(q2_max, wx2_ref[...], preferred_element_type=jnp.float32)
         + b1_ref[...])
    h = jnp.maximum(h, 0.0)
    h = jnp.maximum(jnp.dot(h.astype(jnp.bfloat16), w2_ref[...],
                            preferred_element_type=jnp.float32) + b2_ref[...], 0.0)
    o_ref[...] = (jnp.dot(h.astype(jnp.bfloat16), w3_ref[...],
                          preferred_element_type=jnp.float32) + b3_ref[...])


def pool_classifier_pallas(c1, m1, c2, m2, wa1, wx1, wa2, wx2, b1,
                           w2, b2, w3, b3, *, bt_target=32):
    B, S, Hp = c1.shape
    H2p = w2.shape[1]
    C = w3.shape[1]
    bt, n_pad = _batch_tile(B, bt_target)
    c1 = _pad_rows(c1, n_pad)
    m1 = _pad_rows(m1, n_pad)
    c2 = _pad_rows(c2, n_pad)
    m2 = _pad_rows(m2, n_pad)

    logits = pl.pallas_call(
        _pool_clf_kernel,
        out_shape=jax.ShapeDtypeStruct((n_pad, C), jnp.float32),
        grid=(n_pad // bt,),
        in_specs=[
            pl.BlockSpec((bt, S, Hp), lambda i: (i, 0, 0)),
            pl.BlockSpec((bt, S, 1), lambda i: (i, 0, 0)),
            pl.BlockSpec((bt, S, Hp), lambda i: (i, 0, 0)),
            pl.BlockSpec((bt, S, 1), lambda i: (i, 0, 0)),
            pl.BlockSpec((Hp, Hp), lambda i: (0, 0)),
            pl.BlockSpec((Hp, Hp), lambda i: (0, 0)),
            pl.BlockSpec((Hp, Hp), lambda i: (0, 0)),
            pl.BlockSpec((Hp, Hp), lambda i: (0, 0)),
            pl.BlockSpec((1, Hp), lambda i: (0, 0)),
            pl.BlockSpec((Hp, H2p), lambda i: (0, 0)),
            pl.BlockSpec((1, H2p), lambda i: (0, 0)),
            pl.BlockSpec((H2p, C), lambda i: (0, 0)),
            pl.BlockSpec((1, C), lambda i: (0, 0)),
        ],
        out_specs=pl.BlockSpec((bt, C), lambda i: (i, 0)),
        compiler_params=pltpu.CompilerParams(
            dimension_semantics=("parallel",),
            vmem_limit_bytes=_VMEM_LIMIT),
    )(c1, m1, c2, m2, wa1, wx1, wa2, wx2, b1, w2, b2, w3, b3)
    return logits[:B]


# -----------------------------------------------------------------------------
# Parameter preparation: fold / pad (H -> multiple of 128) / cast to bf16 once.
# -----------------------------------------------------------------------------
def prepare_params(params):
    H = params["w_hh1"].shape[0]
    Hp = _round_up(H, 128)
    H2 = params["wc2"].shape[1]
    H2p = _round_up(H2, 128)
    C = params["wc3"].shape[1]
    E = params["w_ih1"].shape[0]

    def pad2(w, r, c):
        return jnp.pad(w, ((0, r - w.shape[0]), (0, c - w.shape[1])))

    def prep_lstm(w_ih, w_hh, b, fin_pad):
        fin = w_ih.shape[0]
        wih = jnp.pad(w_ih.reshape(fin, 4, H),
                      ((0, fin_pad - fin), (0, 0), (0, Hp - H))).reshape(fin_pad, 4 * Hp)
        whh = jnp.pad(w_hh.reshape(H, 4, H),
                      ((0, Hp - H), (0, 0), (0, Hp - H))).reshape(Hp, 4 * Hp)
        # NOTE: b is assumed to be the pre-folded b_ih + b_hh of the nn.LSTM.
        bb = jnp.pad(b.reshape(1, 4, H), ((0, 0), (0, 0), (0, Hp - H))).reshape(1, 4 * Hp)
        return wih.astype(jnp.bfloat16), whh.astype(jnp.bfloat16), bb.astype(jnp.float32)

    wih1, whh1, bl1 = prep_lstm(params["w_ih1"], params["w_hh1"], params["b_l1"], E)
    wih2, whh2, bl2 = prep_lstm(params["w_ih2"], params["w_hh2"], params["b_l2"], Hp)

    # Projection weight folding: concat([e, a, e-a, e*a]) @ W
    #   == e @ (W0+W2) + a @ (W1-W2) + (e*a) @ W3
    wp = params["wp"]
    w_e = wp[0:H] + wp[2 * H:3 * H]
    w_a = wp[H:2 * H] - wp[2 * H:3 * H]
    w_m = wp[3 * H:4 * H]
    wp_ea = jnp.concatenate([pad2(w_e, Hp, Hp), pad2(w_a, Hp, Hp)],
                            axis=0).astype(jnp.bfloat16)
    wp_m = pad2(w_m, Hp, Hp).astype(jnp.bfloat16)
    bp = pad2(params["bp"], 1, Hp).astype(jnp.float32)

    wc1 = params["wc1"]
    wc1_chunks = [pad2(wc1[g * H:(g + 1) * H], Hp, Hp).astype(jnp.bfloat16)
                  for g in range(4)]

    return dict(
        emb=params["emb"].astype(jnp.bfloat16),
        w_ih1=wih1, w_hh1=whh1, b_l1=bl1,
        w_ih2=wih2, w_hh2=whh2, b_l2=bl2,
        wp_ea=wp_ea, wp_m=wp_m, bp=bp,
        wc1_a1=wc1_chunks[0], wc1_x1=wc1_chunks[1],
        wc1_a2=wc1_chunks[2], wc1_x2=wc1_chunks[3],
        bc1=pad2(params["bc1"], 1, Hp).astype(jnp.float32),
        wc2=pad2(params["wc2"], Hp, H2p).astype(jnp.bfloat16),
        bc2=pad2(params["bc2"], 1, H2p).astype(jnp.float32),
        wc3=pad2(params["wc3"], H2p, C).astype(jnp.bfloat16),
        bc3=params["bc3"].astype(jnp.float32),
    )


# -----------------------------------------------------------------------------
# ESIM forward (glue in plain JAX; hot paths in the Pallas kernels above)
# -----------------------------------------------------------------------------
def esim_forward(q1, q2, p):
    B, S = q1.shape
    Hp = p["w_hh1"].shape[0]

    # lengths = number of ZERO tokens per row, exactly as in the PyTorch module.
    len1 = jnp.sum((q1 == 0).astype(jnp.int32), axis=-1)
    len2 = jnp.sum((q2 == 0).astype(jnp.int32), axis=-1)
    max1 = jnp.max(len1)
    max2 = jnp.max(len2)
    pos = jnp.arange(S, dtype=jnp.int32)

    # get_mask(...) over the (dynamic) max length; positions beyond it are masked
    # to zero instead of truncated, keeping every shape static (no recompiles).
    mask1 = ((q1 != 0) & (pos[None, :] < max1)).astype(jnp.float32)          # (B, S)
    mask2 = ((q2 != 0) & (pos[None, :] < max2)).astype(jnp.float32)
    # pack/pad_packed emulation mask for the LSTM outputs: t < length[b]
    tmask1 = (pos[None, :] < len1[:, None]).astype(jnp.float32)[:, :, None]  # (B, S, 1)
    tmask2 = (pos[None, :] < len2[:, None]).astype(jnp.float32)[:, :, None]

    emb1 = p["emb"][q1]                                                      # XLA gather
    emb2 = p["emb"][q2]

    # q1/q2 share the encoder & projection weights -> stack along batch and run
    # each shared-weight kernel ONCE (halves launches, doubles MXU fill).
    x = jnp.concatenate([emb1, emb2], axis=0)                 # (2B, S, E)
    tmask = jnp.concatenate([tmask1, tmask2], axis=0)         # (2B, S, 1)

    enc = lstm_pallas(x, p["w_ih1"], p["w_hh1"], p["b_l1"], tmask, Hp)
    q1_enc, q2_enc = enc[:B], enc[B:]

    q1_al, q2_al = attention_pallas(q1_enc, q2_enc, mask1, mask2)
    al = jnp.concatenate([q1_al, q2_al], axis=0)

    proj = projection_pallas(enc, al, p["wp_ea"], p["wp_m"], p["bp"])

    cmp = lstm_pallas(proj, p["w_ih2"], p["w_hh2"], p["b_l2"], tmask, Hp)
    q1_cmp, q2_cmp = cmp[:B], cmp[B:]

    logits = pool_classifier_pallas(
        q1_cmp, mask1[:, :, None], q2_cmp, mask2[:, :, None],
        p["wc1_a1"], p["wc1_x1"], p["wc1_a2"], p["wc1_x2"], p["bc1"],
        p["wc2"], p["bc2"], p["wc3"], p["bc3"])

    probabilities = jax.nn.softmax(logits, axis=-1)
    pred = jnp.argmax(probabilities, axis=-1)
    # TODO(synk): CrossEntropyLoss branch (labels is not None) not implemented.
    return logits, pred


# -----------------------------------------------------------------------------
if __name__ == "__main__":
    B, S, VOCAB, E, H, C = 2, 8, 20, 32, 32, 3

    key = jax.random.PRNGKey(0)
    ks = jax.random.split(key, 16)

    # token ids (nonzero), with zeros planted so lengths >= 2 and masks vary
    q1 = jax.random.randint(ks[0], (B, S), 1, VOCAB, dtype=jnp.int32)
    q1 = q1.at[0, 5:].set(0).at[1, 6:].set(0).at[1, 2].set(0)
    q2 = jax.random.randint(ks[1], (B, S), 1, VOCAB, dtype=jnp.int32)
    q2 = q2.at[0, 4:].set(0).at[1, 6:].set(0).at[1, 1].set(0)

    sc = 0.1
    raw_params = {
        "emb":   sc * jax.random.normal(ks[2],  (VOCAB, E),  jnp.float32),
        "w_ih1": sc * jax.random.normal(ks[3],  (E, 4 * H),  jnp.float32),
        "w_hh1": sc * jax.random.normal(ks[4],  (H, 4 * H),  jnp.float32),
        "b_l1":  sc * jax.random.normal(ks[5],  (1, 4 * H),  jnp.float32),
        "w_ih2": sc * jax.random.normal(ks[6],  (H, 4 * H),  jnp.float32),
        "w_hh2": sc * jax.random.normal(ks[7],  (H, 4 * H),  jnp.float32),
        "b_l2":  sc * jax.random.normal(ks[8],  (1, 4 * H),  jnp.float32),
        "wp":    sc * jax.random.normal(ks[9],  (4 * H, H),  jnp.float32),
        "bp":    jnp.zeros((1, H), jnp.float32),
        "wc1":   sc * jax.random.normal(ks[10], (4 * H, H),  jnp.float32),
        "bc1":   jnp.zeros((1, H), jnp.float32),
        "wc2":   sc * jax.random.normal(ks[11], (H, H // 2), jnp.float32),
        "bc2":   jnp.zeros((1, H // 2), jnp.float32),
        "wc3":   sc * jax.random.normal(ks[12], (H // 2, C), jnp.float32),
        "bc3":   jnp.zeros((1, C), jnp.float32),
    }
    params = prepare_params(raw_params)

    fwd = jax.jit(esim_forward)
    logits, pred = fwd(q1, q2, params)
    logits = jax.block_until_ready(logits)
    pred = jax.block_until_ready(pred)
    assert logits.shape == (B, C) and pred.shape == (B,)
    assert bool(jnp.all(jnp.isfinite(logits)))
    print("KERNEL_OK")
</pallas_src>

<mosaic_0001>
module attributes {stable_mosaic.version = 11 : i64} {
  func.func @_lstm_kernel(%arg0: i32, %arg1: memref<4x8x32xbf16, #tpu.memory_space<vmem>>, %arg2: memref<32x512xbf16, #tpu.memory_space<vmem>>, %arg3: memref<128x512xbf16, #tpu.memory_space<vmem>>, %arg4: memref<1x512xf32, #tpu.memory_space<vmem>>, %arg5: memref<4x8x1xf32, #tpu.memory_space<vmem>>, %arg6: memref<4x8x128xbf16, #tpu.memory_space<vmem>>, %arg7: memref<4x8x512xf32, #tpu.memory_space<vmem>>) attributes {dimension_semantics = [#tpu.dimension_semantics<parallel>], iteration_bounds = array<i64: 1>, scalar_prefetch = 0 : i64, scratch_operands = 1 : i64, tpu.core_type = #tpu.core_type<tc>, window_params = [{transform_indices = @transform_0, window_bounds = array<i64: 4, 8, 32>}, {pipeline_mode = #tpu.pipeline_mode<synchronous>, transform_indices = @transform_1, window_bounds = array<i64: 32, 512>}, {pipeline_mode = #tpu.pipeline_mode<synchronous>, transform_indices = @transform_2, window_bounds = array<i64: 128, 512>}, {pipeline_mode = #tpu.pipeline_mode<synchronous>, transform_indices = @transform_3, window_bounds = array<i64: 1, 512>}, {transform_indices = @transform_4, window_bounds = array<i64: 4, 8, 1>}, {transform_indices = @transform_5, window_bounds = array<i64: 4, 8, 128>}]} {
    %c0 = arith.constant 0 : index
    %c0_0 = arith.constant 0 : index
    %c0_1 = arith.constant 0 : index
    %0 = vector.load %arg1[%c0, %c0_0, %c0_1] : memref<4x8x32xbf16, #tpu.memory_space<vmem>>, vector<4x8x32xbf16>
    %1 = vector.shape_cast %0 : vector<4x8x32xbf16> to vector<32x32xbf16>
    %c0_2 = arith.constant 0 : index
    %c0_3 = arith.constant 0 : index
    %2 = vector.load %arg2[%c0_2, %c0_3] : memref<32x512xbf16, #tpu.memory_space<vmem>>, vector<32x512xbf16>
    %cst = arith.constant dense<0.000000e+00> : vector<32x512xf32>
    %3 = tpu.matmul %1, %2, %cst {dimension_numbers = #tpu.dot_dimension_numbers<[1], [0], [0], [1], [0, 0, 1, 1], [], []>} : vector<32x32xbf16>, vector<32x512xbf16>, vector<32x512xf32> -> vector<32x512xf32>
    %c0_4 = arith.constant 0 : index
    %c0_5 = arith.constant 0 : index
    %4 = vector.load %arg4[%c0_4, %c0_5] : memref<1x512xf32, #tpu.memory_space<vmem>>, vector<1x512xf32>
    %5 = vector.broadcast %4 : vector<1x512xf32> to vector<32x512xf32>
    %6 = arith.addf %3, %5 : vector<32x512xf32>
    %7 = vector.shape_cast %6 : vector<32x512xf32> to vector<4x8x512xf32>
    %c0_6 = arith.constant 0 : index
    %c0_7 = arith.constant 0 : index
    %c0_8 = arith.constant 0 : index
    %8 = vector.load %arg7[%c0_6, %c0_7, %c0_8] : memref<4x8x512xf32, #tpu.memory_space<vmem>>, vector<4x8x512xf32>
    tpu.vector_store %arg7[%c0_6, %c0_7, %c0_8], %7 {strides = array<i32>} : memref<4x8x512xf32, #tpu.memory_space<vmem>>, vector<4x8x512xf32>,
    %c0_9 = arith.constant 0 : index
    %c0_10 = arith.constant 0 : index
    %9 = vector.load %arg3[%c0_9, %c0_10] : memref<128x512xbf16, #tpu.memory_space<vmem>>, vector<128x512xbf16>
    %cst_11 = arith.constant 0.000000e+00 : f32
    %10 = vector.broadcast %cst_11 : f32 to vector<4x128xf32>
    %cst_12 = arith.constant 0.000000e+00 : f32
    %11 = vector.broadcast %cst_12 : f32 to vector<4x128xf32>
    %c0_i32 = arith.constant 0 : i32
    %c0_13 = arith.constant 0 : index
    %12 = arith.index_cast %c0_i32 : i32 to index
    %c0_14 = arith.constant 0 : index
    %13 = vector.load %arg7[%c0_13, %12, %c0_14] : memref<4x8x512xf32, #tpu.memory_space<vmem>>, vector<4x1x512xf32>
    %14 = vector.shape_cast %13 : vector<4x1x512xf32> to vector<4x512xf32>
    %15 = arith.truncf %10 : vector<4x128xf32> to vector<4x128xbf16>
    %cst_15 = arith.constant dense<0.000000e+00> : vector<4x512xf32>
    %16 = tpu.matmul %15, %9, %cst_15 {dimension_numbers = #tpu.dot_dimension_numbers<[1], [0], [0], [1], [0, 0, 1, 1], [], []>} : vector<4x128xbf16>, vector<128x512xbf16>, vector<4x512xf32> -> vector<4x512xf32>
    %17 = arith.addf %14, %16 : vector<4x512xf32>
    %18 = vector.extract_strided_slice %17 {offsets = [0, 0], sizes = [4, 128], strides = [1, 1]} : vector<4x512xf32> to vector<4x128xf32>
    %19 = arith.negf %18 : vector<4x128xf32>
    %20 = math.exp %19 : vector<4x128xf32>
    %cst_16 = arith.constant 1.000000e+00 : f32
    %21 = vector.broadcast %cst_16 : f32 to vector<4x128xf32>
    %22 = arith.addf %21, %20 : vector<4x128xf32>
    %23 = arith.divf %21, %22 : vector<4x128xf32>
    %24 = vector.extract_strided_slice %17 {offsets = [0, 128], sizes = [4, 128], strides = [1, 1]} : vector<4x512xf32> to vector<4x128xf32>
    %25 = arith.negf %24 : vector<4x128xf32>
    %26 = math.exp %25 : vector<4x128xf32>
    %cst_17 = arith.constant 1.000000e+00 : f32
    %27 = vector.broadcast %cst_17 : f32 to vector<4x128xf32>
    %28 = arith.addf %27, %26 : vector<4x128xf32>
    %29 = arith.divf %27, %28 : vector<4x128xf32>
    %30 = vector.extract_strided_slice %17 {offsets = [0, 256], sizes = [4, 128], strides = [1, 1]} : vector<4x512xf32> to vector<4x128xf32>
    %31 = math.tanh %30 : vector<4x128xf32>
    %32 = vector.extract_strided_slice %17 {offsets = [0, 384], sizes = [4, 128], strides = [1, 1]} : vector<4x512xf32> to vector<4x128xf32>
    %33 = arith.negf %32 : vector<4x128xf32>
    %34 = math.exp %33 : vector<4x128xf32>
    %cst_18 = arith.constant 1.000000e+00 : f32
    %35 = vector.broadcast %cst_18 : f32 to vector<4x128xf32>
    %36 = arith.addf %35, %34 : vector<4x128xf32>
    %37 = arith.divf %35, %36 : vector<4x128xf32>
    %38 = arith.mulf %29, %11 : vector<4x128xf32>
    %39 = arith.mulf %23, %31 : vector<4x128xf32>
    %40 = arith.addf %38, %39 : vector<4x128xf32>
    %41 = math.tanh %40 : vector<4x128xf32>
    %42 = arith.mulf %37, %41 : vector<4x128xf32>
    %c0_19 = arith.constant 0 : index
    %43 = arith.index_cast %c0_i32 : i32 to index
    %c0_20 = arith.constant 0 : index
    %44 = vector.load %arg5[%c0_19, %43, %c0_20] : memref<4x8x1xf32, #tpu.memory_space<vmem>>, vector<4x1x1xf32>
    %45 = vector.shape_cast %44 : vector<4x1x1xf32> to vector<4x1xf32>
    %46 = vector.broadcast %45 : vector<4x1xf32> to vector<4x128xf32>
    %47 = arith.mulf %42, %46 : vector<4x128xf32>
    %48 = arith.truncf %47 : vector<4x128xf32> to vector<4x128xbf16>
    %49 = vector.shape_cast %48 : vector<4x128xbf16> to vector<4x1x128xbf16>
    %c0_21 = arith.constant 0 : index
    %50 = arith.index_cast %c0_i32 : i32 to index
    %c0_22 = arith.constant 0 : index
    %51 = vector.load %arg6[%c0_21, %50, %c0_22] : memref<4x8x128xbf16, #tpu.memory_space<vmem>>, vector<4x1x128xbf16>
    tpu.vector_store %arg6[%c0_21, %50, %c0_22], %49 {strides = array<i32>} : memref<4x8x128xbf16, #tpu.memory_space<vmem>>, vector<4x1x128xbf16>,
    %c1_i32 = arith.constant 1 : i32
    %c0_23 = arith.constant 0 : index
    %52 = arith.index_cast %c1_i32 : i32 to index
    %c0_24 = arith.constant 0 : index
    %53 = vector.load %arg7[%c0_23, %52, %c0_24] : memref<4x8x512xf32, #tpu.memory_space<vmem>>, vector<4x1x512xf32>
    %54 = vector.shape_cast %53 : vector<4x1x512xf32> to vector<4x512xf32>
    %55 = arith.truncf %42 : vector<4x128xf32> to vector<4x128xbf16>
    %cst_25 = arith.constant dense<0.000000e+00> : vector<4x512xf32>
    %56 = tpu.matmul %55, %9, %cst_25 {dimension_numbers = #tpu.dot_dimension_numbers<[1], [0], [0], [1], [0, 0, 1, 1], [], []>} : vector<4x128xbf16>, vector<128x512xbf16>, vector<4x512xf32> -> vector<4x512xf32>
    %57 = arith.addf %54, %56 : vector<4x512xf32>
    %58 = vector.extract_strided_slice %57 {offsets = [0, 0], sizes = [4, 128], strides = [1, 1]} : vector<4x512xf32> to vector<4x128xf32>
    %59 = arith.negf %58 : vector<4x128xf32>
    %60 = math.exp %59 : vector<4x128xf32>
    %cst_26 = arith.constant 1.000000e+00 : f32
    %61 = vector.broadcast %cst_26 : f32 to vector<4x128xf32>
    %62 = arith.addf %61, %60 : vector<4x128xf32>
    %63 = arith.divf %61, %62 : vector<4x128xf32>
    %64 = vector.extract_strided_slice %57 {offsets = [0, 128], sizes = [4, 128], strides = [1, 1]} : vector<4x512xf32> to vector<4x128xf32>
    %65 = arith.negf %64 : vector<4x128xf32>
    %66 = math.exp %65 : vector<4x128xf32>
    %cst_27 = arith.constant 1.000000e+00 : f32
    %67 = vector.broadcast %cst_27 : f32 to vector<4x128xf32>
    %68 = arith.addf %67, %66 : vector<4x128xf32>
    %69 = arith.divf %67, %68 : vector<4x128xf32>
    %70 = vector.extract_strided_slice %57 {offsets = [0, 256], sizes = [4, 128], strides = [1, 1]} : vector<4x512xf32> to vector<4x128xf32>
    %71 = math.tanh %70 : vector<4x128xf32>
    %72 = vector.extract_strided_slice %57 {offsets = [0, 384], sizes = [4, 128], strides = [1, 1]} : vector<4x512xf32> to vector<4x128xf32>
    %73 = arith.negf %72 : vector<4x128xf32>
    %74 = math.exp %73 : vector<4x128xf32>
    %cst_28 = arith.constant 1.000000e+00 : f32
    %75 = vector.broadcast %cst_28 : f32 to vector<4x128xf32>
    %76 = arith.addf %75, %74 : vector<4x128xf32>
    %77 = arith.divf %75, %76 : vector<4x128xf32>
    %78 = arith.mulf %69, %40 : vector<4x128xf32>
    %79 = arith.mulf %63, %71 : vector<4x128xf32>
    %80 = arith.addf %78, %79 : vector<4x128xf32>
    %81 = math.tanh %80 : vector<4x128xf32>
    %82 = arith.mulf %77, %81 : vector<4x128xf32>
    %c0_29 = arith.constant 0 : index
    %83 = arith.index_cast %c1_i32 : i32 to index
    %c0_30 = arith.constant 0 : index
    %84 = vector.load %arg5[%c0_29, %83, %c0_30] : memref<4x8x1xf32, #tpu.memory_space<vmem>>, vector<4x1x1xf32>
    %85 = vector.shape_cast %84 : vector<4x1x1xf32> to vector<4x1xf32>
    %86 = vector.broadcast %85 : vector<4x1xf32> to vector<4x128xf32>
    %87 = arith.mulf %82, %86 : vector<4x128xf32>
    %88 = arith.truncf %87 : vector<4x128xf32> to vector<4x128xbf16>
    %89 = vector.shape_cast %88 : vector<4x128xbf16> to vector<4x1x128xbf16>
    %c0_31 = arith.constant 0 : index
    %90 = arith.index_cast %c1_i32 : i32 to index
    %c0_32 = arith.constant 0 : index
    %91 = vector.load %arg6[%c0_31, %90, %c0_32] : memref<4x8x128xbf16, #tpu.memory_space<vmem>>, vector<4x1x128xbf16>
    tpu.vector_store %arg6[%c0_31, %90, %c0_32], %89 {strides = array<i32>} : memref<4x8x128xbf16, #tpu.memory_space<vmem>>, vector<4x1x128xbf16>,
    %c2_i32 = arith.constant 2 : i32
    %c0_33 = arith.constant 0 : index
    %92 = arith.index_cast %c2_i32 : i32 to index
    %c0_34 = arith.constant 0 : index
    %93 = vector.load %arg7[%c0_33, %92, %c0_34] : memref<4x8x512xf32, #tpu.memory_space<vmem>>, vector<4x1x512xf32>
    %94 = vector.shape_cast %93 : vector<4x1x512xf32> to vector<4x512xf32>
    %95 = arith.truncf %82 : vector<4x128xf32> to vector<4x128xbf16>
    %cst_35 = arith.constant dense<0.000000e+00> : vector<4x512xf32>
    %96 = tpu.matmul %95, %9, %cst_35 {dimension_numbers = #tpu.dot_dimension_numbers<[1], [0], [0], [1], [0, 0, 1, 1], [], []>} : vector<4x128xbf16>, vector<128x512xbf16>, vector<4x512xf32> -> vector<4x512xf32>
    %97 = arith.addf %94, %96 : vector<4x512xf32>
    %98 = vector.extract_strided_slice %97 {offsets = [0, 0], sizes = [4, 128], strides = [1, 1]} : vector<4x512xf32> to vector<4x128xf32>
    %99 = arith.negf %98 : vector<4x128xf32>
    %100 = math.exp %99 : vector<4x128xf32>
    %cst_36 = arith.constant 1.000000e+00 : f32
    %101 = vector.broadcast %cst_36 : f32 to vector<4x128xf32>
    %102 = arith.addf %101, %100 : vector<4x128xf32>
    %103 = arith.divf %101, %102 : vector<4x128xf32>
    %104 = vector.extract_strided_slice %97 {offsets = [0, 128], sizes = [4, 128], strides = [1, 1]} : vector<4x512xf32> to vector<4x128xf32>
    %105 = arith.negf %104 : vector<4x128xf32>
    %106 = math.exp %105 : vector<4x128xf32>
    %cst_37 = arith.constant 1.000000e+00 : f32
    %107 = vector.broadcast %cst_37 : f32 to vector<4x128xf32>
    %108 = arith.addf %107, %106 : vector<4x128xf32>
    %109 = arith.divf %107, %108 : vector<4x128xf32>
    %110 = vector.extract_strided_slice %97 {offsets = [0, 256], sizes = [4, 128], strides = [1, 1]} : vector<4x512xf32> to vector<4x128xf32>
    %111 = math.tanh %110 : vector<4x128xf32>
    %112 = vector.extract_strided_slice %97 {offsets = [0, 384], sizes = [4, 128], strides = [1, 1]} : vector<4x512xf32> to vector<4x128xf32>
    %113 = arith.negf %112 : vector<4x128xf32>
    %114 = math.exp %113 : vector<4x128xf32>
    %cst_38 = arith.constant 1.000000e+00 : f32
    %115 = vector.broadcast %cst_38 : f32 to vector<4x128xf32>
    %116 = arith.addf %115, %114 : vector<4x128xf32>
    %117 = arith.divf %115, %116 : vector<4x128xf32>
    %118 = arith.mulf %109, %80 : vector<4x128xf32>
    %119 = arith.mulf %103, %111 : vector<4x128xf32>
    %120 = arith.addf %118, %119 : vector<4x128xf32>
    %121 = math.tanh %120 : vector<4x128xf32>
    %122 = arith.mulf %117, %121 : vector<4x128xf32>
    %c0_39 = arith.constant 0 : index
    %123 = arith.index_cast %c2_i32 : i32 to index
    %c0_40 = arith.constant 0 : index
    %124 = vector.load %arg5[%c0_39, %123, %c0_40] : memref<4x8x1xf32, #tpu.memory_space<vmem>>, vector<4x1x1xf32>
    %125 = vector.shape_cast %124 : vector<4x1x1xf32> to vector<4x1xf32>
    %126 = vector.broadcast %125 : vector<4x1xf32> to vector<4x128xf32>
    %127 = arith.mulf %122, %126 : vector<4x128xf32>
    %128 = arith.truncf %127 : vector<4x128xf32> to vector<4x128xbf16>
    %129 = vector.shape_cast %128 : vector<4x128xbf16> to vector<4x1x128xbf16>
    %c0_41 = arith.constant 0 : index
    %130 = arith.index_cast %c2_i32 : i32 to index
    %c0_42 = arith.constant 0 : index
    %131 = vector.load %arg6[%c0_41, %130, %c0_42] : memref<4x8x128xbf16, #tpu.memory_space<vmem>>, vector<4x1x128xbf16>
    tpu.vector_store %arg6[%c0_41, %130, %c0_42], %129 {strides = array<i32>} : memref<4x8x128xbf16, #tpu.memory_space<vmem>>, vector<4x1x128xbf16>,
    %c3_i32 = arith.constant 3 : i32
    %c0_43 = arith.constant 0 : index
    %132 = arith.index_cast %c3_i32 : i32 to index
    %c0_44 = arith.constant 0 : index
    %133 = vector.load %arg7[%c0_43, %132, %c0_44] : memref<4x8x512xf32, #tpu.memory_space<vmem>>, vector<4x1x512xf32>
    %134 = vector.shape_cast %133 : vector<4x1x512xf32> to vector<4x512xf32>
    %135 = arith.truncf %122 : vector<4x128xf32> to vector<4x128xbf16>
    %cst_45 = arith.constant dense<0.000000e+00> : vector<4x512xf32>
    %136 = tpu.matmul %135, %9, %cst_45 {dimension_numbers = #tpu.dot_dimension_numbers<[1], [0], [0], [1], [0, 0, 1, 1], [], []>} : vector<4x128xbf16>, vector<128x512xbf16>, vector<4x512xf32> -> vector<4x512xf32>
    %137 = arith.addf %134, %136 : vector<4x512xf32>
    %138 = vector.extract_strided_slice %137 {offsets = [0, 0], sizes = [4, 128], strides = [1, 1]} : vector<4x512xf32> to vector<4x128xf32>
    %139 = arith.negf %138 : vector<4x128xf32>
    %140 = math.exp %139 : vector<4x128xf32>
    %cst_46 = arith.constant 1.000000e+00 : f32
    %141 = vector.broadcast %cst_46 : f32 to vector<4x128xf32>
    %142 = arith.addf %141, %140 : vector<4x128xf32>
    %143 = arith.divf %141, %142 : vector<4x128xf32>
    %144 = vector.extract_strided_slice %137 {offsets = [0, 128], sizes = [4, 128], strides = [1, 1]} : vector<4x512xf32> to vector<4x128xf32>
    %145 = arith.negf %144 : vector<4x128xf32>
    %146 = math.exp %145 : vector<4x128xf32>
    %cst_47 = arith.constant 1.000000e+00 : f32
    %147 = vector.broadcast %cst_47 : f32 to vector<4x128xf32>
    %148 = arith.addf %147, %146 : vector<4x128xf32>
    %149 = arith.divf %147, %148 : vector<4x128xf32>
    %150 = vector.extract_strided_slice %137 {offsets = [0, 256], sizes = [4, 128], strides = [1, 1]} : vector<4x512xf32> to vector<4x128xf32>
    %151 = math.tanh %150 : vector<4x128xf32>
    %152 = vector.extract_strided_slice %137 {offsets = [0, 384], sizes = [4, 128], strides = [1, 1]} : vector<4x512xf32> to vector<4x128xf32>
    %153 = arith.negf %152 : vector<4x128xf32>
    %154 = math.exp %153 : vector<4x128xf32>
    %cst_48 = arith.constant 1.000000e+00 : f32
    %155 = vector.broadcast %cst_48 : f32 to vector<4x128xf32>
    %156 = arith.addf %155, %154 : vector<4x128xf32>
    %157 = arith.divf %155, %156 : vector<4x128xf32>
    %158 = arith.mulf %149, %120 : vector<4x128xf32>
    %159 = arith.mulf %143, %151 : vector<4x128xf32>
    %160 = arith.addf %158, %159 : vector<4x128xf32>
    %161 = math.tanh %160 : vector<4x128xf32>
    %162 = arith.mulf %157, %161 : vector<4x128xf32>
    %c0_49 = arith.constant 0 : index
    %163 = arith.index_cast %c3_i32 : i32 to index
    %c0_50 = arith.constant 0 : index
    %164 = vector.load %arg5[%c0_49, %163, %c0_50] : memref<4x8x1xf32, #tpu.memory_space<vmem>>, vector<4x1x1xf32>
    %165 = vector.shape_cast %164 : vector<4x1x1xf32> to vector<4x1xf32>
    %166 = vector.broadcast %165 : vector<4x1xf32> to vector<4x128xf32>
    %167 = arith.mulf %162, %166 : vector<4x128xf32>
    %168 = arith.truncf %167 : vector<4x128xf32> to vector<4x128xbf16>
    %169 = vector.shape_cast %168 : vector<4x128xbf16> to vector<4x1x128xbf16>
    %c0_51 = arith.constant 0 : index
    %170 = arith.index_cast %c3_i32 : i32 to index
    %c0_52 = arith.constant 0 : index
    %171 = vector.load %arg6[%c0_51, %170, %c0_52] : memref<4x8x128xbf16, #tpu.memory_space<vmem>>, vector<4x1x128xbf16>
    tpu.vector_store %arg6[%c0_51, %170, %c0_52], %169 {strides = array<i32>} : memref<4x8x128xbf16, #tpu.memory_space<vmem>>, vector<4x1x128xbf16>,
    %c4_i32 = arith.constant 4 : i32
    %c0_53 = arith.constant 0 : index
    %172 = arith.index_cast %c4_i32 : i32 to index
    %c0_54 = arith.constant 0 : index
    %173 = vector.load %arg7[%c0_53, %172, %c0_54] : memref<4x8x512xf32, #tpu.memory_space<vmem>>, vector<4x1x512xf32>
    %174 = vector.shape_cast %173 : vector<4x1x512xf32> to vector<4x512xf32>
    %175 = arith.truncf %162 : vector<4x128xf32> to vector<4x128xbf16>
    %cst_55 = arith.constant dense<0.000000e+00> : vector<4x512xf32>
    %176 = tpu.matmul %175, %9, %cst_55 {dimension_numbers = #tpu.dot_dimension_numbers<[1], [0], [0], [1], [0, 0, 1, 1], [], []>} : vector<4x128xbf16>, vector<128x512xbf16>, vector<4x512xf32> -> vector<4x512xf32>
    %177 = arith.addf %174, %176 : vector<4x512xf32>
    %178 = vector.extract_strided_slice %177 {offsets = [0, 0], sizes = [4, 128], strides = [1, 1]} : vector<4x512xf32> to vector<4x128xf32>
    %179 = arith.negf %178 : vector<4x128xf32>
    %180 = math.exp %179 : vector<4x128xf32>
    %cst_56 = arith.constant 1.000000e+00 : f32
    %181 = vector.broadcast %cst_56 : f32 to vector<4x128xf32>
    %182 = arith.addf %181, %180 : vector<4x128xf32>
    %183 = arith.divf %181, %182 : vector<4x128xf32>
    %184 = vector.extract_strided_slice %177 {offsets = [0, 128], sizes = [4, 128], strides = [1, 1]} : vector<4x512xf32> to vector<4x128xf32>
    %185 = arith.negf %184 : vector<4x128xf32>
    %186 = math.exp %185 : vector<4x128xf32>
    %cst_57 = arith.constant 1.000000e+00 : f32
    %187 = vector.broadcast %cst_57 : f32 to vector<4x128xf32>
    %188 = arith.addf %187, %186 : vector<4x128xf32>
    %189 = arith.divf %187, %188 : vector<4x128xf32>
    %190 = vector.extract_strided_slice %177 {offsets = [0, 256], sizes = [4, 128], strides = [1, 1]} : vector<4x512xf32> to vector<4x128xf32>
    %191 = math.tanh %190 : vector<4x128xf32>
    %192 = vector.extract_strided_slice %177 {offsets = [0, 384], sizes = [4, 128], strides = [1, 1]} : vector<4x512xf32> to vector<4x128xf32>
    %193 = arith.negf %192 : vector<4x128xf32>
    %194 = math.exp %193 : vector<4x128xf32>
    %cst_58 = arith.constant 1.000000e+00 : f32
    %195 = vector.broadcast %cst_58 : f32 to vector<4x128xf32>
    %196 = arith.addf %195, %194 : vector<4x128xf32>
    %197 = arith.divf %195, %196 : vector<4x128xf32>
    %198 = arith.mulf %189, %160 : vector<4x128xf32>
    %199 = arith.mulf %183, %191 : vector<4x128xf32>
    %200 = arith.addf %198, %199 : vector<4x128xf32>
    %201 = math.tanh %200 : vector<4x128xf32>
    %202 = arith.mulf %197, %201 : vector<4x128xf32>
    %c0_59 = arith.constant 0 : index
    %203 = arith.index_cast %c4_i32 : i32 to index
    %c0_60 = arith.constant 0 : index
    %204 = vector.load %arg5[%c0_59, %203, %c0_60] : memref<4x8x1xf32, #tpu.memory_space<vmem>>, vector<4x1x1xf32>
    %205 = vector.shape_cast %204 : vector<4x1x1xf32> to vector<4x1xf32>
    %206 = vector.broadcast %205 : vector<4x1xf32> to vector<4x128xf32>
    %207 = arith.mulf %202, %206 : vector<4x128xf32>
    %208 = arith.truncf %207 : vector<4x128xf32> to vector<4x128xbf16>
    %209 = vector.shape_cast %208 : vector<4x128xbf16> to vector<4x1x128xbf16>
    %c0_61 = arith.constant 0 : index
    %210 = arith.index_cast %c4_i32 : i32 to index
    %c0_62 = arith.constant 0 : index
    %211 = vector.load %arg6[%c0_61, %210, %c0_62] : memref<4x8x128xbf16, #tpu.memory_space<vmem>>, vector<4x1x128xbf16>
    tpu.vector_store %arg6[%c0_61, %210, %c0_62], %209 {strides = array<i32>} : memref<4x8x128xbf16, #tpu.memory_space<vmem>>, vector<4x1x128xbf16>,
    %c5_i32 = arith.constant 5 : i32
    %c0_63 = arith.constant 0 : index
    %212 = arith.index_cast %c5_i32 : i32 to index
    %c0_64 = arith.constant 0 : index
    %213 = vector.load %arg7[%c0_63, %212, %c0_64] : memref<4x8x512xf32, #tpu.memory_space<vmem>>, vector<4x1x512xf32>
    %214 = vector.shape_cast %213 : vector<4x1x512xf32> to vector<4x512xf32>
    %215 = arith.truncf %202 : vector<4x128xf32> to vector<4x128xbf16>
    %cst_65 = arith.constant dense<0.000000e+00> : vector<4x512xf32>
    %216 = tpu.matmul %215, %9, %cst_65 {dimension_numbers = #tpu.dot_dimension_numbers<[1], [0], [0], [1], [0, 0, 1, 1], [], []>} : vector<4x128xbf16>, vector<128x512xbf16>, vector<4x512xf32> -> vector<4x512xf32>
    %217 = arith.addf %214, %216 : vector<4x512xf32>
    %218 = vector.extract_strided_slice %217 {offsets = [0, 0], sizes = [4, 128], strides = [1, 1]} : vector<4x512xf32> to vector<4x128xf32>
    %219 = arith.negf %218 : vector<4x128xf32>
    %220 = math.exp %219 : vector<4x128xf32>
    %cst_66 = arith.constant 1.000000e+00 : f32
    %221 = vector.broadcast %cst_66 : f32 to vector<4x128xf32>
    %222 = arith.addf %221, %220 : vector<4x128xf32>
    %223 = arith.divf %221, %222 : vector<4x128xf32>
    %224 = vector.extract_strided_slice %217 {offsets = [0, 128], sizes = [4, 128], strides = [1, 1]} : vector<4x512xf32> to vector<4x128xf32>
    %225 = arith.negf %224 : vector<4x128xf32>
    %226 = math.exp %225 : vector<4x128xf32>
    %cst_67 = arith.constant 1.000000e+00 : f32
    %227 = vector.broadcast %cst_67 : f32 to vector<4x128xf32>
    %228 = arith.addf %227, %226 : vector<4x128xf32>
    %229 = arith.divf %227, %228 : vector<4x128xf32>
    %230 = vector.extract_strided_slice %217 {offsets = [0, 256], sizes = [4, 128], strides = [1, 1]} : vector<4x512xf32> to vector<4x128xf32>
    %231 = math.tanh %230 : vector<4x128xf32>
    %232 = vector.extract_strided_slice %217 {offsets = [0, 384], sizes = [4, 128], strides = [1, 1]} : vector<4x512xf32> to vector<4x128xf32>
    %233 = arith.negf %232 : vector<4x128xf32>
    %234 = math.exp %233 : vector<4x128xf32>
    %cst_68 = arith.constant 1.000000e+00 : f32
    %235 = vector.broadcast %cst_68 : f32 to vector<4x128xf32>
    %236 = arith.addf %235, %234 : vector<4x128xf32>
    %237 = arith.divf %235, %236 : vector<4x128xf32>
    %238 = arith.mulf %229, %200 : vector<4x128xf32>
    %239 = arith.mulf %223, %231 : vector<4x128xf32>
    %240 = arith.addf %238, %239 : vector<4x128xf32>
    %241 = math.tanh %240 : vector<4x128xf32>
    %242 = arith.mulf %237, %241 : vector<4x128xf32>
    %c0_69 = arith.constant 0 : index
    %243 = arith.index_cast %c5_i32 : i32 to index
    %c0_70 = arith.constant 0 : index
    %244 = vector.load %arg5[%c0_69, %243, %c0_70] : memref<4x8x1xf32, #tpu.memory_space<vmem>>, vector<4x1x1xf32>
    %245 = vector.shape_cast %244 : vector<4x1x1xf32> to vector<4x1xf32>
    %246 = vector.broadcast %245 : vector<4x1xf32> to vector<4x128xf32>
    %247 = arith.mulf %242, %246 : vector<4x128xf32>
    %248 = arith.truncf %247 : vector<4x128xf32> to vector<4x128xbf16>
    %249 = vector.shape_cast %248 : vector<4x128xbf16> to vector<4x1x128xbf16>
    %c0_71 = arith.constant 0 : index
    %250 = arith.index_cast %c5_i32 : i32 to index
    %c0_72 = arith.constant 0 : index
    %251 = vector.load %arg6[%c0_71, %250, %c0_72] : memref<4x8x128xbf16, #tpu.memory_space<vmem>>, vector<4x1x128xbf16>
    tpu.vector_store %arg6[%c0_71, %250, %c0_72], %249 {strides = array<i32>} : memref<4x8x128xbf16, #tpu.memory_space<vmem>>, vector<4x1x128xbf16>,
    %c6_i32 = arith.constant 6 : i32
    %c0_73 = arith.constant 0 : index
    %252 = arith.index_cast %c6_i32 : i32 to index
    %c0_74 = arith.constant 0 : index
    %253 = vector.load %arg7[%c0_73, %252, %c0_74] : memref<4x8x512xf32, #tpu.memory_space<vmem>>, vector<4x1x512xf32>
    %254 = vector.shape_cast %253 : vector<4x1x512xf32> to vector<4x512xf32>
    %255 = arith.truncf %242 : vector<4x128xf32> to vector<4x128xbf16>
    %cst_75 = arith.constant dense<0.000000e+00> : vector<4x512xf32>
    %256 = tpu.matmul %255, %9, %cst_75 {dimension_numbers = #tpu.dot_dimension_numbers<[1], [0], [0], [1], [0, 0, 1, 1], [], []>} : vector<4x128xbf16>, vector<128x512xbf16>, vector<4x512xf32> -> vector<4x512xf32>
    %257 = arith.addf %254, %256 : vector<4x512xf32>
    %258 = vector.extract_strided_slice %257 {offsets = [0, 0], sizes = [4, 128], strides = [1, 1]} : vector<4x512xf32> to vector<4x128xf32>
    %259 = arith.negf %258 : vector<4x128xf32>
    %260 = math.exp %259 : vector<4x128xf32>
    %cst_76 = arith.constant 1.000000e+00 : f32
    %261 = vector.broadcast %cst_76 : f32 to vector<4x128xf32>
    %262 = arith.addf %261, %260 : vector<4x128xf32>
    %263 = arith.divf %261, %262 : vector<4x128xf32>
    %264 = vector.extract_strided_slice %257 {offsets = [0, 128], sizes = [4, 128], strides = [1, 1]} : vector<4x512xf32> to vector<4x128xf32>
    %265 = arith.negf %264 : vector<4x128xf32>
    %266 = math.exp %265 : vector<4x128xf32>
    %cst_77 = arith.constant 1.000000e+00 : f32
    %267 = vector.broadcast %cst_77 : f32 to vector<4x128xf32>
    %268 = arith.addf %267, %266 : vector<4x128xf32>
    %269 = arith.divf %267, %268 : vector<4x128xf32>
    %270 = vector.extract_strided_slice %257 {offsets = [0, 256], sizes = [4, 128], strides = [1, 1]} : vector<4x512xf32> to vector<4x128xf32>
    %271 = math.tanh %270 : vector<4x128xf32>
    %272 = vector.extract_strided_slice %257 {offsets = [0, 384], sizes = [4, 128], strides = [1, 1]} : vector<4x512xf32> to vector<4x128xf32>
    %273 = arith.negf %272 : vector<4x128xf32>
    %274 = math.exp %273 : vector<4x128xf32>
    %cst_78 = arith.constant 1.000000e+00 : f32
    %275 = vector.broadcast %cst_78 : f32 to vector<4x128xf32>
    %276 = arith.addf %275, %274 : vector<4x128xf32>
    %277 = arith.divf %275, %276 : vector<4x128xf32>
    %278 = arith.mulf %269, %240 : vector<4x128xf32>
    %279 = arith.mulf %263, %271 : vector<4x128xf32>
    %280 = arith.addf %278, %279 : vector<4x128xf32>
    %281 = math.tanh %280 : vector<4x128xf32>
    %282 = arith.mulf %277, %281 : vector<4x128xf32>
    %c0_79 = arith.constant 0 : index
    %283 = arith.index_cast %c6_i32 : i32 to index
    %c0_80 = arith.constant 0 : index
    %284 = vector.load %arg5[%c0_79, %283, %c0_80] : memref<4x8x1xf32, #tpu.memory_space<vmem>>, vector<4x1x1xf32>
    %285 = vector.shape_cast %284 : vector<4x1x1xf32> to vector<4x1xf32>
    %286 = vector.broadcast %285 : vector<4x1xf32> to vector<4x128xf32>
    %287 = arith.mulf %282, %286 : vector<4x128xf32>
    %288 = arith.truncf %287 : vector<4x128xf32> to vector<4x128xbf16>
    %289 = vector.shape_cast %288 : vector<4x128xbf16> to vector<4x1x128xbf16>
    %c0_81 = arith.constant 0 : index
    %290 = arith.index_cast %c6_i32 : i32 to index
    %c0_82 = arith.constant 0 : index
    %291 = vector.load %arg6[%c0_81, %290, %c0_82] : memref<4x8x128xbf16, #tpu.memory_space<vmem>>, vector<4x1x128xbf16>
    tpu.vector_store %arg6[%c0_81, %290, %c0_82], %289 {strides = array<i32>} : memref<4x8x128xbf16, #tpu.memory_space<vmem>>, vector<4x1x128xbf16>,
    %c7_i32 = arith.constant 7 : i32
    %c0_83 = arith.constant 0 : index
    %292 = arith.index_cast %c7_i32 : i32 to index
    %c0_84 = arith.constant 0 : index
    %293 = vector.load %arg7[%c0_83, %292, %c0_84] : memref<4x8x512xf32, #tpu.memory_space<vmem>>, vector<4x1x512xf32>
    %294 = vector.shape_cast %293 : vector<4x1x512xf32> to vector<4x512xf32>
    %295 = arith.truncf %282 : vector<4x128xf32> to vector<4x128xbf16>
    %cst_85 = arith.constant dense<0.000000e+00> : vector<4x512xf32>
    %296 = tpu.matmul %295, %9, %cst_85 {dimension_numbers = #tpu.dot_dimension_numbers<[1], [0], [0], [1], [0, 0, 1, 1], [], []>} : vector<4x128xbf16>, vector<128x512xbf16>, vector<4x512xf32> -> vector<4x512xf32>
    %297 = arith.addf %294, %296 : vector<4x512xf32>
    %298 = vector.extract_strided_slice %297 {offsets = [0, 0], sizes = [4, 128], strides = [1, 1]} : vector<4x512xf32> to vector<4x128xf32>
    %299 = arith.negf %298 : vector<4x128xf32>
    %300 = math.exp %299 : vector<4x128xf32>
    %cst_86 = arith.constant 1.000000e+00 : f32
    %301 = vector.broadcast %cst_86 : f32 to vector<4x128xf32>
    %302 = arith.addf %301, %300 : vector<4x128xf32>
    %303 = arith.divf %301, %302 : vector<4x128xf32>
    %304 = vector.extract_strided_slice %297 {offsets = [0, 128], sizes = [4, 128], strides = [1, 1]} : vector<4x512xf32> to vector<4x128xf32>
    %305 = arith.negf %304 : vector<4x128xf32>
    %306 = math.exp %305 : vector<4x128xf32>
    %cst_87 = arith.constant 1.000000e+00 : f32
    %307 = vector.broadcast %cst_87 : f32 to vector<4x128xf32>
    %308 = arith.addf %307, %306 : vector<4x128xf32>
    %309 = arith.divf %307, %308 : vector<4x128xf32>
    %310 = vector.extract_strided_slice %297 {offsets = [0, 256], sizes = [4, 128], strides = [1, 1]} : vector<4x512xf32> to vector<4x128xf32>
    %311 = math.tanh %310 : vector<4x128xf32>
    %312 = vector.extract_strided_slice %297 {offsets = [0, 384], sizes = [4, 128], strides = [1, 1]} : vector<4x512xf32> to vector<4x128xf32>
    %313 = arith.negf %312 : vector<4x128xf32>
    %314 = math.exp %313 : vector<4x128xf32>
    %cst_88 = arith.constant 1.000000e+00 : f32
    %315 = vector.broadcast %cst_88 : f32 to vector<4x128xf32>
    %316 = arith.addf %315, %314 : vector<4x128xf32>
    %317 = arith.divf %315, %316 : vector<4x128xf32>
    %318 = arith.mulf %309, %280 : vector<4x128xf32>
    %319 = arith.mulf %303, %311 : vector<4x128xf32>
    %320 = arith.addf %318, %319 : vector<4x128xf32>
    %321 = math.tanh %320 : vector<4x128xf32>
    %322 = arith.mulf %317, %321 : vector<4x128xf32>
    %c0_89 = arith.constant 0 : index
    %323 = arith.index_cast %c7_i32 : i32 to index
    %c0_90 = arith.constant 0 : index
    %324 = vector.load %arg5[%c0_89, %323, %c0_90] : memref<4x8x1xf32, #tpu.memory_space<vmem>>, vector<4x1x1xf32>
    %325 = vector.shape_cast %324 : vector<4x1x1xf32> to vector<4x1xf32>
    %326 = vector.broadcast %325 : vector<4x1xf32> to vector<4x128xf32>
    %327 = arith.mulf %322, %326 : vector<4x128xf32>
    %328 = arith.truncf %327 : vector<4x128xf32> to vector<4x128xbf16>
    %329 = vector.shape_cast %328 : vector<4x128xbf16> to vector<4x1x128xbf16>
    %c0_91 = arith.constant 0 : index
    %330 = arith.index_cast %c7_i32 : i32 to index
    %c0_92 = arith.constant 0 : index
    %331 = vector.load %arg6[%c0_91, %330, %c0_92] : memref<4x8x128xbf16, #tpu.memory_space<vmem>>, vector<4x1x128xbf16>
    tpu.vector_store %arg6[%c0_91, %330, %c0_92], %329 {strides = array<i32>} : memref<4x8x128xbf16, #tpu.memory_space<vmem>>, vector<4x1x128xbf16>,
    %c8_i32 = arith.constant 8 : i32
    return
  }
  func.func @transform_0(%arg0: i32) -> (i32, i32, i32) {
    %c0_i32 = arith.constant 0 : i32
    %c0_i32_0 = arith.constant 0 : i32
    %c0_i32_1 = arith.constant 0 : i32
    return %arg0, %c0_i32, %c0_i32_0 : i32, i32, i32
  }
  func.func @transform_1(%arg0: i32) -> (i32, i32) {
    %c0_i32 = arith.constant 0 : i32
    %c0_i32_0 = arith.constant 0 : i32
    %c0_i32_1 = arith.constant 0 : i32
    return %c0_i32, %c0_i32_0 : i32, i32
  }
  func.func @transform_2(%arg0: i32) -> (i32, i32) {
    %c0_i32 = arith.constant 0 : i32
    %c0_i32_0 = arith.constant 0 : i32
    %c0_i32_1 = arith.constant 0 : i32
    return %c0_i32, %c0_i32_0 : i32, i32
  }
  func.func @transform_3(%arg0: i32) -> (i32, i32) {
    %c0_i32 = arith.constant 0 : i32
    %c0_i32_0 = arith.constant 0 : i32
    %c0_i32_1 = arith.constant 0 : i32
    return %c0_i32, %c0_i32_0 : i32, i32
  }
  func.func @transform_4(%arg0: i32) -> (i32, i32, i32) {
    %c0_i32 = arith.constant 0 : i32
    %c0_i32_0 = arith.constant 0 : i32
    %c0_i32_1 = arith.constant 0 : i32
    return %arg0, %c0_i32, %c0_i32_0 : i32, i32, i32
  }
  func.func @transform_5(%arg0: i32) -> (i32, i32, i32) {
    %c0_i32 = arith.constant 0 : i32
    %c0_i32_0 = arith.constant 0 : i32
    %c0_i32_1 = arith.constant 0 : i32
    return %arg0, %c0_i32, %c0_i32_0 : i32, i32, i32
  }
}

module attributes {stable_mosaic.version = 11 : i64} {
  func.func @_attn_kernel(%arg0: i32, %arg1: memref<2x8x128xbf16, #tpu.memory_space<vmem>>, %arg2: memref<2x8x128xbf16, #tpu.memory_space<vmem>>, %arg3: memref<2x8xf32, #tpu.memory_space<vmem>>, %arg4: memref<2x8xf32, #tpu.memory_space<vmem>>, %arg5: memref<2x8x128xbf16, #tpu.memory_space<vmem>>, %arg6: memref<2x8x128xbf16, #tpu.memory_space<vmem>>) attributes {dimension_semantics = [#tpu.dimension_semantics<parallel>], iteration_bounds = array<i64: 1>, scalar_prefetch = 0 : i64, scratch_operands = 0 : i64, tpu.core_type = #tpu.core_type<tc>, window_params = [{transform_indices = @transform_0, window_bounds = array<i64: 2, 8, 128>}, {transform_indices = @transform_1, window_bounds = array<i64: 2, 8, 128>}, {transform_indices = @transform_2, window_bounds = array<i64: 2, 8>}, {transform_indices = @transform_3, window_bounds = array<i64: 2, 8>}, {transform_indices = @transform_4, window_bounds = array<i64: 2, 8, 128>}, {transform_indices = @transform_5, window_bounds = array<i64: 2, 8, 128>}]} {
    %c0 = arith.constant 0 : index
    %c0_0 = arith.constant 0 : index
    %c0_1 = arith.constant 0 : index
    %0 = vector.load %arg1[%c0, %c0_0, %c0_1] : memref<2x8x128xbf16, #tpu.memory_space<vmem>>, vector<2x8x128xbf16>
    %c0_2 = arith.constant 0 : index
    %c0_3 = arith.constant 0 : index
    %c0_4 = arith.constant 0 : index
    %1 = vector.load %arg2[%c0_2, %c0_3, %c0_4] : memref<2x8x128xbf16, #tpu.memory_space<vmem>>, vector<2x8x128xbf16>
    %c0_5 = arith.constant 0 : index
    %c0_6 = arith.constant 0 : index
    %2 = vector.load %arg3[%c0_5, %c0_6] : memref<2x8xf32, #tpu.memory_space<vmem>>, vector<2x8xf32>
    %c0_7 = arith.constant 0 : index
    %c0_8 = arith.constant 0 : index
    %3 = vector.load %arg4[%c0_7, %c0_8] : memref<2x8xf32, #tpu.memory_space<vmem>>, vector<2x8xf32>
    "tpu.trace_start"() <{level = 10 : i32, message = "bqh,bkh->bqk"}> : () -> ()
    %cst = arith.constant dense<0.000000e+00> : vector<2x8x8xf32>
    %4 = tpu.matmul %0, %1, %cst {dimension_numbers = #tpu.dot_dimension_numbers<[2], [2], [1], [1], [0, 0, 0, 1, 1, 1], [0], [0]>} : vector<2x8x128xbf16>, vector<2x8x128xbf16>, vector<2x8x8xf32> -> vector<2x8x8xf32>
    "tpu.trace_stop"() : () -> ()
    "tpu.trace_start"() <{level = 10 : i32, message = "bkh,bqh->bkq"}> : () -> ()
    %cst_9 = arith.constant dense<0.000000e+00> : vector<2x8x8xf32>
    %5 = tpu.matmul %1, %0, %cst_9 {dimension_numbers = #tpu.dot_dimension_numbers<[2], [2], [1], [1], [0, 0, 0, 1, 1, 1], [0], [0]>} : vector<2x8x128xbf16>, vector<2x8x128xbf16>, vector<2x8x8xf32> -> vector<2x8x8xf32>
    "tpu.trace_stop"() : () -> ()
    %6 = vector.shape_cast %3 : vector<2x8xf32> to vector<2x1x8xf32>
    %7 = vector.broadcast %6 : vector<2x1x8xf32> to vector<2x8x8xf32>
    %8 = arith.mulf %4, %7 : vector<2x8x8xf32>
    %cst_10 = arith.constant dense<0xFF800000> : vector<2x8xf32>
    %9 = vector.multi_reduction <maximumf>, %8, %cst_10 [2] : vector<2x8x8xf32> to vector<2x8xf32>
    %10 = vector.shape_cast %9 : vector<2x8xf32> to vector<2x8x1xf32>
    %11 = vector.broadcast %10 : vector<2x8x1xf32> to vector<2x8x8xf32>
    %12 = arith.subf %8, %11 : vector<2x8x8xf32>
    %13 = math.exp %12 : vector<2x8x8xf32>
    %cst_11 = arith.constant dense<0.000000e+00> : vector<2x8xf32>
    %14 = vector.multi_reduction <add>, %13, %cst_11 [2] : vector<2x8x8xf32> to vector<2x8xf32>
    %15 = vector.shape_cast %14 : vector<2x8xf32> to vector<2x8x1xf32>
    %16 = tpu.reciprocal %15 {approx = true} : vector<2x8x1xf32> -> vector<2x8x1xf32>
    %17 = vector.broadcast %16 : vector<2x8x1xf32> to vector<2x8x8xf32>
    %18 = arith.mulf %13, %17 : vector<2x8x8xf32>
    %19 = vector.broadcast %6 : vector<2x1x8xf32> to vector<2x8x8xf32>
    %20 = arith.mulf %18, %19 : vector<2x8x8xf32>
    %cst_12 = arith.constant dense<0.000000e+00> : vector<2x8xf32>
    %21 = vector.multi_reduction <add>, %20, %cst_12 [2] : vector<2x8x8xf32> to vector<2x8xf32>
    %22 = vector.shape_cast %21 : vector<2x8xf32> to vector<2x8x1xf32>
    %cst_13 = arith.constant 9.99999982E-14 : f32
    %23 = vector.broadcast %cst_13 : f32 to vector<2x8x1xf32>
    %24 = arith.addf %22, %23 : vector<2x8x1xf32>
    %25 = tpu.reciprocal %24 {approx = true} : vector<2x8x1xf32> -> vector<2x8x1xf32>
    %26 = vector.broadcast %25 : vector<2x8x1xf32> to vector<2x8x8xf32>
    %27 = arith.mulf %20, %26 : vector<2x8x8xf32>
    %28 = vector.shape_cast %2 : vector<2x8xf32> to vector<2x1x8xf32>
    %29 = vector.broadcast %28 : vector<2x1x8xf32> to vector<2x8x8xf32>
    %30 = arith.mulf %5, %29 : vector<2x8x8xf32>
    %cst_14 = arith.constant dense<0xFF800000> : vector<2x8xf32>
    %31 = vector.multi_reduction <maximumf>, %30, %cst_14 [2] : vector<2x8x8xf32> to vector<2x8xf32>
    %32 = vector.shape_cast %31 : vector<2x8xf32> to vector<2x8x1xf32>
    %33 = vector.broadcast %32 : vector<2x8x1xf32> to vector<2x8x8xf32>
    %34 = arith.subf %30, %33 : vector<2x8x8xf32>
    %35 = math.exp %34 : vector<2x8x8xf32>
    %cst_15 = arith.constant dense<0.000000e+00> : vector<2x8xf32>
    %36 = vector.multi_reduction <add>, %35, %cst_15 [2] : vector<2x8x8xf32> to vector<2x8xf32>
    %37 = vector.shape_cast %36 : vector<2x8xf32> to vector<2x8x1xf32>
    %38 = tpu.reciprocal %37 {approx = true} : vector<2x8x1xf32> -> vector<2x8x1xf32>
    %39 = vector.broadcast %38 : vector<2x8x1xf32> to vector<2x8x8xf32>
    %40 = arith.mulf %35, %39 : vector<2x8x8xf32>
    %41 = vector.broadcast %28 : vector<2x1x8xf32> to vector<2x8x8xf32>
    %42 = arith.mulf %40, %41 : vector<2x8x8xf32>
    %cst_16 = arith.constant dense<0.000000e+00> : vector<2x8xf32>
    %43 = vector.multi_reduction <add>, %42, %cst_16 [2] : vector<2x8x8xf32> to vector<2x8xf32>
    %44 = vector.shape_cast %43 : vector<2x8xf32> to vector<2x8x1xf32>
    %cst_17 = arith.constant 9.99999982E-14 : f32
    %45 = vector.broadcast %cst_17 : f32 to vector<2x8x1xf32>
    %46 = arith.addf %44, %45 : vector<2x8x1xf32>
    %47 = tpu.reciprocal %46 {approx = true} : vector<2x8x1xf32> -> vector<2x8x1xf32>
    %48 = vector.broadcast %47 : vector<2x8x1xf32> to vector<2x8x8xf32>
    %49 = arith.mulf %42, %48 : vector<2x8x8xf32>
    %50 = arith.truncf %27 : vector<2x8x8xf32> to vector<2x8x8xbf16>
    "tpu.trace_start"() <{level = 10 : i32, message = "bqk,bkh->bqh"}> : () -> ()
    %cst_18 = arith.constant dense<0.000000e+00> : vector<2x8x128xf32>
    %51 = tpu.matmul %50, %1, %cst_18 {dimension_numbers = #tpu.dot_dimension_numbers<[2], [1], [1], [2], [0, 0, 0, 1, 1, 2], [0], [0]>} : vector<2x8x8xbf16>, vector<2x8x128xbf16>, vector<2x8x128xf32> -> vector<2x8x128xf32>
    "tpu.trace_stop"() : () -> ()
    %52 = arith.truncf %49 : vector<2x8x8xf32> to vector<2x8x8xbf16>
    "tpu.trace_start"() <{level = 10 : i32, message = "bqk,bkh->bqh"}> : () -> ()
    %cst_19 = arith.constant dense<0.000000e+00> : vector<2x8x128xf32>
    %53 = tpu.matmul %52, %0, %cst_19 {dimension_numbers = #tpu.dot_dimension_numbers<[2], [1], [1], [2], [0, 0, 0, 1, 1, 2], [0], [0]>} : vector<2x8x8xbf16>, vector<2x8x128xbf16>, vector<2x8x128xf32> -> vector<2x8x128xf32>
    "tpu.trace_stop"() : () -> ()
    %54 = vector.shape_cast %2 : vector<2x8xf32> to vector<2x8x1xf32>
    %55 = vector.broadcast %54 : vector<2x8x1xf32> to vector<2x8x128xf32>
    %56 = arith.mulf %51, %55 : vector<2x8x128xf32>
    %57 = arith.truncf %56 : vector<2x8x128xf32> to vector<2x8x128xbf16>
    %c0_20 = arith.constant 0 : index
    %c0_21 = arith.constant 0 : index
    %c0_22 = arith.constant 0 : index
    %58 = vector.load %arg5[%c0_20, %c0_21, %c0_22] : memref<2x8x128xbf16, #tpu.memory_space<vmem>>, vector<2x8x128xbf16>
    tpu.vector_store %arg5[%c0_20, %c0_21, %c0_22], %57 {strides = array<i32>} : memref<2x8x128xbf16, #tpu.memory_space<vmem>>, vector<2x8x128xbf16>,
    %59 = vector.shape_cast %3 : vector<2x8xf32> to vector<2x8x1xf32>
    %60 = vector.broadcast %59 : vector<2x8x1xf32> to vector<2x8x128xf32>
    %61 = arith.mulf %53, %60 : vector<2x8x128xf32>
    %62 = arith.truncf %61 : vector<2x8x128xf32> to vector<2x8x128xbf16>
    %c0_23 = arith.constant 0 : index
    %c0_24 = arith.constant 0 : index
    %c0_25 = arith.constant 0 : index
    %63 = vector.load %arg6[%c0_23, %c0_24, %c0_25] : memref<2x8x128xbf16, #tpu.memory_space<vmem>>, vector<2x8x128xbf16>
    tpu.vector_store %arg6[%c0_23, %c0_24, %c0_25], %62 {strides = array<i32>} : memref<2x8x128xbf16, #tpu.memory_space<vmem>>, vector<2x8x128xbf16>,
    return
  }
  func.func @transform_0(%arg0: i32) -> (i32, i32, i32) {
    %c0_i32 = arith.constant 0 : i32
    %c0_i32_0 = arith.constant 0 : i32
    %c0_i32_1 = arith.constant 0 : i32
    return %arg0, %c0_i32, %c0_i32_0 : i32, i32, i32
  }
  func.func @transform_1(%arg0: i32) -> (i32, i32, i32) {
    %c0_i32 = arith.constant 0 : i32
    %c0_i32_0 = arith.constant 0 : i32
    %c0_i32_1 = arith.constant 0 : i32
    return %arg0, %c0_i32, %c0_i32_0 : i32, i32, i32
  }
  func.func @transform_2(%arg0: i32) -> (i32, i32) {
    %c0_i32 = arith.constant 0 : i32
    %c0_i32_0 = arith.constant 0 : i32
    return %arg0, %c0_i32 : i32, i32
  }
  func.func @transform_3(%arg0: i32) -> (i32, i32) {
    %c0_i32 = arith.constant 0 : i32
    %c0_i32_0 = arith.constant 0 : i32
    return %arg0, %c0_i32 : i32, i32
  }
  func.func @transform_4(%arg0: i32) -> (i32, i32, i32) {
    %c0_i32 = arith.constant 0 : i32
    %c0_i32_0 = arith.constant 0 : i32
    %c0_i32_1 = arith.constant 0 : i32
    return %arg0, %c0_i32, %c0_i32_0 : i32, i32, i32
  }
  func.func @transform_5(%arg0: i32) -> (i32, i32, i32) {
    %c0_i32 = arith.constant 0 : i32
    %c0_i32_0 = arith.constant 0 : i32
    %c0_i32_1 = arith.constant 0 : i32
    return %arg0, %c0_i32, %c0_i32_0 : i32, i32, i32
  }
}

module attributes {stable_mosaic.version = 11 : i64} {
  func.func @_proj_kernel(%arg0: i32, %arg1: memref<4x8x128xbf16, #tpu.memory_space<vmem>>, %arg2: memref<4x8x128xbf16, #tpu.memory_space<vmem>>, %arg3: memref<256x128xbf16, #tpu.memory_space<vmem>>, %arg4: memref<128x128xbf16, #tpu.memory_space<vmem>>, %arg5: memref<1x128xf32, #tpu.memory_space<vmem>>, %arg6: memref<4x8x128xbf16, #tpu.memory_space<vmem>>) attributes {dimension_semantics = [#tpu.dimension_semantics<parallel>], iteration_bounds = array<i64: 1>, scalar_prefetch = 0 : i64, scratch_operands = 0 : i64, tpu.core_type = #tpu.core_type<tc>, window_params = [{transform_indices = @transform_0, window_bounds = array<i64: 4, 8, 128>}, {transform_indices = @transform_1, window_bounds = array<i64: 4, 8, 128>}, {pipeline_mode = #tpu.pipeline_mode<synchronous>, transform_indices = @transform_2, window_bounds = array<i64: 256, 128>}, {pipeline_mode = #tpu.pipeline_mode<synchronous>, transform_indices = @transform_3, window_bounds = array<i64: 128, 128>}, {pipeline_mode = #tpu.pipeline_mode<synchronous>, transform_indices = @transform_4, window_bounds = array<i64: 1, 128>}, {transform_indices = @transform_5, window_bounds = array<i64: 4, 8, 128>}]} {
    %c0 = arith.constant 0 : index
    %c0_0 = arith.constant 0 : index
    %c0_1 = arith.constant 0 : index
    %0 = vector.load %arg1[%c0, %c0_0, %c0_1] : memref<4x8x128xbf16, #tpu.memory_space<vmem>>, vector<4x8x128xbf16>
    %1 = vector.shape_cast %0 : vector<4x8x128xbf16> to vector<32x128xbf16>
    %c0_2 = arith.constant 0 : index
    %c0_3 = arith.constant 0 : index
    %c0_4 = arith.constant 0 : index
    %2 = vector.load %arg2[%c0_2, %c0_3, %c0_4] : memref<4x8x128xbf16, #tpu.memory_space<vmem>>, vector<4x8x128xbf16>
    %3 = vector.shape_cast %2 : vector<4x8x128xbf16> to vector<32x128xbf16>
    %4 = tpu.concatenate %1, %3 in 1 : vector<32x128xbf16>, vector<32x128xbf16> -> vector<32x256xbf16>
    %c0_5 = arith.constant 0 : index
    %c0_6 = arith.constant 0 : index
    %5 = vector.load %arg3[%c0_5, %c0_6] : memref<256x128xbf16, #tpu.memory_space<vmem>>, vector<256x128xbf16>
    %cst = arith.constant dense<0.000000e+00> : vector<32x128xf32>
    %6 = tpu.matmul %4, %5, %cst {dimension_numbers = #tpu.dot_dimension_numbers<[1], [0], [0], [1], [0, 0, 1, 1], [], []>} : vector<32x256xbf16>, vector<256x128xbf16>, vector<32x128xf32> -> vector<32x128xf32>
    %7 = arith.mulf %1, %3 : vector<32x128xbf16>
    %c0_7 = arith.constant 0 : index
    %c0_8 = arith.constant 0 : index
    %8 = vector.load %arg4[%c0_7, %c0_8] : memref<128x128xbf16, #tpu.memory_space<vmem>>, vector<128x128xbf16>
    %cst_9 = arith.constant dense<0.000000e+00> : vector<32x128xf32>
    %9 = tpu.matmul %7, %8, %cst_9 {dimension_numbers = #tpu.dot_dimension_numbers<[1], [0], [0], [1], [0, 0, 1, 1], [], []>} : vector<32x128xbf16>, vector<128x128xbf16>, vector<32x128xf32> -> vector<32x128xf32>
    %10 = arith.addf %6, %9 : vector<32x128xf32>
    %c0_10 = arith.constant 0 : index
    %c0_11 = arith.constant 0 : index
    %11 = vector.load %arg5[%c0_10, %c0_11] : memref<1x128xf32, #tpu.memory_space<vmem>>, vector<1x128xf32>
    %12 = vector.broadcast %11 : vector<1x128xf32> to vector<32x128xf32>
    %13 = arith.addf %10, %12 : vector<32x128xf32>
    %cst_12 = arith.constant 0.000000e+00 : f32
    %14 = vector.broadcast %cst_12 : f32 to vector<32x128xf32>
    %15 = arith.maximumf %13, %14 : vector<32x128xf32>
    %16 = vector.shape_cast %15 : vector<32x128xf32> to vector<4x8x128xf32>
    %17 = arith.truncf %16 : vector<4x8x128xf32> to vector<4x8x128xbf16>
    %c0_13 = arith.constant 0 : index
    %c0_14 = arith.constant 0 : index
    %c0_15 = arith.constant 0 : index
    %18 = vector.load %arg6[%c0_13, %c0_14, %c0_15] : memref<4x8x128xbf16, #tpu.memory_space<vmem>>, vector<4x8x128xbf16>
    tpu.vector_store %arg6[%c0_13, %c0_14, %c0_15], %17 {strides = array<i32>} : memref<4x8x128xbf16, #tpu.memory_space<vmem>>, vector<4x8x128xbf16>,
    return
  }
  func.func @transform_0(%arg0: i32) -> (i32, i32, i32) {
    %c0_i32 = arith.constant 0 : i32
    %c0_i32_0 = arith.constant 0 : i32
    %c0_i32_1 = arith.constant 0 : i32
    return %arg0, %c0_i32, %c0_i32_0 : i32, i32, i32
  }
  func.func @transform_1(%arg0: i32) -> (i32, i32, i32) {
    %c0_i32 = arith.constant 0 : i32
    %c0_i32_0 = arith.constant 0 : i32
    %c0_i32_1 = arith.constant 0 : i32
    return %arg0, %c0_i32, %c0_i32_0 : i32, i32, i32
  }
  func.func @transform_2(%arg0: i32) -> (i32, i32) {
    %c0_i32 = arith.constant 0 : i32
    %c0_i32_0 = arith.constant 0 : i32
    %c0_i32_1 = arith.constant 0 : i32
    return %c0_i32, %c0_i32_0 : i32, i32
  }
  func.func @transform_3(%arg0: i32) -> (i32, i32) {
    %c0_i32 = arith.constant 0 : i32
    %c0_i32_0 = arith.constant 0 : i32
    %c0_i32_1 = arith.constant 0 : i32
    return %c0_i32, %c0_i32_0 : i32, i32
  }
  func.func @transform_4(%arg0: i32) -> (i32, i32) {
    %c0_i32 = arith.constant 0 : i32
    %c0_i32_0 = arith.constant 0 : i32
    %c0_i32_1 = arith.constant 0 : i32
    return %c0_i32, %c0_i32_0 : i32, i32
  }
  func.func @transform_5(%arg0: i32) -> (i32, i32, i32) {
    %c0_i32 = arith.constant 0 : i32
    %c0_i32_0 = arith.constant 0 : i32
    %c0_i32_1 = arith.constant 0 : i32
    return %arg0, %c0_i32, %c0_i32_0 : i32, i32, i32
  }
}

module attributes {stable_mosaic.version = 11 : i64} {
  func.func @_lstm_kernel(%arg0: i32, %arg1: memref<4x8x128xbf16, #tpu.memory_space<vmem>>, %arg2: memref<128x512xbf16, #tpu.memory_space<vmem>>, %arg3: memref<128x512xbf16, #tpu.memory_space<vmem>>, %arg4: memref<1x512xf32, #tpu.memory_space<vmem>>, %arg5: memref<4x8x1xf32, #tpu.memory_space<vmem>>, %arg6: memref<4x8x128xbf16, #tpu.memory_space<vmem>>, %arg7: memref<4x8x512xf32, #tpu.memory_space<vmem>>) attributes {dimension_semantics = [#tpu.dimension_semantics<parallel>], iteration_bounds = array<i64: 1>, scalar_prefetch = 0 : i64, scratch_operands = 1 : i64, tpu.core_type = #tpu.core_type<tc>, window_params = [{transform_indices = @transform_0, window_bounds = array<i64: 4, 8, 128>}, {pipeline_mode = #tpu.pipeline_mode<synchronous>, transform_indices = @transform_1, window_bounds = array<i64: 128, 512>}, {pipeline_mode = #tpu.pipeline_mode<synchronous>, transform_indices = @transform_2, window_bounds = array<i64: 128, 512>}, {pipeline_mode = #tpu.pipeline_mode<synchronous>, transform_indices = @transform_3, window_bounds = array<i64: 1, 512>}, {transform_indices = @transform_4, window_bounds = array<i64: 4, 8, 1>}, {transform_indices = @transform_5, window_bounds = array<i64: 4, 8, 128>}]} {
    %c0 = arith.constant 0 : index
    %c0_0 = arith.constant 0 : index
    %c0_1 = arith.constant 0 : index
    %0 = vector.load %arg1[%c0, %c0_0, %c0_1] : memref<4x8x128xbf16, #tpu.memory_space<vmem>>, vector<4x8x128xbf16>
    %1 = vector.shape_cast %0 : vector<4x8x128xbf16> to vector<32x128xbf16>
    %c0_2 = arith.constant 0 : index
    %c0_3 = arith.constant 0 : index
    %2 = vector.load %arg2[%c0_2, %c0_3] : memref<128x512xbf16, #tpu.memory_space<vmem>>, vector<128x512xbf16>
    %cst = arith.constant dense<0.000000e+00> : vector<32x512xf32>
    %3 = tpu.matmul %1, %2, %cst {dimension_numbers = #tpu.dot_dimension_numbers<[1], [0], [0], [1], [0, 0, 1, 1], [], []>} : vector<32x128xbf16>, vector<128x512xbf16>, vector<32x512xf32> -> vector<32x512xf32>
    %c0_4 = arith.constant 0 : index
    %c0_5 = arith.constant 0 : index
    %4 = vector.load %arg4[%c0_4, %c0_5] : memref<1x512xf32, #tpu.memory_space<vmem>>, vector<1x512xf32>
    %5 = vector.broadcast %4 : vector<1x512xf32> to vector<32x512xf32>
    %6 = arith.addf %3, %5 : vector<32x512xf32>
    %7 = vector.shape_cast %6 : vector<32x512xf32> to vector<4x8x512xf32>
    %c0_6 = arith.constant 0 : index
    %c0_7 = arith.constant 0 : index
    %c0_8 = arith.constant 0 : index
    %8 = vector.load %arg7[%c0_6, %c0_7, %c0_8] : memref<4x8x512xf32, #tpu.memory_space<vmem>>, vector<4x8x512xf32>
    tpu.vector_store %arg7[%c0_6, %c0_7, %c0_8], %7 {strides = array<i32>} : memref<4x8x512xf32, #tpu.memory_space<vmem>>, vector<4x8x512xf32>,
    %c0_9 = arith.constant 0 : index
    %c0_10 = arith.constant 0 : index
    %9 = vector.load %arg3[%c0_9, %c0_10] : memref<128x512xbf16, #tpu.memory_space<vmem>>, vector<128x512xbf16>
    %cst_11 = arith.constant 0.000000e+00 : f32
    %10 = vector.broadcast %cst_11 : f32 to vector<4x128xf32>
    %cst_12 = arith.constant 0.000000e+00 : f32
    %11 = vector.broadcast %cst_12 : f32 to vector<4x128xf32>
    %c0_i32 = arith.constant 0 : i32
    %c0_13 = arith.constant 0 : index
    %12 = arith.index_cast %c0_i32 : i32 to index
    %c0_14 = arith.constant 0 : index
    %13 = vector.load %arg7[%c0_13, %12, %c0_14] : memref<4x8x512xf32, #tpu.memory_space<vmem>>, vector<4x1x512xf32>
    %14 = vector.shape_cast %13 : vector<4x1x512xf32> to vector<4x512xf32>
    %15 = arith.truncf %10 : vector<4x128xf32> to vector<4x128xbf16>
    %cst_15 = arith.constant dense<0.000000e+00> : vector<4x512xf32>
    %16 = tpu.matmul %15, %9, %cst_15 {dimension_numbers = #tpu.dot_dimension_numbers<[1], [0], [0], [1], [0, 0, 1, 1], [], []>} : vector<4x128xbf16>, vector<128x512xbf16>, vector<4x512xf32> -> vector<4x512xf32>
    %17 = arith.addf %14, %16 : vector<4x512xf32>
    %18 = vector.extract_strided_slice %17 {offsets = [0, 0], sizes = [4, 128], strides = [1, 1]} : vector<4x512xf32> to vector<4x128xf32>
    %19 = arith.negf %18 : vector<4x128xf32>
    %20 = math.exp %19 : vector<4x128xf32>
    %cst_16 = arith.constant 1.000000e+00 : f32
    %21 = vector.broadcast %cst_16 : f32 to vector<4x128xf32>
    %22 = arith.addf %21, %20 : vector<4x128xf32>
    %23 = arith.divf %21, %22 : vector<4x128xf32>
    %24 = vector.extract_strided_slice %17 {offsets = [0, 128], sizes = [4, 128], strides = [1, 1]} : vector<4x512xf32> to vector<4x128xf32>
    %25 = arith.negf %24 : vector<4x128xf32>
    %26 = math.exp %25 : vector<4x128xf32>
    %cst_17 = arith.constant 1.000000e+00 : f32
    %27 = vector.broadcast %cst_17 : f32 to vector<4x128xf32>
    %28 = arith.addf %27, %26 : vector<4x128xf32>
    %29 = arith.divf %27, %28 : vector<4x128xf32>
    %30 = vector.extract_strided_slice %17 {offsets = [0, 256], sizes = [4, 128], strides = [1, 1]} : vector<4x512xf32> to vector<4x128xf32>
    %31 = math.tanh %30 : vector<4x128xf32>
    %32 = vector.extract_strided_slice %17 {offsets = [0, 384], sizes = [4, 128], strides = [1, 1]} : vector<4x512xf32> to vector<4x128xf32>
    %33 = arith.negf %32 : vector<4x128xf32>
    %34 = math.exp %33 : vector<4x128xf32>
    %cst_18 = arith.constant 1.000000e+00 : f32
    %35 = vector.broadcast %cst_18 : f32 to vector<4x128xf32>
    %36 = arith.addf %35, %34 : vector<4x128xf32>
    %37 = arith.divf %35, %36 : vector<4x128xf32>
    %38 = arith.mulf %29, %11 : vector<4x128xf32>
    %39 = arith.mulf %23, %31 : vector<4x128xf32>
    %40 = arith.addf %38, %39 : vector<4x128xf32>
    %41 = math.tanh %40 : vector<4x128xf32>
    %42 = arith.mulf %37, %41 : vector<4x128xf32>
    %c0_19 = arith.constant 0 : index
    %43 = arith.index_cast %c0_i32 : i32 to index
    %c0_20 = arith.constant 0 : index
    %44 = vector.load %arg5[%c0_19, %43, %c0_20] : memref<4x8x1xf32, #tpu.memory_space<vmem>>, vector<4x1x1xf32>
    %45 = vector.shape_cast %44 : vector<4x1x1xf32> to vector<4x1xf32>
    %46 = vector.broadcast %45 : vector<4x1xf32> to vector<4x128xf32>
    %47 = arith.mulf %42, %46 : vector<4x128xf32>
    %48 = arith.truncf %47 : vector<4x128xf32> to vector<4x128xbf16>
    %49 = vector.shape_cast %48 : vector<4x128xbf16> to vector<4x1x128xbf16>
    %c0_21 = arith.constant 0 : index
    %50 = arith.index_cast %c0_i32 : i32 to index
    %c0_22 = arith.constant 0 : index
    %51 = vector.load %arg6[%c0_21, %50, %c0_22] : memref<4x8x128xbf16, #tpu.memory_space<vmem>>, vector<4x1x128xbf16>
    tpu.vector_store %arg6[%c0_21, %50, %c0_22], %49 {strides = array<i32>} : memref<4x8x128xbf16, #tpu.memory_space<vmem>>, vector<4x1x128xbf16>,
    %c1_i32 = arith.constant 1 : i32
    %c0_23 = arith.constant 0 : index
    %52 = arith.index_cast %c1_i32 : i32 to index
    %c0_24 = arith.constant 0 : index
    %53 = vector.load %arg7[%c0_23, %52, %c0_24] : memref<4x8x512xf32, #tpu.memory_space<vmem>>, vector<4x1x512xf32>
    %54 = vector.shape_cast %53 : vector<4x1x512xf32> to vector<4x512xf32>
    %55 = arith.truncf %42 : vector<4x128xf32> to vector<4x128xbf16>
    %cst_25 = arith.constant dense<0.000000e+00> : vector<4x512xf32>
    %56 = tpu.matmul %55, %9, %cst_25 {dimension_numbers = #tpu.dot_dimension_numbers<[1], [0], [0], [1], [0, 0, 1, 1], [], []>} : vector<4x128xbf16>, vector<128x512xbf16>, vector<4x512xf32> -> vector<4x512xf32>
    %57 = arith.addf %54, %56 : vector<4x512xf32>
    %58 = vector.extract_strided_slice %57 {offsets = [0, 0], sizes = [4, 128], strides = [1, 1]} : vector<4x512xf32> to vector<4x128xf32>
    %59 = arith.negf %58 : vector<4x128xf32>
    %60 = math.exp %59 : vector<4x128xf32>
    %cst_26 = arith.constant 1.000000e+00 : f32
    %61 = vector.broadcast %cst_26 : f32 to vector<4x128xf32>
    %62 = arith.addf %61, %60 : vector<4x128xf32>
    %63 = arith.divf %61, %62 : vector<4x128xf32>
    %64 = vector.extract_strided_slice %57 {offsets = [0, 128], sizes = [4, 128], strides = [1, 1]} : vector<4x512xf32> to vector<4x128xf32>
    %65 = arith.negf %64 : vector<4x128xf32>
    %66 = math.exp %65 : vector<4x128xf32>
    %cst_27 = arith.constant 1.000000e+00 : f32
    %67 = vector.broadcast %cst_27 : f32 to vector<4x128xf32>
    %68 = arith.addf %67, %66 : vector<4x128xf32>
    %69 = arith.divf %67, %68 : vector<4x128xf32>
    %70 = vector.extract_strided_slice %57 {offsets = [0, 256], sizes = [4, 128], strides = [1, 1]} : vector<4x512xf32> to vector<4x128xf32>
    %71 = math.tanh %70 : vector<4x128xf32>
    %72 = vector.extract_strided_slice %57 {offsets = [0, 384], sizes = [4, 128], strides = [1, 1]} : vector<4x512xf32> to vector<4x128xf32>
    %73 = arith.negf %72 : vector<4x128xf32>
    %74 = math.exp %73 : vector<4x128xf32>
    %cst_28 = arith.constant 1.000000e+00 : f32
    %75 = vector.broadcast %cst_28 : f32 to vector<4x128xf32>
    %76 = arith.addf %75, %74 : vector<4x128xf32>
    %77 = arith.divf %75, %76 : vector<4x128xf32>
    %78 = arith.mulf %69, %40 : vector<4x128xf32>
    %79 = arith.mulf %63, %71 : vector<4x128xf32>
    %80 = arith.addf %78, %79 : vector<4x128xf32>
    %81 = math.tanh %80 : vector<4x128xf32>
    %82 = arith.mulf %77, %81 : vector<4x128xf32>
    %c0_29 = arith.constant 0 : index
    %83 = arith.index_cast %c1_i32 : i32 to index
    %c0_30 = arith.constant 0 : index
    %84 = vector.load %arg5[%c0_29, %83, %c0_30] : memref<4x8x1xf32, #tpu.memory_space<vmem>>, vector<4x1x1xf32>
    %85 = vector.shape_cast %84 : vector<4x1x1xf32> to vector<4x1xf32>
    %86 = vector.broadcast %85 : vector<4x1xf32> to vector<4x128xf32>
    %87 = arith.mulf %82, %86 : vector<4x128xf32>
    %88 = arith.truncf %87 : vector<4x128xf32> to vector<4x128xbf16>
    %89 = vector.shape_cast %88 : vector<4x128xbf16> to vector<4x1x128xbf16>
    %c0_31 = arith.constant 0 : index
    %90 = arith.index_cast %c1_i32 : i32 to index
    %c0_32 = arith.constant 0 : index
    %91 = vector.load %arg6[%c0_31, %90, %c0_32] : memref<4x8x128xbf16, #tpu.memory_space<vmem>>, vector<4x1x128xbf16>
    tpu.vector_store %arg6[%c0_31, %90, %c0_32], %89 {strides = array<i32>} : memref<4x8x128xbf16, #tpu.memory_space<vmem>>, vector<4x1x128xbf16>,
    %c2_i32 = arith.constant 2 : i32
    %c0_33 = arith.constant 0 : index
    %92 = arith.index_cast %c2_i32 : i32 to index
    %c0_34 = arith.constant 0 : index
    %93 = vector.load %arg7[%c0_33, %92, %c0_34] : memref<4x8x512xf32, #tpu.memory_space<vmem>>, vector<4x1x512xf32>
    %94 = vector.shape_cast %93 : vector<4x1x512xf32> to vector<4x512xf32>
    %95 = arith.truncf %82 : vector<4x128xf32> to vector<4x128xbf16>
    %cst_35 = arith.constant dense<0.000000e+00> : vector<4x512xf32>
    %96 = tpu.matmul %95, %9, %cst_35 {dimension_numbers = #tpu.dot_dimension_numbers<[1], [0], [0], [1], [0, 0, 1, 1], [], []>} : vector<4x128xbf16>, vector<128x512xbf16>, vector<4x512xf32> -> vector<4x512xf32>
    %97 = arith.addf %94, %96 : vector<4x512xf32>
    %98 = vector.extract_strided_slice %97 {offsets = [0, 0], sizes = [4, 128], strides = [1, 1]} : vector<4x512xf32> to vector<4x128xf32>
    %99 = arith.negf %98 : vector<4x128xf32>
    %100 = math.exp %99 : vector<4x128xf32>
    %cst_36 = arith.constant 1.000000e+00 : f32
    %101 = vector.broadcast %cst_36 : f32 to vector<4x128xf32>
    %102 = arith.addf %101, %100 : vector<4x128xf32>
    %103 = arith.divf %101, %102 : vector<4x128xf32>
    %104 = vector.extract_strided_slice %97 {offsets = [0, 128], sizes = [4, 128], strides = [1, 1]} : vector<4x512xf32> to vector<4x128xf32>
    %105 = arith.negf %104 : vector<4x128xf32>
    %106 = math.exp %105 : vector<4x128xf32>
    %cst_37 = arith.constant 1.000000e+00 : f32
    %107 = vector.broadcast %cst_37 : f32 to vector<4x128xf32>
    %108 = arith.addf %107, %106 : vector<4x128xf32>
    %109 = arith.divf %107, %108 : vector<4x128xf32>
    %110 = vector.extract_strided_slice %97 {offsets = [0, 256], sizes = [4, 128], strides = [1, 1]} : vector<4x512xf32> to vector<4x128xf32>
    %111 = math.tanh %110 : vector<4x128xf32>
    %112 = vector.extract_strided_slice %97 {offsets = [0, 384], sizes = [4, 128], strides = [1, 1]} : vector<4x512xf32> to vector<4x128xf32>
    %113 = arith.negf %112 : vector<4x128xf32>
    %114 = math.exp %113 : vector<4x128xf32>
    %cst_38 = arith.constant 1.000000e+00 : f32
    %115 = vector.broadcast %cst_38 : f32 to vector<4x128xf32>
    %116 = arith.addf %115, %114 : vector<4x128xf32>
    %117 = arith.divf %115, %116 : vector<4x128xf32>
    %118 = arith.mulf %109, %80 : vector<4x128xf32>
    %119 = arith.mulf %103, %111 : vector<4x128xf32>
    %120 = arith.addf %118, %119 : vector<4x128xf32>
    %121 = math.tanh %120 : vector<4x128xf32>
    %122 = arith.mulf %117, %121 : vector<4x128xf32>
    %c0_39 = arith.constant 0 : index
    %123 = arith.index_cast %c2_i32 : i32 to index
    %c0_40 = arith.constant 0 : index
    %124 = vector.load %arg5[%c0_39, %123, %c0_40] : memref<4x8x1xf32, #tpu.memory_space<vmem>>, vector<4x1x1xf32>
    %125 = vector.shape_cast %124 : vector<4x1x1xf32> to vector<4x1xf32>
    %126 = vector.broadcast %125 : vector<4x1xf32> to vector<4x128xf32>
    %127 = arith.mulf %122, %126 : vector<4x128xf32>
    %128 = arith.truncf %127 : vector<4x128xf32> to vector<4x128xbf16>
    %129 = vector.shape_cast %128 : vector<4x128xbf16> to vector<4x1x128xbf16>
    %c0_41 = arith.constant 0 : index
    %130 = arith.index_cast %c2_i32 : i32 to index
    %c0_42 = arith.constant 0 : index
    %131 = vector.load %arg6[%c0_41, %130, %c0_42] : memref<4x8x128xbf16, #tpu.memory_space<vmem>>, vector<4x1x128xbf16>
    tpu.vector_store %arg6[%c0_41, %130, %c0_42], %129 {strides = array<i32>} : memref<4x8x128xbf16, #tpu.memory_space<vmem>>, vector<4x1x128xbf16>,
    %c3_i32 = arith.constant 3 : i32
    %c0_43 = arith.constant 0 : index
    %132 = arith.index_cast %c3_i32 : i32 to index
    %c0_44 = arith.constant 0 : index
    %133 = vector.load %arg7[%c0_43, %132, %c0_44] : memref<4x8x512xf32, #tpu.memory_space<vmem>>, vector<4x1x512xf32>
    %134 = vector.shape_cast %133 : vector<4x1x512xf32> to vector<4x512xf32>
    %135 = arith.truncf %122 : vector<4x128xf32> to vector<4x128xbf16>
    %cst_45 = arith.constant dense<0.000000e+00> : vector<4x512xf32>
    %136 = tpu.matmul %135, %9, %cst_45 {dimension_numbers = #tpu.dot_dimension_numbers<[1], [0], [0], [1], [0, 0, 1, 1], [], []>} : vector<4x128xbf16>, vector<128x512xbf16>, vector<4x512xf32> -> vector<4x512xf32>
    %137 = arith.addf %134, %136 : vector<4x512xf32>
    %138 = vector.extract_strided_slice %137 {offsets = [0, 0], sizes = [4, 128], strides = [1, 1]} : vector<4x512xf32> to vector<4x128xf32>
    %139 = arith.negf %138 : vector<4x128xf32>
    %140 = math.exp %139 : vector<4x128xf32>
    %cst_46 = arith.constant 1.000000e+00 : f32
    %141 = vector.broadcast %cst_46 : f32 to vector<4x128xf32>
    %142 = arith.addf %141, %140 : vector<4x128xf32>
    %143 = arith.divf %141, %142 : vector<4x128xf32>
    %144 = vector.extract_strided_slice %137 {offsets = [0, 128], sizes = [4, 128], strides = [1, 1]} : vector<4x512xf32> to vector<4x128xf32>
    %145 = arith.negf %144 : vector<4x128xf32>
    %146 = math.exp %145 : vector<4x128xf32>
    %cst_47 = arith.constant 1.000000e+00 : f32
    %147 = vector.broadcast %cst_47 : f32 to vector<4x128xf32>
    %148 = arith.addf %147, %146 : vector<4x128xf32>
    %149 = arith.divf %147, %148 : vector<4x128xf32>
    %150 = vector.extract_strided_slice %137 {offsets = [0, 256], sizes = [4, 128], strides = [1, 1]} : vector<4x512xf32> to vector<4x128xf32>
    %151 = math.tanh %150 : vector<4x128xf32>
    %152 = vector.extract_strided_slice %137 {offsets = [0, 384], sizes = [4, 128], strides = [1, 1]} : vector<4x512xf32> to vector<4x128xf32>
    %153 = arith.negf %152 : vector<4x128xf32>
    %154 = math.exp %153 : vector<4x128xf32>
    %cst_48 = arith.constant 1.000000e+00 : f32
    %155 = vector.broadcast %cst_48 : f32 to vector<4x128xf32>
    %156 = arith.addf %155, %154 : vector<4x128xf32>
    %157 = arith.divf %155, %156 : vector<4x128xf32>
    %158 = arith.mulf %149, %120 : vector<4x128xf32>
    %159 = arith.mulf %143, %151 : vector<4x128xf32>
    %160 = arith.addf %158, %159 : vector<4x128xf32>
    %161 = math.tanh %160 : vector<4x128xf32>
    %162 = arith.mulf %157, %161 : vector<4x128xf32>
    %c0_49 = arith.constant 0 : index
    %163 = arith.index_cast %c3_i32 : i32 to index
    %c0_50 = arith.constant 0 : index
    %164 = vector.load %arg5[%c0_49, %163, %c0_50] : memref<4x8x1xf32, #tpu.memory_space<vmem>>, vector<4x1x1xf32>
    %165 = vector.shape_cast %164 : vector<4x1x1xf32> to vector<4x1xf32>
    %166 = vector.broadcast %165 : vector<4x1xf32> to vector<4x128xf32>
    %167 = arith.mulf %162, %166 : vector<4x128xf32>
    %168 = arith.truncf %167 : vector<4x128xf32> to vector<4x128xbf16>
    %169 = vector.shape_cast %168 : vector<4x128xbf16> to vector<4x1x128xbf16>
    %c0_51 = arith.constant 0 : index
    %170 = arith.index_cast %c3_i32 : i32 to index
    %c0_52 = arith.constant 0 : index
    %171 = vector.load %arg6[%c0_51, %170, %c0_52] : memref<4x8x128xbf16, #tpu.memory_space<vmem>>, vector<4x1x128xbf16>
    tpu.vector_store %arg6[%c0_51, %170, %c0_52], %169 {strides = array<i32>} : memref<4x8x128xbf16, #tpu.memory_space<vmem>>, vector<4x1x128xbf16>,
    %c4_i32 = arith.constant 4 : i32
    %c0_53 = arith.constant 0 : index
    %172 = arith.index_cast %c4_i32 : i32 to index
    %c0_54 = arith.constant 0 : index
    %173 = vector.load %arg7[%c0_53, %172, %c0_54] : memref<4x8x512xf32, #tpu.memory_space<vmem>>, vector<4x1x512xf32>
    %174 = vector.shape_cast %173 : vector<4x1x512xf32> to vector<4x512xf32>
    %175 = arith.truncf %162 : vector<4x128xf32> to vector<4x128xbf16>
    %cst_55 = arith.constant dense<0.000000e+00> : vector<4x512xf32>
    %176 = tpu.matmul %175, %9, %cst_55 {dimension_numbers = #tpu.dot_dimension_numbers<[1], [0], [0], [1], [0, 0, 1, 1], [], []>} : vector<4x128xbf16>, vector<128x512xbf16>, vector<4x512xf32> -> vector<4x512xf32>
    %177 = arith.addf %174, %176 : vector<4x512xf32>
    %178 = vector.extract_strided_slice %177 {offsets = [0, 0], sizes = [4, 128], strides = [1, 1]} : vector<4x512xf32> to vector<4x128xf32>
    %179 = arith.negf %178 : vector<4x128xf32>
    %180 = math.exp %179 : vector<4x128xf32>
    %cst_56 = arith.constant 1.000000e+00 : f32
    %181 = vector.broadcast %cst_56 : f32 to vector<4x128xf32>
    %182 = arith.addf %181, %180 : vector<4x128xf32>
    %183 = arith.divf %181, %182 : vector<4x128xf32>
    %184 = vector.extract_strided_slice %177 {offsets = [0, 128], sizes = [4, 128], strides = [1, 1]} : vector<4x512xf32> to vector<4x128xf32>
    %185 = arith.negf %184 : vector<4x128xf32>
    %186 = math.exp %185 : vector<4x128xf32>
    %cst_57 = arith.constant 1.000000e+00 : f32
    %187 = vector.broadcast %cst_57 : f32 to vector<4x128xf32>
    %188 = arith.addf %187, %186 : vector<4x128xf32>
    %189 = arith.divf %187, %188 : vector<4x128xf32>
    %190 = vector.extract_strided_slice %177 {offsets = [0, 256], sizes = [4, 128], strides = [1, 1]} : vector<4x512xf32> to vector<4x128xf32>
    %191 = math.tanh %190 : vector<4x128xf32>
    %192 = vector.extract_strided_slice %177 {offsets = [0, 384], sizes = [4, 128], strides = [1, 1]} : vector<4x512xf32> to vector<4x128xf32>
    %193 = arith.negf %192 : vector<4x128xf32>
    %194 = math.exp %193 : vector<4x128xf32>
    %cst_58 = arith.constant 1.000000e+00 : f32
    %195 = vector.broadcast %cst_58 : f32 to vector<4x128xf32>
    %196 = arith.addf %195, %194 : vector<4x128xf32>
    %197 = arith.divf %195, %196 : vector<4x128xf32>
    %198 = arith.mulf %189, %160 : vector<4x128xf32>
    %199 = arith.mulf %183, %191 : vector<4x128xf32>
    %200 = arith.addf %198, %199 : vector<4x128xf32>
    %201 = math.tanh %200 : vector<4x128xf32>
    %202 = arith.mulf %197, %201 : vector<4x128xf32>
    %c0_59 = arith.constant 0 : index
    %203 = arith.index_cast %c4_i32 : i32 to index
    %c0_60 = arith.constant 0 : index
    %204 = vector.load %arg5[%c0_59, %203, %c0_60] : memref<4x8x1xf32, #tpu.memory_space<vmem>>, vector<4x1x1xf32>
    %205 = vector.shape_cast %204 : vector<4x1x1xf32> to vector<4x1xf32>
    %206 = vector.broadcast %205 : vector<4x1xf32> to vector<4x128xf32>
    %207 = arith.mulf %202, %206 : vector<4x128xf32>
    %208 = arith.truncf %207 : vector<4x128xf32> to vector<4x128xbf16>
    %209 = vector.shape_cast %208 : vector<4x128xbf16> to vector<4x1x128xbf16>
    %c0_61 = arith.constant 0 : index
    %210 = arith.index_cast %c4_i32 : i32 to index
    %c0_62 = arith.constant 0 : index
    %211 = vector.load %arg6[%c0_61, %210, %c0_62] : memref<4x8x128xbf16, #tpu.memory_space<vmem>>, vector<4x1x128xbf16>
    tpu.vector_store %arg6[%c0_61, %210, %c0_62], %209 {strides = array<i32>} : memref<4x8x128xbf16, #tpu.memory_space<vmem>>, vector<4x1x128xbf16>,
    %c5_i32 = arith.constant 5 : i32
    %c0_63 = arith.constant 0 : index
    %212 = arith.index_cast %c5_i32 : i32 to index
    %c0_64 = arith.constant 0 : index
    %213 = vector.load %arg7[%c0_63, %212, %c0_64] : memref<4x8x512xf32, #tpu.memory_space<vmem>>, vector<4x1x512xf32>
    %214 = vector.shape_cast %213 : vector<4x1x512xf32> to vector<4x512xf32>
    %215 = arith.truncf %202 : vector<4x128xf32> to vector<4x128xbf16>
    %cst_65 = arith.constant dense<0.000000e+00> : vector<4x512xf32>
    %216 = tpu.matmul %215, %9, %cst_65 {dimension_numbers = #tpu.dot_dimension_numbers<[1], [0], [0], [1], [0, 0, 1, 1], [], []>} : vector<4x128xbf16>, vector<128x512xbf16>, vector<4x512xf32> -> vector<4x512xf32>
    %217 = arith.addf %214, %216 : vector<4x512xf32>
    %218 = vector.extract_strided_slice %217 {offsets = [0, 0], sizes = [4, 128], strides = [1, 1]} : vector<4x512xf32> to vector<4x128xf32>
    %219 = arith.negf %218 : vector<4x128xf32>
    %220 = math.exp %219 : vector<4x128xf32>
    %cst_66 = arith.constant 1.000000e+00 : f32
    %221 = vector.broadcast %cst_66 : f32 to vector<4x128xf32>
    %222 = arith.addf %221, %220 : vector<4x128xf32>
    %223 = arith.divf %221, %222 : vector<4x128xf32>
    %224 = vector.extract_strided_slice %217 {offsets = [0, 128], sizes = [4, 128], strides = [1, 1]} : vector<4x512xf32> to vector<4x128xf32>
    %225 = arith.negf %224 : vector<4x128xf32>
    %226 = math.exp %225 : vector<4x128xf32>
    %cst_67 = arith.constant 1.000000e+00 : f32
    %227 = vector.broadcast %cst_67 : f32 to vector<4x128xf32>
    %228 = arith.addf %227, %226 : vector<4x128xf32>
    %229 = arith.divf %227, %228 : vector<4x128xf32>
    %230 = vector.extract_strided_slice %217 {offsets = [0, 256], sizes = [4, 128], strides = [1, 1]} : vector<4x512xf32> to vector<4x128xf32>
    %231 = math.tanh %230 : vector<4x128xf32>
    %232 = vector.extract_strided_slice %217 {offsets = [0, 384], sizes = [4, 128], strides = [1, 1]} : vector<4x512xf32> to vector<4x128xf32>
    %233 = arith.negf %232 : vector<4x128xf32>
    %234 = math.exp %233 : vector<4x128xf32>
    %cst_68 = arith.constant 1.000000e+00 : f32
    %235 = vector.broadcast %cst_68 : f32 to vector<4x128xf32>
    %236 = arith.addf %235, %234 : vector<4x128xf32>
    %237 = arith.divf %235, %236 : vector<4x128xf32>
    %238 = arith.mulf %229, %200 : vector<4x128xf32>
    %239 = arith.mulf %223, %231 : vector<4x128xf32>
    %240 = arith.addf %238, %239 : vector<4x128xf32>
    %241 = math.tanh %240 : vector<4x128xf32>
    %242 = arith.mulf %237, %241 : vector<4x128xf32>
    %c0_69 = arith.constant 0 : index
    %243 = arith.index_cast %c5_i32 : i32 to index
    %c0_70 = arith.constant 0 : index
    %244 = vector.load %arg5[%c0_69, %243, %c0_70] : memref<4x8x1xf32, #tpu.memory_space<vmem>>, vector<4x1x1xf32>
    %245 = vector.shape_cast %244 : vector<4x1x1xf32> to vector<4x1xf32>
    %246 = vector.broadcast %245 : vector<4x1xf32> to vector<4x128xf32>
    %247 = arith.mulf %242, %246 : vector<4x128xf32>
    %248 = arith.truncf %247 : vector<4x128xf32> to vector<4x128xbf16>
    %249 = vector.shape_cast %248 : vector<4x128xbf16> to vector<4x1x128xbf16>
    %c0_71 = arith.constant 0 : index
    %250 = arith.index_cast %c5_i32 : i32 to index
    %c0_72 = arith.constant 0 : index
    %251 = vector.load %arg6[%c0_71, %250, %c0_72] : memref<4x8x128xbf16, #tpu.memory_space<vmem>>, vector<4x1x128xbf16>
    tpu.vector_store %arg6[%c0_71, %250, %c0_72], %249 {strides = array<i32>} : memref<4x8x128xbf16, #tpu.memory_space<vmem>>, vector<4x1x128xbf16>,
    %c6_i32 = arith.constant 6 : i32
    %c0_73 = arith.constant 0 : index
    %252 = arith.index_cast %c6_i32 : i32 to index
    %c0_74 = arith.constant 0 : index
    %253 = vector.load %arg7[%c0_73, %252, %c0_74] : memref<4x8x512xf32, #tpu.memory_space<vmem>>, vector<4x1x512xf32>
    %254 = vector.shape_cast %253 : vector<4x1x512xf32> to vector<4x512xf32>
    %255 = arith.truncf %242 : vector<4x128xf32> to vector<4x128xbf16>
    %cst_75 = arith.constant dense<0.000000e+00> : vector<4x512xf32>
    %256 = tpu.matmul %255, %9, %cst_75 {dimension_numbers = #tpu.dot_dimension_numbers<[1], [0], [0], [1], [0, 0, 1, 1], [], []>} : vector<4x128xbf16>, vector<128x512xbf16>, vector<4x512xf32> -> vector<4x512xf32>
    %257 = arith.addf %254, %256 : vector<4x512xf32>
    %258 = vector.extract_strided_slice %257 {offsets = [0, 0], sizes = [4, 128], strides = [1, 1]} : vector<4x512xf32> to vector<4x128xf32>
    %259 = arith.negf %258 : vector<4x128xf32>
    %260 = math.exp %259 : vector<4x128xf32>
    %cst_76 = arith.constant 1.000000e+00 : f32
    %261 = vector.broadcast %cst_76 : f32 to vector<4x128xf32>
    %262 = arith.addf %261, %260 : vector<4x128xf32>
    %263 = arith.divf %261, %262 : vector<4x128xf32>
    %264 = vector.extract_strided_slice %257 {offsets = [0, 128], sizes = [4, 128], strides = [1, 1]} : vector<4x512xf32> to vector<4x128xf32>
    %265 = arith.negf %264 : vector<4x128xf32>
    %266 = math.exp %265 : vector<4x128xf32>
    %cst_77 = arith.constant 1.000000e+00 : f32
    %267 = vector.broadcast %cst_77 : f32 to vector<4x128xf32>
    %268 = arith.addf %267, %266 : vector<4x128xf32>
    %269 = arith.divf %267, %268 : vector<4x128xf32>
    %270 = vector.extract_strided_slice %257 {offsets = [0, 256], sizes = [4, 128], strides = [1, 1]} : vector<4x512xf32> to vector<4x128xf32>
    %271 = math.tanh %270 : vector<4x128xf32>
    %272 = vector.extract_strided_slice %257 {offsets = [0, 384], sizes = [4, 128], strides = [1, 1]} : vector<4x512xf32> to vector<4x128xf32>
    %273 = arith.negf %272 : vector<4x128xf32>
    %274 = math.exp %273 : vector<4x128xf32>
    %cst_78 = arith.constant 1.000000e+00 : f32
    %275 = vector.broadcast %cst_78 : f32 to vector<4x128xf32>
    %276 = arith.addf %275, %274 : vector<4x128xf32>
    %277 = arith.divf %275, %276 : vector<4x128xf32>
    %278 = arith.mulf %269, %240 : vector<4x128xf32>
    %279 = arith.mulf %263, %271 : vector<4x128xf32>
    %280 = arith.addf %278, %279 : vector<4x128xf32>
    %281 = math.tanh %280 : vector<4x128xf32>
    %282 = arith.mulf %277, %281 : vector<4x128xf32>
    %c0_79 = arith.constant 0 : index
    %283 = arith.index_cast %c6_i32 : i32 to index
    %c0_80 = arith.constant 0 : index
    %284 = vector.load %arg5[%c0_79, %283, %c0_80] : memref<4x8x1xf32, #tpu.memory_space<vmem>>, vector<4x1x1xf32>
    %285 = vector.shape_cast %284 : vector<4x1x1xf32> to vector<4x1xf32>
    %286 = vector.broadcast %285 : vector<4x1xf32> to vector<4x128xf32>
    %287 = arith.mulf %282, %286 : vector<4x128xf32>
    %288 = arith.truncf %287 : vector<4x128xf32> to vector<4x128xbf16>
    %289 = vector.shape_cast %288 : vector<4x128xbf16> to vector<4x1x128xbf16>
    %c0_81 = arith.constant 0 : index
    %290 = arith.index_cast %c6_i32 : i32 to index
    %c0_82 = arith.constant 0 : index
    %291 = vector.load %arg6[%c0_81, %290, %c0_82] : memref<4x8x128xbf16, #tpu.memory_space<vmem>>, vector<4x1x128xbf16>
    tpu.vector_store %arg6[%c0_81, %290, %c0_82], %289 {strides = array<i32>} : memref<4x8x128xbf16, #tpu.memory_space<vmem>>, vector<4x1x128xbf16>,
    %c7_i32 = arith.constant 7 : i32
    %c0_83 = arith.constant 0 : index
    %292 = arith.index_cast %c7_i32 : i32 to index
    %c0_84 = arith.constant 0 : index
    %293 = vector.load %arg7[%c0_83, %292, %c0_84] : memref<4x8x512xf32, #tpu.memory_space<vmem>>, vector<4x1x512xf32>
    %294 = vector.shape_cast %293 : vector<4x1x512xf32> to vector<4x512xf32>
    %295 = arith.truncf %282 : vector<4x128xf32> to vector<4x128xbf16>
    %cst_85 = arith.constant dense<0.000000e+00> : vector<4x512xf32>
    %296 = tpu.matmul %295, %9, %cst_85 {dimension_numbers = #tpu.dot_dimension_numbers<[1], [0], [0], [1], [0, 0, 1, 1], [], []>} : vector<4x128xbf16>, vector<128x512xbf16>, vector<4x512xf32> -> vector<4x512xf32>
    %297 = arith.addf %294, %296 : vector<4x512xf32>
    %298 = vector.extract_strided_slice %297 {offsets = [0, 0], sizes = [4, 128], strides = [1, 1]} : vector<4x512xf32> to vector<4x128xf32>
    %299 = arith.negf %298 : vector<4x128xf32>
    %300 = math.exp %299 : vector<4x128xf32>
    %cst_86 = arith.constant 1.000000e+00 : f32
    %301 = vector.broadcast %cst_86 : f32 to vector<4x128xf32>
    %302 = arith.addf %301, %300 : vector<4x128xf32>
    %303 = arith.divf %301, %302 : vector<4x128xf32>
    %304 = vector.extract_strided_slice %297 {offsets = [0, 128], sizes = [4, 128], strides = [1, 1]} : vector<4x512xf32> to vector<4x128xf32>
    %305 = arith.negf %304 : vector<4x128xf32>
    %306 = math.exp %305 : vector<4x128xf32>
    %cst_87 = arith.constant 1.000000e+00 : f32
    %307 = vector.broadcast %cst_87 : f32 to vector<4x128xf32>
    %308 = arith.addf %307, %306 : vector<4x128xf32>
    %309 = arith.divf %307, %308 : vector<4x128xf32>
    %310 = vector.extract_strided_slice %297 {offsets = [0, 256], sizes = [4, 128], strides = [1, 1]} : vector<4x512xf32> to vector<4x128xf32>
    %311 = math.tanh %310 : vector<4x128xf32>
    %312 = vector.extract_strided_slice %297 {offsets = [0, 384], sizes = [4, 128], strides = [1, 1]} : vector<4x512xf32> to vector<4x128xf32>
    %313 = arith.negf %312 : vector<4x128xf32>
    %314 = math.exp %313 : vector<4x128xf32>
    %cst_88 = arith.constant 1.000000e+00 : f32
    %315 = vector.broadcast %cst_88 : f32 to vector<4x128xf32>
    %316 = arith.addf %315, %314 : vector<4x128xf32>
    %317 = arith.divf %315, %316 : vector<4x128xf32>
    %318 = arith.mulf %309, %280 : vector<4x128xf32>
    %319 = arith.mulf %303, %311 : vector<4x128xf32>
    %320 = arith.addf %318, %319 : vector<4x128xf32>
    %321 = math.tanh %320 : vector<4x128xf32>
    %322 = arith.mulf %317, %321 : vector<4x128xf32>
    %c0_89 = arith.constant 0 : index
    %323 = arith.index_cast %c7_i32 : i32 to index
    %c0_90 = arith.constant 0 : index
    %324 = vector.load %arg5[%c0_89, %323, %c0_90] : memref<4x8x1xf32, #tpu.memory_space<vmem>>, vector<4x1x1xf32>
    %325 = vector.shape_cast %324 : vector<4x1x1xf32> to vector<4x1xf32>
    %326 = vector.broadcast %325 : vector<4x1xf32> to vector<4x128xf32>
    %327 = arith.mulf %322, %326 : vector<4x128xf32>
    %328 = arith.truncf %327 : vector<4x128xf32> to vector<4x128xbf16>
    %329 = vector.shape_cast %328 : vector<4x128xbf16> to vector<4x1x128xbf16>
    %c0_91 = arith.constant 0 : index
    %330 = arith.index_cast %c7_i32 : i32 to index
    %c0_92 = arith.constant 0 : index
    %331 = vector.load %arg6[%c0_91, %330, %c0_92] : memref<4x8x128xbf16, #tpu.memory_space<vmem>>, vector<4x1x128xbf16>
    tpu.vector_store %arg6[%c0_91, %330, %c0_92], %329 {strides = array<i32>} : memref<4x8x128xbf16, #tpu.memory_space<vmem>>, vector<4x1x128xbf16>,
    %c8_i32 = arith.constant 8 : i32
    return
  }
  func.func @transform_0(%arg0: i32) -> (i32, i32, i32) {
    %c0_i32 = arith.constant 0 : i32
    %c0_i32_0 = arith.constant 0 : i32
    %c0_i32_1 = arith.constant 0 : i32
    return %arg0, %c0_i32, %c0_i32_0 : i32, i32, i32
  }
  func.func @transform_1(%arg0: i32) -> (i32, i32) {
    %c0_i32 = arith.constant 0 : i32
    %c0_i32_0 = arith.constant 0 : i32
    %c0_i32_1 = arith.constant 0 : i32
    return %c0_i32, %c0_i32_0 : i32, i32
  }
  func.func @transform_2(%arg0: i32) -> (i32, i32) {
    %c0_i32 = arith.constant 0 : i32
    %c0_i32_0 = arith.constant 0 : i32
    %c0_i32_1 = arith.constant 0 : i32
    return %c0_i32, %c0_i32_0 : i32, i32
  }
  func.func @transform_3(%arg0: i32) -> (i32, i32) {
    %c0_i32 = arith.constant 0 : i32
    %c0_i32_0 = arith.constant 0 : i32
    %c0_i32_1 = arith.constant 0 : i32
    return %c0_i32, %c0_i32_0 : i32, i32
  }
  func.func @transform_4(%arg0: i32) -> (i32, i32, i32) {
    %c0_i32 = arith.constant 0 : i32
    %c0_i32_0 = arith.constant 0 : i32
    %c0_i32_1 = arith.constant 0 : i32
    return %arg0, %c0_i32, %c0_i32_0 : i32, i32, i32
  }
  func.func @transform_5(%arg0: i32) -> (i32, i32, i32) {
    %c0_i32 = arith.constant 0 : i32
    %c0_i32_0 = arith.constant 0 : i32
    %c0_i32_1 = arith.constant 0 : i32
    return %arg0, %c0_i32, %c0_i32_0 : i32, i32, i32
  }
}

module attributes {stable_mosaic.version = 11 : i64} {
  func.func @_pool_clf_kernel(%arg0: i32, %arg1: memref<2x8x128xbf16, #tpu.memory_space<vmem>>, %arg2: memref<2x8x1xf32, #tpu.memory_space<vmem>>, %arg3: memref<2x8x128xbf16, #tpu.memory_space<vmem>>, %arg4: memref<2x8x1xf32, #tpu.memory_space<vmem>>, %arg5: memref<128x128xbf16, #tpu.memory_space<vmem>>, %arg6: memref<128x128xbf16, #tpu.memory_space<vmem>>, %arg7: memref<128x128xbf16, #tpu.memory_space<vmem>>, %arg8: memref<128x128xbf16, #tpu.memory_space<vmem>>, %arg9: memref<1x128xf32, #tpu.memory_space<vmem>>, %arg10: memref<128x128xbf16, #tpu.memory_space<vmem>>, %arg11: memref<1x128xf32, #tpu.memory_space<vmem>>, %arg12: memref<128x3xbf16, #tpu.memory_space<vmem>>, %arg13: memref<1x3xf32, #tpu.memory_space<vmem>>, %arg14: memref<2x3xf32, #tpu.memory_space<vmem>>) attributes {dimension_semantics = [#tpu.dimension_semantics<parallel>], iteration_bounds = array<i64: 1>, scalar_prefetch = 0 : i64, scratch_operands = 0 : i64, tpu.core_type = #tpu.core_type<tc>, window_params = [{transform_indices = @transform_0, window_bounds = array<i64: 2, 8, 128>}, {transform_indices = @transform_1, window_bounds = array<i64: 2, 8, 1>}, {transform_indices = @transform_2, window_bounds = array<i64: 2, 8, 128>}, {transform_indices = @transform_3, window_bounds = array<i64: 2, 8, 1>}, {pipeline_mode = #tpu.pipeline_mode<synchronous>, transform_indices = @transform_4, window_bounds = array<i64: 128, 128>}, {pipeline_mode = #tpu.pipeline_mode<synchronous>, transform_indices = @transform_5, window_bounds = array<i64: 128, 128>}, {pipeline_mode = #tpu.pipeline_mode<synchronous>, transform_indices = @transform_6, window_bounds = array<i64: 128, 128>}, {pipeline_mode = #tpu.pipeline_mode<synchronous>, transform_indices = @transform_7, window_bounds = array<i64: 128, 128>}, {pipeline_mode = #tpu.pipeline_mode<synchronous>, transform_indices = @transform_8, window_bounds = array<i64: 1, 128>}, {pipeline_mode = #tpu.pipeline_mode<synchronous>, transform_indices = @transform_9, window_bounds = array<i64: 128, 128>}, {pipeline_mode = #tpu.pipeline_mode<synchronous>, transform_indices = @transform_10, window_bounds = array<i64: 1, 128>}, {pipeline_mode = #tpu.pipeline_mode<synchronous>, transform_indices = @transform_11, window_bounds = array<i64: 128, 3>}, {pipeline_mode = #tpu.pipeline_mode<synchronous>, transform_indices = @transform_12, window_bounds = array<i64: 1, 3>}, {transform_indices = @transform_13, window_bounds = array<i64: 2, 3>}]} {
    %c0 = arith.constant 0 : index
    %c0_0 = arith.constant 0 : index
    %c0_1 = arith.constant 0 : index
    %0 = vector.load %arg1[%c0, %c0_0, %c0_1] : memref<2x8x128xbf16, #tpu.memory_space<vmem>>, vector<2x8x128xbf16>
    %1 = arith.extf %0 : vector<2x8x128xbf16> to vector<2x8x128xf32>
    %c0_2 = arith.constant 0 : index
    %c0_3 = arith.constant 0 : index
    %c0_4 = arith.constant 0 : index
    %2 = vector.load %arg2[%c0_2, %c0_3, %c0_4] : memref<2x8x1xf32, #tpu.memory_space<vmem>>, vector<2x8x1xf32>
    %3 = vector.broadcast %2 : vector<2x8x1xf32> to vector<2x8x128xf32>
    %4 = arith.mulf %1, %3 : vector<2x8x128xf32>
    %cst = arith.constant dense<0.000000e+00> : vector<2x1xf32>
    %5 = vector.multi_reduction <add>, %2, %cst [1] : vector<2x8x1xf32> to vector<2x1xf32>
    %cst_5 = arith.constant 9.99999982E-14 : f32
    %6 = vector.broadcast %cst_5 : f32 to vector<2x1xf32>
    %7 = arith.maximumf %5, %6 : vector<2x1xf32>
    %8 = tpu.reciprocal %7 {approx = true} : vector<2x1xf32> -> vector<2x1xf32>
    %cst_6 = arith.constant dense<0.000000e+00> : vector<2x128xf32>
    %9 = vector.multi_reduction <add>, %4, %cst_6 [1] : vector<2x8x128xf32> to vector<2x128xf32>
    %10 = vector.broadcast %8 : vector<2x1xf32> to vector<2x128xf32>
    %11 = arith.mulf %9, %10 : vector<2x128xf32>
    %cst_7 = arith.constant 1.000000e+00 : f32
    %12 = vector.broadcast %cst_7 : f32 to vector<2x8x1xf32>
    %13 = arith.subf %12, %2 : vector<2x8x1xf32>
    %cst_8 = arith.constant -1.000000e+07 : f32
    %14 = vector.broadcast %cst_8 : f32 to vector<2x8x1xf32>
    %15 = arith.mulf %14, %13 : vector<2x8x1xf32>
    %16 = vector.broadcast %15 : vector<2x8x1xf32> to vector<2x8x128xf32>
    %17 = arith.addf %4, %16 : vector<2x8x128xf32>
    %cst_9 = arith.constant dense<0xFF800000> : vector<2x128xf32>
    %18 = vector.multi_reduction <maximumf>, %17, %cst_9 [1] : vector<2x8x128xf32> to vector<2x128xf32>
    %19 = arith.truncf %11 : vector<2x128xf32> to vector<2x128xbf16>
    %20 = arith.truncf %18 : vector<2x128xf32> to vector<2x128xbf16>
    %c0_10 = arith.constant 0 : index
    %c0_11 = arith.constant 0 : index
    %c0_12 = arith.constant 0 : index
    %21 = vector.load %arg3[%c0_10, %c0_11, %c0_12] : memref<2x8x128xbf16, #tpu.memory_space<vmem>>, vector<2x8x128xbf16>
    %22 = arith.extf %21 : vector<2x8x128xbf16> to vector<2x8x128xf32>
    %c0_13 = arith.constant 0 : index
    %c0_14 = arith.constant 0 : index
    %c0_15 = arith.constant 0 : index
    %23 = vector.load %arg4[%c0_13, %c0_14, %c0_15] : memref<2x8x1xf32, #tpu.memory_space<vmem>>, vector<2x8x1xf32>
    %24 = vector.broadcast %23 : vector<2x8x1xf32> to vector<2x8x128xf32>
    %25 = arith.mulf %22, %24 : vector<2x8x128xf32>
    %cst_16 = arith.constant dense<0.000000e+00> : vector<2x1xf32>
    %26 = vector.multi_reduction <add>, %23, %cst_16 [1] : vector<2x8x1xf32> to vector<2x1xf32>
    %cst_17 = arith.constant 9.99999982E-14 : f32
    %27 = vector.broadcast %cst_17 : f32 to vector<2x1xf32>
    %28 = arith.maximumf %26, %27 : vector<2x1xf32>
    %29 = tpu.reciprocal %28 {approx = true} : vector<2x1xf32> -> vector<2x1xf32>
    %cst_18 = arith.constant dense<0.000000e+00> : vector<2x128xf32>
    %30 = vector.multi_reduction <add>, %25, %cst_18 [1] : vector<2x8x128xf32> to vector<2x128xf32>
    %31 = vector.broadcast %29 : vector<2x1xf32> to vector<2x128xf32>
    %32 = arith.mulf %30, %31 : vector<2x128xf32>
    %cst_19 = arith.constant 1.000000e+00 : f32
    %33 = vector.broadcast %cst_19 : f32 to vector<2x8x1xf32>
    %34 = arith.subf %33, %23 : vector<2x8x1xf32>
    %cst_20 = arith.constant -1.000000e+07 : f32
    %35 = vector.broadcast %cst_20 : f32 to vector<2x8x1xf32>
    %36 = arith.mulf %35, %34 : vector<2x8x1xf32>
    %37 = vector.broadcast %36 : vector<2x8x1xf32> to vector<2x8x128xf32>
    %38 = arith.addf %25, %37 : vector<2x8x128xf32>
    %cst_21 = arith.constant dense<0xFF800000> : vector<2x128xf32>
    %39 = vector.multi_reduction <maximumf>, %38, %cst_21 [1] : vector<2x8x128xf32> to vector<2x128xf32>
    %40 = arith.truncf %32 : vector<2x128xf32> to vector<2x128xbf16>
    %41 = arith.truncf %39 : vector<2x128xf32> to vector<2x128xbf16>
    %c0_22 = arith.constant 0 : index
    %c0_23 = arith.constant 0 : index
    %42 = vector.load %arg5[%c0_22, %c0_23] : memref<128x128xbf16, #tpu.memory_space<vmem>>, vector<128x128xbf16>
    %cst_24 = arith.constant dense<0.000000e+00> : vector<2x128xf32>
    %43 = tpu.matmul %19, %42, %cst_24 {dimension_numbers = #tpu.dot_dimension_numbers<[1], [0], [0], [1], [0, 0, 1, 1], [], []>} : vector<2x128xbf16>, vector<128x128xbf16>, vector<2x128xf32> -> vector<2x128xf32>
    %c0_25 = arith.constant 0 : index
    %c0_26 = arith.constant 0 : index
    %44 = vector.load %arg6[%c0_25, %c0_26] : memref<128x128xbf16, #tpu.memory_space<vmem>>, vector<128x128xbf16>
    %cst_27 = arith.constant dense<0.000000e+00> : vector<2x128xf32>
    %45 = tpu.matmul %20, %44, %cst_27 {dimension_numbers = #tpu.dot_dimension_numbers<[1], [0], [0], [1], [0, 0, 1, 1], [], []>} : vector<2x128xbf16>, vector<128x128xbf16>, vector<2x128xf32> -> vector<2x128xf32>
    %46 = arith.addf %43, %45 : vector<2x128xf32>
    %c0_28 = arith.constant 0 : index
    %c0_29 = arith.constant 0 : index
    %47 = vector.load %arg7[%c0_28, %c0_29] : memref<128x128xbf16, #tpu.memory_space<vmem>>, vector<128x128xbf16>
    %cst_30 = arith.constant dense<0.000000e+00> : vector<2x128xf32>
    %48 = tpu.matmul %40, %47, %cst_30 {dimension_numbers = #tpu.dot_dimension_numbers<[1], [0], [0], [1], [0, 0, 1, 1], [], []>} : vector<2x128xbf16>, vector<128x128xbf16>, vector<2x128xf32> -> vector<2x128xf32>
    %49 = arith.addf %46, %48 : vector<2x128xf32>
    %c0_31 = arith.constant 0 : index
    %c0_32 = arith.constant 0 : index
    %50 = vector.load %arg8[%c0_31, %c0_32] : memref<128x128xbf16, #tpu.memory_space<vmem>>, vector<128x128xbf16>
    %cst_33 = arith.constant dense<0.000000e+00> : vector<2x128xf32>
    %51 = tpu.matmul %41, %50, %cst_33 {dimension_numbers = #tpu.dot_dimension_numbers<[1], [0], [0], [1], [0, 0, 1, 1], [], []>} : vector<2x128xbf16>, vector<128x128xbf16>, vector<2x128xf32> -> vector<2x128xf32>
    %52 = arith.addf %49, %51 : vector<2x128xf32>
    %c0_34 = arith.constant 0 : index
    %c0_35 = arith.constant 0 : index
    %53 = vector.load %arg9[%c0_34, %c0_35] : memref<1x128xf32, #tpu.memory_space<vmem>>, vector<1x128xf32>
    %54 = vector.broadcast %53 : vector<1x128xf32> to vector<2x128xf32>
    %55 = arith.addf %52, %54 : vector<2x128xf32>
    %cst_36 = arith.constant 0.000000e+00 : f32
    %56 = vector.broadcast %cst_36 : f32 to vector<2x128xf32>
    %57 = arith.maximumf %55, %56 : vector<2x128xf32>
    %58 = arith.truncf %57 : vector<2x128xf32> to vector<2x128xbf16>
    %c0_37 = arith.constant 0 : index
    %c0_38 = arith.constant 0 : index
    %59 = vector.load %arg10[%c0_37, %c0_38] : memref<128x128xbf16, #tpu.memory_space<vmem>>, vector<128x128xbf16>
    %cst_39 = arith.constant dense<0.000000e+00> : vector<2x128xf32>
    %60 = tpu.matmul %58, %59, %cst_39 {dimension_numbers = #tpu.dot_dimension_numbers<[1], [0], [0], [1], [0, 0, 1, 1], [], []>} : vector<2x128xbf16>, vector<128x128xbf16>, vector<2x128xf32> -> vector<2x128xf32>
    %c0_40 = arith.constant 0 : index
    %c0_41 = arith.constant 0 : index
    %61 = vector.load %arg11[%c0_40, %c0_41] : memref<1x128xf32, #tpu.memory_space<vmem>>, vector<1x128xf32>
    %62 = vector.broadcast %61 : vector<1x128xf32> to vector<2x128xf32>
    %63 = arith.addf %60, %62 : vector<2x128xf32>
    %cst_42 = arith.constant 0.000000e+00 : f32
    %64 = vector.broadcast %cst_42 : f32 to vector<2x128xf32>
    %65 = arith.maximumf %63, %64 : vector<2x128xf32>
    %66 = arith.truncf %65 : vector<2x128xf32> to vector<2x128xbf16>
    %c0_43 = arith.constant 0 : index
    %c0_44 = arith.constant 0 : index
    %67 = vector.load %arg12[%c0_43, %c0_44] : memref<128x3xbf16, #tpu.memory_space<vmem>>, vector<128x3xbf16>
    %cst_45 = arith.constant dense<0.000000e+00> : vector<2x3xf32>
    %68 = tpu.matmul %66, %67, %cst_45 {dimension_numbers = #tpu.dot_dimension_numbers<[1], [0], [0], [1], [0, 0, 1, 1], [], []>} : vector<2x128xbf16>, vector<128x3xbf16>, vector<2x3xf32> -> vector<2x3xf32>
    %c0_46 = arith.constant 0 : index
    %c0_47 = arith.constant 0 : index
    %69 = vector.load %arg13[%c0_46, %c0_47] : memref<1x3xf32, #tpu.memory_space<vmem>>, vector<1x3xf32>
    %70 = vector.broadcast %69 : vector<1x3xf32> to vector<2x3xf32>
    %71 = arith.addf %68, %70 : vector<2x3xf32>
    %c0_48 = arith.constant 0 : index
    %c0_49 = arith.constant 0 : index
    %72 = vector.load %arg14[%c0_48, %c0_49] : memref<2x3xf32, #tpu.memory_space<vmem>>, vector<2x3xf32>
    tpu.vector_store %arg14[%c0_48, %c0_49], %71 {strides = array<i32>} : memref<2x3xf32, #tpu.memory_space<vmem>>, vector<2x3xf32>,
    return
  }
  func.func @transform_0(%arg0: i32) -> (i32, i32, i32) {
    %c0_i32 = arith.constant 0 : i32
    %c0_i32_0 = arith.constant 0 : i32
    %c0_i32_1 = arith.constant 0 : i32
    return %arg0, %c0_i32, %c0_i32_0 : i32, i32, i32
  }
  func.func @transform_1(%arg0: i32) -> (i32, i32, i32) {
    %c0_i32 = arith.constant 0 : i32
    %c0_i32_0 = arith.constant 0 : i32
    %c0_i32_1 = arith.constant 0 : i32
    return %arg0, %c0_i32, %c0_i32_0 : i32, i32, i32
  }
  func.func @transform_2(%arg0: i32) -> (i32, i32, i32) {
    %c0_i32 = arith.constant 0 : i32
    %c0_i32_0 = arith.constant 0 : i32
    %c0_i32_1 = arith.constant 0 : i32
    return %arg0, %c0_i32, %c0_i32_0 : i32, i32, i32
  }
  func.func @transform_3(%arg0: i32) -> (i32, i32, i32) {
    %c0_i32 = arith.constant 0 : i32
    %c0_i32_0 = arith.constant 0 : i32
    %c0_i32_1 = arith.constant 0 : i32
    return %arg0, %c0_i32, %c0_i32_0 : i32, i32, i32
  }
  func.func @transform_4(%arg0: i32) -> (i32, i32) {
    %c0_i32 = arith.constant 0 : i32
    %c0_i32_0 = arith.constant 0 : i32
    %c0_i32_1 = arith.constant 0 : i32
    return %c0_i32, %c0_i32_0 : i32, i32
  }
  func.func @transform_5(%arg0: i32) -> (i32, i32) {
    %c0_i32 = arith.constant 0 : i32
    %c0_i32_0 = arith.constant 0 : i32
    %c0_i32_1 = arith.constant 0 : i32
    return %c0_i32, %c0_i32_0 : i32, i32
  }
  func.func @transform_6(%arg0: i32) -> (i32, i32) {
    %c0_i32 = arith.constant 0 : i32
    %c0_i32_0 = arith.constant 0 : i32
    %c0_i32_1 = arith.constant 0 : i32
    return %c0_i32, %c0_i32_0 : i32, i32
  }
  func.func @transform_7(%arg0: i32) -> (i32, i32) {
    %c0_i32 = arith.constant 0 : i32
    %c0_i32_0 = arith.constant 0 : i32
    %c0_i32_1 = arith.constant 0 : i32
    return %c0_i32, %c0_i32_0 : i32, i32
  }
  func.func @transform_8(%arg0: i32) -> (i32, i32) {
    %c0_i32 = arith.constant 0 : i32
    %c0_i32_0 = arith.constant 0 : i32
    %c0_i32_1 = arith.constant 0 : i32
    return %c0_i32, %c0_i32_0 : i32, i32
  }
  func.func @transform_9(%arg0: i32) -> (i32, i32) {
    %c0_i32 = arith.constant 0 : i32
    %c0_i32_0 = arith.constant 0 : i32
    %c0_i32_1 = arith.constant 0 : i32
    return %c0_i32, %c0_i32_0 : i32, i32
  }
  func.func @transform_10(%arg0: i32) -> (i32, i32) {
    %c0_i32 = arith.constant 0 : i32
    %c0_i32_0 = arith.constant 0 : i32
    %c0_i32_1 = arith.constant 0 : i32
    return %c0_i32, %c0_i32_0 : i32, i32
  }
  func.func @transform_11(%arg0: i32) -> (i32, i32) {
    %c0_i32 = arith.constant 0 : i32
    %c0_i32_0 = arith.constant 0 : i32
    %c0_i32_1 = arith.constant 0 : i32
    return %c0_i32, %c0_i32_0 : i32, i32
  }
  func.func @transform_12(%arg0: i32) -> (i32, i32) {
    %c0_i32 = arith.constant 0 : i32
    %c0_i32_0 = arith.constant 0 : i32
    %c0_i32_1 = arith.constant 0 : i32
    return %c0_i32, %c0_i32_0 : i32, i32
  }
  func.func @transform_13(%arg0: i32) -> (i32, i32) {
    %c0_i32 = arith.constant 0 : i32
    %c0_i32_0 = arith.constant 0 : i32
    return %arg0, %c0_i32 : i32, i32
  }
}

</mosaic_0001>

<llo_original>
// kernel: esim_forward.6
$region0: #{esim_forward.6}
  #allocation0 [shape = 'u32[]', space=smem, size = 0x4, offset = 0x4, fixed_abs, tag = 'smem constant byte address 0x4 - core index']
  #allocation1 [shape = 'u32[72,128]{1,0:T(1,128)}', space=vmem, size = 0x9000, scoped, tag = 'internal scratch']
  %s0 = inlined_call_operand.vmem [shape: bf16[2,8,128], index: 0, kind: input, shape index: {}]
  %s1 = inlined_call_operand.vmem [shape: bf16[2,8,128], index: 1, kind: input, shape index: {}]
  %s2 = inlined_call_operand.vmem [shape: f32[2,8], index: 2, kind: input, shape index: {}]
  %s3 = inlined_call_operand.vmem [shape: f32[2,8], index: 3, kind: input, shape index: {}]
  %s4 = inlined_call_operand.vmem [shape: bf16[2,8,128], index: 4, kind: output, shape index: {0}]
  %s5 = inlined_call_operand.vmem [shape: bf16[2,8,128], index: 5, kind: output, shape index: {1}]
  %6 = xla_tuple %s4, %s5
  %s7 = sld [smem:[#allocation0]]
  $region34: #{esim_forward.6} parent=0
    _
  %s9 = ssub.s32 1, %s7
  %s10 = scalar_select 0, %s9, %s7
  // Predicated region
  $region2: #{esim_forward.6} parent=0 // pred_check
    _
  $region3: #{esim_forward.6} parent=0 // pred_check_branch
    %12 = sbr.rel (0) target = $region5
  $region4: #{esim_forward.6} parent=0 // pred_region
    _
  $region5: #{esim_forward.6} parent=0 // pred_fallthru
    _
  // Predicated region
  $region6: #{esim_forward.6} parent=0 // pred_check
    _
  $region7: #{esim_forward.6} parent=0 // pred_check_branch
    %14 = sbr.rel (0) target = $region9
  $region8: #{esim_forward.6} parent=0 // pred_region
    _
  $region9: #{esim_forward.6} parent=0 // pred_fallthru
    _
  // Predicated region
  $region10: #{esim_forward.6} parent=0 // pred_check
    _
  $region11: #{esim_forward.6} parent=0 // pred_check_branch
    %16 = sbr.rel (0) target = $region13
  $region12: #{esim_forward.6} parent=0 // pred_region
    _
  $region13: #{esim_forward.6} parent=0 // pred_fallthru
    _
  // Predicated region
  $region14: #{esim_forward.6} parent=0 // pred_check
    _
  $region15: #{esim_forward.6} parent=0 // pred_check_branch
    %18 = sbr.rel (0) target = $region17
  $region16: #{esim_forward.6} parent=0 // pred_region
    _
  $region17: #{esim_forward.6} parent=0 // pred_fallthru
    _
  %v20 = vld [vmem:[%s0] sm:$0xf]
  %v21 = vld [vmem:[%s0 + $0x4] sm:$0xf]
  %v22 = vld [vmem:[%s1] sm:$0xf]
  %v23 = vld [vmem:[%s1 + $0x4] sm:$0xf]
  %v24 = vld [vmem:[%s2] sm:$0x3]
  %v25 = vld [vmem:[%s3] sm:$0x3]
  %26 = vmatpush.bf16.xpose.msra.mxu0 0
  %27 = vmatpush.bf16.xpose.msra.mxu0 0
  %28 = vmatpush.bf16.xpose.msra.mxu0 0
  %29 = vmatpush.bf16.xpose.msra.mxu0 0
  %30 = vmatpush.bf16.xpose.msra.mxu0 0
  %31 = vmatpush.bf16.xpose.msra.mxu0 0
  %32 = vmatpush.bf16.xpose.msra.mxu0 0
  %33 = vmatpush.bf16.xpose.msra.mxu0 %v22
  %34 = vmatmul.bf16.gmra.mxu0 %v20
  %v35 = vpop.f32.mrf.mxu0
  %v36 = vadd.f32 0.0, %v35
  %v37 = vpop.f32.mrf.mxu0
  %38 = vdwg.mxu0
  %39 = vmatpush.bf16.xpose.msra.mxu0 0
  %40 = vmatpush.bf16.xpose.msra.mxu0 0
  %41 = vmatpush.bf16.xpose.msra.mxu0 0
  %42 = vmatpush.bf16.xpose.msra.mxu0 0
  %43 = vmatpush.bf16.xpose.msra.mxu0 0
  %44 = vmatpush.bf16.xpose.msra.mxu0 0
  %45 = vmatpush.bf16.xpose.msra.mxu0 0
  %46 = vmatpush.bf16.xpose.msra.mxu0 %v23
  %47 = vmatmul.bf16.gmra.mxu0 %v21
  %v48 = vpop.f32.mrf.mxu0
  %v49 = vadd.f32 0.0, %v48
  %v50 = vpop.f32.mrf.mxu0
  %51 = vdwg.mxu0
  %52 = vmatpush.bf16.xpose.msra.mxu0 0
  %53 = vmatpush.bf16.xpose.msra.mxu0 0
  %54 = vmatpush.bf16.xpose.msra.mxu0 0
  %55 = vmatpush.bf16.xpose.msra.mxu0 0
  %56 = vmatpush.bf16.xpose.msra.mxu0 0
  %57 = vmatpush.bf16.xpose.msra.mxu0 0
  %58 = vmatpush.bf16.xpose.msra.mxu0 0
  %59 = vmatpush.bf16.xpose.msra.mxu0 %v20
  %60 = vmatmul.bf16.gmra.mxu0 %v22
  %v61 = vpop.f32.mrf.mxu0
  %v62 = vadd.f32 0.0, %v61
  %v63 = vpop.f32.mrf.mxu0
  %64 = vdwg.mxu0
  %65 = vmatpush.bf16.xpose.msra.mxu0 0
  %66 = vmatpush.bf16.xpose.msra.mxu0 0
  %67 = vmatpush.bf16.xpose.msra.mxu0 0
  %68 = vmatpush.bf16.xpose.msra.mxu0 0
  %69 = vmatpush.bf16.xpose.msra.mxu0 0
  %70 = vmatpush.bf16.xpose.msra.mxu0 0
  %71 = vmatpush.bf16.xpose.msra.mxu0 0
  %72 = vmatpush.bf16.xpose.msra.mxu0 %v21
  %73 = vmatmul.bf16.gmra.mxu0 %v23
  %v74 = vpop.f32.mrf.mxu0
  %v75 = vadd.f32 0.0, %v74
  %v76 = vpop.f32.mrf.mxu0
  %77 = vdwg.mxu0
  %v79 = vrot.slane %v25, 1
  %v80 = vperm.slane %v25, 0
  %v81 = vperm.slane %v79, 0
  %v84 = vmul.f32 %v36, %v80
  %v85 = vmul.f32 %v49, %v81
  %vm86 = vcmask 64512
  %v87 = vsel %vm86, %v84, -inf
  %88 = vmax.xlane.f32.xlu0 %v87
  %v89 = vpop.xlane.xlu0 %88
  %v90 = vsel %vm86, %v85, -inf
  %91 = vmax.xlane.f32.xlu0 %v90
  %v92 = vpop.xlane.xlu0 %91
  %v93 = vsub.f32 %v84, %v89
  %v94 = vsub.f32 %v85, %v92
  %v95 = vmul.f32 %v93, 1.442695
  %v96 = vpow.pop %v95
  %v97 = vmul.f32 %v94, 1.442695
  %v98 = vpow.pop %v97
  %v99 = vsel %vm86, %v96, 0.0
  %100 = vadd.xlane.f32.xlu0 %v99
  %v101 = vpop.xlane.xlu0 %100
  %v102 = vsel %vm86, %v98, 0.0
  %103 = vadd.xlane.f32.xlu0 %v102
  %v104 = vpop.xlane.xlu0 %103
  %v105 = vrcp.pop %v101
  %v106 = vrcp.pop %v104
  %v107 = vmul.f32 %v96, %v105
  %v108 = vmul.f32 %v98, %v106
  %v109 = vmul.f32 %v107, %v80
  %v110 = vmul.f32 %v108, %v81
  %v111 = vsel %vm86, %v109, 0.0
  %112 = vadd.xlane.f32.xlu0 %v111
  %v113 = vpop.xlane.xlu0 %112
  %v114 = vsel %vm86, %v110, 0.0
  %115 = vadd.xlane.f32.xlu0 %v114
  %v116 = vpop.xlane.xlu0 %115
  %v117 = vadd.f32 %v113, 1e-13
  %v118 = vadd.f32 %v116, 1e-13
  %v119 = vrcp.pop %v117
  %v120 = vrcp.pop %v118
  %v121 = vmul.f32 %v109, %v119
  %v122 = vmul.f32 %v110, %v120
  %v124 = vrot.slane %v24, 1
  %v125 = vperm.slane %v24, 0
  %v126 = vperm.slane %v124, 0
  %v129 = vmul.f32 %v62, %v125
  %v130 = vmul.f32 %v75, %v126
  %v131 = vsel %vm86, %v129, -inf
  %132 = vmax.xlane.f32.xlu0 %v131
  %v133 = vpop.xlane.xlu0 %132
  %v134 = vsel %vm86, %v130, -inf
  %135 = vmax.xlane.f32.xlu0 %v134
  %v136 = vpop.xlane.xlu0 %135
  %v137 = vsub.f32 %v129, %v133
  %v138 = vsub.f32 %v130, %v136
  %v139 = vmul.f32 %v137, 1.442695
  %v140 = vpow.pop %v139
  %v141 = vmul.f32 %v138, 1.442695
  %v142 = vpow.pop %v141
  %v143 = vsel %vm86, %v140, 0.0
  %144 = vadd.xlane.f32.xlu0 %v143
  %v145 = vpop.xlane.xlu0 %144
  %v146 = vsel %vm86, %v142, 0.0
  %147 = vadd.xlane.f32.xlu0 %v146
  %v148 = vpop.xlane.xlu0 %147
  %v149 = vrcp.pop %v145
  %v150 = vrcp.pop %v148
  %v151 = vmul.f32 %v140, %v149
  %v152 = vmul.f32 %v142, %v150
  %v153 = vmul.f32 %v151, %v125
  %v154 = vmul.f32 %v152, %v126
  %v155 = vsel %vm86, %v153, 0.0
  %156 = vadd.xlane.f32.xlu0 %v155
  %v157 = vpop.xlane.xlu0 %156
  %v158 = vsel %vm86, %v154, 0.0
  %159 = vadd.xlane.f32.xlu0 %v158
  %v160 = vpop.xlane.xlu0 %159
  %v161 = vadd.f32 %v157, 1e-13
  %v162 = vadd.f32 %v160, 1e-13
  %v163 = vrcp.pop %v161
  %v164 = vrcp.pop %v162
  %v165 = vmul.f32 %v153, %v163
  %v166 = vmul.f32 %v154, %v164
  %v167 = vpack.c.bf16 %v121, %v121
  %v168 = vpack.c.bf16 %v122, %v122
  %v170 = vsel %vm86, %v167, 0
  %vm172 = vcmask 1043456
  %v174 = vsel %vm172, %v22, 0
  %176 = vmatpush.bf16.msra.mxu0 0
  %177 = vmatpush.bf16.msra.mxu0 0
  %178 = vmatpush.bf16.msra.mxu0 0
  %179 = vmatpush.bf16.msra.mxu0 0
  %180 = vmatpush.bf16.msra.mxu0 0
  %181 = vmatpush.bf16.msra.mxu0 0
  %182 = vmatpush.bf16.msra.mxu0 0
  %183 = vmatpush.bf16.msra.mxu0 %v174
  %184 = vmatmul.bf16.gmra.mxu0 %v170
  %v185 = vpop.f32.mrf.mxu0
  %v186 = vadd.f32 0.0, %v185
  %v187 = vpop.f32.mrf.mxu0
  %188 = vdwg.mxu0
  %v190 = vsel %vm86, %v168, 0
  %v193 = vsel %vm172, %v23, 0
  %195 = vmatpush.bf16.msra.mxu0 0
  %196 = vmatpush.bf16.msra.mxu0 0
  %197 = vmatpush.bf16.msra.mxu0 0
  %198 = vmatpush.bf16.msra.mxu0 0
  %199 = vmatpush.bf16.msra.mxu0 0
  %200 = vmatpush.bf16.msra.mxu0 0
  %201 = vmatpush.bf16.msra.mxu0 0
  %202 = vmatpush.bf16.msra.mxu0 %v193
  %203 = vmatmul.bf16.gmra.mxu0 %v190
  %v204 = vpop.f32.mrf.mxu0
  %v205 = vadd.f32 0.0, %v204
  %v206 = vpop.f32.mrf.mxu0
  %207 = vdwg.mxu0
  %v208 = vpack.c.bf16 %v165, %v165
  %v209 = vpack.c.bf16 %v166, %v166
  %v211 = vsel %vm86, %v208, 0
  %v214 = vsel %vm172, %v20, 0
  %216 = vmatpush.bf16.msra.mxu0 0
  %217 = vmatpush.bf16.msra.mxu0 0
  %218 = vmatpush.bf16.msra.mxu0 0
  %219 = vmatpush.bf16.msra.mxu0 0
  %220 = vmatpush.bf16.msra.mxu0 0
  %221 = vmatpush.bf16.msra.mxu0 0
  %222 = vmatpush.bf16.msra.mxu0 0
  %223 = vmatpush.bf16.msra.mxu0 %v214
  %224 = vmatmul.bf16.gmra.mxu0 %v211
  %v225 = vpop.f32.mrf.mxu0
  %v226 = vadd.f32 0.0, %v225
  %v227 = vpop.f32.mrf.mxu0
  %228 = vdwg.mxu0
  %v230 = vsel %vm86, %v209, 0
  %v233 = vsel %vm172, %v21, 0
  %235 = vmatpush.bf16.msra.mxu0 0
  %236 = vmatpush.bf16.msra.mxu0 0
  %237 = vmatpush.bf16.msra.mxu0 0
  %238 = vmatpush.bf16.msra.mxu0 0
  %239 = vmatpush.bf16.msra.mxu0 0
  %240 = vmatpush.bf16.msra.mxu0 0
  %241 = vmatpush.bf16.msra.mxu0 0
  %242 = vmatpush.bf16.msra.mxu0 %v233
  %243 = vmatmul.bf16.gmra.mxu0 %v230
  %v244 = vpop.f32.mrf.mxu0
  %v245 = vadd.f32 0.0, %v244
  %v246 = vpop.f32.mrf.mxu0
  %247 = vdwg.mxu0
  %v248 = vperm.slane %v24, 0
  %v249 = vlaneseq
  %v250 = vshrl.u32 %v249, 7
  %252 = vset.pattern.permute.xlu0 %v250
  %253 = vperm.xlu0 %252, %v248
  %v254 = vpop.permute.xlu0 %253
  %v255 = vperm.slane %v24, 1
  %v256 = vlaneseq
  %v257 = vshrl.u32 %v256, 7
  %259 = vset.pattern.permute.xlu0 %v257
  %260 = vperm.xlu0 %259, %v255
  %v261 = vpop.permute.xlu0 %260
  %v262 = vmul.f32 %v186, %v254
  %v263 = vmul.f32 %v205, %v261
  %v264 = vpack.c.bf16 %v262, %v262
  %v265 = vpack.c.bf16 %v263, %v263
  %266 = vst [vmem:[%s4] sm:$0xf] %v264
  %267 = vst [vmem:[%s4 + $0x4] sm:$0xf] %v265
  %v268 = vperm.slane %v25, 0
  %v269 = vlaneseq
  %v270 = vshrl.u32 %v269, 7
  %272 = vset.pattern.permute.xlu0 %v270
  %273 = vperm.xlu0 %272, %v268
  %v274 = vpop.permute.xlu0 %273
  %v275 = vperm.slane %v25, 1
  %v276 = vlaneseq
  %v277 = vshrl.u32 %v276, 7
  %279 = vset.pattern.permute.xlu0 %v277
  %280 = vperm.xlu0 %279, %v275
  %v281 = vpop.permute.xlu0 %280
  %v282 = vmul.f32 %v226, %v274
  %v283 = vmul.f32 %v245, %v281
  %v284 = vpack.c.bf16 %v282, %v282
  %v285 = vpack.c.bf16 %v283, %v283
  %286 = vst [vmem:[%s5] sm:$0xf] %v284
  %287 = vst [vmem:[%s5 + $0x4] sm:$0xf] %v285
  // Predicated region
  $region18: #{esim_forward.6} parent=0 // pred_check
    _
  $region19: #{esim_forward.6} parent=0 // pred_check_branch
    %289 = sbr.rel (0) target = $region21
  $region20: #{esim_forward.6} parent=0 // pred_region
    _
  $region21: #{esim_forward.6} parent=0 // pred_fallthru
    _
  // Predicated region
  $region22: #{esim_forward.6} parent=0 // pred_check
    _
  $region23: #{esim_forward.6} parent=0 // pred_check_branch
    %291 = sbr.rel (0) target = $region25
  $region24: #{esim_forward.6} parent=0 // pred_region
    _
  $region25: #{esim_forward.6} parent=0 // pred_fallthru
    _
  // Predicated region
  $region26: #{esim_forward.6} parent=0 // pred_check
    _
  $region27: #{esim_forward.6} parent=0 // pred_check_branch
    %293 = sbr.rel (0) target = $region29
  $region28: #{esim_forward.6} parent=0 // pred_region
    _
  $region29: #{esim_forward.6} parent=0 // pred_fallthru
    _
  // Predicated region
  $region30: #{esim_forward.6} parent=0 // pred_check
    _
  $region31: #{esim_forward.6} parent=0 // pred_check_branch
    %295 = sbr.rel (0) target = $region33
  $region32: #{esim_forward.6} parent=0 // pred_region
    _
  $region33: #{esim_forward.6} parent=0 // pred_fallthru
    _

// kernel: esim_forward.7
$region0: #{esim_forward.7}
  #allocation0 [shape = 'u32[]', space=smem, size = 0x4, offset = 0x4, fixed_abs, tag = 'smem constant byte address 0x4 - core index']
  #allocation1 [shape = 'u32[72,128]{1,0:T(1,128)}', space=vmem, size = 0x9000, scoped, tag = 'internal scratch']
  %s0 = inlined_call_operand.vmem [shape: bf16[4,8,128], index: 0, kind: input, shape index: {}]
  %s1 = inlined_call_operand.vmem [shape: bf16[4,8,128], index: 1, kind: input, shape index: {}]
  %s2 = inlined_call_operand.vmem [shape: bf16[256,128], index: 2, kind: input, shape index: {}]
  %s3 = inlined_call_operand.vmem [shape: bf16[128,128], index: 3, kind: input, shape index: {}]
  %s4 = inlined_call_operand.vmem [shape: f32[1,128], index: 4, kind: input, shape index: {}]
  %s5 = inlined_call_operand.vmem [shape: bf16[4,8,128], index: 5, kind: output, shape index: {}]
  %s6 = sld [smem:[#allocation0]]
  $region30: #{esim_forward.7} parent=0
    _
  %s8 = ssub.s32 1, %s6
  %s9 = scalar_select 0, %s8, %s6
  // Predicated region
  $region2: #{esim_forward.7} parent=0 // pred_check
    _
  $region3: #{esim_forward.7} parent=0 // pred_check_branch
    %11 = sbr.rel (0) target = $region5
  $region4: #{esim_forward.7} parent=0 // pred_region
    _
  $region5: #{esim_forward.7} parent=0 // pred_fallthru
    _
  // Predicated region
  $region6: #{esim_forward.7} parent=0 // pred_check
    _
  $region7: #{esim_forward.7} parent=0 // pred_check_branch
    %13 = sbr.rel (0) target = $region9
  $region8: #{esim_forward.7} parent=0 // pred_region
    _
  $region9: #{esim_forward.7} parent=0 // pred_fallthru
    _
  // Predicated region
  $region10: #{esim_forward.7} parent=0 // pred_check
    _
  $region11: #{esim_forward.7} parent=0 // pred_check_branch
    %15 = sbr.rel (0) target = $region13
  $region12: #{esim_forward.7} parent=0 // pred_region
    _
  $region13: #{esim_forward.7} parent=0 // pred_fallthru
    _
  // Predicated region
  $region14: #{esim_forward.7} parent=0 // pred_check
    _
  $region15: #{esim_forward.7} parent=0 // pred_check_branch
    %17 = sbr.rel (0) target = $region17
  $region16: #{esim_forward.7} parent=0 // pred_region
    _
  $region17: #{esim_forward.7} parent=0 // pred_fallthru
    _
  // Predicated region
  $region18: #{esim_forward.7} parent=0 // pred_check
    _
  $region19: #{esim_forward.7} parent=0 // pred_check_branch
    %19 = sbr.rel (0) target = $region21
  $region20: #{esim_forward.7} parent=0 // pred_region
    _
  $region21: #{esim_forward.7} parent=0 // pred_fallthru
    _
  %v20 = vld [vmem:[%s0] sm:$0xf]
  %v21 = vld [vmem:[%s0 + $0x4] sm:$0xf]
  %v22 = vld [vmem:[%s0 + $0x8] sm:$0xf]
  %v23 = vld [vmem:[%s0 + $0xc] sm:$0xf]
  %v24 = vld [vmem:[%s1] sm:$0xf]
  %v25 = vld [vmem:[%s1 + $0x4] sm:$0xf]
  %v26 = vld [vmem:[%s1 + $0x8] sm:$0xf]
  %v27 = vld [vmem:[%s1 + $0xc] sm:$0xf]
  %v32 = vunpack.c.l.b16 %v20
  %v33 = vunpack.c.l.b16 %v21
  %v34 = vunpack.c.l.b16 %v22
  %v35 = vunpack.c.l.b16 %v23
  %v36 = vpack.c.b16 %v33, %v32
  %v37 = vpack.c.b16 %v35, %v34
  %v44 = vunpack.c.l.b16 %v24
  %v45 = vunpack.c.l.b16 %v25
  %v46 = vunpack.c.l.b16 %v26
  %v47 = vunpack.c.l.b16 %v27
  %v48 = vpack.c.b16 %v45, %v44
  %v49 = vpack.c.b16 %v47, %v46
  %v52 = vld [vmem:[%s2] sm:$0xf]
  %v53 = vld [vmem:[%s2 + $0x4] sm:$0xf]
  %v54 = vld [vmem:[%s2 + $0x8] sm:$0xf]
  %v55 = vld [vmem:[%s2 + $0xc] sm:$0xf]
  %v56 = vld [vmem:[%s2 + $0x10] sm:$0xf]
  %v57 = vld [vmem:[%s2 + $0x14] sm:$0xf]
  %v58 = vld [vmem:[%s2 + $0x18] sm:$0xf]
  %v59 = vld [vmem:[%s2 + $0x1c] sm:$0xf]
  %v60 = vld [vmem:[%s2 + $0x20] sm:$0xf]
  %v61 = vld [vmem:[%s2 + $0x24] sm:$0xf]
  %v62 = vld [vmem:[%s2 + $0x28] sm:$0xf]
  %v63 = vld [vmem:[%s2 + $0x2c] sm:$0xf]
  %v64 = vld [vmem:[%s2 + $0x30] sm:$0xf]
  %v65 = vld [vmem:[%s2 + $0x34] sm:$0xf]
  %v66 = vld [vmem:[%s2 + $0x38] sm:$0xf]
  %v67 = vld [vmem:[%s2 + $0x3c] sm:$0xf]
  %v68 = vld [vmem:[%s2 + $0x40] sm:$0xf]
  %v69 = vld [vmem:[%s2 + $0x44] sm:$0xf]
  %v70 = vld [vmem:[%s2 + $0x48] sm:$0xf]
  %v71 = vld [vmem:[%s2 + $0x4c] sm:$0xf]
  %v72 = vld [vmem:[%s2 + $0x50] sm:$0xf]
  %v73 = vld [vmem:[%s2 + $0x54] sm:$0xf]
  %v74 = vld [vmem:[%s2 + $0x58] sm:$0xf]
  %v75 = vld [vmem:[%s2 + $0x5c] sm:$0xf]
  %v76 = vld [vmem:[%s2 + $0x60] sm:$0xf]
  %v77 = vld [vmem:[%s2 + $0x64] sm:$0xf]
  %v78 = vld [vmem:[%s2 + $0x68] sm:$0xf]
  %v79 = vld [vmem:[%s2 + $0x6c] sm:$0xf]
  %v80 = vld [vmem:[%s2 + $0x70] sm:$0xf]
  %v81 = vld [vmem:[%s2 + $0x74] sm:$0xf]
  %v82 = vld [vmem:[%s2 + $0x78] sm:$0xf]
  %v83 = vld [vmem:[%s2 + $0x7c] sm:$0xf]
  %v84 = vunpack.c.l.bf16 %v20
  %v85 = vunpack.c.l.bf16 %v21
  %v86 = vunpack.c.l.bf16 %v22
  %v87 = vunpack.c.l.bf16 %v23
  %v88 = vunpack.c.l.bf16 %v24
  %v89 = vunpack.c.l.bf16 %v25
  %v90 = vunpack.c.l.bf16 %v26
  %v91 = vunpack.c.l.bf16 %v27
  %v92 = vmul.f32 %v84, %v88
  %v93 = vmul.f32 %v85, %v89
  %v94 = vmul.f32 %v86, %v90
  %v95 = vmul.f32 %v87, %v91
  %v96 = vpack.c.bf16 %v93, %v92
  %v97 = vpack.c.bf16 %v95, %v94
  %v98 = vld [vmem:[%s3] sm:$0xf]
  %v99 = vld [vmem:[%s3 + $0x4] sm:$0xf]
  %v100 = vld [vmem:[%s3 + $0x8] sm:$0xf]
  %v101 = vld [vmem:[%s3 + $0xc] sm:$0xf]
  %v102 = vld [vmem:[%s3 + $0x10] sm:$0xf]
  %v103 = vld [vmem:[%s3 + $0x14] sm:$0xf]
  %v104 = vld [vmem:[%s3 + $0x18] sm:$0xf]
  %v105 = vld [vmem:[%s3 + $0x1c] sm:$0xf]
  %v106 = vld [vmem:[%s3 + $0x20] sm:$0xf]
  %v107 = vld [vmem:[%s3 + $0x24] sm:$0xf]
  %v108 = vld [vmem:[%s3 + $0x28] sm:$0xf]
  %v109 = vld [vmem:[%s3 + $0x2c] sm:$0xf]
  %v110 = vld [vmem:[%s3 + $0x30] sm:$0xf]
  %v111 = vld [vmem:[%s3 + $0x34] sm:$0xf]
  %v112 = vld [vmem:[%s3 + $0x38] sm:$0xf]
  %v113 = vld [vmem:[%s3 + $0x3c] sm:$0xf]
  %v130 = vunpack.c.l.b16 %v98
  %v131 = vunpack.c.l.b16 %v99
  %v132 = vunpack.c.l.b16 %v100
  %v133 = vunpack.c.l.b16 %v101
  %v134 = vunpack.c.l.b16 %v102
  %v135 = vunpack.c.l.b16 %v103
  %v136 = vunpack.c.l.b16 %v104
  %v137 = vunpack.c.l.b16 %v105
  %v138 = vunpack.c.l.b16 %v106
  %v139 = vunpack.c.l.b16 %v107
  %v140 = vunpack.c.l.b16 %v108
  %v141 = vunpack.c.l.b16 %v109
  %v142 = vunpack.c.l.b16 %v110
  %v143 = vunpack.c.l.b16 %v111
  %v144 = vunpack.c.l.b16 %v112
  %v145 = vunpack.c.l.b16 %v113
  %v146 = vpack.c.b16 %v131, %v130
  %v147 = vpack.c.b16 %v133, %v132
  %v148 = vpack.c.b16 %v135, %v134
  %v149 = vpack.c.b16 %v137, %v136
  %v150 = vpack.c.b16 %v139, %v138
  %v151 = vpack.c.b16 %v141, %v140
  %v152 = vpack.c.b16 %v143, %v142
  %v153 = vpack.c.b16 %v145, %v144
  %162 = vmatpush.bf16.msra.mxu0 %v153
  %163 = vmatpush.bf16.msra.mxu0 %v152
  %164 = vmatpush.bf16.msra.mxu0 %v151
  %165 = vmatpush.bf16.msra.mxu0 %v150
  %166 = vmatpush.bf16.msra.mxu0 %v149
  %167 = vmatpush.bf16.msra.mxu0 %v148
  %168 = vmatpush.bf16.msra.mxu0 %v147
  %169 = vmatpush.bf16.msra.mxu0 %v146
  %170 = vmatmul.bf16.gmra.mxu0 %v96
  %v171 = vpop.f32.mrf.mxu0
  %v172 = vadd.f32 0.0, %v171
  %v173 = vpop.f32.mrf.mxu0
  %v174 = vadd.f32 0.0, %v173
  %175 = vmatmul.bf16.gmra.mxu0 %v97
  %v176 = vpop.f32.mrf.mxu0
  %v177 = vadd.f32 0.0, %v176
  %v178 = vpop.f32.mrf.mxu0
  %v179 = vadd.f32 0.0, %v178
  %180 = vdwg.mxu0
  %v213 = vunpack.c.l.b16 %v52
  %v214 = vunpack.c.l.b16 %v53
  %v215 = vunpack.c.l.b16 %v54
  %v216 = vunpack.c.l.b16 %v55
  %v217 = vunpack.c.l.b16 %v56
  %v218 = vunpack.c.l.b16 %v57
  %v219 = vunpack.c.l.b16 %v58
  %v220 = vunpack.c.l.b16 %v59
  %v221 = vunpack.c.l.b16 %v60
  %v222 = vunpack.c.l.b16 %v61
  %v223 = vunpack.c.l.b16 %v62
  %v224 = vunpack.c.l.b16 %v63
  %v225 = vunpack.c.l.b16 %v64
  %v226 = vunpack.c.l.b16 %v65
  %v227 = vunpack.c.l.b16 %v66
  %v228 = vunpack.c.l.b16 %v67
  %v229 = vunpack.c.l.b16 %v68
  %v230 = vunpack.c.l.b16 %v69
  %v231 = vunpack.c.l.b16 %v70
  %v232 = vunpack.c.l.b16 %v71
  %v233 = vunpack.c.l.b16 %v72
  %v234 = vunpack.c.l.b16 %v73
  %v235 = vunpack.c.l.b16 %v74
  %v236 = vunpack.c.l.b16 %v75
  %v237 = vunpack.c.l.b16 %v76
  %v238 = vunpack.c.l.b16 %v77
  %v239 = vunpack.c.l.b16 %v78
  %v240 = vunpack.c.l.b16 %v79
  %v241 = vunpack.c.l.b16 %v80
  %v242 = vunpack.c.l.b16 %v81
  %v243 = vunpack.c.l.b16 %v82
  %v244 = vunpack.c.l.b16 %v83
  %v245 = vpack.c.b16 %v214, %v213
  %v246 = vpack.c.b16 %v216, %v215
  %v247 = vpack.c.b16 %v218, %v217
  %v248 = vpack.c.b16 %v220, %v219
  %v249 = vpack.c.b16 %v222, %v221
  %v250 = vpack.c.b16 %v224, %v223
  %v251 = vpack.c.b16 %v226, %v225
  %v252 = vpack.c.b16 %v228, %v227
  %v253 = vpack.c.b16 %v230, %v229
  %v254 = vpack.c.b16 %v232, %v231
  %v255 = vpack.c.b16 %v234, %v233
  %v256 = vpack.c.b16 %v236, %v235
  %v257 = vpack.c.b16 %v238, %v237
  %v258 = vpack.c.b16 %v240, %v239
  %v259 = vpack.c.b16 %v242, %v241
  %v260 = vpack.c.b16 %v244, %v243
  %277 = vmatpush.bf16.msra.mxu0 %v252
  %278 = vmatpush.bf16.msra.mxu0 %v251
  %279 = vmatpush.bf16.msra.mxu0 %v250
  %280 = vmatpush.bf16.msra.mxu0 %v249
  %281 = vmatpush.bf16.msra.mxu0 %v248
  %282 = vmatpush.bf16.msra.mxu0 %v247
  %283 = vmatpush.bf16.msra.mxu0 %v246
  %284 = vmatpush.bf16.msra.mxu0 %v245
  %285 = vmatmul.bf16.gmra.mxu0 %v36
  %v286 = vpop.f32.mrf.mxu0
  %v287 = vadd.f32 %v172, %v286
  %v288 = vpop.f32.mrf.mxu0
  %v289 = vadd.f32 %v174, %v288
  %290 = vmatmul.bf16.gmra.mxu0 %v37
  %v291 = vpop.f32.mrf.mxu0
  %v292 = vadd.f32 %v177, %v291
  %v293 = vpop.f32.mrf.mxu0
  %v294 = vadd.f32 %v179, %v293
  %295 = vdwg.mxu0
  %296 = vmatpush.bf16.msra.mxu0 %v260
  %297 = vmatpush.bf16.msra.mxu0 %v259
  %298 = vmatpush.bf16.msra.mxu0 %v258
  %299 = vmatpush.bf16.msra.mxu0 %v257
  %300 = vmatpush.bf16.msra.mxu0 %v256
  %301 = vmatpush.bf16.msra.mxu0 %v255
  %302 = vmatpush.bf16.msra.mxu0 %v254
  %303 = vmatpush.bf16.msra.mxu0 %v253
  %304 = vmatmul.bf16.gmra.mxu0 %v48
  %v305 = vpop.f32.mrf.mxu0
  %v306 = vadd.f32 %v287, %v305
  %v307 = vpop.f32.mrf.mxu0
  %v308 = vadd.f32 %v289, %v307
  %309 = vmatmul.bf16.gmra.mxu0 %v49
  %v310 = vpop.f32.mrf.mxu0
  %v311 = vadd.f32 %v292, %v310
  %v312 = vpop.f32.mrf.mxu0
  %v313 = vadd.f32 %v294, %v312
  %314 = vdwg.mxu0
  %v315 = vld [vmem:[%s4] sm:$0x1]
  %v317 = vperm.slane %v315, 0
  %v319 = vadd.f32 %v306, %v317
  %v320 = vadd.f32 %v308, %v317
  %v321 = vadd.f32 %v311, %v317
  %v322 = vadd.f32 %v313, %v317
  %v323 = vmax.f32 %v319, 0.0
  %v324 = vmax.f32 %v320, 0.0
  %v325 = vmax.f32 %v321, 0.0
  %v326 = vmax.f32 %v322, 0.0
  %v327 = vpack.c.bf16 %v323, %v323
  %v328 = vpack.c.bf16 %v324, %v324
  %v329 = vpack.c.bf16 %v325, %v325
  %v330 = vpack.c.bf16 %v326, %v326
  %331 = vst [vmem:[%s5] sm:$0xf] %v327
  %332 = vst [vmem:[%s5 + $0x4] sm:$0xf] %v328
  %333 = vst [vmem:[%s5 + $0x8] sm:$0xf] %v329
  %334 = vst [vmem:[%s5 + $0xc] sm:$0xf] %v330
  // Predicated region
  $region22: #{esim_forward.7} parent=0 // pred_check
    _
  $region23: #{esim_forward.7} parent=0 // pred_check_branch
    %336 = sbr.rel (0) target = $region25
  $region24: #{esim_forward.7} parent=0 // pred_region
    _
  $region25: #{esim_forward.7} parent=0 // pred_fallthru
    _
  // Predicated region
  $region26: #{esim_forward.7} parent=0 // pred_check
    _
  $region27: #{esim_forward.7} parent=0 // pred_check_branch
    %338 = sbr.rel (0) target = $region29
  $region28: #{esim_forward.7} parent=0 // pred_region
    _
  $region29: #{esim_forward.7} parent=0 // pred_fallthru
    _

// kernel: esim_forward.5
$region0: #{esim_forward.5}
  #allocation0 [shape = 'u32[]', space=smem, size = 0x4, offset = 0x4, fixed_abs, tag = 'smem constant byte address 0x4 - core index']
  #allocation1 [shape = 'u32[72,128]{1,0:T(1,128)}', space=vmem, size = 0x9000, scoped, tag = 'internal scratch']
  #allocation2 [shape = 'f32[4,8,512]{2,1,0:T(8,128)}', space=vmem, size = 0x10000, scoped, tag = 'scratch operand']
  %s0 = inlined_call_operand.vmem [shape: bf16[4,8,32], index: 0, kind: input, shape index: {}]
  %s1 = inlined_call_operand.hbm [shape: bf16[32,512], index: 1, kind: input, shape index: {}]
  %s2 = inlined_call_operand.vmem [shape: bf16[128,512], index: 2, kind: input, shape index: {}]
  %s3 = inlined_call_operand.vmem [shape: f32[1,512], index: 3, kind: input, shape index: {}]
  %s4 = inlined_call_operand.vmem [shape: f32[4,8,1], index: 4, kind: input, shape index: {}]
  %s5 = inlined_call_operand.vmem [shape: bf16[4,8,128], index: 5, kind: output, shape index: {}]
  %s6 = sld [smem:[#allocation0]]
  $region34: #{esim_forward.5} parent=0
    _
  %s8 = ssub.s32 1, %s6
  %s9 = scalar_select 0, %s8, %s6
  $region1: #{esim_forward.5} parent=0
    #allocation3 [shape = 'u8[32768]{0}', space=vmem, size = 0x8000, scoped, tag = 'input window, operand 1, single buffered']
    #allocation4 [shape = 's32[1]{0}', space=sflag, size = 0x4, scoped, tag = 'scoped memory for esim_forward.5']
    %10 = vsyncpa [#allocation4], 0
    // Predicated region
    $region2: #{esim_forward.5} parent=1 // pred_check
      _
    $region3: #{esim_forward.5} parent=1 // pred_check_branch
      %12 = sbr.rel (0) target = $region5
    $region4: #{esim_forward.5} parent=1 // pred_region
      _
    $region5: #{esim_forward.5} parent=1 // pred_fallthru
      _
    // Predicated region
    $region6: #{esim_forward.5} parent=1 // pred_check
      _
    $region7: #{esim_forward.5} parent=1 // pred_check_branch
      %14 = sbr.rel (0) target = $region9
    $region8: #{esim_forward.5} parent=1 // pred_region
      %16 = vsyncadd [#allocation4], 0
      %s17 = sshll.u32 %s1, 4
      %s18 = int_to_ptr.hbm [resolvable:$true] %s17
      %s19 = sshll.u32 [#allocation3], 4
      %s20 = int_to_ptr.vmem [resolvable:$true] %s19
      %25 = dma.hbm_to_vmem [thread:$0]  %s18, 1024, %s20, [#allocation4], 256, 256, 16
    $region9: #{esim_forward.5} parent=1 // pred_fallthru
      _
    // Predicated region
    $region10: #{esim_forward.5} parent=1 // pred_check
      _
    $region11: #{esim_forward.5} parent=1 // pred_check_branch
      %27 = sbr.rel (0) target = $region13
    $region12: #{esim_forward.5} parent=1 // pred_region
      _
    $region13: #{esim_forward.5} parent=1 // pred_fallthru
      _
    // Predicated region
    $region14: #{esim_forward.5} parent=1 // pred_check
      _
    $region15: #{esim_forward.5} parent=1 // pred_check_branch
      %29 = sbr.rel (0) target = $region17
    $region16: #{esim_forward.5} parent=1 // pred_region
      _
    $region17: #{esim_forward.5} parent=1 // pred_fallthru
      _
    // Predicated region
    $region18: #{esim_forward.5} parent=1 // pred_check
      _
    $region19: #{esim_forward.5} parent=1 // pred_check_branch
      %31 = sbr.rel (0) target = $region21
    $region20: #{esim_forward.5} parent=1 // pred_region
      _
    $region21: #{esim_forward.5} parent=1 // pred_fallthru
      _
    // Predicated region
    $region22: #{esim_forward.5} parent=1 // pred_check
      _
    $region23: #{esim_forward.5} parent=1 // pred_check_branch
      %33 = sbr.rel (0) target = $region25
    $region24: #{esim_forward.5} parent=1 // pred_region
      %35 = dma.done [#allocation4], 1024
    $region25: #{esim_forward.5} parent=1 // pred_fallthru
      _
    %v37 = vld [vmem:[%s0] sm:$0xf]
    %v38 = vld [vmem:[%s0 + $0x4] sm:$0xf]
    %v39 = vld [vmem:[%s0 + $0x8] sm:$0xf]
    %v40 = vld [vmem:[%s0 + $0xc] sm:$0xf]
    %v41 = vld [vmem:[#allocation3] sm:$0xff]
    %v42 = vld [vmem:[#allocation3 + $0x8] sm:$0xff]
    %v43 = vld [vmem:[#allocation3 + $0x10] sm:$0xff]
    %v44 = vld [vmem:[#allocation3 + $0x18] sm:$0xff]
    %v45 = vld [vmem:[#allocation3 + $0x20] sm:$0xff]
    %v46 = vld [vmem:[#allocation3 + $0x28] sm:$0xff]
    %v47 = vld [vmem:[#allocation3 + $0x30] sm:$0xff]
    %v48 = vld [vmem:[#allocation3 + $0x38] sm:$0xff]
    %v49 = vld [vmem:[%s3] sm:$0xf]
    %v51 = vperm.slane %v49, 0
    %v52 = vperm.slane %v49, 1
    %v53 = vperm.slane %v49, 2
    %v54 = vperm.slane %v49, 3
    %v63 = vunpack.c.l.b16 %v37
    %v64 = vunpack.c.l.b16 %v38
    %v65 = vunpack.c.l.b16 %v39
    %v66 = vunpack.c.l.b16 %v40
    %v67 = vpack.c.b16 %v64, %v63
    %v68 = vpack.c.b16 %v66, %v65
    %v77 = vunpack.c.l.b16 %v41
    %v78 = vunpack.c.h.b16 %v41
    %v79 = vunpack.c.l.b16 %v42
    %v80 = vunpack.c.h.b16 %v42
    %v81 = vunpack.c.l.b16 %v43
    %v82 = vunpack.c.h.b16 %v43
    %v83 = vunpack.c.l.b16 %v44
    %v84 = vunpack.c.h.b16 %v44
    %v85 = vunpack.c.l.b16 %v45
    %v86 = vunpack.c.h.b16 %v45
    %v87 = vunpack.c.l.b16 %v46
    %v88 = vunpack.c.h.b16 %v46
    %v89 = vunpack.c.l.b16 %v47
    %v90 = vunpack.c.h.b16 %v47
    %v91 = vunpack.c.l.b16 %v48
    %v92 = vunpack.c.h.b16 %v48
    %v93 = vpack.c.b16 %v81, %v77
    %v94 = vpack.c.b16 %v82, %v78
    %v95 = vpack.c.b16 %v83, %v79
    %v96 = vpack.c.b16 %v84, %v80
    %v97 = vpack.c.b16 %v89, %v85
    %v98 = vpack.c.b16 %v90, %v86
    %v99 = vpack.c.b16 %v91, %v87
    %v100 = vpack.c.b16 %v92, %v88
    %vm109 = vcmask 261120
    %v111 = vsel %vm109, %v67, 0
    %v114 = vsel %vm109, %v68, 0
    %116 = vmatpush.bf16.msra.mxu0 0
    %117 = vmatpush.bf16.msra.mxu0 0
    %118 = vmatpush.bf16.msra.mxu0 0
    %119 = vmatpush.bf16.msra.mxu0 0
    %120 = vmatpush.bf16.msra.mxu0 0
    %121 = vmatpush.bf16.msra.mxu0 0
    %122 = vmatpush.bf16.msra.mxu0 %v97
    %123 = vmatpush.bf16.msra.mxu0 %v93
    %124 = vmatmul.bf16.gmra.mxu0 %v111
    %v125 = vpop.f32.mrf.mxu0
    %v126 = vadd.f32 %v51, %v125
    %v127 = vpop.f32.mrf.mxu0
    %v128 = vadd.f32 %v51, %v127
    %129 = vmatmul.bf16.gmra.mxu0 %v114
    %v130 = vpop.f32.mrf.mxu0
    %v131 = vadd.f32 %v51, %v130
    %v132 = vpop.f32.mrf.mxu0
    %v133 = vadd.f32 %v51, %v132
    %134 = vdwg.mxu0
    %135 = vmatpush.bf16.msra.mxu0 0
    %136 = vmatpush.bf16.msra.mxu0 0
    %137 = vmatpush.bf16.msra.mxu0 0
    %138 = vmatpush.bf16.msra.mxu0 0
    %139 = vmatpush.bf16.msra.mxu0 0
    %140 = vmatpush.bf16.msra.mxu0 0
    %141 = vmatpush.bf16.msra.mxu0 %v98
    %142 = vmatpush.bf16.msra.mxu0 %v94
    %143 = vmatmul.bf16.gmra.mxu0 %v111
    %v144 = vpop.f32.mrf.mxu0
    %v145 = vadd.f32 %v52, %v144
    %v146 = vpop.f32.mrf.mxu0
    %v147 = vadd.f32 %v52, %v146
    %148 = vmatmul.bf16.gmra.mxu0 %v114
    %v149 = vpop.f32.mrf.mxu0
    %v150 = vadd.f32 %v52, %v149
    %v151 = vpop.f32.mrf.mxu0
    %v152 = vadd.f32 %v52, %v151
    %153 = vdwg.mxu0
    %154 = vmatpush.bf16.msra.mxu0 0
    %155 = vmatpush.bf16.msra.mxu0 0
    %156 = vmatpush.bf16.msra.mxu0 0
    %157 = vmatpush.bf16.msra.mxu0 0
    %158 = vmatpush.bf16.msra.mxu0 0
    %159 = vmatpush.bf16.msra.mxu0 0
    %160 = vmatpush.bf16.msra.mxu0 %v99
    %161 = vmatpush.bf16.msra.mxu0 %v95
    %162 = vmatmul.bf16.gmra.mxu0 %v111
    %v163 = vpop.f32.mrf.mxu0
    %v164 = vadd.f32 %v53, %v163
    %v165 = vpop.f32.mrf.mxu0
    %v166 = vadd.f32 %v53, %v165
    %167 = vmatmul.bf16.gmra.mxu0 %v114
    %v168 = vpop.f32.mrf.mxu0
    %v169 = vadd.f32 %v53, %v168
    %v170 = vpop.f32.mrf.mxu0
    %v171 = vadd.f32 %v53, %v170
    %172 = vdwg.mxu0
    %173 = vmatpush.bf16.msra.mxu0 0
    %174 = vmatpush.bf16.msra.mxu0 0
    %175 = vmatpush.bf16.msra.mxu0 0
    %176 = vmatpush.bf16.msra.mxu0 0
    %177 = vmatpush.bf16.msra.mxu0 0
    %178 = vmatpush.bf16.msra.mxu0 0
    %179 = vmatpush.bf16.msra.mxu0 %v100
    %180 = vmatpush.bf16.msra.mxu0 %v96
    %181 = vmatmul.bf16.gmra.mxu0 %v111
    %v182 = vpop.f32.mrf.mxu0
    %v183 = vadd.f32 %v54, %v182
    %v184 = vpop.f32.mrf.mxu0
    %v185 = vadd.f32 %v54, %v184
    %186 = vmatmul.bf16.gmra.mxu0 %v114
    %v187 = vpop.f32.mrf.mxu0
    %v188 = vadd.f32 %v54, %v187
    %v189 = vpop.f32.mrf.mxu0
    %v190 = vadd.f32 %v54, %v189
    %191 = vdwg.mxu0
    %192 = vst [vmem:[#allocation2] sm:$0xff] %v126
    %193 = vst [vmem:[#allocation2 + $0x8] sm:$0xff] %v145
    %194 = vst [vmem:[#allocation2 + $0x10] sm:$0xff] %v164
    %195 = vst [vmem:[#allocation2 + $0x18] sm:$0xff] %v183
    %196 = vst [vmem:[#allocation2 + $0x20] sm:$0xff] %v128
    %197 = vst [vmem:[#allocation2 + $0x28] sm:$0xff] %v147
    %198 = vst [vmem:[#allocation2 + $0x30] sm:$0xff] %v166
    %199 = vst [vmem:[#allocation2 + $0x38] sm:$0xff] %v185
    %200 = vst [vmem:[#allocation2 + $0x40] sm:$0xff] %v131
    %201 = vst [vmem:[#allocation2 + $0x48] sm:$0xff] %v150
    %202 = vst [vmem:[#allocation2 + $0x50] sm:$0xff] %v169
    %203 = vst [vmem:[#allocation2 + $0x58] sm:$0xff] %v188
    %204 = vst [vmem:[#allocation2 + $0x60] sm:$0xff] %v133
    %205 = vst [vmem:[#allocation2 + $0x68] sm:$0xff] %v152
    %206 = vst [vmem:[#allocation2 + $0x70] sm:$0xff] %v171
    %207 = vst [vmem:[#allocation2 + $0x78] sm:$0xff] %v190
    %v208 = vld [vmem:[%s2] sm:$0xff]
    %v209 = vld [vmem:[%s2 + $0x8] sm:$0xff]
    %v210 = vld [vmem:[%s2 + $0x10] sm:$0xff]
    %v211 = vld [vmem:[%s2 + $0x18] sm:$0xff]
    %v212 = vld [vmem:[%s2 + $0x20] sm:$0xff]
    %v213 = vld [vmem:[%s2 + $0x28] sm:$0xff]
    %v214 = vld [vmem:[%s2 + $0x30] sm:$0xff]
    %v215 = vld [vmem:[%s2 + $0x38] sm:$0xff]
    %v216 = vld [vmem:[%s2 + $0x40] sm:$0xff]
    %v217 = vld [vmem:[%s2 + $0x48] sm:$0xff]
    %v218 = vld [vmem:[%s2 + $0x50] sm:$0xff]
    %v219 = vld [vmem:[%s2 + $0x58] sm:$0xff]
    %v220 = vld [vmem:[%s2 + $0x60] sm:$0xff]
    %v221 = vld [vmem:[%s2 + $0x68] sm:$0xff]
    %v222 = vld [vmem:[%s2 + $0x70] sm:$0xff]
    %v223 = vld [vmem:[%s2 + $0x78] sm:$0xff]
    %v224 = vld [vmem:[%s2 + $0x80] sm:$0xff]
    %v225 = vld [vmem:[%s2 + $0x88] sm:$0xff]
    %v226 = vld [vmem:[%s2 + $0x90] sm:$0xff]
    %v227 = vld [vmem:[%s2 + $0x98] sm:$0xff]
    %v228 = vld [vmem:[%s2 + $0xa0] sm:$0xff]
    %v229 = vld [vmem:[%s2 + $0xa8] sm:$0xff]
    %v230 = vld [vmem:[%s2 + $0xb0] sm:$0xff]
    %v231 = vld [vmem:[%s2 + $0xb8] sm:$0xff]
    %v232 = vld [vmem:[%s2 + $0xc0] sm:$0xff]
    %v233 = vld [vmem:[%s2 + $0xc8] sm:$0xff]
    %v234 = vld [vmem:[%s2 + $0xd0] sm:$0xff]
    %v235 = vld [vmem:[%s2 + $0xd8] sm:$0xff]
    %v236 = vld [vmem:[%s2 + $0xe0] sm:$0xff]
    %v237 = vld [vmem:[%s2 + $0xe8] sm:$0xff]
    %v238 = vld [vmem:[%s2 + $0xf0] sm:$0xff]
    %v239 = vld [vmem:[%s2 + $0xf8] sm:$0xff]
    %v240 = vld [vmem:[#allocation2] ss:$8 sm:$0xf]
    %s241 = scalar_lea.vmem [#allocation2], 32
    %v242 = vld [vmem:[%s241] ss:$8 sm:$0xf]
    %s243 = scalar_lea.vmem [#allocation2], 64
    %v244 = vld [vmem:[%s243] ss:$8 sm:$0xf]
    %s245 = scalar_lea.vmem [#allocation2], 96
    %v246 = vld [vmem:[%s245] ss:$8 sm:$0xf]
    %v279 = vunpack.c.l.b16 %v208
    %v280 = vunpack.c.h.b16 %v208
    %v281 = vunpack.c.l.b16 %v209
    %v282 = vunpack.c.h.b16 %v209
    %v283 = vunpack.c.l.b16 %v210
    %v284 = vunpack.c.h.b16 %v210
    %v285 = vunpack.c.l.b16 %v211
    %v286 = vunpack.c.h.b16 %v211
    %v287 = vunpack.c.l.b16 %v212
    %v288 = vunpack.c.h.b16 %v212
    %v289 = vunpack.c.l.b16 %v213
    %v290 = vunpack.c.h.b16 %v213
    %v291 = vunpack.c.l.b16 %v214
    %v292 = vunpack.c.h.b16 %v214
    %v293 = vunpack.c.l.b16 %v215
    %v294 = vunpack.c.h.b16 %v215
    %v295 = vunpack.c.l.b16 %v216
    %v296 = vunpack.c.h.b16 %v216
    %v297 = vunpack.c.l.b16 %v217
    %v298 = vunpack.c.h.b16 %v217
    %v299 = vunpack.c.l.b16 %v218
    %v300 = vunpack.c.h.b16 %v218
    %v301 = vunpack.c.l.b16 %v219
    %v302 = vunpack.c.h.b16 %v219
    %v303 = vunpack.c.l.b16 %v220
    %v304 = vunpack.c.h.b16 %v220
    %v305 = vunpack.c.l.b16 %v221
    %v306 = vunpack.c.h.b16 %v221
    %v307 = vunpack.c.l.b16 %v222
    %v308 = vunpack.c.h.b16 %v222
    %v309 = vunpack.c.l.b16 %v223
    %v310 = vunpack.c.h.b16 %v223
    %v311 = vunpack.c.l.b16 %v224
    %v312 = vunpack.c.h.b16 %v224
    %v313 = vunpack.c.l.b16 %v225
    %v314 = vunpack.c.h.b16 %v225
    %v315 = vunpack.c.l.b16 %v226
    %v316 = vunpack.c.h.b16 %v226
    %v317 = vunpack.c.l.b16 %v227
    %v318 = vunpack.c.h.b16 %v227
    %v319 = vunpack.c.l.b16 %v228
    %v320 = vunpack.c.h.b16 %v228
    %v321 = vunpack.c.l.b16 %v229
    %v322 = vunpack.c.h.b16 %v229
    %v323 = vunpack.c.l.b16 %v230
    %v324 = vunpack.c.h.b16 %v230
    %v325 = vunpack.c.l.b16 %v231
    %v326 = vunpack.c.h.b16 %v231
    %v327 = vunpack.c.l.b16 %v232
    %v328 = vunpack.c.h.b16 %v232
    %v329 = vunpack.c.l.b16 %v233
    %v330 = vunpack.c.h.b16 %v233
    %v331 = vunpack.c.l.b16 %v234
    %v332 = vunpack.c.h.b16 %v234
    %v333 = vunpack.c.l.b16 %v235
    %v334 = vunpack.c.h.b16 %v235
    %v335 = vunpack.c.l.b16 %v236
    %v336 = vunpack.c.h.b16 %v236
    %v337 = vunpack.c.l.b16 %v237
    %v338 = vunpack.c.h.b16 %v237
    %v339 = vunpack.c.l.b16 %v238
    %v340 = vunpack.c.h.b16 %v238
    %v341 = vunpack.c.l.b16 %v239
    %v342 = vunpack.c.h.b16 %v239
    %v343 = vpack.c.b16 %v283, %v279
    %v344 = vpack.c.b16 %v284, %v280
    %v345 = vpack.c.b16 %v285, %v281
    %v346 = vpack.c.b16 %v286, %v282
    %v347 = vpack.c.b16 %v291, %v287
    %v348 = vpack.c.b16 %v292, %v288
    %v349 = vpack.c.b16 %v293, %v289
    %v350 = vpack.c.b16 %v294, %v290
    %v351 = vpack.c.b16 %v299, %v295
    %v352 = vpack.c.b16 %v300, %v296
    %v353 = vpack.c.b16 %v301, %v297
    %v354 = vpack.c.b16 %v302, %v298
    %v355 = vpack.c.b16 %v307, %v303
    %v356 = vpack.c.b16 %v308, %v304
    %v357 = vpack.c.b16 %v309, %v305
    %v358 = vpack.c.b16 %v310, %v306
    %v359 = vpack.c.b16 %v315, %v311
    %v360 = vpack.c.b16 %v316, %v312
    %v361 = vpack.c.b16 %v317, %v313
    %v362 = vpack.c.b16 %v318, %v314
    %v363 = vpack.c.b16 %v323, %v319
    %v364 = vpack.c.b16 %v324, %v320
    %v365 = vpack.c.b16 %v325, %v321
    %v366 = vpack.c.b16 %v326, %v322
    %v367 = vpack.c.b16 %v331, %v327
    %v368 = vpack.c.b16 %v332, %v328
    %v369 = vpack.c.b16 %v333, %v329
    %v370 = vpack.c.b16 %v334, %v330
    %v371 = vpack.c.b16 %v339, %v335
    %v372 = vpack.c.b16 %v340, %v336
    %v373 = vpack.c.b16 %v341, %v337
    %v374 = vpack.c.b16 %v342, %v338
    %407 = vmatpush.bf16.msra.mxu0 %v371
    %408 = vmatpush.bf16.msra.mxu0 %v367
    %409 = vmatpush.bf16.msra.mxu0 %v363
    %410 = vmatpush.bf16.msra.mxu0 %v359
    %411 = vmatpush.bf16.msra.mxu0 %v355
    %412 = vmatpush.bf16.msra.mxu0 %v351
    %413 = vmatpush.bf16.msra.mxu0 %v347
    %414 = vmatpush.bf16.msra.mxu0 %v343
    %415 = vmatmul.bf16.gmra.mxu0 0
    %v416 = vpop.f32.mrf.mxu0
    %v417 = vadd.f32 0.0, %v416
    %v418 = vpop.f32.mrf.mxu0
    %419 = vdwg.mxu0
    %420 = vmatpush.bf16.msra.mxu0 %v372
    %421 = vmatpush.bf16.msra.mxu0 %v368
    %422 = vmatpush.bf16.msra.mxu0 %v364
    %423 = vmatpush.bf16.msra.mxu0 %v360
    %424 = vmatpush.bf16.msra.mxu0 %v356
    %425 = vmatpush.bf16.msra.mxu0 %v352
    %426 = vmatpush.bf16.msra.mxu0 %v348
    %427 = vmatpush.bf16.msra.mxu0 %v344
    %428 = vmatmul.bf16.gmra.mxu0 0
    %v429 = vpop.f32.mrf.mxu0
    %v430 = vadd.f32 0.0, %v429
    %v431 = vpop.f32.mrf.mxu0
    %432 = vdwg.mxu0
    %433 = vmatpush.bf16.msra.mxu0 %v373
    %434 = vmatpush.bf16.msra.mxu0 %v369
    %435 = vmatpush.bf16.msra.mxu0 %v365
    %436 = vmatpush.bf16.msra.mxu0 %v361
    %437 = vmatpush.bf16.msra.mxu0 %v357
    %438 = vmatpush.bf16.msra.mxu0 %v353
    %439 = vmatpush.bf16.msra.mxu0 %v349
    %440 = vmatpush.bf16.msra.mxu0 %v345
    %441 = vmatmul.bf16.gmra.mxu0 0
    %v442 = vpop.f32.mrf.mxu0
    %v443 = vadd.f32 0.0, %v442
    %v444 = vpop.f32.mrf.mxu0
    %445 = vdwg.mxu0
    %446 = vmatpush.bf16.msra.mxu0 %v374
    %447 = vmatpush.bf16.msra.mxu0 %v370
    %448 = vmatpush.bf16.msra.mxu0 %v366
    %449 = vmatpush.bf16.msra.mxu0 %v362
    %450 = vmatpush.bf16.msra.mxu0 %v358
    %451 = vmatpush.bf16.msra.mxu0 %v354
    %452 = vmatpush.bf16.msra.mxu0 %v350
    %453 = vmatpush.bf16.msra.mxu0 %v346
    %454 = vmatmul.bf16.gmra.mxu0 0
    %v455 = vpop.f32.mrf.mxu0
    %v456 = vadd.f32 0.0, %v455
    %v457 = vpop.f32.mrf.mxu0
    %458 = vdwg.mxu0
    %v463 = vrot.slane %v430, 7
    %v464 = vrot.slane %v443, 6
    %v465 = vrot.slane %v456, 5
    %vm466 = vcmask 1040384
    %v467 = vsel %vm466, %v417, %v463
    %vm468 = vcmask 1042434
    %v469 = vsel %vm468, %v464, %v465
    %vm470 = vcmask 1041408
    %v471 = vsel %vm470, %v467, %v469
    %vm472 = vcmask 1041409
    %v473 = vsel %vm472, %v417, %v463
    %vm474 = vcmask 1043459
    %v475 = vsel %vm474, %v464, %v465
    %vm476 = vcmask 1042433
    %v477 = vsel %vm476, %v473, %v475
    %v478 = vrot.slane %v477, 1
    %v479 = vsel %vm468, %v417, %v463
    %vm480 = vcmask 1044484
    %v481 = vsel %vm480, %v464, %v465
    %vm482 = vcmask 1043458
    %v483 = vsel %vm482, %v479, %v481
    %v484 = vrot.slane %v483, 2
    %v485 = vsel %vm474, %v417, %v463
    %vm486 = vcmask 1045509
    %v487 = vsel %vm486, %v464, %v465
    %vm488 = vcmask 1044483
    %v489 = vsel %vm488, %v485, %v487
    %v490 = vrot.slane %v489, 3
    %v495 = vadd.f32 %v240, %v471
    %v496 = vadd.f32 %v242, %v478
    %v497 = vadd.f32 %v244, %v484
    %v498 = vadd.f32 %v246, %v490
    %v499 = vxor.u32 %v495, 2147483648
    %v500 = vxor.u32 %v496, 2147483648
    %v501 = vxor.u32 %v497, 2147483648
    %v502 = vxor.u32 %v498, 2147483648
    %v503 = vmul.f32 %v499, 1.442695
    %v504 = vpow.pop %v503
    %v505 = vmul.f32 %v500, 1.442695
    %v506 = vpow.pop %v505
    %v507 = vmul.f32 %v501, 1.442695
    %v508 = vpow.pop %v507
    %v509 = vmul.f32 %v502, 1.442695
    %v510 = vpow.pop %v509
    %v511 = vadd.f32 %v504, 1.0
    %v512 = vadd.f32 %v506, 1.0
    %v513 = vadd.f32 %v508, 1.0
    %v514 = vadd.f32 %v510, 1.0
    %v515 = vrcp.pop %v511
    %v516 = vmul.f32 %v511, %v515
    %v517 = vsub.f32 1.0, %v516
    %v518 = vmul.f32 %v515, %v517
    %v519 = vadd.f32 %v515, %v518
    %vm520 = vweird.f32 %v511
    %vm521 = vweird.f32 %v515
    %vm522 = vmor %vm520, %vm521
    %v523 = vsel %vm522, %v515, %v519
    %v524 = vand.u32 2147483647, %v511
    %vm525 = vcmp.eq.f32.partialorder %v524, 8.507059e+37
    %v526 = vand.u32 %v511, 2147483648
    %v527 = vor.u32 1.1754944e-38, %v526
    %v528 = vsel %vm525, %v527, %v523
    %v529 = vmul.f32 1.0, %v528
    %v530 = vrcp.pop %v512
    %v531 = vmul.f32 %v512, %v530
    %v532 = vsub.f32 1.0, %v531
    %v533 = vmul.f32 %v530, %v532
    %v534 = vadd.f32 %v530, %v533
    %vm535 = vweird.f32 %v512
    %vm536 = vweird.f32 %v530
    %vm537 = vmor %vm535, %vm536
    %v538 = vsel %vm537, %v530, %v534
    %v539 = vand.u32 2147483647, %v512
    %vm540 = vcmp.eq.f32.partialorder %v539, 8.507059e+37
    %v541 = vand.u32 %v512, 2147483648
    %v542 = vor.u32 1.1754944e-38, %v541
    %v543 = vsel %vm540, %v542, %v538
    %v544 = vmul.f32 1.0, %v543
    %v545 = vrcp.pop %v513
    %v546 = vmul.f32 %v513, %v545
    %v547 = vsub.f32 1.0, %v546
    %v548 = vmul.f32 %v545, %v547
    %v549 = vadd.f32 %v545, %v548
    %vm550 = vweird.f32 %v513
    %vm551 = vweird.f32 %v545
    %vm552 = vmor %vm550, %vm551
    %v553 = vsel %vm552, %v545, %v549
    %v554 = vand.u32 2147483647, %v513
    %vm555 = vcmp.eq.f32.partialorder %v554, 8.507059e+37
    %v556 = vand.u32 %v513, 2147483648
    %v557 = vor.u32 1.1754944e-38, %v556
    %v558 = vsel %vm555, %v557, %v553
    %v559 = vmul.f32 1.0, %v558
    %v560 = vrcp.pop %v514
    %v561 = vmul.f32 %v514, %v560
    %v562 = vsub.f32 1.0, %v561
    %v563 = vmul.f32 %v560, %v562
    %v564 = vadd.f32 %v560, %v563
    %vm565 = vweird.f32 %v514
    %vm566 = vweird.f32 %v560
    %vm567 = vmor %vm565, %vm566
    %v568 = vsel %vm567, %v560, %v564
    %v569 = vand.u32 2147483647, %v514
    %vm570 = vcmp.eq.f32.partialorder %v569, 8.507059e+37
    %v571 = vand.u32 %v514, 2147483648
    %v572 = vor.u32 1.1754944e-38, %v571
    %v573 = vsel %vm570, %v572, %v568
    %v574 = vmul.f32 1.0, %v573
    %v579 = vrot.slane %v495, 1
    %v580 = vrot.slane %v496, 1
    %v581 = vrot.slane %v497, 1
    %v582 = vrot.slane %v498, 1
    %v587 = vxor.u32 %v579, 2147483648
    %v588 = vxor.u32 %v580, 2147483648
    %v589 = vxor.u32 %v581, 2147483648
    %v590 = vxor.u32 %v582, 2147483648
    %v591 = vmul.f32 %v587, 1.442695
    %v592 = vpow.pop %v591
    %v593 = vmul.f32 %v588, 1.442695
    %v594 = vpow.pop %v593
    %v595 = vmul.f32 %v589, 1.442695
    %v596 = vpow.pop %v595
    %v597 = vmul.f32 %v590, 1.442695
    %v598 = vpow.pop %v597
    %v599 = vadd.f32 %v592, 1.0
    %v600 = vadd.f32 %v594, 1.0
    %v601 = vadd.f32 %v596, 1.0
    %v602 = vadd.f32 %v598, 1.0
    %v603 = vrcp.pop %v599
    %v604 = vmul.f32 %v599, %v603
    %v605 = vsub.f32 1.0, %v604
    %v606 = vmul.f32 %v603, %v605
    %v607 = vadd.f32 %v603, %v606
    %vm608 = vweird.f32 %v599
    %vm609 = vweird.f32 %v603
    %vm610 = vmor %vm608, %vm609
    %v611 = vsel %vm610, %v603, %v607
    %v612 = vand.u32 2147483647, %v599
    %vm613 = vcmp.eq.f32.partialorder %v612, 8.507059e+37
    %v614 = vand.u32 %v599, 2147483648
    %v615 = vor.u32 1.1754944e-38, %v614
    %v616 = vsel %vm613, %v615, %v611
    %v617 = vmul.f32 1.0, %v616
    %v618 = vrcp.pop %v600
    %v619 = vmul.f32 %v600, %v618
    %v620 = vsub.f32 1.0, %v619
    %v621 = vmul.f32 %v618, %v620
    %v622 = vadd.f32 %v618, %v621
    %vm623 = vweird.f32 %v600
    %vm624 = vweird.f32 %v618
    %vm625 = vmor %vm623, %vm624
    %v626 = vsel %vm625, %v618, %v622
    %v627 = vand.u32 2147483647, %v600
    %vm628 = vcmp.eq.f32.partialorder %v627, 8.507059e+37
    %v629 = vand.u32 %v600, 2147483648
    %v630 = vor.u32 1.1754944e-38, %v629
    %v631 = vsel %vm628, %v630, %v626
    %v632 = vmul.f32 1.0, %v631
    %v633 = vrcp.pop %v601
    %v634 = vmul.f32 %v601, %v633
    %v635 = vsub.f32 1.0, %v634
    %v636 = vmul.f32 %v633, %v635
    %v637 = vadd.f32 %v633, %v636
    %vm638 = vweird.f32 %v601
    %vm639 = vweird.f32 %v633
    %vm640 = vmor %vm638, %vm639
    %v641 = vsel %vm640, %v633, %v637
    %v642 = vand.u32 2147483647, %v601
    %vm643 = vcmp.eq.f32.partialorder %v642, 8.507059e+37
    %v644 = vand.u32 %v601, 2147483648
    %v645 = vor.u32 1.1754944e-38, %v644
    %v646 = vsel %vm643, %v645, %v641
    %v647 = vmul.f32 1.0, %v646
    %v648 = vrcp.pop %v602
    %v649 = vmul.f32 %v602, %v648
    %v650 = vsub.f32 1.0, %v649
    %v651 = vmul.f32 %v648, %v650
    %v652 = vadd.f32 %v648, %v651
    %vm653 = vweird.f32 %v602
    %vm654 = vweird.f32 %v648
    %vm655 = vmor %vm653, %vm654
    %v656 = vsel %vm655, %v648, %v652
    %v657 = vand.u32 2147483647, %v602
    %vm658 = vcmp.eq.f32.partialorder %v657, 8.507059e+37
    %v659 = vand.u32 %v602, 2147483648
    %v660 = vor.u32 1.1754944e-38, %v659
    %v661 = vsel %vm658, %v660, %v656
    %v662 = vmul.f32 1.0, %v661
    %v663 = vrot.slane %v495, 2
    %v664 = vrot.slane %v496, 2
    %v665 = vrot.slane %v497, 2
    %v666 = vrot.slane %v498, 2
    %v671 = vtanh.pop %v663
    %v672 = vtanh.pop %v664
    %v673 = vtanh.pop %v665
    %v674 = vtanh.pop %v666
    %v675 = vrot.slane %v495, 3
    %v676 = vrot.slane %v496, 3
    %v677 = vrot.slane %v497, 3
    %v678 = vrot.slane %v498, 3
    %v683 = vxor.u32 %v675, 2147483648
    %v684 = vxor.u32 %v676, 2147483648
    %v685 = vxor.u32 %v677, 2147483648
    %v686 = vxor.u32 %v678, 2147483648
    %v687 = vmul.f32 %v683, 1.442695
    %v688 = vpow.pop %v687
    %v689 = vmul.f32 %v684, 1.442695
    %v690 = vpow.pop %v689
    %v691 = vmul.f32 %v685, 1.442695
    %v692 = vpow.pop %v691
    %v693 = vmul.f32 %v686, 1.442695
    %v694 = vpow.pop %v693
    %v695 = vadd.f32 %v688, 1.0
    %v696 = vadd.f32 %v690, 1.0
    %v697 = vadd.f32 %v692, 1.0
    %v698 = vadd.f32 %v694, 1.0
    %v699 = vrcp.pop %v695
    %v700 = vmul.f32 %v695, %v699
    %v701 = vsub.f32 1.0, %v700
    %v702 = vmul.f32 %v699, %v701
    %v703 = vadd.f32 %v699, %v702
    %vm704 = vweird.f32 %v695
    %vm705 = vweird.f32 %v699
    %vm706 = vmor %vm704, %vm705
    %v707 = vsel %vm706, %v699, %v703
    %v708 = vand.u32 2147483647, %v695
    %vm709 = vcmp.eq.f32.partialorder %v708, 8.507059e+37
    %v710 = vand.u32 %v695, 2147483648
    %v711 = vor.u32 1.1754944e-38, %v710
    %v712 = vsel %vm709, %v711, %v707
    %v713 = vmul.f32 1.0, %v712
    %v714 = vrcp.pop %v696
    %v715 = vmul.f32 %v696, %v714
    %v716 = vsub.f32 1.0, %v715
    %v717 = vmul.f32 %v714, %v716
    %v718 = vadd.f32 %v714, %v717
    %vm719 = vweird.f32 %v696
    %vm720 = vweird.f32 %v714
    %vm721 = vmor %vm719, %vm720
    %v722 = vsel %vm721, %v714, %v718
    %v723 = vand.u32 2147483647, %v696
    %vm724 = vcmp.eq.f32.partialorder %v723, 8.507059e+37
    %v725 = vand.u32 %v696, 2147483648
    %v726 = vor.u32 1.1754944e-38, %v725
    %v727 = vsel %vm724, %v726, %v722
    %v728 = vmul.f32 1.0, %v727
    %v729 = vrcp.pop %v697
    %v730 = vmul.f32 %v697, %v729
    %v731 = vsub.f32 1.0, %v730
    %v732 = vmul.f32 %v729, %v731
    %v733 = vadd.f32 %v729, %v732
    %vm734 = vweird.f32 %v697
    %vm735 = vweird.f32 %v729
    %vm736 = vmor %vm734, %vm735
    %v737 = vsel %vm736, %v729, %v733
    %v738 = vand.u32 2147483647, %v697
    %vm739 = vcmp.eq.f32.partialorder %v738, 8.507059e+37
    %v740 = vand.u32 %v697, 2147483648
    %v741 = vor.u32 1.1754944e-38, %v740
    %v742 = vsel %vm739, %v741, %v737
    %v743 = vmul.f32 1.0, %v742
    %v744 = vrcp.pop %v698
    %v745 = vmul.f32 %v698, %v744
    %v746 = vsub.f32 1.0, %v745
    %v747 = vmul.f32 %v744, %v746
    %v748 = vadd.f32 %v744, %v747
    %vm749 = vweird.f32 %v698
    %vm750 = vweird.f32 %v744
    %vm751 = vmor %vm749, %vm750
    %v752 = vsel %vm751, %v744, %v748
    %v753 = vand.u32 2147483647, %v698
    %vm754 = vcmp.eq.f32.partialorder %v753, 8.507059e+37
    %v755 = vand.u32 %v698, 2147483648
    %v756 = vor.u32 1.1754944e-38, %v755
    %v757 = vsel %vm754, %v756, %v752
    %v758 = vmul.f32 1.0, %v757
    %v759 = vmul.f32 %v617, 0.0
    %v760 = vmul.f32 %v632, 0.0
    %v761 = vmul.f32 %v647, 0.0
    %v762 = vmul.f32 %v662, 0.0
    %v763 = vmul.f32 %v529, %v671
    %v764 = vmul.f32 %v544, %v672
    %v765 = vmul.f32 %v559, %v673
    %v766 = vmul.f32 %v574, %v674
    %v767 = vadd.f32 %v759, %v763
    %v768 = vadd.f32 %v760, %v764
    %v769 = vadd.f32 %v761, %v765
    %v770 = vadd.f32 %v762, %v766
    %v771 = vtanh.pop %v767
    %v772 = vtanh.pop %v768
    %v773 = vtanh.pop %v769
    %v774 = vtanh.pop %v770
    %v775 = vmul.f32 %v713, %v771
    %v776 = vmul.f32 %v728, %v772
    %v777 = vmul.f32 %v743, %v773
    %v778 = vmul.f32 %v758, %v774
    %v779 = vld [vmem:[%s4] sm:$0x1]
    %v780 = vld [vmem:[%s4 + $0x8] sm:$0x1]
    %v781 = vld [vmem:[%s4 + $0x10] sm:$0x1]
    %v782 = vld [vmem:[%s4 + $0x18] sm:$0x1]
    %784 = vset.pattern.permute.xlu0 0
    %785 = vperm.xlu0 %784, %v779
    %v786 = vpop.permute.xlu0 %785
    %789 = vset.pattern.permute.xlu0 0
    %790 = vperm.xlu0 %789, %v780
    %v791 = vpop.permute.xlu0 %790
    %794 = vset.pattern.permute.xlu0 0
    %795 = vperm.xlu0 %794, %v781
    %v796 = vpop.permute.xlu0 %795
    %799 = vset.pattern.permute.xlu0 0
    %800 = vperm.xlu0 %799, %v782
    %v801 = vpop.permute.xlu0 %800
    %v803 = vmul.f32 %v775, %v786
    %v804 = vmul.f32 %v776, %v791
    %v805 = vmul.f32 %v777, %v796
    %v806 = vmul.f32 %v778, %v801
    %v807 = vpack.c.bf16 %v803, %v803
    %v808 = vpack.c.bf16 %v804, %v804
    %v809 = vpack.c.bf16 %v805, %v805
    %v810 = vpack.c.bf16 %v806, %v806
    %vm811 = vcmask 1040384
    %vm812 = vsmask.f32 256
    %vm813 = vmand %vm811, %vm812
    %v814 = vld [vmem:[%s5] sm:$0x1]
    %v815 = vsel %vm813, %v807, %v814
    %816 = vst [vmem:[%s5] sm:$0x1] %v815
    %v817 = vld [vmem:[%s5 + $0x4] sm:$0x1]
    %v818 = vsel %vm813, %v808, %v817
    %819 = vst [vmem:[%s5 + $0x4] sm:$0x1] %v818
    %v820 = vld [vmem:[%s5 + $0x8] sm:$0x1]
    %v821 = vsel %vm813, %v809, %v820
    %822 = vst [vmem:[%s5 + $0x8] sm:$0x1] %v821
    %v823 = vld [vmem:[%s5 + $0xc] sm:$0x1]
    %v824 = vsel %vm813, %v810, %v823
    %825 = vst [vmem:[%s5 + $0xc] sm:$0x1] %v824
    %s826 = scalar_lea.vmem [#allocation2], 1
    %v827 = vld [vmem:[%s826] ss:$8 sm:$0xf]
    %s828 = scalar_lea.vmem [#allocation2], 33
    %v829 = vld [vmem:[%s828] ss:$8 sm:$0xf]
    %s830 = scalar_lea.vmem [#allocation2], 65
    %v831 = vld [vmem:[%s830] ss:$8 sm:$0xf]
    %s832 = scalar_lea.vmem [#allocation2], 97
    %v833 = vld [vmem:[%s832] ss:$8 sm:$0xf]
    %v834 = vpack.c.bf16 %v775, %v775
    %v835 = vpack.c.bf16 %v776, %v776
    %v836 = vpack.c.bf16 %v777, %v777
    %v837 = vpack.c.bf16 %v778, %v778
    %v842 = vunpack.c.l.b16 %v834
    %v843 = vunpack.c.l.b16 %v835
    %v844 = vunpack.c.l.b16 %v836
    %v845 = vunpack.c.l.b16 %v837
    %v846 = vrot.slane %v843, 7
    %v847 = vsel %vm472, %v846, %v842
    %v848 = vrot.slane %v844, 6
    %v849 = vsel %vm468, %v848, %v847
    %v850 = vrot.slane %v845, 5
    %v851 = vsel %vm474, %v850, %v849
    %v852 = vpack.c.b16 %v851, %v851
    %854 = vmatpush.bf16.msra.mxu0 %v371
    %855 = vmatpush.bf16.msra.mxu0 %v367
    %856 = vmatpush.bf16.msra.mxu0 %v363
    %857 = vmatpush.bf16.msra.mxu0 %v359
    %858 = vmatpush.bf16.msra.mxu0 %v355
    %859 = vmatpush.bf16.msra.mxu0 %v351
    %860 = vmatpush.bf16.msra.mxu0 %v347
    %861 = vmatpush.bf16.msra.mxu0 %v343
    %862 = vmatmul.bf16.gmra.mxu0 %v852
    %v863 = vpop.f32.mrf.mxu0
    %v864 = vadd.f32 0.0, %v863
    %v865 = vpop.f32.mrf.mxu0
    %866 = vdwg.mxu0
    %867 = vmatpush.bf16.msra.mxu0 %v372
    %868 = vmatpush.bf16.msra.mxu0 %v368
    %869 = vmatpush.bf16.msra.mxu0 %v364
    %870 = vmatpush.bf16.msra.mxu0 %v360
    %871 = vmatpush.bf16.msra.mxu0 %v356
    %872 = vmatpush.bf16.msra.mxu0 %v352
    %873 = vmatpush.bf16.msra.mxu0 %v348
    %874 = vmatpush.bf16.msra.mxu0 %v344
    %875 = vmatmul.bf16.gmra.mxu0 %v852
    %v876 = vpop.f32.mrf.mxu0
    %v877 = vadd.f32 0.0, %v876
    %v878 = vpop.f32.mrf.mxu0
    %879 = vdwg.mxu0
    %880 = vmatpush.bf16.msra.mxu0 %v373
    %881 = vmatpush.bf16.msra.mxu0 %v369
    %882 = vmatpush.bf16.msra.mxu0 %v365
    %883 = vmatpush.bf16.msra.mxu0 %v361
    %884 = vmatpush.bf16.msra.mxu0 %v357
    %885 = vmatpush.bf16.msra.mxu0 %v353
    %886 = vmatpush.bf16.msra.mxu0 %v349
    %887 = vmatpush.bf16.msra.mxu0 %v345
    %888 = vmatmul.bf16.gmra.mxu0 %v852
    %v889 = vpop.f32.mrf.mxu0
    %v890 = vadd.f32 0.0, %v889
    %v891 = vpop.f32.mrf.mxu0
    %892 = vdwg.mxu0
    %893 = vmatpush.bf16.msra.mxu0 %v374
    %894 = vmatpush.bf16.msra.mxu0 %v370
    %895 = vmatpush.bf16.msra.mxu0 %v366
    %896 = vmatpush.bf16.msra.mxu0 %v362
    %897 = vmatpush.bf16.msra.mxu0 %v358
    %898 = vmatpush.bf16.msra.mxu0 %v354
    %899 = vmatpush.bf16.msra.mxu0 %v350
    %900 = vmatpush.bf16.msra.mxu0 %v346
    %901 = vmatmul.bf16.gmra.mxu0 %v852
    %v902 = vpop.f32.mrf.mxu0
    %v903 = vadd.f32 0.0, %v902
    %v904 = vpop.f32.mrf.mxu0
    %905 = vdwg.mxu0
    %v910 = vrot.slane %v877, 7
    %v911 = vrot.slane %v890, 6
    %v912 = vrot.slane %v903, 5
    %v913 = vsel %vm466, %v864, %v910
    %v914 = vsel %vm468, %v911, %v912
    %v915 = vsel %vm470, %v913, %v914
    %v916 = vsel %vm472, %v864, %v910
    %v917 = vsel %vm474, %v911, %v912
    %v918 = vsel %vm476, %v916, %v917
    %v919 = vrot.slane %v918, 1
    %v920 = vsel %vm468, %v864, %v910
    %v921 = vsel %vm480, %v911, %v912
    %v922 = vsel %vm482, %v920, %v921
    %v923 = vrot.slane %v922, 2
    %v924 = vsel %vm474, %v864, %v910
    %v925 = vsel %vm486, %v911, %v912
    %v926 = vsel %vm488, %v924, %v925
    %v927 = vrot.slane %v926, 3
    %v932 = vadd.f32 %v827, %v915
    %v933 = vadd.f32 %v829, %v919
    %v934 = vadd.f32 %v831, %v923
    %v935 = vadd.f32 %v833, %v927
    %v936 = vxor.u32 %v932, 2147483648
    %v937 = vxor.u32 %v933, 2147483648
    %v938 = vxor.u32 %v934, 2147483648
    %v939 = vxor.u32 %v935, 2147483648
    %v940 = vmul.f32 %v936, 1.442695
    %v941 = vpow.pop %v940
    %v942 = vmul.f32 %v937, 1.442695
    %v943 = vpow.pop %v942
    %v944 = vmul.f32 %v938, 1.442695
    %v945 = vpow.pop %v944
    %v946 = vmul.f32 %v939, 1.442695
    %v947 = vpow.pop %v946
    %v948 = vadd.f32 %v941, 1.0
    %v949 = vadd.f32 %v943, 1.0
    %v950 = vadd.f32 %v945, 1.0
    %v951 = vadd.f32 %v947, 1.0
    %v952 = vrcp.pop %v948
    %v953 = vmul.f32 %v948, %v952
    %v954 = vsub.f32 1.0, %v953
    %v955 = vmul.f32 %v952, %v954
    %v956 = vadd.f32 %v952, %v955
    %vm957 = vweird.f32 %v948
    %vm958 = vweird.f32 %v952
    %vm959 = vmor %vm957, %vm958
    %v960 = vsel %vm959, %v952, %v956
    %v961 = vand.u32 2147483647, %v948
    %vm962 = vcmp.eq.f32.partialorder %v961, 8.507059e+37
    %v963 = vand.u32 %v948, 2147483648
    %v964 = vor.u32 1.1754944e-38, %v963
    %v965 = vsel %vm962, %v964, %v960
    %v966 = vmul.f32 1.0, %v965
    %v967 = vrcp.pop %v949
    %v968 = vmul.f32 %v949, %v967
    %v969 = vsub.f32 1.0, %v968
    %v970 = vmul.f32 %v967, %v969
    %v971 = vadd.f32 %v967, %v970
    %vm972 = vweird.f32 %v949
    %vm973 = vweird.f32 %v967
    %vm974 = vmor %vm972, %vm973
    %v975 = vsel %vm974, %v967, %v971
    %v976 = vand.u32 2147483647, %v949
    %vm977 = vcmp.eq.f32.partialorder %v976, 8.507059e+37
    %v978 = vand.u32 %v949, 2147483648
    %v979 = vor.u32 1.1754944e-38, %v978
    %v980 = vsel %vm977, %v979, %v975
    %v981 = vmul.f32 1.0, %v980
    %v982 = vrcp.pop %v950
    %v983 = vmul.f32 %v950, %v982
    %v984 = vsub.f32 1.0, %v983
    %v985 = vmul.f32 %v982, %v984
    %v986 = vadd.f32 %v982, %v985
    %vm987 = vweird.f32 %v950
    %vm988 = vweird.f32 %v982
    %vm989 = vmor %vm987, %vm988
    %v990 = vsel %vm989, %v982, %v986
    %v991 = vand.u32 2147483647, %v950
    %vm992 = vcmp.eq.f32.partialorder %v991, 8.507059e+37
    %v993 = vand.u32 %v950, 2147483648
    %v994 = vor.u32 1.1754944e-38, %v993
    %v995 = vsel %vm992, %v994, %v990
    %v996 = vmul.f32 1.0, %v995
    %v997 = vrcp.pop %v951
    %v998 = vmul.f32 %v951, %v997
    %v999 = vsub.f32 1.0, %v998
    %v1000 = vmul.f32 %v997, %v999
    %v1001 = vadd.f32 %v997, %v1000
    %vm1002 = vweird.f32 %v951
    %vm1003 = vweird.f32 %v997
    %vm1004 = vmor %vm1002, %vm1003
    %v1005 = vsel %vm1004, %v997, %v1001
    %v1006 = vand.u32 2147483647, %v951
    %vm1007 = vcmp.eq.f32.partialorder %v1006, 8.507059e+37
    %v1008 = vand.u32 %v951, 2147483648
    %v1009 = vor.u32 1.1754944e-38, %v1008
    %v1010 = vsel %vm1007, %v1009, %v1005
    %v1011 = vmul.f32 1.0, %v1010
    %v1016 = vrot.slane %v932, 1
    %v1017 = vrot.slane %v933, 1
    %v1018 = vrot.slane %v934, 1
    %v1019 = vrot.slane %v935, 1
    %v1024 = vxor.u32 %v1016, 2147483648
    %v1025 = vxor.u32 %v1017, 2147483648
    %v1026 = vxor.u32 %v1018, 2147483648
    %v1027 = vxor.u32 %v1019, 2147483648
    %v1028 = vmul.f32 %v1024, 1.442695
    %v1029 = vpow.pop %v1028
    %v1030 = vmul.f32 %v1025, 1.442695
    %v1031 = vpow.pop %v1030
    %v1032 = vmul.f32 %v1026, 1.442695
    %v1033 = vpow.pop %v1032
    %v1034 = vmul.f32 %v1027, 1.442695
    %v1035 = vpow.pop %v1034
    %v1036 = vadd.f32 %v1029, 1.0
    %v1037 = vadd.f32 %v1031, 1.0
    %v1038 = vadd.f32 %v1033, 1.0
    %v1039 = vadd.f32 %v1035, 1.0
    %v1040 = vrcp.pop %v1036
    %v1041 = vmul.f32 %v1036, %v1040
    %v1042 = vsub.f32 1.0, %v1041
    %v1043 = vmul.f32 %v1040, %v1042
    %v1044 = vadd.f32 %v1040, %v1043
    %vm1045 = vweird.f32 %v1036
    %vm1046 = vweird.f32 %v1040
    %vm1047 = vmor %vm1045, %vm1046
    %v1048 = vsel %vm1047, %v1040, %v1044
    %v1049 = vand.u32 2147483647, %v1036
    %vm1050 = vcmp.eq.f32.partialorder %v1049, 8.507059e+37
    %v1051 = vand.u32 %v1036, 2147483648
    %v1052 = vor.u32 1.1754944e-38, %v1051
    %v1053 = vsel %vm1050, %v1052, %v1048
    %v1054 = vmul.f32 1.0, %v1053
    %v1055 = vrcp.pop %v1037
    %v1056 = vmul.f32 %v1037, %v1055
    %v1057 = vsub.f32 1.0, %v1056
    %v1058 = vmul.f32 %v1055, %v1057
    %v1059 = vadd.f32 %v1055, %v1058
    %vm1060 = vweird.f32 %v1037
    %vm1061 = vweird.f32 %v1055
    %vm1062 = vmor %vm1060, %vm1061
    %v1063 = vsel %vm1062, %v1055, %v1059
    %v1064 = vand.u32 2147483647, %v1037
    %vm1065 = vcmp.eq.f32.partialorder %v1064, 8.507059e+37
    %v1066 = vand.u32 %v1037, 2147483648
    %v1067 = vor.u32 1.1754944e-38, %v1066
    %v1068 = vsel %vm1065, %v1067, %v1063
    %v1069 = vmul.f32 1.0, %v1068
    %v1070 = vrcp.pop %v1038
    %v1071 = vmul.f32 %v1038, %v1070
    %v1072 = vsub.f32 1.0, %v1071
    %v1073 = vmul.f32 %v1070, %v1072
    %v1074 = vadd.f32 %v1070, %v1073
    %vm1075 = vweird.f32 %v1038
    %vm1076 = vweird.f32 %v1070
    %vm1077 = vmor %vm1075, %vm1076
    %v1078 = vsel %vm1077, %v1070, %v1074
    %v1079 = vand.u32 2147483647, %v1038
    %vm1080 = vcmp.eq.f32.partialorder %v1079, 8.507059e+37
    %v1081 = vand.u32 %v1038, 2147483648
    %v1082 = vor.u32 1.1754944e-38, %v1081
    %v1083 = vsel %vm1080, %v1082, %v1078
    %v1084 = vmul.f32 1.0, %v1083
    %v1085 = vrcp.pop %v1039
    %v1086 = vmul.f32 %v1039, %v1085
    %v1087 = vsub.f32 1.0, %v1086
    %v1088 = vmul.f32 %v1085, %v1087
    %v1089 = vadd.f32 %v1085, %v1088
    %vm1090 = vweird.f32 %v1039
    %vm1091 = vweird.f32 %v1085
    %vm1092 = vmor %vm1090, %vm1091
    %v1093 = vsel %vm1092, %v1085, %v1089
    %v1094 = vand.u32 2147483647, %v1039
    %vm1095 = vcmp.eq.f32.partialorder %v1094, 8.507059e+37
    %v1096 = vand.u32 %v1039, 2147483648
    %v1097 = vor.u32 1.1754944e-38, %v1096
    %v1098 = vsel %vm1095, %v1097, %v1093
    %v1099 = vmul.f32 1.0, %v1098
    %v1100 = vrot.slane %v932, 2
    %v1101 = vrot.slane %v933, 2
    %v1102 = vrot.slane %v934, 2
    %v1103 = vrot.slane %v935, 2
    %v1108 = vtanh.pop %v1100
    %v1109 = vtanh.pop %v1101
    %v1110 = vtanh.pop %v1102
    %v1111 = vtanh.pop %v1103
    %v1112 = vrot.slane %v932, 3
    %v1113 = vrot.slane %v933, 3
    %v1114 = vrot.slane %v934, 3
    %v1115 = vrot.slane %v935, 3
    %v1120 = vxor.u32 %v1112, 2147483648
    %v1121 = vxor.u32 %v1113, 2147483648
    %v1122 = vxor.u32 %v1114, 2147483648
    %v1123 = vxor.u32 %v1115, 2147483648
    %v1124 = vmul.f32 %v1120, 1.442695
    %v1125 = vpow.pop %v1124
    %v1126 = vmul.f32 %v1121, 1.442695
    %v1127 = vpow.pop %v1126
    %v1128 = vmul.f32 %v1122, 1.442695
    %v1129 = vpow.pop %v1128
    %v1130 = vmul.f32 %v1123, 1.442695
    %v1131 = vpow.pop %v1130
    %v1132 = vadd.f32 %v1125, 1.0
    %v1133 = vadd.f32 %v1127, 1.0
    %v1134 = vadd.f32 %v1129, 1.0
    %v1135 = vadd.f32 %v1131, 1.0
    %v1136 = vrcp.pop %v1132
    %v1137 = vmul.f32 %v1132, %v1136
    %v1138 = vsub.f32 1.0, %v1137
    %v1139 = vmul.f32 %v1136, %v1138
    %v1140 = vadd.f32 %v1136, %v1139
    %vm1141 = vweird.f32 %v1132
    %vm1142 = vweird.f32 %v1136
    %vm1143 = vmor %vm1141, %vm1142
    %v1144 = vsel %vm1143, %v1136, %v1140
    %v1145 = vand.u32 2147483647, %v1132
    %vm1146 = vcmp.eq.f32.partialorder %v1145, 8.507059e+37
    %v1147 = vand.u32 %v1132, 2147483648
    %v1148 = vor.u32 1.1754944e-38, %v1147
    %v1149 = vsel %vm1146, %v1148, %v1144
    %v1150 = vmul.f32 1.0, %v1149
    %v1151 = vrcp.pop %v1133
    %v1152 = vmul.f32 %v1133, %v1151
    %v1153 = vsub.f32 1.0, %v1152
    %v1154 = vmul.f32 %v1151, %v1153
    %v1155 = vadd.f32 %v1151, %v1154
    %vm1156 = vweird.f32 %v1133
    %vm1157 = vweird.f32 %v1151
    %vm1158 = vmor %vm1156, %vm1157
    %v1159 = vsel %vm1158, %v1151, %v1155
    %v1160 = vand.u32 2147483647, %v1133
    %vm1161 = vcmp.eq.f32.partialorder %v1160, 8.507059e+37
    %v1162 = vand.u32 %v1133, 2147483648
    %v1163 = vor.u32 1.1754944e-38, %v1162
    %v1164 = vsel %vm1161, %v1163, %v1159
    %v1165 = vmul.f32 1.0, %v1164
    %v1166 = vrcp.pop %v1134
    %v1167 = vmul.f32 %v1134, %v1166
    %v1168 = vsub.f32 1.0, %v1167
    %v1169 = vmul.f32 %v1166, %v1168
    %v1170 = vadd.f32 %v1166, %v1169
    %vm1171 = vweird.f32 %v1134
    %vm1172 = vweird.f32 %v1166
    %vm1173 = vmor %vm1171, %vm1172
    %v1174 = vsel %vm1173, %v1166, %v1170
    %v1175 = vand.u32 2147483647, %v1134
    %vm1176 = vcmp.eq.f32.partialorder %v1175, 8.507059e+37
    %v1177 = vand.u32 %v1134, 2147483648
    %v1178 = vor.u32 1.1754944e-38, %v1177
    %v1179 = vsel %vm1176, %v1178, %v1174
    %v1180 = vmul.f32 1.0, %v1179
    %v1181 = vrcp.pop %v1135
    %v1182 = vmul.f32 %v1135, %v1181
    %v1183 = vsub.f32 1.0, %v1182
    %v1184 = vmul.f32 %v1181, %v1183
    %v1185 = vadd.f32 %v1181, %v1184
    %vm1186 = vweird.f32 %v1135
    %vm1187 = vweird.f32 %v1181
    %vm1188 = vmor %vm1186, %vm1187
    %v1189 = vsel %vm1188, %v1181, %v1185
    %v1190 = vand.u32 2147483647, %v1135
    %vm1191 = vcmp.eq.f32.partialorder %v1190, 8.507059e+37
    %v1192 = vand.u32 %v1135, 2147483648
    %v1193 = vor.u32 1.1754944e-38, %v1192
    %v1194 = vsel %vm1191, %v1193, %v1189
    %v1195 = vmul.f32 1.0, %v1194
    %v1196 = vmul.f32 %v1054, %v767
    %v1197 = vmul.f32 %v1069, %v768
    %v1198 = vmul.f32 %v1084, %v769
    %v1199 = vmul.f32 %v1099, %v770
    %v1200 = vmul.f32 %v966, %v1108
    %v1201 = vmul.f32 %v981, %v1109
    %v1202 = vmul.f32 %v996, %v1110
    %v1203 = vmul.f32 %v1011, %v1111
    %v1204 = vadd.f32 %v1196, %v1200
    %v1205 = vadd.f32 %v1197, %v1201
    %v1206 = vadd.f32 %v1198, %v1202
    %v1207 = vadd.f32 %v1199, %v1203
    %v1208 = vtanh.pop %v1204
    %v1209 = vtanh.pop %v1205
    %v1210 = vtanh.pop %v1206
    %v1211 = vtanh.pop %v1207
    %v1212 = vmul.f32 %v1150, %v1208
    %v1213 = vmul.f32 %v1165, %v1209
    %v1214 = vmul.f32 %v1180, %v1210
    %v1215 = vmul.f32 %v1195, %v1211
    %v1216 = vld [vmem:[%s4 + $0x1] sm:$0x1]
    %v1217 = vld [vmem:[%s4 + $0x9] sm:$0x1]
    %v1218 = vld [vmem:[%s4 + $0x11] sm:$0x1]
    %v1219 = vld [vmem:[%s4 + $0x19] sm:$0x1]
    %1221 = vset.pattern.permute.xlu0 0
    %1222 = vperm.xlu0 %1221, %v1216
    %v1223 = vpop.permute.xlu0 %1222
    %1226 = vset.pattern.permute.xlu0 0
    %1227 = vperm.xlu0 %1226, %v1217
    %v1228 = vpop.permute.xlu0 %1227
    %1231 = vset.pattern.permute.xlu0 0
    %1232 = vperm.xlu0 %1231, %v1218
    %v1233 = vpop.permute.xlu0 %1232
    %1236 = vset.pattern.permute.xlu0 0
    %1237 = vperm.xlu0 %1236, %v1219
    %v1238 = vpop.permute.xlu0 %1237
    %v1240 = vmul.f32 %v1212, %v1223
    %v1241 = vmul.f32 %v1213, %v1228
    %v1242 = vmul.f32 %v1214, %v1233
    %v1243 = vmul.f32 %v1215, %v1238
    %v1244 = vpack.c.bf16 %v1240, %v1240
    %v1245 = vpack.c.bf16 %v1241, %v1241
    %v1246 = vpack.c.bf16 %v1242, %v1242
    %v1247 = vpack.c.bf16 %v1243, %v1243
    %v1249 = vshll.u32 %v1244, 16
    %v1252 = vshll.u32 %v1245, 16
    %v1255 = vshll.u32 %v1246, 16
    %v1258 = vshll.u32 %v1247, 16
    %vm1264 = vsmask.f32 7938
    %vm1265 = vmand %vm811, %vm1264
    %v1266 = vld [vmem:[%s5] sm:$0x1]
    %v1267 = vsel %vm1265, %v1249, %v1266
    %1268 = vst [vmem:[%s5] sm:$0x1] %v1267
    %v1269 = vld [vmem:[%s5 + $0x4] sm:$0x1]
    %v1270 = vsel %vm1265, %v1252, %v1269
    %1271 = vst [vmem:[%s5 + $0x4] sm:$0x1] %v1270
    %v1272 = vld [vmem:[%s5 + $0x8] sm:$0x1]
    %v1273 = vsel %vm1265, %v1255, %v1272
    %1274 = vst [vmem:[%s5 + $0x8] sm:$0x1] %v1273
    %v1275 = vld [vmem:[%s5 + $0xc] sm:$0x1]
    %v1276 = vsel %vm1265, %v1258, %v1275
    %1277 = vst [vmem:[%s5 + $0xc] sm:$0x1] %v1276
    %s1278 = scalar_lea.vmem [#allocation2], 2
    %v1279 = vld [vmem:[%s1278] ss:$8 sm:$0xf]
    %s1280 = scalar_lea.vmem [#allocation2], 34
    %v1281 = vld [vmem:[%s1280] ss:$8 sm:$0xf]
    %s1282 = scalar_lea.vmem [#allocation2], 66
    %v1283 = vld [vmem:[%s1282] ss:$8 sm:$0xf]
    %s1284 = scalar_lea.vmem [#allocation2], 98
    %v1285 = vld [vmem:[%s1284] ss:$8 sm:$0xf]
    %v1286 = vpack.c.bf16 %v1212, %v1212
    %v1287 = vpack.c.bf16 %v1213, %v1213
    %v1288 = vpack.c.bf16 %v1214, %v1214
    %v1289 = vpack.c.bf16 %v1215, %v1215
    %v1294 = vunpack.c.l.b16 %v1286
    %v1295 = vunpack.c.l.b16 %v1287
    %v1296 = vunpack.c.l.b16 %v1288
    %v1297 = vunpack.c.l.b16 %v1289
    %v1298 = vrot.slane %v1295, 7
    %v1299 = vsel %vm472, %v1298, %v1294
    %v1300 = vrot.slane %v1296, 6
    %v1301 = vsel %vm468, %v1300, %v1299
    %v1302 = vrot.slane %v1297, 5
    %v1303 = vsel %vm474, %v1302, %v1301
    %v1304 = vpack.c.b16 %v1303, %v1303
    %1306 = vmatpush.bf16.msra.mxu0 %v371
    %1307 = vmatpush.bf16.msra.mxu0 %v367
    %1308 = vmatpush.bf16.msra.mxu0 %v363
    %1309 = vmatpush.bf16.msra.mxu0 %v359
    %1310 = vmatpush.bf16.msra.mxu0 %v355
    %1311 = vmatpush.bf16.msra.mxu0 %v351
    %1312 = vmatpush.bf16.msra.mxu0 %v347
    %1313 = vmatpush.bf16.msra.mxu0 %v343
    %1314 = vmatmul.bf16.gmra.mxu0 %v1304
    %v1315 = vpop.f32.mrf.mxu0
    %v1316 = vadd.f32 0.0, %v1315
    %v1317 = vpop.f32.mrf.mxu0
    %1318 = vdwg.mxu0
    %1319 = vmatpush.bf16.msra.mxu0 %v372
    %1320 = vmatpush.bf16.msra.mxu0 %v368
    %1321 = vmatpush.bf16.msra.mxu0 %v364
    %1322 = vmatpush.bf16.msra.mxu0 %v360
    %1323 = vmatpush.bf16.msra.mxu0 %v356
    %1324 = vmatpush.bf16.msra.mxu0 %v352
    %1325 = vmatpush.bf16.msra.mxu0 %v348
    %1326 = vmatpush.bf16.msra.mxu0 %v344
    %1327 = vmatmul.bf16.gmra.mxu0 %v1304
    %v1328 = vpop.f32.mrf.mxu0
    %v1329 = vadd.f32 0.0, %v1328
    %v1330 = vpop.f32.mrf.mxu0
    %1331 = vdwg.mxu0
    %1332 = vmatpush.bf16.msra.mxu0 %v373
    %1333 = vmatpush.bf16.msra.mxu0 %v369
    %1334 = vmatpush.bf16.msra.mxu0 %v365
    %1335 = vmatpush.bf16.msra.mxu0 %v361
    %1336 = vmatpush.bf16.msra.mxu0 %v357
    %1337 = vmatpush.bf16.msra.mxu0 %v353
    %1338 = vmatpush.bf16.msra.mxu0 %v349
    %1339 = vmatpush.bf16.msra.mxu0 %v345
    %1340 = vmatmul.bf16.gmra.mxu0 %v1304
    %v1341 = vpop.f32.mrf.mxu0
    %v1342 = vadd.f32 0.0, %v1341
    %v1343 = vpop.f32.mrf.mxu0
    %1344 = vdwg.mxu0
    %1345 = vmatpush.bf16.msra.mxu0 %v374
    %1346 = vmatpush.bf16.msra.mxu0 %v370
    %1347 = vmatpush.bf16.msra.mxu0 %v366
    %1348 = vmatpush.bf16.msra.mxu0 %v362
    %1349 = vmatpush.bf16.msra.mxu0 %v358
    %1350 = vmatpush.bf16.msra.mxu0 %v354
    %1351 = vmatpush.bf16.msra.mxu0 %v350
    %1352 = vmatpush.bf16.msra.mxu0 %v346
    %1353 = vmatmul.bf16.gmra.mxu0 %v1304
    %v1354 = vpop.f32.mrf.mxu0
    %v1355 = vadd.f32 0.0, %v1354
    %v1356 = vpop.f32.mrf.mxu0
    %1357 = vdwg.mxu0
    %v1362 = vrot.slane %v1329, 7
    %v1363 = vrot.slane %v1342, 6
    %v1364 = vrot.slane %v1355, 5
    %v1365 = vsel %vm466, %v1316, %v1362
    %v1366 = vsel %vm468, %v1363, %v1364
    %v1367 = vsel %vm470, %v1365, %v1366
    %v1368 = vsel %vm472, %v1316, %v1362
    %v1369 = vsel %vm474, %v1363, %v1364
    %v1370 = vsel %vm476, %v1368, %v1369
    %v1371 = vrot.slane %v1370, 1
    %v1372 = vsel %vm468, %v1316, %v1362
    %v1373 = vsel %vm480, %v1363, %v1364
    %v1374 = vsel %vm482, %v1372, %v1373
    %v1375 = vrot.slane %v1374, 2
    %v1376 = vsel %vm474, %v1316, %v1362
    %v1377 = vsel %vm486, %v1363, %v1364
    %v1378 = vsel %vm488, %v1376, %v1377
    %v1379 = vrot.slane %v1378, 3
    %v1384 = vadd.f32 %v1279, %v1367
    %v1385 = vadd.f32 %v1281, %v1371
    %v1386 = vadd.f32 %v1283, %v1375
    %v1387 = vadd.f32 %v1285, %v1379
    %v1388 = vxor.u32 %v1384, 2147483648
    %v1389 = vxor.u32 %v1385, 2147483648
    %v1390 = vxor.u32 %v1386, 2147483648
    %v1391 = vxor.u32 %v1387, 2147483648
    %v1392 = vmul.f32 %v1388, 1.442695
    %v1393 = vpow.pop %v1392
    %v1394 = vmul.f32 %v1389, 1.442695
    %v1395 = vpow.pop %v1394
    %v1396 = vmul.f32 %v1390, 1.442695
    %v1397 = vpow.pop %v1396
    %v1398 = vmul.f32 %v1391, 1.442695
    %v1399 = vpow.pop %v1398
    %v1400 = vadd.f32 %v1393, 1.0
    %v1401 = vadd.f32 %v1395, 1.0
    %v1402 = vadd.f32 %v1397, 1.0
    %v1403 = vadd.f32 %v1399, 1.0
    %v1404 = vrcp.pop %v1400
    %v1405 = vmul.f32 %v1400, %v1404
    %v1406 = vsub.f32 1.0, %v1405
    %v1407 = vmul.f32 %v1404, %v1406
    %v1408 = vadd.f32 %v1404, %v1407
    %vm1409 = vweird.f32 %v1400
    %vm1410 = vweird.f32 %v1404
    %vm1411 = vmor %vm1409, %vm1410
    %v1412 = vsel %vm1411, %v1404, %v1408
    %v1413 = vand.u32 2147483647, %v1400
    %vm1414 = vcmp.eq.f32.partialorder %v1413, 8.507059e+37
    %v1415 = vand.u32 %v1400, 2147483648
    %v1416 = vor.u32 1.1754944e-38, %v1415
    %v1417 = vsel %vm1414, %v1416, %v1412
    %v1418 = vmul.f32 1.0, %v1417
    %v1419 = vrcp.pop %v1401
    %v1420 = vmul.f32 %v1401, %v1419
    %v1421 = vsub.f32 1.0, %v1420
    %v1422 = vmul.f32 %v1419, %v1421
    %v1423 = vadd.f32 %v1419, %v1422
    %vm1424 = vweird.f32 %v1401
    %vm1425 = vweird.f32 %v1419
    %vm1426 = vmor %vm1424, %vm1425
    %v1427 = vsel %vm1426, %v1419, %v1423
    %v1428 = vand.u32 2147483647, %v1401
    %vm1429 = vcmp.eq.f32.partialorder %v1428, 8.507059e+37
    %v1430 = vand.u32 %v1401, 2147483648
    %v1431 = vor.u32 1.1754944e-38, %v1430
    %v1432 = vsel %vm1429, %v1431, %v1427
    %v1433 = vmul.f32 1.0, %v1432
    %v1434 = vrcp.pop %v1402
    %v1435 = vmul.f32 %v1402, %v1434
    %v1436 = vsub.f32 1.0, %v1435
    %v1437 = vmul.f32 %v1434, %v1436
    %v1438 = vadd.f32 %v1434, %v1437
    %vm1439 = vweird.f32 %v1402
    %vm1440 = vweird.f32 %v1434
    %vm1441 = vmor %vm1439, %vm1440
    %v1442 = vsel %vm1441, %v1434, %v1438
    %v1443 = vand.u32 2147483647, %v1402
    %vm1444 = vcmp.eq.f32.partialorder %v1443, 8.507059e+37
    %v1445 = vand.u32 %v1402, 2147483648
    %v1446 = vor.u32 1.1754944e-38, %v1445
    %v1447 = vsel %vm1444, %v1446, %v1442
    %v1448 = vmul.f32 1.0, %v1447
    %v1449 = vrcp.pop %v1403
    %v1450 = vmul.f32 %v1403, %v1449
    %v1451 = vsub.f32 1.0, %v1450
    %v1452 = vmul.f32 %v1449, %v1451
    %v1453 = vadd.f32 %v1449, %v1452
    %vm1454 = vweird.f32 %v1403
    %vm1455 = vweird.f32 %v1449
    %vm1456 = vmor %vm1454, %vm1455
    %v1457 = vsel %vm1456, %v1449, %v1453
    %v1458 = vand.u32 2147483647, %v1403
    %vm1459 = vcmp.eq.f32.partialorder %v1458, 8.507059e+37
    %v1460 = vand.u32 %v1403, 2147483648
    %v1461 = vor.u32 1.1754944e-38, %v1460
    %v1462 = vsel %vm1459, %v1461, %v1457
    %v1463 = vmul.f32 1.0, %v1462
    %v1468 = vrot.slane %v1384, 1
    %v1469 = vrot.slane %v1385, 1
    %v1470 = vrot.slane %v1386, 1
    %v1471 = vrot.slane %v1387, 1
    %v1476 = vxor.u32 %v1468, 2147483648
    %v1477 = vxor.u32 %v1469, 2147483648
    %v1478 = vxor.u32 %v1470, 2147483648
    %v1479 = vxor.u32 %v1471, 2147483648
    %v1480 = vmul.f32 %v1476, 1.442695
    %v1481 = vpow.pop %v1480
    %v1482 = vmul.f32 %v1477, 1.442695
    %v1483 = vpow.pop %v1482
    %v1484 = vmul.f32 %v1478, 1.442695
    %v1485 = vpow.pop %v1484
    %v1486 = vmul.f32 %v1479, 1.442695
    %v1487 = vpow.pop %v1486
    %v1488 = vadd.f32 %v1481, 1.0
    %v1489 = vadd.f32 %v1483, 1.0
    %v1490 = vadd.f32 %v1485, 1.0
    %v1491 = vadd.f32 %v1487, 1.0
    %v1492 = vrcp.pop %v1488
    %v1493 = vmul.f32 %v1488, %v1492
    %v1494 = vsub.f32 1.0, %v1493
    %v1495 = vmul.f32 %v1492, %v1494
    %v1496 = vadd.f32 %v1492, %v1495
    %vm1497 = vweird.f32 %v1488
    %vm1498 = vweird.f32 %v1492
    %vm1499 = vmor %vm1497, %vm1498
    %v1500 = vsel %vm1499, %v1492, %v1496
    %v1501 = vand.u32 2147483647, %v1488
    %vm1502 = vcmp.eq.f32.partialorder %v1501, 8.507059e+37
    %v1503 = vand.u32 %v1488, 2147483648
    %v1504 = vor.u32 1.1754944e-38, %v1503
    %v1505 = vsel %vm1502, %v1504, %v1500
    %v1506 = vmul.f32 1.0, %v1505
    %v1507 = vrcp.pop %v1489
    %v1508 = vmul.f32 %v1489, %v1507
    %v1509 = vsub.f32 1.0, %v1508
    %v1510 = vmul.f32 %v1507, %v1509
    %v1511 = vadd.f32 %v1507, %v1510
    %vm1512 = vweird.f32 %v1489
    %vm1513 = vweird.f32 %v1507
    %vm1514 = vmor %vm1512, %vm1513
    %v1515 = vsel %vm1514, %v1507, %v1511
    %v1516 = vand.u32 2147483647, %v1489
    %vm1517 = vcmp.eq.f32.partialorder %v1516, 8.507059e+37
    %v1518 = vand.u32 %v1489, 2147483648
    %v1519 = vor.u32 1.1754944e-38, %v1518
    %v1520 = vsel %vm1517, %v1519, %v1515
    %v1521 = vmul.f32 1.0, %v1520
    %v1522 = vrcp.pop %v1490
    %v1523 = vmul.f32 %v1490, %v1522
    %v1524 = vsub.f32 1.0, %v1523
    %v1525 = vmul.f32 %v1522, %v1524
    %v1526 = vadd.f32 %v1522, %v1525
    %vm1527 = vweird.f32 %v1490
    %vm1528 = vweird.f32 %v1522
    %vm1529 = vmor %vm1527, %vm1528
    %v1530 = vsel %vm1529, %v1522, %v1526
    %v1531 = vand.u32 2147483647, %v1490
    %vm1532 = vcmp.eq.f32.partialorder %v1531, 8.507059e+37
    %v1533 = vand.u32 %v1490, 2147483648
    %v1534 = vor.u32 1.1754944e-38, %v1533
    %v1535 = vsel %vm1532, %v1534, %v1530
    %v1536 = vmul.f32 1.0, %v1535
    %v1537 = vrcp.pop %v1491
    %v1538 = vmul.f32 %v1491, %v1537
    %v1539 = vsub.f32 1.0, %v1538
    %v1540 = vmul.f32 %v1537, %v1539
    %v1541 = vadd.f32 %v1537, %v1540
    %vm1542 = vweird.f32 %v1491
    %vm1543 = vweird.f32 %v1537
    %vm1544 = vmor %vm1542, %vm1543
    %v1545 = vsel %vm1544, %v1537, %v1541
    %v1546 = vand.u32 2147483647, %v1491
    %vm1547 = vcmp.eq.f32.partialorder %v1546, 8.507059e+37
    %v1548 = vand.u32 %v1491, 2147483648
    %v1549 = vor.u32 1.1754944e-38, %v1548
    %v1550 = vsel %vm1547, %v1549, %v1545
    %v1551 = vmul.f32 1.0, %v1550
    %v1552 = vrot.slane %v1384, 2
    %v1553 = vrot.slane %v1385, 2
    %v1554 = vrot.slane %v1386, 2
    %v1555 = vrot.slane %v1387, 2
    %v1560 = vtanh.pop %v1552
    %v1561 = vtanh.pop %v1553
    %v1562 = vtanh.pop %v1554
    %v1563 = vtanh.pop %v1555
    %v1564 = vrot.slane %v1384, 3
    %v1565 = vrot.slane %v1385, 3
    %v1566 = vrot.slane %v1386, 3
    %v1567 = vrot.slane %v1387, 3
    %v1572 = vxor.u32 %v1564, 2147483648
    %v1573 = vxor.u32 %v1565, 2147483648
    %v1574 = vxor.u32 %v1566, 2147483648
    %v1575 = vxor.u32 %v1567, 2147483648
    %v1576 = vmul.f32 %v1572, 1.442695
    %v1577 = vpow.pop %v1576
    %v1578 = vmul.f32 %v1573, 1.442695
    %v1579 = vpow.pop %v1578
    %v1580 = vmul.f32 %v1574, 1.442695
    %v1581 = vpow.pop %v1580
    %v1582 = vmul.f32 %v1575, 1.442695
    %v1583 = vpow.pop %v1582
    %v1584 = vadd.f32 %v1577, 1.0
    %v1585 = vadd.f32 %v1579, 1.0
    %v1586 = vadd.f32 %v1581, 1.0
    %v1587 = vadd.f32 %v1583, 1.0
    %v1588 = vrcp.pop %v1584
    %v1589 = vmul.f32 %v1584, %v1588
    %v1590 = vsub.f32 1.0, %v1589
    %v1591 = vmul.f32 %v1588, %v1590
    %v1592 = vadd.f32 %v1588, %v1591
    %vm1593 = vweird.f32 %v1584
    %vm1594 = vweird.f32 %v1588
    %vm1595 = vmor %vm1593, %vm1594
    %v1596 = vsel %vm1595, %v1588, %v1592
    %v1597 = vand.u32 2147483647, %v1584
    %vm1598 = vcmp.eq.f32.partialorder %v1597, 8.507059e+37
    %v1599 = vand.u32 %v1584, 2147483648
    %v1600 = vor.u32 1.1754944e-38, %v1599
    %v1601 = vsel %vm1598, %v1600, %v1596
    %v1602 = vmul.f32 1.0, %v1601
    %v1603 = vrcp.pop %v1585
    %v1604 = vmul.f32 %v1585, %v1603
    %v1605 = vsub.f32 1.0, %v1604
    %v1606 = vmul.f32 %v1603, %v1605
    %v1607 = vadd.f32 %v1603, %v1606
    %vm1608 = vweird.f32 %v1585
    %vm1609 = vweird.f32 %v1603
    %vm1610 = vmor %vm1608, %vm1609
    %v1611 = vsel %vm1610, %v1603, %v1607
    %v1612 = vand.u32 2147483647, %v1585
    %vm1613 = vcmp.eq.f32.partialorder %v1612, 8.507059e+37
    %v1614 = vand.u32 %v1585, 2147483648
    %v1615 = vor.u32 1.1754944e-38, %v1614
    %v1616 = vsel %vm1613, %v1615, %v1611
    %v1617 = vmul.f32 1.0, %v1616
    %v1618 = vrcp.pop %v1586
    %v1619 = vmul.f32 %v1586, %v1618
    %v1620 = vsub.f32 1.0, %v1619
    %v1621 = vmul.f32 %v1618, %v1620
    %v1622 = vadd.f32 %v1618, %v1621
    %vm1623 = vweird.f32 %v1586
    %vm1624 = vweird.f32 %v1618
    %vm1625 = vmor %vm1623, %vm1624
    %v1626 = vsel %vm1625, %v1618, %v1622
    %v1627 = vand.u32 2147483647, %v1586
    %vm1628 = vcmp.eq.f32.partialorder %v1627, 8.507059e+37
    %v1629 = vand.u32 %v1586, 2147483648
    %v1630 = vor.u32 1.1754944e-38, %v1629
    %v1631 = vsel %vm1628, %v1630, %v1626
    %v1632 = vmul.f32 1.0, %v1631
    %v1633 = vrcp.pop %v1587
    %v1634 = vmul.f32 %v1587, %v1633
    %v1635 = vsub.f32 1.0, %v1634
    %v1636 = vmul.f32 %v1633, %v1635
    %v1637 = vadd.f32 %v1633, %v1636
    %vm1638 = vweird.f32 %v1587
    %vm1639 = vweird.f32 %v1633
    %vm1640 = vmor %vm1638, %vm1639
    %v1641 = vsel %vm1640, %v1633, %v1637
    %v1642 = vand.u32 2147483647, %v1587
    %vm1643 = vcmp.eq.f32.partialorder %v1642, 8.507059e+37
    %v1644 = vand.u32 %v1587, 2147483648
    %v1645 = vor.u32 1.1754944e-38, %v1644
    %v1646 = vsel %vm1643, %v1645, %v1641
    %v1647 = vmul.f32 1.0, %v1646
    %v1648 = vmul.f32 %v1506, %v1204
    %v1649 = vmul.f32 %v1521, %v1205
    %v1650 = vmul.f32 %v1536, %v1206
    %v1651 = vmul.f32 %v1551, %v1207
    %v1652 = vmul.f32 %v1418, %v1560
    %v1653 = vmul.f32 %v1433, %v1561
    %v1654 = vmul.f32 %v1448, %v1562
    %v1655 = vmul.f32 %v1463, %v1563
    %v1656 = vadd.f32 %v1648, %v1652
    %v1657 = vadd.f32 %v1649, %v1653
    %v1658 = vadd.f32 %v1650, %v1654
    %v1659 = vadd.f32 %v1651, %v1655
    %v1660 = vtanh.pop %v1656
    %v1661 = vtanh.pop %v1657
    %v1662 = vtanh.pop %v1658
    %v1663 = vtanh.pop %v1659
    %v1664 = vmul.f32 %v1602, %v1660
    %v1665 = vmul.f32 %v1617, %v1661
    %v1666 = vmul.f32 %v1632, %v1662
    %v1667 = vmul.f32 %v1647, %v1663
    %v1668 = vld [vmem:[%s4 + $0x2] sm:$0x1]
    %v1669 = vld [vmem:[%s4 + $0xa] sm:$0x1]
    %v1670 = vld [vmem:[%s4 + $0x12] sm:$0x1]
    %v1671 = vld [vmem:[%s4 + $0x1a] sm:$0x1]
    %1673 = vset.pattern.permute.xlu0 0
    %1674 = vperm.xlu0 %1673, %v1668
    %v1675 = vpop.permute.xlu0 %1674
    %1678 = vset.pattern.permute.xlu0 0
    %1679 = vperm.xlu0 %1678, %v1669
    %v1680 = vpop.permute.xlu0 %1679
    %1683 = vset.pattern.permute.xlu0 0
    %1684 = vperm.xlu0 %1683, %v1670
    %v1685 = vpop.permute.xlu0 %1684
    %1688 = vset.pattern.permute.xlu0 0
    %1689 = vperm.xlu0 %1688, %v1671
    %v1690 = vpop.permute.xlu0 %1689
    %v1692 = vmul.f32 %v1664, %v1675
    %v1693 = vmul.f32 %v1665, %v1680
    %v1694 = vmul.f32 %v1666, %v1685
    %v1695 = vmul.f32 %v1667, %v1690
    %v1696 = vpack.c.bf16 %v1692, %v1692
    %v1697 = vpack.c.bf16 %v1693, %v1693
    %v1698 = vpack.c.bf16 %v1694, %v1694
    %v1699 = vpack.c.bf16 %v1695, %v1695
    %v1704 = vrot.slane %v1696, 7
    %v1705 = vrot.slane %v1697, 7
    %v1706 = vrot.slane %v1698, 7
    %v1707 = vrot.slane %v1699, 7
    %vm1712 = vcmask 1041409
    %vm1713 = vsmask.f32 1280
    %vm1714 = vmand %vm1712, %vm1713
    %v1715 = vld [vmem:[%s5] sm:$0x2]
    %v1716 = vsel %vm1714, %v1704, %v1715
    %1717 = vst [vmem:[%s5] sm:$0x2] %v1716
    %v1718 = vld [vmem:[%s5 + $0x4] sm:$0x2]
    %v1719 = vsel %vm1714, %v1705, %v1718
    %1720 = vst [vmem:[%s5 + $0x4] sm:$0x2] %v1719
    %v1721 = vld [vmem:[%s5 + $0x8] sm:$0x2]
    %v1722 = vsel %vm1714, %v1706, %v1721
    %1723 = vst [vmem:[%s5 + $0x8] sm:$0x2] %v1722
    %v1724 = vld [vmem:[%s5 + $0xc] sm:$0x2]
    %v1725 = vsel %vm1714, %v1707, %v1724
    %1726 = vst [vmem:[%s5 + $0xc] sm:$0x2] %v1725
    %s1727 = scalar_lea.vmem [#allocation2], 3
    %v1728 = vld [vmem:[%s1727] ss:$8 sm:$0xf]
    %s1729 = scalar_lea.vmem [#allocation2], 35
    %v1730 = vld [vmem:[%s1729] ss:$8 sm:$0xf]
    %s1731 = scalar_lea.vmem [#allocation2], 67
    %v1732 = vld [vmem:[%s1731] ss:$8 sm:$0xf]
    %s1733 = scalar_lea.vmem [#allocation2], 99
    %v1734 = vld [vmem:[%s1733] ss:$8 sm:$0xf]
    %v1735 = vpack.c.bf16 %v1664, %v1664
    %v1736 = vpack.c.bf16 %v1665, %v1665
    %v1737 = vpack.c.bf16 %v1666, %v1666
    %v1738 = vpack.c.bf16 %v1667, %v1667
    %v1743 = vunpack.c.l.b16 %v1735
    %v1744 = vunpack.c.l.b16 %v1736
    %v1745 = vunpack.c.l.b16 %v1737
    %v1746 = vunpack.c.l.b16 %v1738
    %v1747 = vrot.slane %v1744, 7
    %v1748 = vsel %vm472, %v1747, %v1743
    %v1749 = vrot.slane %v1745, 6
    %v1750 = vsel %vm468, %v1749, %v1748
    %v1751 = vrot.slane %v1746, 5
    %v1752 = vsel %vm474, %v1751, %v1750
    %v1753 = vpack.c.b16 %v1752, %v1752
    %1755 = vmatpush.bf16.msra.mxu0 %v371
    %1756 = vmatpush.bf16.msra.mxu0 %v367
    %1757 = vmatpush.bf16.msra.mxu0 %v363
    %1758 = vmatpush.bf16.msra.mxu0 %v359
    %1759 = vmatpush.bf16.msra.mxu0 %v355
    %1760 = vmatpush.bf16.msra.mxu0 %v351
    %1761 = vmatpush.bf16.msra.mxu0 %v347
    %1762 = vmatpush.bf16.msra.mxu0 %v343
    %1763 = vmatmul.bf16.gmra.mxu0 %v1753
    %v1764 = vpop.f32.mrf.mxu0
    %v1765 = vadd.f32 0.0, %v1764
    %v1766 = vpop.f32.mrf.mxu0
    %1767 = vdwg.mxu0
    %1768 = vmatpush.bf16.msra.mxu0 %v372
    %1769 = vmatpush.bf16.msra.mxu0 %v368
    %1770 = vmatpush.bf16.msra.mxu0 %v364
    %1771 = vmatpush.bf16.msra.mxu0 %v360
    %1772 = vmatpush.bf16.msra.mxu0 %v356
    %1773 = vmatpush.bf16.msra.mxu0 %v352
    %1774 = vmatpush.bf16.msra.mxu0 %v348
    %1775 = vmatpush.bf16.msra.mxu0 %v344
    %1776 = vmatmul.bf16.gmra.mxu0 %v1753
    %v1777 = vpop.f32.mrf.mxu0
    %v1778 = vadd.f32 0.0, %v1777
    %v1779 = vpop.f32.mrf.mxu0
    %1780 = vdwg.mxu0
    %1781 = vmatpush.bf16.msra.mxu0 %v373
    %1782 = vmatpush.bf16.msra.mxu0 %v369
    %1783 = vmatpush.bf16.msra.mxu0 %v365
    %1784 = vmatpush.bf16.msra.mxu0 %v361
    %1785 = vmatpush.bf16.msra.mxu0 %v357
    %1786 = vmatpush.bf16.msra.mxu0 %v353
    %1787 = vmatpush.bf16.msra.mxu0 %v349
    %1788 = vmatpush.bf16.msra.mxu0 %v345
    %1789 = vmatmul.bf16.gmra.mxu0 %v1753
    %v1790 = vpop.f32.mrf.mxu0
    %v1791 = vadd.f32 0.0, %v1790
    %v1792 = vpop.f32.mrf.mxu0
    %1793 = vdwg.mxu0
    %1794 = vmatpush.bf16.msra.mxu0 %v374
    %1795 = vmatpush.bf16.msra.mxu0 %v370
    %1796 = vmatpush.bf16.msra.mxu0 %v366
    %1797 = vmatpush.bf16.msra.mxu0 %v362
    %1798 = vmatpush.bf16.msra.mxu0 %v358
    %1799 = vmatpush.bf16.msra.mxu0 %v354
    %1800 = vmatpush.bf16.msra.mxu0 %v350
    %1801 = vmatpush.bf16.msra.mxu0 %v346
    %1802 = vmatmul.bf16.gmra.mxu0 %v1753
    %v1803 = vpop.f32.mrf.mxu0
    %v1804 = vadd.f32 0.0, %v1803
    %v1805 = vpop.f32.mrf.mxu0
    %1806 = vdwg.mxu0
    %v1811 = vrot.slane %v1778, 7
    %v1812 = vrot.slane %v1791, 6
    %v1813 = vrot.slane %v1804, 5
    %v1814 = vsel %vm466, %v1765, %v1811
    %v1815 = vsel %vm468, %v1812, %v1813
    %v1816 = vsel %vm470, %v1814, %v1815
    %v1817 = vsel %vm472, %v1765, %v1811
    %v1818 = vsel %vm474, %v1812, %v1813
    %v1819 = vsel %vm476, %v1817, %v1818
    %v1820 = vrot.slane %v1819, 1
    %v1821 = vsel %vm468, %v1765, %v1811
    %v1822 = vsel %vm480, %v1812, %v1813
    %v1823 = vsel %vm482, %v1821, %v1822
    %v1824 = vrot.slane %v1823, 2
    %v1825 = vsel %vm474, %v1765, %v1811
    %v1826 = vsel %vm486, %v1812, %v1813
    %v1827 = vsel %vm488, %v1825, %v1826
    %v1828 = vrot.slane %v1827, 3
    %v1833 = vadd.f32 %v1728, %v1816
    %v1834 = vadd.f32 %v1730, %v1820
    %v1835 = vadd.f32 %v1732, %v1824
    %v1836 = vadd.f32 %v1734, %v1828
    %v1837 = vxor.u32 %v1833, 2147483648
    %v1838 = vxor.u32 %v1834, 2147483648
    %v1839 = vxor.u32 %v1835, 2147483648
    %v1840 = vxor.u32 %v1836, 2147483648
    %v1841 = vmul.f32 %v1837, 1.442695
    %v1842 = vpow.pop %v1841
    %v1843 = vmul.f32 %v1838, 1.442695
    %v1844 = vpow.pop %v1843
    %v1845 = vmul.f32 %v1839, 1.442695
    %v1846 = vpow.pop %v1845
    %v1847 = vmul.f32 %v1840, 1.442695
    %v1848 = vpow.pop %v1847
    %v1849 = vadd.f32 %v1842, 1.0
    %v1850 = vadd.f32 %v1844, 1.0
    %v1851 = vadd.f32 %v1846, 1.0
    %v1852 = vadd.f32 %v1848, 1.0
    %v1853 = vrcp.pop %v1849
    %v1854 = vmul.f32 %v1849, %v1853
    %v1855 = vsub.f32 1.0, %v1854
    %v1856 = vmul.f32 %v1853, %v1855
    %v1857 = vadd.f32 %v1853, %v1856
    %vm1858 = vweird.f32 %v1849
    %vm1859 = vweird.f32 %v1853
    %vm1860 = vmor %vm1858, %vm1859
    %v1861 = vsel %vm1860, %v1853, %v1857
    %v1862 = vand.u32 2147483647, %v1849
    %vm1863 = vcmp.eq.f32.partialorder %v1862, 8.507059e+37
    %v1864 = vand.u32 %v1849, 2147483648
    %v1865 = vor.u32 1.1754944e-38, %v1864
    %v1866 = vsel %vm1863, %v1865, %v1861
    %v1867 = vmul.f32 1.0, %v1866
    %v1868 = vrcp.pop %v1850
    %v1869 = vmul.f32 %v1850, %v1868
    %v1870 = vsub.f32 1.0, %v1869
    %v1871 = vmul.f32 %v1868, %v1870
    %v1872 = vadd.f32 %v1868, %v1871
    %vm1873 = vweird.f32 %v1850
    %vm1874 = vweird.f32 %v1868
    %vm1875 = vmor %vm1873, %vm1874
    %v1876 = vsel %vm1875, %v1868, %v1872
    %v1877 = vand.u32 2147483647, %v1850
    %vm1878 = vcmp.eq.f32.partialorder %v1877, 8.507059e+37
    %v1879 = vand.u32 %v1850, 2147483648
    %v1880 = vor.u32 1.1754944e-38, %v1879
    %v1881 = vsel %vm1878, %v1880, %v1876
    %v1882 = vmul.f32 1.0, %v1881
    %v1883 = vrcp.pop %v1851
    %v1884 = vmul.f32 %v1851, %v1883
    %v1885 = vsub.f32 1.0, %v1884
    %v1886 = vmul.f32 %v1883, %v1885
    %v1887 = vadd.f32 %v1883, %v1886
    %vm1888 = vweird.f32 %v1851
    %vm1889 = vweird.f32 %v1883
    %vm1890 = vmor %vm1888, %vm1889
    %v1891 = vsel %vm1890, %v1883, %v1887
    %v1892 = vand.u32 2147483647, %v1851
    %vm1893 = vcmp.eq.f32.partialorder %v1892, 8.507059e+37
    %v1894 = vand.u32 %v1851, 2147483648
    %v1895 = vor.u32 1.1754944e-38, %v1894
    %v1896 = vsel %vm1893, %v1895, %v1891
    %v1897 = vmul.f32 1.0, %v1896
    %v1898 = vrcp.pop %v1852
    %v1899 = vmul.f32 %v1852, %v1898
    %v1900 = vsub.f32 1.0, %v1899
    %v1901 = vmul.f32 %v1898, %v1900
    %v1902 = vadd.f32 %v1898, %v1901
    %vm1903 = vweird.f32 %v1852
    %vm1904 = vweird.f32 %v1898
    %vm1905 = vmor %vm1903, %vm1904
    %v1906 = vsel %vm1905, %v1898, %v1902
    %v1907 = vand.u32 2147483647, %v1852
    %vm1908 = vcmp.eq.f32.partialorder %v1907, 8.507059e+37
    %v1909 = vand.u32 %v1852, 2147483648
    %v1910 = vor.u32 1.1754944e-38, %v1909
    %v1911 = vsel %vm1908, %v1910, %v1906
    %v1912 = vmul.f32 1.0, %v1911
    %v1917 = vrot.slane %v1833, 1
    %v1918 = vrot.slane %v1834, 1
    %v1919 = vrot.slane %v1835, 1
    %v1920 = vrot.slane %v1836, 1
    %v1925 = vxor.u32 %v1917, 2147483648
    %v1926 = vxor.u32 %v1918, 2147483648
    %v1927 = vxor.u32 %v1919, 2147483648
    %v1928 = vxor.u32 %v1920, 2147483648
    %v1929 = vmul.f32 %v1925, 1.442695
    %v1930 = vpow.pop %v1929
    %v1931 = vmul.f32 %v1926, 1.442695
    %v1932 = vpow.pop %v1931
    %v1933 = vmul.f32 %v1927, 1.442695
    %v1934 = vpow.pop %v1933
    %v1935 = vmul.f32 %v1928, 1.442695
    %v1936 = vpow.pop %v1935
    %v1937 = vadd.f32 %v1930, 1.0
    %v1938 = vadd.f32 %v1932, 1.0
    %v1939 = vadd.f32 %v1934, 1.0
    %v1940 = vadd.f32 %v1936, 1.0
    %v1941 = vrcp.pop %v1937
    %v1942 = vmul.f32 %v1937, %v1941
    %v1943 = vsub.f32 1.0, %v1942
    %v1944 = vmul.f32 %v1941, %v1943
    %v1945 = vadd.f32 %v1941, %v1944
    %vm1946 = vweird.f32 %v1937
    %vm1947 = vweird.f32 %v1941
    %vm1948 = vmor %vm1946, %vm1947
    %v1949 = vsel %vm1948, %v1941, %v1945
    %v1950 = vand.u32 2147483647, %v1937
    %vm1951 = vcmp.eq.f32.partialorder %v1950, 8.507059e+37
    %v1952 = vand.u32 %v1937, 2147483648
    %v1953 = vor.u32 1.1754944e-38, %v1952
    %v1954 = vsel %vm1951, %v1953, %v1949
    %v1955 = vmul.f32 1.0, %v1954
    %v1956 = vrcp.pop %v1938
    %v1957 = vmul.f32 %v1938, %v1956
    %v1958 = vsub.f32 1.0, %v1957
    %v1959 = vmul.f32 %v1956, %v1958
    %v1960 = vadd.f32 %v1956, %v1959
    %vm1961 = vweird.f32 %v1938
    %vm1962 = vweird.f32 %v1956
    %vm1963 = vmor %vm1961, %vm1962
    %v1964 = vsel %vm1963, %v1956, %v1960
    %v1965 = vand.u32 2147483647, %v1938
    %vm1966 = vcmp.eq.f32.partialorder %v1965, 8.507059e+37
    %v1967 = vand.u32 %v1938, 2147483648
    %v1968 = vor.u32 1.1754944e-38, %v1967
    %v1969 = vsel %vm1966, %v1968, %v1964
    %v1970 = vmul.f32 1.0, %v1969
    %v1971 = vrcp.pop %v1939
    %v1972 = vmul.f32 %v1939, %v1971
    %v1973 = vsub.f32 1.0, %v1972
    %v1974 = vmul.f32 %v1971, %v1973
    %v1975 = vadd.f32 %v1971, %v1974
    %vm1976 = vweird.f32 %v1939
    %vm1977 = vweird.f32 %v1971
    %vm1978 = vmor %vm1976, %vm1977
    %v1979 = vsel %vm1978, %v1971, %v1975
    %v1980 = vand.u32 2147483647, %v1939
    %vm1981 = vcmp.eq.f32.partialorder %v1980, 8.507059e+37
    %v1982 = vand.u32 %v1939, 2147483648
    %v1983 = vor.u32 1.1754944e-38, %v1982
    %v1984 = vsel %vm1981, %v1983, %v1979
    %v1985 = vmul.f32 1.0, %v1984
    %v1986 = vrcp.pop %v1940
    %v1987 = vmul.f32 %v1940, %v1986
    %v1988 = vsub.f32 1.0, %v1987
    %v1989 = vmul.f32 %v1986, %v1988
    %v1990 = vadd.f32 %v1986, %v1989
    %vm1991 = vweird.f32 %v1940
    %vm1992 = vweird.f32 %v1986
    %vm1993 = vmor %vm1991, %vm1992
    %v1994 = vsel %vm1993, %v1986, %v1990
    %v1995 = vand.u32 2147483647, %v1940
    %vm1996 = vcmp.eq.f32.partialorder %v1995, 8.507059e+37
    %v1997 = vand.u32 %v1940, 2147483648
    %v1998 = vor.u32 1.1754944e-38, %v1997
    %v1999 = vsel %vm1996, %v1998, %v1994
    %v2000 = vmul.f32 1.0, %v1999
    %v2001 = vrot.slane %v1833, 2
    %v2002 = vrot.slane %v1834, 2
    %v2003 = vrot.slane %v1835, 2
    %v2004 = vrot.slane %v1836, 2
    %v2009 = vtanh.pop %v2001
    %v2010 = vtanh.pop %v2002
    %v2011 = vtanh.pop %v2003
    %v2012 = vtanh.pop %v2004
    %v2013 = vrot.slane %v1833, 3
    %v2014 = vrot.slane %v1834, 3
    %v2015 = vrot.slane %v1835, 3
    %v2016 = vrot.slane %v1836, 3
    %v2021 = vxor.u32 %v2013, 2147483648
    %v2022 = vxor.u32 %v2014, 2147483648
    %v2023 = vxor.u32 %v2015, 2147483648
    %v2024 = vxor.u32 %v2016, 2147483648
    %v2025 = vmul.f32 %v2021, 1.442695
    %v2026 = vpow.pop %v2025
    %v2027 = vmul.f32 %v2022, 1.442695
    %v2028 = vpow.pop %v2027
    %v2029 = vmul.f32 %v2023, 1.442695
    %v2030 = vpow.pop %v2029
    %v2031 = vmul.f32 %v2024, 1.442695
    %v2032 = vpow.pop %v2031
    %v2033 = vadd.f32 %v2026, 1.0
    %v2034 = vadd.f32 %v2028, 1.0
    %v2035 = vadd.f32 %v2030, 1.0
    %v2036 = vadd.f32 %v2032, 1.0
    %v2037 = vrcp.pop %v2033
    %v2038 = vmul.f32 %v2033, %v2037
    %v2039 = vsub.f32 1.0, %v2038
    %v2040 = vmul.f32 %v2037, %v2039
    %v2041 = vadd.f32 %v2037, %v2040
    %vm2042 = vweird.f32 %v2033
    %vm2043 = vweird.f32 %v2037
    %vm2044 = vmor %vm2042, %vm2043
    %v2045 = vsel %vm2044, %v2037, %v2041
    %v2046 = vand.u32 2147483647, %v2033
    %vm2047 = vcmp.eq.f32.partialorder %v2046, 8.507059e+37
    %v2048 = vand.u32 %v2033, 2147483648
    %v2049 = vor.u32 1.1754944e-38, %v2048
    %v2050 = vsel %vm2047, %v2049, %v2045
    %v2051 = vmul.f32 1.0, %v2050
    %v2052 = vrcp.pop %v2034
    %v2053 = vmul.f32 %v2034, %v2052
    %v2054 = vsub.f32 1.0, %v2053
    %v2055 = vmul.f32 %v2052, %v2054
    %v2056 = vadd.f32 %v2052, %v2055
    %vm2057 = vweird.f32 %v2034
    %vm2058 = vweird.f32 %v2052
    %vm2059 = vmor %vm2057, %vm2058
    %v2060 = vsel %vm2059, %v2052, %v2056
    %v2061 = vand.u32 2147483647, %v2034
    %vm2062 = vcmp.eq.f32.partialorder %v2061, 8.507059e+37
    %v2063 = vand.u32 %v2034, 2147483648
    %v2064 = vor.u32 1.1754944e-38, %v2063
    %v2065 = vsel %vm2062, %v2064, %v2060
    %v2066 = vmul.f32 1.0, %v2065
    %v2067 = vrcp.pop %v2035
    %v2068 = vmul.f32 %v2035, %v2067
    %v2069 = vsub.f32 1.0, %v2068
    %v2070 = vmul.f32 %v2067, %v2069
    %v2071 = vadd.f32 %v2067, %v2070
    %vm2072 = vweird.f32 %v2035
    %vm2073 = vweird.f32 %v2067
    %vm2074 = vmor %vm2072, %vm2073
    %v2075 = vsel %vm2074, %v2067, %v2071
    %v2076 = vand.u32 2147483647, %v2035
    %vm2077 = vcmp.eq.f32.partialorder %v2076, 8.507059e+37
    %v2078 = vand.u32 %v2035, 2147483648
    %v2079 = vor.u32 1.1754944e-38, %v2078
    %v2080 = vsel %vm2077, %v2079, %v2075
    %v2081 = vmul.f32 1.0, %v2080
    %v2082 = vrcp.pop %v2036
    %v2083 = vmul.f32 %v2036, %v2082
    %v2084 = vsub.f32 1.0, %v2083
    %v2085 = vmul.f32 %v2082, %v2084
    %v2086 = vadd.f32 %v2082, %v2085
    %vm2087 = vweird.f32 %v2036
    %vm2088 = vweird.f32 %v2082
    %vm2089 = vmor %vm2087, %vm2088
    %v2090 = vsel %vm2089, %v2082, %v2086
    %v2091 = vand.u32 2147483647, %v2036
    %vm2092 = vcmp.eq.f32.partialorder %v2091, 8.507059e+37
    %v2093 = vand.u32 %v2036, 2147483648
    %v2094 = vor.u32 1.1754944e-38, %v2093
    %v2095 = vsel %vm2092, %v2094, %v2090
    %v2096 = vmul.f32 1.0, %v2095
    %v2097 = vmul.f32 %v1955, %v1656
    %v2098 = vmul.f32 %v1970, %v1657
    %v2099 = vmul.f32 %v1985, %v1658
    %v2100 = vmul.f32 %v2000, %v1659
    %v2101 = vmul.f32 %v1867, %v2009
    %v2102 = vmul.f32 %v1882, %v2010
    %v2103 = vmul.f32 %v1897, %v2011
    %v2104 = vmul.f32 %v1912, %v2012
    %v2105 = vadd.f32 %v2097, %v2101
    %v2106 = vadd.f32 %v2098, %v2102
    %v2107 = vadd.f32 %v2099, %v2103
    %v2108 = vadd.f32 %v2100, %v2104
    %v2109 = vtanh.pop %v2105
    %v2110 = vtanh.pop %v2106
    %v2111 = vtanh.pop %v2107
    %v2112 = vtanh.pop %v2108
    %v2113 = vmul.f32 %v2051, %v2109
    %v2114 = vmul.f32 %v2066, %v2110
    %v2115 = vmul.f32 %v2081, %v2111
    %v2116 = vmul.f32 %v2096, %v2112
    %v2117 = vld [vmem:[%s4 + $0x3] sm:$0x1]
    %v2118 = vld [vmem:[%s4 + $0xb] sm:$0x1]
    %v2119 = vld [vmem:[%s4 + $0x13] sm:$0x1]
    %v2120 = vld [vmem:[%s4 + $0x1b] sm:$0x1]
    %2122 = vset.pattern.permute.xlu0 0
    %2123 = vperm.xlu0 %2122, %v2117
    %v2124 = vpop.permute.xlu0 %2123
    %2127 = vset.pattern.permute.xlu0 0
    %2128 = vperm.xlu0 %2127, %v2118
    %v2129 = vpop.permute.xlu0 %2128
    %2132 = vset.pattern.permute.xlu0 0
    %2133 = vperm.xlu0 %2132, %v2119
    %v2134 = vpop.permute.xlu0 %2133
    %2137 = vset.pattern.permute.xlu0 0
    %2138 = vperm.xlu0 %2137, %v2120
    %v2139 = vpop.permute.xlu0 %2138
    %v2141 = vmul.f32 %v2113, %v2124
    %v2142 = vmul.f32 %v2114, %v2129
    %v2143 = vmul.f32 %v2115, %v2134
    %v2144 = vmul.f32 %v2116, %v2139
    %v2145 = vpack.c.bf16 %v2141, %v2141
    %v2146 = vpack.c.bf16 %v2142, %v2142
    %v2147 = vpack.c.bf16 %v2143, %v2143
    %v2148 = vpack.c.bf16 %v2144, %v2144
    %v2150 = vshll.u32 %v2145, 16
    %v2152 = vrot.slane %v2150, 7
    %v2154 = vshll.u32 %v2146, 16
    %v2156 = vrot.slane %v2154, 7
    %v2158 = vshll.u32 %v2147, 16
    %v2160 = vrot.slane %v2158, 7
    %v2162 = vshll.u32 %v2148, 16
    %v2164 = vrot.slane %v2162, 7
    %vm2169 = vsmask.f32 7942
    %vm2170 = vmand %vm1712, %vm2169
    %v2171 = vld [vmem:[%s5] sm:$0x2]
    %v2172 = vsel %vm2170, %v2152, %v2171
    %2173 = vst [vmem:[%s5] sm:$0x2] %v2172
    %v2174 = vld [vmem:[%s5 + $0x4] sm:$0x2]
    %v2175 = vsel %vm2170, %v2156, %v2174
    %2176 = vst [vmem:[%s5 + $0x4] sm:$0x2] %v2175
    %v2177 = vld [vmem:[%s5 + $0x8] sm:$0x2]
    %v2178 = vsel %vm2170, %v2160, %v2177
    %2179 = vst [vmem:[%s5 + $0x8] sm:$0x2] %v2178
    %v2180 = vld [vmem:[%s5 + $0xc] sm:$0x2]
    %v2181 = vsel %vm2170, %v2164, %v2180
    %2182 = vst [vmem:[%s5 + $0xc] sm:$0x2] %v2181
    %s2183 = scalar_lea.vmem [#allocation2], 4
    %v2184 = vld [vmem:[%s2183] ss:$8 sm:$0xf]
    %s2185 = scalar_lea.vmem [#allocation2], 36
    %v2186 = vld [vmem:[%s2185] ss:$8 sm:$0xf]
    %s2187 = scalar_lea.vmem [#allocation2], 68
    %v2188 = vld [vmem:[%s2187] ss:$8 sm:$0xf]
    %s2189 = scalar_lea.vmem [#allocation2], 100
    %v2190 = vld [vmem:[%s2189] ss:$8 sm:$0xf]
    %v2191 = vpack.c.bf16 %v2113, %v2113
    %v2192 = vpack.c.bf16 %v2114, %v2114
    %v2193 = vpack.c.bf16 %v2115, %v2115
    %v2194 = vpack.c.bf16 %v2116, %v2116
    %v2199 = vunpack.c.l.b16 %v2191
    %v2200 = vunpack.c.l.b16 %v2192
    %v2201 = vunpack.c.l.b16 %v2193
    %v2202 = vunpack.c.l.b16 %v2194
    %v2203 = vrot.slane %v2200, 7
    %v2204 = vsel %vm472, %v2203, %v2199
    %v2205 = vrot.slane %v2201, 6
    %v2206 = vsel %vm468, %v2205, %v2204
    %v2207 = vrot.slane %v2202, 5
    %v2208 = vsel %vm474, %v2207, %v2206
    %v2209 = vpack.c.b16 %v2208, %v2208
    %2211 = vmatpush.bf16.msra.mxu0 %v371
    %2212 = vmatpush.bf16.msra.mxu0 %v367
    %2213 = vmatpush.bf16.msra.mxu0 %v363
    %2214 = vmatpush.bf16.msra.mxu0 %v359
    %2215 = vmatpush.bf16.msra.mxu0 %v355
    %2216 = vmatpush.bf16.msra.mxu0 %v351
    %2217 = vmatpush.bf16.msra.mxu0 %v347
    %2218 = vmatpush.bf16.msra.mxu0 %v343
    %2219 = vmatmul.bf16.gmra.mxu0 %v2209
    %v2220 = vpop.f32.mrf.mxu0
    %v2221 = vadd.f32 0.0, %v2220
    %v2222 = vpop.f32.mrf.mxu0
    %2223 = vdwg.mxu0
    %2224 = vmatpush.bf16.msra.mxu0 %v372
    %2225 = vmatpush.bf16.msra.mxu0 %v368
    %2226 = vmatpush.bf16.msra.mxu0 %v364
    %2227 = vmatpush.bf16.msra.mxu0 %v360
    %2228 = vmatpush.bf16.msra.mxu0 %v356
    %2229 = vmatpush.bf16.msra.mxu0 %v352
    %2230 = vmatpush.bf16.msra.mxu0 %v348
    %2231 = vmatpush.bf16.msra.mxu0 %v344
    %2232 = vmatmul.bf16.gmra.mxu0 %v2209
    %v2233 = vpop.f32.mrf.mxu0
    %v2234 = vadd.f32 0.0, %v2233
    %v2235 = vpop.f32.mrf.mxu0
    %2236 = vdwg.mxu0
    %2237 = vmatpush.bf16.msra.mxu0 %v373
    %2238 = vmatpush.bf16.msra.mxu0 %v369
    %2239 = vmatpush.bf16.msra.mxu0 %v365
    %2240 = vmatpush.bf16.msra.mxu0 %v361
    %2241 = vmatpush.bf16.msra.mxu0 %v357
    %2242 = vmatpush.bf16.msra.mxu0 %v353
    %2243 = vmatpush.bf16.msra.mxu0 %v349
    %2244 = vmatpush.bf16.msra.mxu0 %v345
    %2245 = vmatmul.bf16.gmra.mxu0 %v2209
    %v2246 = vpop.f32.mrf.mxu0
    %v2247 = vadd.f32 0.0, %v2246
    %v2248 = vpop.f32.mrf.mxu0
    %2249 = vdwg.mxu0
    %2250 = vmatpush.bf16.msra.mxu0 %v374
    %2251 = vmatpush.bf16.msra.mxu0 %v370
    %2252 = vmatpush.bf16.msra.mxu0 %v366
    %2253 = vmatpush.bf16.msra.mxu0 %v362
    %2254 = vmatpush.bf16.msra.mxu0 %v358
    %2255 = vmatpush.bf16.msra.mxu0 %v354
    %2256 = vmatpush.bf16.msra.mxu0 %v350
    %2257 = vmatpush.bf16.msra.mxu0 %v346
    %2258 = vmatmul.bf16.gmra.mxu0 %v2209
    %v2259 = vpop.f32.mrf.mxu0
    %v2260 = vadd.f32 0.0, %v2259
    %v2261 = vpop.f32.mrf.mxu0
    %2262 = vdwg.mxu0
    %v2267 = vrot.slane %v2234, 7
    %v2268 = vrot.slane %v2247, 6
    %v2269 = vrot.slane %v2260, 5
    %v2270 = vsel %vm466, %v2221, %v2267
    %v2271 = vsel %vm468, %v2268, %v2269
    %v2272 = vsel %vm470, %v2270, %v2271
    %v2273 = vsel %vm472, %v2221, %v2267
    %v2274 = vsel %vm474, %v2268, %v2269
    %v2275 = vsel %vm476, %v2273, %v2274
    %v2276 = vrot.slane %v2275, 1
    %v2277 = vsel %vm468, %v2221, %v2267
    %v2278 = vsel %vm480, %v2268, %v2269
    %v2279 = vsel %vm482, %v2277, %v2278
    %v2280 = vrot.slane %v2279, 2
    %v2281 = vsel %vm474, %v2221, %v2267
    %v2282 = vsel %vm486, %v2268, %v2269
    %v2283 = vsel %vm488, %v2281, %v2282
    %v2284 = vrot.slane %v2283, 3
    %v2289 = vadd.f32 %v2184, %v2272
    %v2290 = vadd.f32 %v2186, %v2276
    %v2291 = vadd.f32 %v2188, %v2280
    %v2292 = vadd.f32 %v2190, %v2284
    %v2293 = vxor.u32 %v2289, 2147483648
    %v2294 = vxor.u32 %v2290, 2147483648
    %v2295 = vxor.u32 %v2291, 2147483648
    %v2296 = vxor.u32 %v2292, 2147483648
    %v2297 = vmul.f32 %v2293, 1.442695
    %v2298 = vpow.pop %v2297
    %v2299 = vmul.f32 %v2294, 1.442695
    %v2300 = vpow.pop %v2299
    %v2301 = vmul.f32 %v2295, 1.442695
    %v2302 = vpow.pop %v2301
    %v2303 = vmul.f32 %v2296, 1.442695
    %v2304 = vpow.pop %v2303
    %v2305 = vadd.f32 %v2298, 1.0
    %v2306 = vadd.f32 %v2300, 1.0
    %v2307 = vadd.f32 %v2302, 1.0
    %v2308 = vadd.f32 %v2304, 1.0
    %v2309 = vrcp.pop %v2305
    %v2310 = vmul.f32 %v2305, %v2309
    %v2311 = vsub.f32 1.0, %v2310
    %v2312 = vmul.f32 %v2309, %v2311
    %v2313 = vadd.f32 %v2309, %v2312
    %vm2314 = vweird.f32 %v2305
    %vm2315 = vweird.f32 %v2309
    %vm2316 = vmor %vm2314, %vm2315
    %v2317 = vsel %vm2316, %v2309, %v2313
    %v2318 = vand.u32 2147483647, %v2305
    %vm2319 = vcmp.eq.f32.partialorder %v2318, 8.507059e+37
    %v2320 = vand.u32 %v2305, 2147483648
    %v2321 = vor.u32 1.1754944e-38, %v2320
    %v2322 = vsel %vm2319, %v2321, %v2317
    %v2323 = vmul.f32 1.0, %v2322
    %v2324 = vrcp.pop %v2306
    %v2325 = vmul.f32 %v2306, %v2324
    %v2326 = vsub.f32 1.0, %v2325
    %v2327 = vmul.f32 %v2324, %v2326
    %v2328 = vadd.f32 %v2324, %v2327
    %vm2329 = vweird.f32 %v2306
    %vm2330 = vweird.f32 %v2324
    %vm2331 = vmor %vm2329, %vm2330
    %v2332 = vsel %vm2331, %v2324, %v2328
    %v2333 = vand.u32 2147483647, %v2306
    %vm2334 = vcmp.eq.f32.partialorder %v2333, 8.507059e+37
    %v2335 = vand.u32 %v2306, 2147483648
    %v2336 = vor.u32 1.1754944e-38, %v2335
    %v2337 = vsel %vm2334, %v2336, %v2332
    %v2338 = vmul.f32 1.0, %v2337
    %v2339 = vrcp.pop %v2307
    %v2340 = vmul.f32 %v2307, %v2339
    %v2341 = vsub.f32 1.0, %v2340
    %v2342 = vmul.f32 %v2339, %v2341
    %v2343 = vadd.f32 %v2339, %v2342
    %vm2344 = vweird.f32 %v2307
    %vm2345 = vweird.f32 %v2339
    %vm2346 = vmor %vm2344, %vm2345
    %v2347 = vsel %vm2346, %v2339, %v2343
    %v2348 = vand.u32 2147483647, %v2307
    %vm2349 = vcmp.eq.f32.partialorder %v2348, 8.507059e+37
    %v2350 = vand.u32 %v2307, 2147483648
    %v2351 = vor.u32 1.1754944e-38, %v2350
    %v2352 = vsel %vm2349, %v2351, %v2347
    %v2353 = vmul.f32 1.0, %v2352
    %v2354 = vrcp.pop %v2308
    %v2355 = vmul.f32 %v2308, %v2354
    %v2356 = vsub.f32 1.0, %v2355
    %v2357 = vmul.f32 %v2354, %v2356
    %v2358 = vadd.f32 %v2354, %v2357
    %vm2359 = vweird.f32 %v2308
    %vm2360 = vweird.f32 %v2354
    %vm2361 = vmor %vm2359, %vm2360
    %v2362 = vsel %vm2361, %v2354, %v2358
    %v2363 = vand.u32 2147483647, %v2308
    %vm2364 = vcmp.eq.f32.partialorder %v2363, 8.507059e+37
    %v2365 = vand.u32 %v2308, 2147483648
    %v2366 = vor.u32 1.1754944e-38, %v2365
    %v2367 = vsel %vm2364, %v2366, %v2362
    %v2368 = vmul.f32 1.0, %v2367
    %v2373 = vrot.slane %v2289, 1
    %v2374 = vrot.slane %v2290, 1
    %v2375 = vrot.slane %v2291, 1
    %v2376 = vrot.slane %v2292, 1
    %v2381 = vxor.u32 %v2373, 2147483648
    %v2382 = vxor.u32 %v2374, 2147483648
    %v2383 = vxor.u32 %v2375, 2147483648
    %v2384 = vxor.u32 %v2376, 2147483648
    %v2385 = vmul.f32 %v2381, 1.442695
    %v2386 = vpow.pop %v2385
    %v2387 = vmul.f32 %v2382, 1.442695
    %v2388 = vpow.pop %v2387
    %v2389 = vmul.f32 %v2383, 1.442695
    %v2390 = vpow.pop %v2389
    %v2391 = vmul.f32 %v2384, 1.442695
    %v2392 = vpow.pop %v2391
    %v2393 = vadd.f32 %v2386, 1.0
    %v2394 = vadd.f32 %v2388, 1.0
    %v2395 = vadd.f32 %v2390, 1.0
    %v2396 = vadd.f32 %v2392, 1.0
    %v2397 = vrcp.pop %v2393
    %v2398 = vmul.f32 %v2393, %v2397
    %v2399 = vsub.f32 1.0, %v2398
    %v2400 = vmul.f32 %v2397, %v2399
    %v2401 = vadd.f32 %v2397, %v2400
    %vm2402 = vweird.f32 %v2393
    %vm2403 = vweird.f32 %v2397
    %vm2404 = vmor %vm2402, %vm2403
    %v2405 = vsel %vm2404, %v2397, %v2401
    %v2406 = vand.u32 2147483647, %v2393
    %vm2407 = vcmp.eq.f32.partialorder %v2406, 8.507059e+37
    %v2408 = vand.u32 %v2393, 2147483648
    %v2409 = vor.u32 1.1754944e-38, %v2408
    %v2410 = vsel %vm2407, %v2409, %v2405
    %v2411 = vmul.f32 1.0, %v2410
    %v2412 = vrcp.pop %v2394
    %v2413 = vmul.f32 %v2394, %v2412
    %v2414 = vsub.f32 1.0, %v2413
    %v2415 = vmul.f32 %v2412, %v2414
    %v2416 = vadd.f32 %v2412, %v2415
    %vm2417 = vweird.f32 %v2394
    %vm2418 = vweird.f32 %v2412
    %vm2419 = vmor %vm2417, %vm2418
    %v2420 = vsel %vm2419, %v2412, %v2416
    %v2421 = vand.u32 2147483647, %v2394
    %vm2422 = vcmp.eq.f32.partialorder %v2421, 8.507059e+37
    %v2423 = vand.u32 %v2394, 2147483648
    %v2424 = vor.u32 1.1754944e-38, %v2423
    %v2425 = vsel %vm2422, %v2424, %v2420
    %v2426 = vmul.f32 1.0, %v2425
    %v2427 = vrcp.pop %v2395
    %v2428 = vmul.f32 %v2395, %v2427
    %v2429 = vsub.f32 1.0, %v2428
    %v2430 = vmul.f32 %v2427, %v2429
    %v2431 = vadd.f32 %v2427, %v2430
    %vm2432 = vweird.f32 %v2395
    %vm2433 = vweird.f32 %v2427
    %vm2434 = vmor %vm2432, %vm2433
    %v2435 = vsel %vm2434, %v2427, %v2431
    %v2436 = vand.u32 2147483647, %v2395
    %vm2437 = vcmp.eq.f32.partialorder %v2436, 8.507059e+37
    %v2438 = vand.u32 %v2395, 2147483648
    %v2439 = vor.u32 1.1754944e-38, %v2438
    %v2440 = vsel %vm2437, %v2439, %v2435
    %v2441 = vmul.f32 1.0, %v2440
    %v2442 = vrcp.pop %v2396
    %v2443 = vmul.f32 %v2396, %v2442
    %v2444 = vsub.f32 1.0, %v2443
    %v2445 = vmul.f32 %v2442, %v2444
    %v2446 = vadd.f32 %v2442, %v2445
    %vm2447 = vweird.f32 %v2396
    %vm2448 = vweird.f32 %v2442
    %vm2449 = vmor %vm2447, %vm2448
    %v2450 = vsel %vm2449, %v2442, %v2446
    %v2451 = vand.u32 2147483647, %v2396
    %vm2452 = vcmp.eq.f32.partialorder %v2451, 8.507059e+37
    %v2453 = vand.u32 %v2396, 2147483648
    %v2454 = vor.u32 1.1754944e-38, %v2453
    %v2455 = vsel %vm2452, %v2454, %v2450
    %v2456 = vmul.f32 1.0, %v2455
    %v2457 = vrot.slane %v2289, 2
    %v2458 = vrot.slane %v2290, 2
    %v2459 = vrot.slane %v2291, 2
    %v2460 = vrot.slane %v2292, 2
    %v2465 = vtanh.pop %v2457
    %v2466 = vtanh.pop %v2458
    %v2467 = vtanh.pop %v2459
    %v2468 = vtanh.pop %v2460
    %v2469 = vrot.slane %v2289, 3
    %v2470 = vrot.slane %v2290, 3
    %v2471 = vrot.slane %v2291, 3
    %v2472 = vrot.slane %v2292, 3
    %v2477 = vxor.u32 %v2469, 2147483648
    %v2478 = vxor.u32 %v2470, 2147483648
    %v2479 = vxor.u32 %v2471, 2147483648
    %v2480 = vxor.u32 %v2472, 2147483648
    %v2481 = vmul.f32 %v2477, 1.442695
    %v2482 = vpow.pop %v2481
    %v2483 = vmul.f32 %v2478, 1.442695
    %v2484 = vpow.pop %v2483
    %v2485 = vmul.f32 %v2479, 1.442695
    %v2486 = vpow.pop %v2485
    %v2487 = vmul.f32 %v2480, 1.442695
    %v2488 = vpow.pop %v2487
    %v2489 = vadd.f32 %v2482, 1.0
    %v2490 = vadd.f32 %v2484, 1.0
    %v2491 = vadd.f32 %v2486, 1.0
    %v2492 = vadd.f32 %v2488, 1.0
    %v2493 = vrcp.pop %v2489
    %v2494 = vmul.f32 %v2489, %v2493
    %v2495 = vsub.f32 1.0, %v2494
    %v2496 = vmul.f32 %v2493, %v2495
    %v2497 = vadd.f32 %v2493, %v2496
    %vm2498 = vweird.f32 %v2489
    %vm2499 = vweird.f32 %v2493
    %vm2500 = vmor %vm2498, %vm2499
    %v2501 = vsel %vm2500, %v2493, %v2497
    %v2502 = vand.u32 2147483647, %v2489
    %vm2503 = vcmp.eq.f32.partialorder %v2502, 8.507059e+37
    %v2504 = vand.u32 %v2489, 2147483648
    %v2505 = vor.u32 1.1754944e-38, %v2504
    %v2506 = vsel %vm2503, %v2505, %v2501
    %v2507 = vmul.f32 1.0, %v2506
    %v2508 = vrcp.pop %v2490
    %v2509 = vmul.f32 %v2490, %v2508
    %v2510 = vsub.f32 1.0, %v2509
    %v2511 = vmul.f32 %v2508, %v2510
    %v2512 = vadd.f32 %v2508, %v2511
    %vm2513 = vweird.f32 %v2490
    %vm2514 = vweird.f32 %v2508
    %vm2515 = vmor %vm2513, %vm2514
    %v2516 = vsel %vm2515, %v2508, %v2512
    %v2517 = vand.u32 2147483647, %v2490
    %vm2518 = vcmp.eq.f32.partialorder %v2517, 8.507059e+37
    %v2519 = vand.u32 %v2490, 2147483648
    %v2520 = vor.u32 1.1754944e-38, %v2519
    %v2521 = vsel %vm2518, %v2520, %v2516
    %v2522 = vmul.f32 1.0, %v2521
    %v2523 = vrcp.pop %v2491
    %v2524 = vmul.f32 %v2491, %v2523
    %v2525 = vsub.f32 1.0, %v2524
    %v2526 = vmul.f32 %v2523, %v2525
    %v2527 = vadd.f32 %v2523, %v2526
    %vm2528 = vweird.f32 %v2491
    %vm2529 = vweird.f32 %v2523
    %vm2530 = vmor %vm2528, %vm2529
    %v2531 = vsel %vm2530, %v2523, %v2527
    %v2532 = vand.u32 2147483647, %v2491
    %vm2533 = vcmp.eq.f32.partialorder %v2532, 8.507059e+37
    %v2534 = vand.u32 %v2491, 2147483648
    %v2535 = vor.u32 1.1754944e-38, %v2534
    %v2536 = vsel %vm2533, %v2535, %v2531
    %v2537 = vmul.f32 1.0, %v2536
    %v2538 = vrcp.pop %v2492
    %v2539 = vmul.f32 %v2492, %v2538
    %v2540 = vsub.f32 1.0, %v2539
    %v2541 = vmul.f32 %v2538, %v2540
    %v2542 = vadd.f32 %v2538, %v2541
    %vm2543 = vweird.f32 %v2492
    %vm2544 = vweird.f32 %v2538
    %vm2545 = vmor %vm2543, %vm2544
    %v2546 = vsel %vm2545, %v2538, %v2542
    %v2547 = vand.u32 2147483647, %v2492
    %vm2548 = vcmp.eq.f32.partialorder %v2547, 8.507059e+37
    %v2549 = vand.u32 %v2492, 2147483648
    %v2550 = vor.u32 1.1754944e-38, %v2549
    %v2551 = vsel %vm2548, %v2550, %v2546
    %v2552 = vmul.f32 1.0, %v2551
    %v2553 = vmul.f32 %v2411, %v2105
    %v2554 = vmul.f32 %v2426, %v2106
    %v2555 = vmul.f32 %v2441, %v2107
    %v2556 = vmul.f32 %v2456, %v2108
    %v2557 = vmul.f32 %v2323, %v2465
    %v2558 = vmul.f32 %v2338, %v2466
    %v2559 = vmul.f32 %v2353, %v2467
    %v2560 = vmul.f32 %v2368, %v2468
    %v2561 = vadd.f32 %v2553, %v2557
    %v2562 = vadd.f32 %v2554, %v2558
    %v2563 = vadd.f32 %v2555, %v2559
    %v2564 = vadd.f32 %v2556, %v2560
    %v2565 = vtanh.pop %v2561
    %v2566 = vtanh.pop %v2562
    %v2567 = vtanh.pop %v2563
    %v2568 = vtanh.pop %v2564
    %v2569 = vmul.f32 %v2507, %v2565
    %v2570 = vmul.f32 %v2522, %v2566
    %v2571 = vmul.f32 %v2537, %v2567
    %v2572 = vmul.f32 %v2552, %v2568
    %v2573 = vld [vmem:[%s4 + $0x4] sm:$0x1]
    %v2574 = vld [vmem:[%s4 + $0xc] sm:$0x1]
    %v2575 = vld [vmem:[%s4 + $0x14] sm:$0x1]
    %v2576 = vld [vmem:[%s4 + $0x1c] sm:$0x1]
    %2578 = vset.pattern.permute.xlu0 0
    %2579 = vperm.xlu0 %2578, %v2573
    %v2580 = vpop.permute.xlu0 %2579
    %2583 = vset.pattern.permute.xlu0 0
    %2584 = vperm.xlu0 %2583, %v2574
    %v2585 = vpop.permute.xlu0 %2584
    %2588 = vset.pattern.permute.xlu0 0
    %2589 = vperm.xlu0 %2588, %v2575
    %v2590 = vpop.permute.xlu0 %2589
    %2593 = vset.pattern.permute.xlu0 0
    %2594 = vperm.xlu0 %2593, %v2576
    %v2595 = vpop.permute.xlu0 %2594
    %v2597 = vmul.f32 %v2569, %v2580
    %v2598 = vmul.f32 %v2570, %v2585
    %v2599 = vmul.f32 %v2571, %v2590
    %v2600 = vmul.f32 %v2572, %v2595
    %v2601 = vpack.c.bf16 %v2597, %v2597
    %v2602 = vpack.c.bf16 %v2598, %v2598
    %v2603 = vpack.c.bf16 %v2599, %v2599
    %v2604 = vpack.c.bf16 %v2600, %v2600
    %v2609 = vrot.slane %v2601, 6
    %v2610 = vrot.slane %v2602, 6
    %v2611 = vrot.slane %v2603, 6
    %v2612 = vrot.slane %v2604, 6
    %vm2617 = vcmask 1042434
    %vm2618 = vsmask.f32 2304
    %vm2619 = vmand %vm2617, %vm2618
    %v2620 = vld [vmem:[%s5] sm:$0x4]
    %v2621 = vsel %vm2619, %v2609, %v2620
    %2622 = vst [vmem:[%s5] sm:$0x4] %v2621
    %v2623 = vld [vmem:[%s5 + $0x4] sm:$0x4]
    %v2624 = vsel %vm2619, %v2610, %v2623
    %2625 = vst [vmem:[%s5 + $0x4] sm:$0x4] %v2624
    %v2626 = vld [vmem:[%s5 + $0x8] sm:$0x4]
    %v2627 = vsel %vm2619, %v2611, %v2626
    %2628 = vst [vmem:[%s5 + $0x8] sm:$0x4] %v2627
    %v2629 = vld [vmem:[%s5 + $0xc] sm:$0x4]
    %v2630 = vsel %vm2619, %v2612, %v2629
    %2631 = vst [vmem:[%s5 + $0xc] sm:$0x4] %v2630
    %s2632 = scalar_lea.vmem [#allocation2], 5
    %v2633 = vld [vmem:[%s2632] ss:$8 sm:$0xf]
    %s2634 = scalar_lea.vmem [#allocation2], 37
    %v2635 = vld [vmem:[%s2634] ss:$8 sm:$0xf]
    %s2636 = scalar_lea.vmem [#allocation2], 69
    %v2637 = vld [vmem:[%s2636] ss:$8 sm:$0xf]
    %s2638 = scalar_lea.vmem [#allocation2], 101
    %v2639 = vld [vmem:[%s2638] ss:$8 sm:$0xf]
    %v2640 = vpack.c.bf16 %v2569, %v2569
    %v2641 = vpack.c.bf16 %v2570, %v2570
    %v2642 = vpack.c.bf16 %v2571, %v2571
    %v2643 = vpack.c.bf16 %v2572, %v2572
    %v2648 = vunpack.c.l.b16 %v2640
    %v2649 = vunpack.c.l.b16 %v2641
    %v2650 = vunpack.c.l.b16 %v2642
    %v2651 = vunpack.c.l.b16 %v2643
    %v2652 = vrot.slane %v2649, 7
    %v2653 = vsel %vm472, %v2652, %v2648
    %v2654 = vrot.slane %v2650, 6
    %v2655 = vsel %vm468, %v2654, %v2653
    %v2656 = vrot.slane %v2651, 5
    %v2657 = vsel %vm474, %v2656, %v2655
    %v2658 = vpack.c.b16 %v2657, %v2657
    %2660 = vmatpush.bf16.msra.mxu0 %v371
    %2661 = vmatpush.bf16.msra.mxu0 %v367
    %2662 = vmatpush.bf16.msra.mxu0 %v363
    %2663 = vmatpush.bf16.msra.mxu0 %v359
    %2664 = vmatpush.bf16.msra.mxu0 %v355
    %2665 = vmatpush.bf16.msra.mxu0 %v351
    %2666 = vmatpush.bf16.msra.mxu0 %v347
    %2667 = vmatpush.bf16.msra.mxu0 %v343
    %2668 = vmatmul.bf16.gmra.mxu0 %v2658
    %v2669 = vpop.f32.mrf.mxu0
    %v2670 = vadd.f32 0.0, %v2669
    %v2671 = vpop.f32.mrf.mxu0
    %2672 = vdwg.mxu0
    %2673 = vmatpush.bf16.msra.mxu0 %v372
    %2674 = vmatpush.bf16.msra.mxu0 %v368
    %2675 = vmatpush.bf16.msra.mxu0 %v364
    %2676 = vmatpush.bf16.msra.mxu0 %v360
    %2677 = vmatpush.bf16.msra.mxu0 %v356
    %2678 = vmatpush.bf16.msra.mxu0 %v352
    %2679 = vmatpush.bf16.msra.mxu0 %v348
    %2680 = vmatpush.bf16.msra.mxu0 %v344
    %2681 = vmatmul.bf16.gmra.mxu0 %v2658
    %v2682 = vpop.f32.mrf.mxu0
    %v2683 = vadd.f32 0.0, %v2682
    %v2684 = vpop.f32.mrf.mxu0
    %2685 = vdwg.mxu0
    %2686 = vmatpush.bf16.msra.mxu0 %v373
    %2687 = vmatpush.bf16.msra.mxu0 %v369
    %2688 = vmatpush.bf16.msra.mxu0 %v365
    %2689 = vmatpush.bf16.msra.mxu0 %v361
    %2690 = vmatpush.bf16.msra.mxu0 %v357
    %2691 = vmatpush.bf16.msra.mxu0 %v353
    %2692 = vmatpush.bf16.msra.mxu0 %v349
    %2693 = vmatpush.bf16.msra.mxu0 %v345
    %2694 = vmatmul.bf16.gmra.mxu0 %v2658
    %v2695 = vpop.f32.mrf.mxu0
    %v2696 = vadd.f32 0.0, %v2695
    %v2697 = vpop.f32.mrf.mxu0
    %2698 = vdwg.mxu0
    %2699 = vmatpush.bf16.msra.mxu0 %v374
    %2700 = vmatpush.bf16.msra.mxu0 %v370
    %2701 = vmatpush.bf16.msra.mxu0 %v366
    %2702 = vmatpush.bf16.msra.mxu0 %v362
    %2703 = vmatpush.bf16.msra.mxu0 %v358
    %2704 = vmatpush.bf16.msra.mxu0 %v354
    %2705 = vmatpush.bf16.msra.mxu0 %v350
    %2706 = vmatpush.bf16.msra.mxu0 %v346
    %2707 = vmatmul.bf16.gmra.mxu0 %v2658
    %v2708 = vpop.f32.mrf.mxu0
    %v2709 = vadd.f32 0.0, %v2708
    %v2710 = vpop.f32.mrf.mxu0
    %2711 = vdwg.mxu0
    %v2716 = vrot.slane %v2683, 7
    %v2717 = vrot.slane %v2696, 6
    %v2718 = vrot.slane %v2709, 5
    %v2719 = vsel %vm466, %v2670, %v2716
    %v2720 = vsel %vm468, %v2717, %v2718
    %v2721 = vsel %vm470, %v2719, %v2720
    %v2722 = vsel %vm472, %v2670, %v2716
    %v2723 = vsel %vm474, %v2717, %v2718
    %v2724 = vsel %vm476, %v2722, %v2723
    %v2725 = vrot.slane %v2724, 1
    %v2726 = vsel %vm468, %v2670, %v2716
    %v2727 = vsel %vm480, %v2717, %v2718
    %v2728 = vsel %vm482, %v2726, %v2727
    %v2729 = vrot.slane %v2728, 2
    %v2730 = vsel %vm474, %v2670, %v2716
    %v2731 = vsel %vm486, %v2717, %v2718
    %v2732 = vsel %vm488, %v2730, %v2731
    %v2733 = vrot.slane %v2732, 3
    %v2738 = vadd.f32 %v2633, %v2721
    %v2739 = vadd.f32 %v2635, %v2725
    %v2740 = vadd.f32 %v2637, %v2729
    %v2741 = vadd.f32 %v2639, %v2733
    %v2742 = vxor.u32 %v2738, 2147483648
    %v2743 = vxor.u32 %v2739, 2147483648
    %v2744 = vxor.u32 %v2740, 2147483648
    %v2745 = vxor.u32 %v2741, 2147483648
    %v2746 = vmul.f32 %v2742, 1.442695
    %v2747 = vpow.pop %v2746
    %v2748 = vmul.f32 %v2743, 1.442695
    %v2749 = vpow.pop %v2748
    %v2750 = vmul.f32 %v2744, 1.442695
    %v2751 = vpow.pop %v2750
    %v2752 = vmul.f32 %v2745, 1.442695
    %v2753 = vpow.pop %v2752
    %v2754 = vadd.f32 %v2747, 1.0
    %v2755 = vadd.f32 %v2749, 1.0
    %v2756 = vadd.f32 %v2751, 1.0
    %v2757 = vadd.f32 %v2753, 1.0
    %v2758 = vrcp.pop %v2754
    %v2759 = vmul.f32 %v2754, %v2758
    %v2760 = vsub.f32 1.0, %v2759
    %v2761 = vmul.f32 %v2758, %v2760
    %v2762 = vadd.f32 %v2758, %v2761
    %vm2763 = vweird.f32 %v2754
    %vm2764 = vweird.f32 %v2758
    %vm2765 = vmor %vm2763, %vm2764
    %v2766 = vsel %vm2765, %v2758, %v2762
    %v2767 = vand.u32 2147483647, %v2754
    %vm2768 = vcmp.eq.f32.partialorder %v2767, 8.507059e+37
    %v2769 = vand.u32 %v2754, 2147483648
    %v2770 = vor.u32 1.1754944e-38, %v2769
    %v2771 = vsel %vm2768, %v2770, %v2766
    %v2772 = vmul.f32 1.0, %v2771
    %v2773 = vrcp.pop %v2755
    %v2774 = vmul.f32 %v2755, %v2773
    %v2775 = vsub.f32 1.0, %v2774
    %v2776 = vmul.f32 %v2773, %v2775
    %v2777 = vadd.f32 %v2773, %v2776
    %vm2778 = vweird.f32 %v2755
    %vm2779 = vweird.f32 %v2773
    %vm2780 = vmor %vm2778, %vm2779
    %v2781 = vsel %vm2780, %v2773, %v2777
    %v2782 = vand.u32 2147483647, %v2755
    %vm2783 = vcmp.eq.f32.partialorder %v2782, 8.507059e+37
    %v2784 = vand.u32 %v2755, 2147483648
    %v2785 = vor.u32 1.1754944e-38, %v2784
    %v2786 = vsel %vm2783, %v2785, %v2781
    %v2787 = vmul.f32 1.0, %v2786
    %v2788 = vrcp.pop %v2756
    %v2789 = vmul.f32 %v2756, %v2788
    %v2790 = vsub.f32 1.0, %v2789
    %v2791 = vmul.f32 %v2788, %v2790
    %v2792 = vadd.f32 %v2788, %v2791
    %vm2793 = vweird.f32 %v2756
    %vm2794 = vweird.f32 %v2788
    %vm2795 = vmor %vm2793, %vm2794
    %v2796 = vsel %vm2795, %v2788, %v2792
    %v2797 = vand.u32 2147483647, %v2756
    %vm2798 = vcmp.eq.f32.partialorder %v2797, 8.507059e+37
    %v2799 = vand.u32 %v2756, 2147483648
    %v2800 = vor.u32 1.1754944e-38, %v2799
    %v2801 = vsel %vm2798, %v2800, %v2796
    %v2802 = vmul.f32 1.0, %v2801
    %v2803 = vrcp.pop %v2757
    %v2804 = vmul.f32 %v2757, %v2803
    %v2805 = vsub.f32 1.0, %v2804
    %v2806 = vmul.f32 %v2803, %v2805
    %v2807 = vadd.f32 %v2803, %v2806
    %vm2808 = vweird.f32 %v2757
    %vm2809 = vweird.f32 %v2803
    %vm2810 = vmor %vm2808, %vm2809
    %v2811 = vsel %vm2810, %v2803, %v2807
    %v2812 = vand.u32 2147483647, %v2757
    %vm2813 = vcmp.eq.f32.partialorder %v2812, 8.507059e+37
    %v2814 = vand.u32 %v2757, 2147483648
    %v2815 = vor.u32 1.1754944e-38, %v2814
    %v2816 = vsel %vm2813, %v2815, %v2811
    %v2817 = vmul.f32 1.0, %v2816
    %v2822 = vrot.slane %v2738, 1
    %v2823 = vrot.slane %v2739, 1
    %v2824 = vrot.slane %v2740, 1
    %v2825 = vrot.slane %v2741, 1
    %v2830 = vxor.u32 %v2822, 2147483648
    %v2831 = vxor.u32 %v2823, 2147483648
    %v2832 = vxor.u32 %v2824, 2147483648
    %v2833 = vxor.u32 %v2825, 2147483648
    %v2834 = vmul.f32 %v2830, 1.442695
    %v2835 = vpow.pop %v2834
    %v2836 = vmul.f32 %v2831, 1.442695
    %v2837 = vpow.pop %v2836
    %v2838 = vmul.f32 %v2832, 1.442695
    %v2839 = vpow.pop %v2838
    %v2840 = vmul.f32 %v2833, 1.442695
    %v2841 = vpow.pop %v2840
    %v2842 = vadd.f32 %v2835, 1.0
    %v2843 = vadd.f32 %v2837, 1.0
    %v2844 = vadd.f32 %v2839, 1.0
    %v2845 = vadd.f32 %v2841, 1.0
    %v2846 = vrcp.pop %v2842
    %v2847 = vmul.f32 %v2842, %v2846
    %v2848 = vsub.f32 1.0, %v2847
    %v2849 = vmul.f32 %v2846, %v2848
    %v2850 = vadd.f32 %v2846, %v2849
    %vm2851 = vweird.f32 %v2842
    %vm2852 = vweird.f32 %v2846
    %vm2853 = vmor %vm2851, %vm2852
    %v2854 = vsel %vm2853, %v2846, %v2850
    %v2855 = vand.u32 2147483647, %v2842
    %vm2856 = vcmp.eq.f32.partialorder %v2855, 8.507059e+37
    %v2857 = vand.u32 %v2842, 2147483648
    %v2858 = vor.u32 1.1754944e-38, %v2857
    %v2859 = vsel %vm2856, %v2858, %v2854
    %v2860 = vmul.f32 1.0, %v2859
    %v2861 = vrcp.pop %v2843
    %v2862 = vmul.f32 %v2843, %v2861
    %v2863 = vsub.f32 1.0, %v2862
    %v2864 = vmul.f32 %v2861, %v2863
    %v2865 = vadd.f32 %v2861, %v2864
    %vm2866 = vweird.f32 %v2843
    %vm2867 = vweird.f32 %v2861
    %vm2868 = vmor %vm2866, %vm2867
    %v2869 = vsel %vm2868, %v2861, %v2865
    %v2870 = vand.u32 2147483647, %v2843
    %vm2871 = vcmp.eq.f32.partialorder %v2870, 8.507059e+37
    %v2872 = vand.u32 %v2843, 2147483648
    %v2873 = vor.u32 1.1754944e-38, %v2872
    %v2874 = vsel %vm2871, %v2873, %v2869
    %v2875 = vmul.f32 1.0, %v2874
    %v2876 = vrcp.pop %v2844
    %v2877 = vmul.f32 %v2844, %v2876
    %v2878 = vsub.f32 1.0, %v2877
    %v2879 = vmul.f32 %v2876, %v2878
    %v2880 = vadd.f32 %v2876, %v2879
    %vm2881 = vweird.f32 %v2844
    %vm2882 = vweird.f32 %v2876
    %vm2883 = vmor %vm2881, %vm2882
    %v2884 = vsel %vm2883, %v2876, %v2880
    %v2885 = vand.u32 2147483647, %v2844
    %vm2886 = vcmp.eq.f32.partialorder %v2885, 8.507059e+37
    %v2887 = vand.u32 %v2844, 2147483648
    %v2888 = vor.u32 1.1754944e-38, %v2887
    %v2889 = vsel %vm2886, %v2888, %v2884
    %v2890 = vmul.f32 1.0, %v2889
    %v2891 = vrcp.pop %v2845
    %v2892 = vmul.f32 %v2845, %v2891
    %v2893 = vsub.f32 1.0, %v2892
    %v2894 = vmul.f32 %v2891, %v2893
    %v2895 = vadd.f32 %v2891, %v2894
    %vm2896 = vweird.f32 %v2845
    %vm2897 = vweird.f32 %v2891
    %vm2898 = vmor %vm2896, %vm2897
    %v2899 = vsel %vm2898, %v2891, %v2895
    %v2900 = vand.u32 2147483647, %v2845
    %vm2901 = vcmp.eq.f32.partialorder %v2900, 8.507059e+37
    %v2902 = vand.u32 %v2845, 2147483648
    %v2903 = vor.u32 1.1754944e-38, %v2902
    %v2904 = vsel %vm2901, %v2903, %v2899
    %v2905 = vmul.f32 1.0, %v2904
    %v2906 = vrot.slane %v2738, 2
    %v2907 = vrot.slane %v2739, 2
    %v2908 = vrot.slane %v2740, 2
    %v2909 = vrot.slane %v2741, 2
    %v2914 = vtanh.pop %v2906
    %v2915 = vtanh.pop %v2907
    %v2916 = vtanh.pop %v2908
    %v2917 = vtanh.pop %v2909
    %v2918 = vrot.slane %v2738, 3
    %v2919 = vrot.slane %v2739, 3
    %v2920 = vrot.slane %v2740, 3
    %v2921 = vrot.slane %v2741, 3
    %v2926 = vxor.u32 %v2918, 2147483648
    %v2927 = vxor.u32 %v2919, 2147483648
    %v2928 = vxor.u32 %v2920, 2147483648
    %v2929 = vxor.u32 %v2921, 2147483648
    %v2930 = vmul.f32 %v2926, 1.442695
    %v2931 = vpow.pop %v2930
    %v2932 = vmul.f32 %v2927, 1.442695
    %v2933 = vpow.pop %v2932
    %v2934 = vmul.f32 %v2928, 1.442695
    %v2935 = vpow.pop %v2934
    %v2936 = vmul.f32 %v2929, 1.442695
    %v2937 = vpow.pop %v2936
    %v2938 = vadd.f32 %v2931, 1.0
    %v2939 = vadd.f32 %v2933, 1.0
    %v2940 = vadd.f32 %v2935, 1.0
    %v2941 = vadd.f32 %v2937, 1.0
    %v2942 = vrcp.pop %v2938
    %v2943 = vmul.f32 %v2938, %v2942
    %v2944 = vsub.f32 1.0, %v2943
    %v2945 = vmul.f32 %v2942, %v2944
    %v2946 = vadd.f32 %v2942, %v2945
    %vm2947 = vweird.f32 %v2938
    %vm2948 = vweird.f32 %v2942
    %vm2949 = vmor %vm2947, %vm2948
    %v2950 = vsel %vm2949, %v2942, %v2946
    %v2951 = vand.u32 2147483647, %v2938
    %vm2952 = vcmp.eq.f32.partialorder %v2951, 8.507059e+37
    %v2953 = vand.u32 %v2938, 2147483648
    %v2954 = vor.u32 1.1754944e-38, %v2953
    %v2955 = vsel %vm2952, %v2954, %v2950
    %v2956 = vmul.f32 1.0, %v2955
    %v2957 = vrcp.pop %v2939
    %v2958 = vmul.f32 %v2939, %v2957
    %v2959 = vsub.f32 1.0, %v2958
    %v2960 = vmul.f32 %v2957, %v2959
    %v2961 = vadd.f32 %v2957, %v2960
    %vm2962 = vweird.f32 %v2939
    %vm2963 = vweird.f32 %v2957
    %vm2964 = vmor %vm2962, %vm2963
    %v2965 = vsel %vm2964, %v2957, %v2961
    %v2966 = vand.u32 2147483647, %v2939
    %vm2967 = vcmp.eq.f32.partialorder %v2966, 8.507059e+37
    %v2968 = vand.u32 %v2939, 2147483648
    %v2969 = vor.u32 1.1754944e-38, %v2968
    %v2970 = vsel %vm2967, %v2969, %v2965
    %v2971 = vmul.f32 1.0, %v2970
    %v2972 = vrcp.pop %v2940
    %v2973 = vmul.f32 %v2940, %v2972
    %v2974 = vsub.f32 1.0, %v2973
    %v2975 = vmul.f32 %v2972, %v2974
    %v2976 = vadd.f32 %v2972, %v2975
    %vm2977 = vweird.f32 %v2940
    %vm2978 = vweird.f32 %v2972
    %vm2979 = vmor %vm2977, %vm2978
    %v2980 = vsel %vm2979, %v2972, %v2976
    %v2981 = vand.u32 2147483647, %v2940
    %vm2982 = vcmp.eq.f32.partialorder %v2981, 8.507059e+37
    %v2983 = vand.u32 %v2940, 2147483648
    %v2984 = vor.u32 1.1754944e-38, %v2983
    %v2985 = vsel %vm2982, %v2984, %v2980
    %v2986 = vmul.f32 1.0, %v2985
    %v2987 = vrcp.pop %v2941
    %v2988 = vmul.f32 %v2941, %v2987
    %v2989 = vsub.f32 1.0, %v2988
    %v2990 = vmul.f32 %v2987, %v2989
    %v2991 = vadd.f32 %v2987, %v2990
    %vm2992 = vweird.f32 %v2941
    %vm2993 = vweird.f32 %v2987
    %vm2994 = vmor %vm2992, %vm2993
    %v2995 = vsel %vm2994, %v2987, %v2991
    %v2996 = vand.u32 2147483647, %v2941
    %vm2997 = vcmp.eq.f32.partialorder %v2996, 8.507059e+37
    %v2998 = vand.u32 %v2941, 2147483648
    %v2999 = vor.u32 1.1754944e-38, %v2998
    %v3000 = vsel %vm2997, %v2999, %v2995
    %v3001 = vmul.f32 1.0, %v3000
    %v3002 = vmul.f32 %v2860, %v2561
    %v3003 = vmul.f32 %v2875, %v2562
    %v3004 = vmul.f32 %v2890, %v2563
    %v3005 = vmul.f32 %v2905, %v2564
    %v3006 = vmul.f32 %v2772, %v2914
    %v3007 = vmul.f32 %v2787, %v2915
    %v3008 = vmul.f32 %v2802, %v2916
    %v3009 = vmul.f32 %v2817, %v2917
    %v3010 = vadd.f32 %v3002, %v3006
    %v3011 = vadd.f32 %v3003, %v3007
    %v3012 = vadd.f32 %v3004, %v3008
    %v3013 = vadd.f32 %v3005, %v3009
    %v3014 = vtanh.pop %v3010
    %v3015 = vtanh.pop %v3011
    %v3016 = vtanh.pop %v3012
    %v3017 = vtanh.pop %v3013
    %v3018 = vmul.f32 %v2956, %v3014
    %v3019 = vmul.f32 %v2971, %v3015
    %v3020 = vmul.f32 %v2986, %v3016
    %v3021 = vmul.f32 %v3001, %v3017
    %v3022 = vld [vmem:[%s4 + $0x5] sm:$0x1]
    %v3023 = vld [vmem:[%s4 + $0xd] sm:$0x1]
    %v3024 = vld [vmem:[%s4 + $0x15] sm:$0x1]
    %v3025 = vld [vmem:[%s4 + $0x1d] sm:$0x1]
    %3027 = vset.pattern.permute.xlu0 0
    %3028 = vperm.xlu0 %3027, %v3022
    %v3029 = vpop.permute.xlu0 %3028
    %3032 = vset.pattern.permute.xlu0 0
    %3033 = vperm.xlu0 %3032, %v3023
    %v3034 = vpop.permute.xlu0 %3033
    %3037 = vset.pattern.permute.xlu0 0
    %3038 = vperm.xlu0 %3037, %v3024
    %v3039 = vpop.permute.xlu0 %3038
    %3042 = vset.pattern.permute.xlu0 0
    %3043 = vperm.xlu0 %3042, %v3025
    %v3044 = vpop.permute.xlu0 %3043
    %v3046 = vmul.f32 %v3018, %v3029
    %v3047 = vmul.f32 %v3019, %v3034
    %v3048 = vmul.f32 %v3020, %v3039
    %v3049 = vmul.f32 %v3021, %v3044
    %v3050 = vpack.c.bf16 %v3046, %v3046
    %v3051 = vpack.c.bf16 %v3047, %v3047
    %v3052 = vpack.c.bf16 %v3048, %v3048
    %v3053 = vpack.c.bf16 %v3049, %v3049
    %v3055 = vshll.u32 %v3050, 16
    %v3057 = vrot.slane %v3055, 6
    %v3059 = vshll.u32 %v3051, 16
    %v3061 = vrot.slane %v3059, 6
    %v3063 = vshll.u32 %v3052, 16
    %v3065 = vrot.slane %v3063, 6
    %v3067 = vshll.u32 %v3053, 16
    %v3069 = vrot.slane %v3067, 6
    %vm3074 = vsmask.f32 7946
    %vm3075 = vmand %vm2617, %vm3074
    %v3076 = vld [vmem:[%s5] sm:$0x4]
    %v3077 = vsel %vm3075, %v3057, %v3076
    %3078 = vst [vmem:[%s5] sm:$0x4] %v3077
    %v3079 = vld [vmem:[%s5 + $0x4] sm:$0x4]
    %v3080 = vsel %vm3075, %v3061, %v3079
    %3081 = vst [vmem:[%s5 + $0x4] sm:$0x4] %v3080
    %v3082 = vld [vmem:[%s5 + $0x8] sm:$0x4]
    %v3083 = vsel %vm3075, %v3065, %v3082
    %3084 = vst [vmem:[%s5 + $0x8] sm:$0x4] %v3083
    %v3085 = vld [vmem:[%s5 + $0xc] sm:$0x4]
    %v3086 = vsel %vm3075, %v3069, %v3085
    %3087 = vst [vmem:[%s5 + $0xc] sm:$0x4] %v3086
    %s3088 = scalar_lea.vmem [#allocation2], 6
    %v3089 = vld [vmem:[%s3088] ss:$8 sm:$0xf]
    %s3090 = scalar_lea.vmem [#allocation2], 38
    %v3091 = vld [vmem:[%s3090] ss:$8 sm:$0xf]
    %s3092 = scalar_lea.vmem [#allocation2], 70
    %v3093 = vld [vmem:[%s3092] ss:$8 sm:$0xf]
    %s3094 = scalar_lea.vmem [#allocation2], 102
    %v3095 = vld [vmem:[%s3094] ss:$8 sm:$0xf]
    %v3096 = vpack.c.bf16 %v3018, %v3018
    %v3097 = vpack.c.bf16 %v3019, %v3019
    %v3098 = vpack.c.bf16 %v3020, %v3020
    %v3099 = vpack.c.bf16 %v3021, %v3021
    %v3104 = vunpack.c.l.b16 %v3096
    %v3105 = vunpack.c.l.b16 %v3097
    %v3106 = vunpack.c.l.b16 %v3098
    %v3107 = vunpack.c.l.b16 %v3099
    %v3108 = vrot.slane %v3105, 7
    %v3109 = vsel %vm472, %v3108, %v3104
    %v3110 = vrot.slane %v3106, 6
    %v3111 = vsel %vm468, %v3110, %v3109
    %v3112 = vrot.slane %v3107, 5
    %v3113 = vsel %vm474, %v3112, %v3111
    %v3114 = vpack.c.b16 %v3113, %v3113
    %3116 = vmatpush.bf16.msra.mxu0 %v371
    %3117 = vmatpush.bf16.msra.mxu0 %v367
    %3118 = vmatpush.bf16.msra.mxu0 %v363
    %3119 = vmatpush.bf16.msra.mxu0 %v359
    %3120 = vmatpush.bf16.msra.mxu0 %v355
    %3121 = vmatpush.bf16.msra.mxu0 %v351
    %3122 = vmatpush.bf16.msra.mxu0 %v347
    %3123 = vmatpush.bf16.msra.mxu0 %v343
    %3124 = vmatmul.bf16.gmra.mxu0 %v3114
    %v3125 = vpop.f32.mrf.mxu0
    %v3126 = vadd.f32 0.0, %v3125
    %v3127 = vpop.f32.mrf.mxu0
    %3128 = vdwg.mxu0
    %3129 = vmatpush.bf16.msra.mxu0 %v372
    %3130 = vmatpush.bf16.msra.mxu0 %v368
    %3131 = vmatpush.bf16.msra.mxu0 %v364
    %3132 = vmatpush.bf16.msra.mxu0 %v360
    %3133 = vmatpush.bf16.msra.mxu0 %v356
    %3134 = vmatpush.bf16.msra.mxu0 %v352
    %3135 = vmatpush.bf16.msra.mxu0 %v348
    %3136 = vmatpush.bf16.msra.mxu0 %v344
    %3137 = vmatmul.bf16.gmra.mxu0 %v3114
    %v3138 = vpop.f32.mrf.mxu0
    %v3139 = vadd.f32 0.0, %v3138
    %v3140 = vpop.f32.mrf.mxu0
    %3141 = vdwg.mxu0
    %3142 = vmatpush.bf16.msra.mxu0 %v373
    %3143 = vmatpush.bf16.msra.mxu0 %v369
    %3144 = vmatpush.bf16.msra.mxu0 %v365
    %3145 = vmatpush.bf16.msra.mxu0 %v361
    %3146 = vmatpush.bf16.msra.mxu0 %v357
    %3147 = vmatpush.bf16.msra.mxu0 %v353
    %3148 = vmatpush.bf16.msra.mxu0 %v349
    %3149 = vmatpush.bf16.msra.mxu0 %v345
    %3150 = vmatmul.bf16.gmra.mxu0 %v3114
    %v3151 = vpop.f32.mrf.mxu0
    %v3152 = vadd.f32 0.0, %v3151
    %v3153 = vpop.f32.mrf.mxu0
    %3154 = vdwg.mxu0
    %3155 = vmatpush.bf16.msra.mxu0 %v374
    %3156 = vmatpush.bf16.msra.mxu0 %v370
    %3157 = vmatpush.bf16.msra.mxu0 %v366
    %3158 = vmatpush.bf16.msra.mxu0 %v362
    %3159 = vmatpush.bf16.msra.mxu0 %v358
    %3160 = vmatpush.bf16.msra.mxu0 %v354
    %3161 = vmatpush.bf16.msra.mxu0 %v350
    %3162 = vmatpush.bf16.msra.mxu0 %v346
    %3163 = vmatmul.bf16.gmra.mxu0 %v3114
    %v3164 = vpop.f32.mrf.mxu0
    %v3165 = vadd.f32 0.0, %v3164
    %v3166 = vpop.f32.mrf.mxu0
    %3167 = vdwg.mxu0
    %v3172 = vrot.slane %v3139, 7
    %v3173 = vrot.slane %v3152, 6
    %v3174 = vrot.slane %v3165, 5
    %v3175 = vsel %vm466, %v3126, %v3172
    %v3176 = vsel %vm468, %v3173, %v3174
    %v3177 = vsel %vm470, %v3175, %v3176
    %v3178 = vsel %vm472, %v3126, %v3172
    %v3179 = vsel %vm474, %v3173, %v3174
    %v3180 = vsel %vm476, %v3178, %v3179
    %v3181 = vrot.slane %v3180, 1
    %v3182 = vsel %vm468, %v3126, %v3172
    %v3183 = vsel %vm480, %v3173, %v3174
    %v3184 = vsel %vm482, %v3182, %v3183
    %v3185 = vrot.slane %v3184, 2
    %v3186 = vsel %vm474, %v3126, %v3172
    %v3187 = vsel %vm486, %v3173, %v3174
    %v3188 = vsel %vm488, %v3186, %v3187
    %v3189 = vrot.slane %v3188, 3
    %v3194 = vadd.f32 %v3089, %v3177
    %v3195 = vadd.f32 %v3091, %v3181
    %v3196 = vadd.f32 %v3093, %v3185
    %v3197 = vadd.f32 %v3095, %v3189
    %v3198 = vxor.u32 %v3194, 2147483648
    %v3199 = vxor.u32 %v3195, 2147483648
    %v3200 = vxor.u32 %v3196, 2147483648
    %v3201 = vxor.u32 %v3197, 2147483648
    %v3202 = vmul.f32 %v3198, 1.442695
    %v3203 = vpow.pop %v3202
    %v3204 = vmul.f32 %v3199, 1.442695
    %v3205 = vpow.pop %v3204
    %v3206 = vmul.f32 %v3200, 1.442695
    %v3207 = vpow.pop %v3206
    %v3208 = vmul.f32 %v3201, 1.442695
    %v3209 = vpow.pop %v3208
    %v3210 = vadd.f32 %v3203, 1.0
    %v3211 = vadd.f32 %v3205, 1.0
    %v3212 = vadd.f32 %v3207, 1.0
    %v3213 = vadd.f32 %v3209, 1.0
    %v3214 = vrcp.pop %v3210
    %v3215 = vmul.f32 %v3210, %v3214
    %v3216 = vsub.f32 1.0, %v3215
    %v3217 = vmul.f32 %v3214, %v3216
    %v3218 = vadd.f32 %v3214, %v3217
    %vm3219 = vweird.f32 %v3210
    %vm3220 = vweird.f32 %v3214
    %vm3221 = vmor %vm3219, %vm3220
    %v3222 = vsel %vm3221, %v3214, %v3218
    %v3223 = vand.u32 2147483647, %v3210
    %vm3224 = vcmp.eq.f32.partialorder %v3223, 8.507059e+37
    %v3225 = vand.u32 %v3210, 2147483648
    %v3226 = vor.u32 1.1754944e-38, %v3225
    %v3227 = vsel %vm3224, %v3226, %v3222
    %v3228 = vmul.f32 1.0, %v3227
    %v3229 = vrcp.pop %v3211
    %v3230 = vmul.f32 %v3211, %v3229
    %v3231 = vsub.f32 1.0, %v3230
    %v3232 = vmul.f32 %v3229, %v3231
    %v3233 = vadd.f32 %v3229, %v3232
    %vm3234 = vweird.f32 %v3211
    %vm3235 = vweird.f32 %v3229
    %vm3236 = vmor %vm3234, %vm3235
    %v3237 = vsel %vm3236, %v3229, %v3233
    %v3238 = vand.u32 2147483647, %v3211
    %vm3239 = vcmp.eq.f32.partialorder %v3238, 8.507059e+37
    %v3240 = vand.u32 %v3211, 2147483648
    %v3241 = vor.u32 1.1754944e-38, %v3240
    %v3242 = vsel %vm3239, %v3241, %v3237
    %v3243 = vmul.f32 1.0, %v3242
    %v3244 = vrcp.pop %v3212
    %v3245 = vmul.f32 %v3212, %v3244
    %v3246 = vsub.f32 1.0, %v3245
    %v3247 = vmul.f32 %v3244, %v3246
    %v3248 = vadd.f32 %v3244, %v3247
    %vm3249 = vweird.f32 %v3212
    %vm3250 = vweird.f32 %v3244
    %vm3251 = vmor %vm3249, %vm3250
    %v3252 = vsel %vm3251, %v3244, %v3248
    %v3253 = vand.u32 2147483647, %v3212
    %vm3254 = vcmp.eq.f32.partialorder %v3253, 8.507059e+37
    %v3255 = vand.u32 %v3212, 2147483648
    %v3256 = vor.u32 1.1754944e-38, %v3255
    %v3257 = vsel %vm3254, %v3256, %v3252
    %v3258 = vmul.f32 1.0, %v3257
    %v3259 = vrcp.pop %v3213
    %v3260 = vmul.f32 %v3213, %v3259
    %v3261 = vsub.f32 1.0, %v3260
    %v3262 = vmul.f32 %v3259, %v3261
    %v3263 = vadd.f32 %v3259, %v3262
    %vm3264 = vweird.f32 %v3213
    %vm3265 = vweird.f32 %v3259
    %vm3266 = vmor %vm3264, %vm3265
    %v3267 = vsel %vm3266, %v3259, %v3263
    %v3268 = vand.u32 2147483647, %v3213
    %vm3269 = vcmp.eq.f32.partialorder %v3268, 8.507059e+37
    %v3270 = vand.u32 %v3213, 2147483648
    %v3271 = vor.u32 1.1754944e-38, %v3270
    %v3272 = vsel %vm3269, %v3271, %v3267
    %v3273 = vmul.f32 1.0, %v3272
    %v3278 = vrot.slane %v3194, 1
    %v3279 = vrot.slane %v3195, 1
    %v3280 = vrot.slane %v3196, 1
    %v3281 = vrot.slane %v3197, 1
    %v3286 = vxor.u32 %v3278, 2147483648
    %v3287 = vxor.u32 %v3279, 2147483648
    %v3288 = vxor.u32 %v3280, 2147483648
    %v3289 = vxor.u32 %v3281, 2147483648
    %v3290 = vmul.f32 %v3286, 1.442695
    %v3291 = vpow.pop %v3290
    %v3292 = vmul.f32 %v3287, 1.442695
    %v3293 = vpow.pop %v3292
    %v3294 = vmul.f32 %v3288, 1.442695
    %v3295 = vpow.pop %v3294
    %v3296 = vmul.f32 %v3289, 1.442695
    %v3297 = vpow.pop %v3296
    %v3298 = vadd.f32 %v3291, 1.0
    %v3299 = vadd.f32 %v3293, 1.0
    %v3300 = vadd.f32 %v3295, 1.0
    %v3301 = vadd.f32 %v3297, 1.0
    %v3302 = vrcp.pop %v3298
    %v3303 = vmul.f32 %v3298, %v3302
    %v3304 = vsub.f32 1.0, %v3303
    %v3305 = vmul.f32 %v3302, %v3304
    %v3306 = vadd.f32 %v3302, %v3305
    %vm3307 = vweird.f32 %v3298
    %vm3308 = vweird.f32 %v3302
    %vm3309 = vmor %vm3307, %vm3308
    %v3310 = vsel %vm3309, %v3302, %v3306
    %v3311 = vand.u32 2147483647, %v3298
    %vm3312 = vcmp.eq.f32.partialorder %v3311, 8.507059e+37
    %v3313 = vand.u32 %v3298, 2147483648
    %v3314 = vor.u32 1.1754944e-38, %v3313
    %v3315 = vsel %vm3312, %v3314, %v3310
    %v3316 = vmul.f32 1.0, %v3315
    %v3317 = vrcp.pop %v3299
    %v3318 = vmul.f32 %v3299, %v3317
    %v3319 = vsub.f32 1.0, %v3318
    %v3320 = vmul.f32 %v3317, %v3319
    %v3321 = vadd.f32 %v3317, %v3320
    %vm3322 = vweird.f32 %v3299
    %vm3323 = vweird.f32 %v3317
    %vm3324 = vmor %vm3322, %vm3323
    %v3325 = vsel %vm3324, %v3317, %v3321
    %v3326 = vand.u32 2147483647, %v3299
    %vm3327 = vcmp.eq.f32.partialorder %v3326, 8.507059e+37
    %v3328 = vand.u32 %v3299, 2147483648
    %v3329 = vor.u32 1.1754944e-38, %v3328
    %v3330 = vsel %vm3327, %v3329, %v3325
    %v3331 = vmul.f32 1.0, %v3330
    %v3332 = vrcp.pop %v3300
    %v3333 = vmul.f32 %v3300, %v3332
    %v3334 = vsub.f32 1.0, %v3333
    %v3335 = vmul.f32 %v3332, %v3334
    %v3336 = vadd.f32 %v3332, %v3335
    %vm3337 = vweird.f32 %v3300
    %vm3338 = vweird.f32 %v3332
    %vm3339 = vmor %vm3337, %vm3338
    %v3340 = vsel %vm3339, %v3332, %v3336
    %v3341 = vand.u32 2147483647, %v3300
    %vm3342 = vcmp.eq.f32.partialorder %v3341, 8.507059e+37
    %v3343 = vand.u32 %v3300, 2147483648
    %v3344 = vor.u32 1.1754944e-38, %v3343
    %v3345 = vsel %vm3342, %v3344, %v3340
    %v3346 = vmul.f32 1.0, %v3345
    %v3347 = vrcp.pop %v3301
    %v3348 = vmul.f32 %v3301, %v3347
    %v3349 = vsub.f32 1.0, %v3348
    %v3350 = vmul.f32 %v3347, %v3349
    %v3351 = vadd.f32 %v3347, %v3350
    %vm3352 = vweird.f32 %v3301
    %vm3353 = vweird.f32 %v3347
    %vm3354 = vmor %vm3352, %vm3353
    %v3355 = vsel %vm3354, %v3347, %v3351
    %v3356 = vand.u32 2147483647, %v3301
    %vm3357 = vcmp.eq.f32.partialorder %v3356, 8.507059e+37
    %v3358 = vand.u32 %v3301, 2147483648
    %v3359 = vor.u32 1.1754944e-38, %v3358
    %v3360 = vsel %vm3357, %v3359, %v3355
    %v3361 = vmul.f32 1.0, %v3360
    %v3362 = vrot.slane %v3194, 2
    %v3363 = vrot.slane %v3195, 2
    %v3364 = vrot.slane %v3196, 2
    %v3365 = vrot.slane %v3197, 2
    %v3370 = vtanh.pop %v3362
    %v3371 = vtanh.pop %v3363
    %v3372 = vtanh.pop %v3364
    %v3373 = vtanh.pop %v3365
    %v3374 = vrot.slane %v3194, 3
    %v3375 = vrot.slane %v3195, 3
    %v3376 = vrot.slane %v3196, 3
    %v3377 = vrot.slane %v3197, 3
    %v3382 = vxor.u32 %v3374, 2147483648
    %v3383 = vxor.u32 %v3375, 2147483648
    %v3384 = vxor.u32 %v3376, 2147483648
    %v3385 = vxor.u32 %v3377, 2147483648
    %v3386 = vmul.f32 %v3382, 1.442695
    %v3387 = vpow.pop %v3386
    %v3388 = vmul.f32 %v3383, 1.442695
    %v3389 = vpow.pop %v3388
    %v3390 = vmul.f32 %v3384, 1.442695
    %v3391 = vpow.pop %v3390
    %v3392 = vmul.f32 %v3385, 1.442695
    %v3393 = vpow.pop %v3392
    %v3394 = vadd.f32 %v3387, 1.0
    %v3395 = vadd.f32 %v3389, 1.0
    %v3396 = vadd.f32 %v3391, 1.0
    %v3397 = vadd.f32 %v3393, 1.0
    %v3398 = vrcp.pop %v3394
    %v3399 = vmul.f32 %v3394, %v3398
    %v3400 = vsub.f32 1.0, %v3399
    %v3401 = vmul.f32 %v3398, %v3400
    %v3402 = vadd.f32 %v3398, %v3401
    %vm3403 = vweird.f32 %v3394
    %vm3404 = vweird.f32 %v3398
    %vm3405 = vmor %vm3403, %vm3404
    %v3406 = vsel %vm3405, %v3398, %v3402
    %v3407 = vand.u32 2147483647, %v3394
    %vm3408 = vcmp.eq.f32.partialorder %v3407, 8.507059e+37
    %v3409 = vand.u32 %v3394, 2147483648
    %v3410 = vor.u32 1.1754944e-38, %v3409
    %v3411 = vsel %vm3408, %v3410, %v3406
    %v3412 = vmul.f32 1.0, %v3411
    %v3413 = vrcp.pop %v3395
    %v3414 = vmul.f32 %v3395, %v3413
    %v3415 = vsub.f32 1.0, %v3414
    %v3416 = vmul.f32 %v3413, %v3415
    %v3417 = vadd.f32 %v3413, %v3416
    %vm3418 = vweird.f32 %v3395
    %vm3419 = vweird.f32 %v3413
    %vm3420 = vmor %vm3418, %vm3419
    %v3421 = vsel %vm3420, %v3413, %v3417
    %v3422 = vand.u32 2147483647, %v3395
    %vm3423 = vcmp.eq.f32.partialorder %v3422, 8.507059e+37
    %v3424 = vand.u32 %v3395, 2147483648
    %v3425 = vor.u32 1.1754944e-38, %v3424
    %v3426 = vsel %vm3423, %v3425, %v3421
    %v3427 = vmul.f32 1.0, %v3426
    %v3428 = vrcp.pop %v3396
    %v3429 = vmul.f32 %v3396, %v3428
    %v3430 = vsub.f32 1.0, %v3429
    %v3431 = vmul.f32 %v3428, %v3430
    %v3432 = vadd.f32 %v3428, %v3431
    %vm3433 = vweird.f32 %v3396
    %vm3434 = vweird.f32 %v3428
    %vm3435 = vmor %vm3433, %vm3434
    %v3436 = vsel %vm3435, %v3428, %v3432
    %v3437 = vand.u32 2147483647, %v3396
    %vm3438 = vcmp.eq.f32.partialorder %v3437, 8.507059e+37
    %v3439 = vand.u32 %v3396, 2147483648
    %v3440 = vor.u32 1.1754944e-38, %v3439
    %v3441 = vsel %vm3438, %v3440, %v3436
    %v3442 = vmul.f32 1.0, %v3441
    %v3443 = vrcp.pop %v3397
    %v3444 = vmul.f32 %v3397, %v3443
    %v3445 = vsub.f32 1.0, %v3444
    %v3446 = vmul.f32 %v3443, %v3445
    %v3447 = vadd.f32 %v3443, %v3446
    %vm3448 = vweird.f32 %v3397
    %vm3449 = vweird.f32 %v3443
    %vm3450 = vmor %vm3448, %vm3449
    %v3451 = vsel %vm3450, %v3443, %v3447
    %v3452 = vand.u32 2147483647, %v3397
    %vm3453 = vcmp.eq.f32.partialorder %v3452, 8.507059e+37
    %v3454 = vand.u32 %v3397, 2147483648
    %v3455 = vor.u32 1.1754944e-38, %v3454
    %v3456 = vsel %vm3453, %v3455, %v3451
    %v3457 = vmul.f32 1.0, %v3456
    %v3458 = vmul.f32 %v3316, %v3010
    %v3459 = vmul.f32 %v3331, %v3011
    %v3460 = vmul.f32 %v3346, %v3012
    %v3461 = vmul.f32 %v3361, %v3013
    %v3462 = vmul.f32 %v3228, %v3370
    %v3463 = vmul.f32 %v3243, %v3371
    %v3464 = vmul.f32 %v3258, %v3372
    %v3465 = vmul.f32 %v3273, %v3373
    %v3466 = vadd.f32 %v3458, %v3462
    %v3467 = vadd.f32 %v3459, %v3463
    %v3468 = vadd.f32 %v3460, %v3464
    %v3469 = vadd.f32 %v3461, %v3465
    %v3470 = vtanh.pop %v3466
    %v3471 = vtanh.pop %v3467
    %v3472 = vtanh.pop %v3468
    %v3473 = vtanh.pop %v3469
    %v3474 = vmul.f32 %v3412, %v3470
    %v3475 = vmul.f32 %v3427, %v3471
    %v3476 = vmul.f32 %v3442, %v3472
    %v3477 = vmul.f32 %v3457, %v3473
    %v3478 = vld [vmem:[%s4 + $0x6] sm:$0x1]
    %v3479 = vld [vmem:[%s4 + $0xe] sm:$0x1]
    %v3480 = vld [vmem:[%s4 + $0x16] sm:$0x1]
    %v3481 = vld [vmem:[%s4 + $0x1e] sm:$0x1]
    %3483 = vset.pattern.permute.xlu0 0
    %3484 = vperm.xlu0 %3483, %v3478
    %v3485 = vpop.permute.xlu0 %3484
    %3488 = vset.pattern.permute.xlu0 0
    %3489 = vperm.xlu0 %3488, %v3479
    %v3490 = vpop.permute.xlu0 %3489
    %3493 = vset.pattern.permute.xlu0 0
    %3494 = vperm.xlu0 %3493, %v3480
    %v3495 = vpop.permute.xlu0 %3494
    %3498 = vset.pattern.permute.xlu0 0
    %3499 = vperm.xlu0 %3498, %v3481
    %v3500 = vpop.permute.xlu0 %3499
    %v3502 = vmul.f32 %v3474, %v3485
    %v3503 = vmul.f32 %v3475, %v3490
    %v3504 = vmul.f32 %v3476, %v3495
    %v3505 = vmul.f32 %v3477, %v3500
    %v3506 = vpack.c.bf16 %v3502, %v3502
    %v3507 = vpack.c.bf16 %v3503, %v3503
    %v3508 = vpack.c.bf16 %v3504, %v3504
    %v3509 = vpack.c.bf16 %v3505, %v3505
    %v3514 = vrot.slane %v3506, 5
    %v3515 = vrot.slane %v3507, 5
    %v3516 = vrot.slane %v3508, 5
    %v3517 = vrot.slane %v3509, 5
    %vm3522 = vcmask 1043459
    %vm3523 = vsmask.f32 3328
    %vm3524 = vmand %vm3522, %vm3523
    %v3525 = vld [vmem:[%s5] sm:$0x8]
    %v3526 = vsel %vm3524, %v3514, %v3525
    %3527 = vst [vmem:[%s5] sm:$0x8] %v3526
    %v3528 = vld [vmem:[%s5 + $0x4] sm:$0x8]
    %v3529 = vsel %vm3524, %v3515, %v3528
    %3530 = vst [vmem:[%s5 + $0x4] sm:$0x8] %v3529
    %v3531 = vld [vmem:[%s5 + $0x8] sm:$0x8]
    %v3532 = vsel %vm3524, %v3516, %v3531
    %3533 = vst [vmem:[%s5 + $0x8] sm:$0x8] %v3532
    %v3534 = vld [vmem:[%s5 + $0xc] sm:$0x8]
    %v3535 = vsel %vm3524, %v3517, %v3534
    %3536 = vst [vmem:[%s5 + $0xc] sm:$0x8] %v3535
    %s3537 = scalar_lea.vmem [#allocation2], 7
    %v3538 = vld [vmem:[%s3537] ss:$8 sm:$0xf]
    %s3539 = scalar_lea.vmem [#allocation2], 39
    %v3540 = vld [vmem:[%s3539] ss:$8 sm:$0xf]
    %s3541 = scalar_lea.vmem [#allocation2], 71
    %v3542 = vld [vmem:[%s3541] ss:$8 sm:$0xf]
    %s3543 = scalar_lea.vmem [#allocation2], 103
    %v3544 = vld [vmem:[%s3543] ss:$8 sm:$0xf]
    %v3545 = vpack.c.bf16 %v3474, %v3474
    %v3546 = vpack.c.bf16 %v3475, %v3475
    %v3547 = vpack.c.bf16 %v3476, %v3476
    %v3548 = vpack.c.bf16 %v3477, %v3477
    %v3553 = vunpack.c.l.b16 %v3545
    %v3554 = vunpack.c.l.b16 %v3546
    %v3555 = vunpack.c.l.b16 %v3547
    %v3556 = vunpack.c.l.b16 %v3548
    %v3557 = vrot.slane %v3554, 7
    %v3558 = vsel %vm472, %v3557, %v3553
    %v3559 = vrot.slane %v3555, 6
    %v3560 = vsel %vm468, %v3559, %v3558
    %v3561 = vrot.slane %v3556, 5
    %v3562 = vsel %vm474, %v3561, %v3560
    %v3563 = vpack.c.b16 %v3562, %v3562
    %3565 = vmatpush.bf16.msra.mxu0 %v371
    %3566 = vmatpush.bf16.msra.mxu0 %v367
    %3567 = vmatpush.bf16.msra.mxu0 %v363
    %3568 = vmatpush.bf16.msra.mxu0 %v359
    %3569 = vmatpush.bf16.msra.mxu0 %v355
    %3570 = vmatpush.bf16.msra.mxu0 %v351
    %3571 = vmatpush.bf16.msra.mxu0 %v347
    %3572 = vmatpush.bf16.msra.mxu0 %v343
    %3573 = vmatmul.bf16.gmra.mxu0 %v3563
    %v3574 = vpop.f32.mrf.mxu0
    %v3575 = vadd.f32 0.0, %v3574
    %v3576 = vpop.f32.mrf.mxu0
    %3577 = vdwg.mxu0
    %3578 = vmatpush.bf16.msra.mxu0 %v372
    %3579 = vmatpush.bf16.msra.mxu0 %v368
    %3580 = vmatpush.bf16.msra.mxu0 %v364
    %3581 = vmatpush.bf16.msra.mxu0 %v360
    %3582 = vmatpush.bf16.msra.mxu0 %v356
    %3583 = vmatpush.bf16.msra.mxu0 %v352
    %3584 = vmatpush.bf16.msra.mxu0 %v348
    %3585 = vmatpush.bf16.msra.mxu0 %v344
    %3586 = vmatmul.bf16.gmra.mxu0 %v3563
    %v3587 = vpop.f32.mrf.mxu0
    %v3588 = vadd.f32 0.0, %v3587
    %v3589 = vpop.f32.mrf.mxu0
    %3590 = vdwg.mxu0
    %3591 = vmatpush.bf16.msra.mxu0 %v373
    %3592 = vmatpush.bf16.msra.mxu0 %v369
    %3593 = vmatpush.bf16.msra.mxu0 %v365
    %3594 = vmatpush.bf16.msra.mxu0 %v361
    %3595 = vmatpush.bf16.msra.mxu0 %v357
    %3596 = vmatpush.bf16.msra.mxu0 %v353
    %3597 = vmatpush.bf16.msra.mxu0 %v349
    %3598 = vmatpush.bf16.msra.mxu0 %v345
    %3599 = vmatmul.bf16.gmra.mxu0 %v3563
    %v3600 = vpop.f32.mrf.mxu0
    %v3601 = vadd.f32 0.0, %v3600
    %v3602 = vpop.f32.mrf.mxu0
    %3603 = vdwg.mxu0
    %3604 = vmatpush.bf16.msra.mxu0 %v374
    %3605 = vmatpush.bf16.msra.mxu0 %v370
    %3606 = vmatpush.bf16.msra.mxu0 %v366
    %3607 = vmatpush.bf16.msra.mxu0 %v362
    %3608 = vmatpush.bf16.msra.mxu0 %v358
    %3609 = vmatpush.bf16.msra.mxu0 %v354
    %3610 = vmatpush.bf16.msra.mxu0 %v350
    %3611 = vmatpush.bf16.msra.mxu0 %v346
    %3612 = vmatmul.bf16.gmra.mxu0 %v3563
    %v3613 = vpop.f32.mrf.mxu0
    %v3614 = vadd.f32 0.0, %v3613
    %v3615 = vpop.f32.mrf.mxu0
    %3616 = vdwg.mxu0
    %v3621 = vrot.slane %v3588, 7
    %v3622 = vrot.slane %v3601, 6
    %v3623 = vrot.slane %v3614, 5
    %v3624 = vsel %vm466, %v3575, %v3621
    %v3625 = vsel %vm468, %v3622, %v3623
    %v3626 = vsel %vm470, %v3624, %v3625
    %v3627 = vsel %vm472, %v3575, %v3621
    %v3628 = vsel %vm474, %v3622, %v3623
    %v3629 = vsel %vm476, %v3627, %v3628
    %v3630 = vrot.slane %v3629, 1
    %v3631 = vsel %vm468, %v3575, %v3621
    %v3632 = vsel %vm480, %v3622, %v3623
    %v3633 = vsel %vm482, %v3631, %v3632
    %v3634 = vrot.slane %v3633, 2
    %v3635 = vsel %vm474, %v3575, %v3621
    %v3636 = vsel %vm486, %v3622, %v3623
    %v3637 = vsel %vm488, %v3635, %v3636
    %v3638 = vrot.slane %v3637, 3
    %v3643 = vadd.f32 %v3538, %v3626
    %v3644 = vadd.f32 %v3540, %v3630
    %v3645 = vadd.f32 %v3542, %v3634
    %v3646 = vadd.f32 %v3544, %v3638
    %v3647 = vxor.u32 %v3643, 2147483648
    %v3648 = vxor.u32 %v3644, 2147483648
    %v3649 = vxor.u32 %v3645, 2147483648
    %v3650 = vxor.u32 %v3646, 2147483648
    %v3651 = vmul.f32 %v3647, 1.442695
    %v3652 = vpow.pop %v3651
    %v3653 = vmul.f32 %v3648, 1.442695
    %v3654 = vpow.pop %v3653
    %v3655 = vmul.f32 %v3649, 1.442695
    %v3656 = vpow.pop %v3655
    %v3657 = vmul.f32 %v3650, 1.442695
    %v3658 = vpow.pop %v3657
    %v3659 = vadd.f32 %v3652, 1.0
    %v3660 = vadd.f32 %v3654, 1.0
    %v3661 = vadd.f32 %v3656, 1.0
    %v3662 = vadd.f32 %v3658, 1.0
    %v3663 = vrcp.pop %v3659
    %v3664 = vmul.f32 %v3659, %v3663
    %v3665 = vsub.f32 1.0, %v3664
    %v3666 = vmul.f32 %v3663, %v3665
    %v3667 = vadd.f32 %v3663, %v3666
    %vm3668 = vweird.f32 %v3659
    %vm3669 = vweird.f32 %v3663
    %vm3670 = vmor %vm3668, %vm3669
    %v3671 = vsel %vm3670, %v3663, %v3667
    %v3672 = vand.u32 2147483647, %v3659
    %vm3673 = vcmp.eq.f32.partialorder %v3672, 8.507059e+37
    %v3674 = vand.u32 %v3659, 2147483648
    %v3675 = vor.u32 1.1754944e-38, %v3674
    %v3676 = vsel %vm3673, %v3675, %v3671
    %v3677 = vmul.f32 1.0, %v3676
    %v3678 = vrcp.pop %v3660
    %v3679 = vmul.f32 %v3660, %v3678
    %v3680 = vsub.f32 1.0, %v3679
    %v3681 = vmul.f32 %v3678, %v3680
    %v3682 = vadd.f32 %v3678, %v3681
    %vm3683 = vweird.f32 %v3660
    %vm3684 = vweird.f32 %v3678
    %vm3685 = vmor %vm3683, %vm3684
    %v3686 = vsel %vm3685, %v3678, %v3682
    %v3687 = vand.u32 2147483647, %v3660
    %vm3688 = vcmp.eq.f32.partialorder %v3687, 8.507059e+37
    %v3689 = vand.u32 %v3660, 2147483648
    %v3690 = vor.u32 1.1754944e-38, %v3689
    %v3691 = vsel %vm3688, %v3690, %v3686
    %v3692 = vmul.f32 1.0, %v3691
    %v3693 = vrcp.pop %v3661
    %v3694 = vmul.f32 %v3661, %v3693
    %v3695 = vsub.f32 1.0, %v3694
    %v3696 = vmul.f32 %v3693, %v3695
    %v3697 = vadd.f32 %v3693, %v3696
    %vm3698 = vweird.f32 %v3661
    %vm3699 = vweird.f32 %v3693
    %vm3700 = vmor %vm3698, %vm3699
    %v3701 = vsel %vm3700, %v3693, %v3697
    %v3702 = vand.u32 2147483647, %v3661
    %vm3703 = vcmp.eq.f32.partialorder %v3702, 8.507059e+37
    %v3704 = vand.u32 %v3661, 2147483648
    %v3705 = vor.u32 1.1754944e-38, %v3704
    %v3706 = vsel %vm3703, %v3705, %v3701
    %v3707 = vmul.f32 1.0, %v3706
    %v3708 = vrcp.pop %v3662
    %v3709 = vmul.f32 %v3662, %v3708
    %v3710 = vsub.f32 1.0, %v3709
    %v3711 = vmul.f32 %v3708, %v3710
    %v3712 = vadd.f32 %v3708, %v3711
    %vm3713 = vweird.f32 %v3662
    %vm3714 = vweird.f32 %v3708
    %vm3715 = vmor %vm3713, %vm3714
    %v3716 = vsel %vm3715, %v3708, %v3712
    %v3717 = vand.u32 2147483647, %v3662
    %vm3718 = vcmp.eq.f32.partialorder %v3717, 8.507059e+37
    %v3719 = vand.u32 %v3662, 2147483648
    %v3720 = vor.u32 1.1754944e-38, %v3719
    %v3721 = vsel %vm3718, %v3720, %v3716
    %v3722 = vmul.f32 1.0, %v3721
    %v3727 = vrot.slane %v3643, 1
    %v3728 = vrot.slane %v3644, 1
    %v3729 = vrot.slane %v3645, 1
    %v3730 = vrot.slane %v3646, 1
    %v3735 = vxor.u32 %v3727, 2147483648
    %v3736 = vxor.u32 %v3728, 2147483648
    %v3737 = vxor.u32 %v3729, 2147483648
    %v3738 = vxor.u32 %v3730, 2147483648
    %v3739 = vmul.f32 %v3735, 1.442695
    %v3740 = vpow.pop %v3739
    %v3741 = vmul.f32 %v3736, 1.442695
    %v3742 = vpow.pop %v3741
    %v3743 = vmul.f32 %v3737, 1.442695
    %v3744 = vpow.pop %v3743
    %v3745 = vmul.f32 %v3738, 1.442695
    %v3746 = vpow.pop %v3745
    %v3747 = vadd.f32 %v3740, 1.0
    %v3748 = vadd.f32 %v3742, 1.0
    %v3749 = vadd.f32 %v3744, 1.0
    %v3750 = vadd.f32 %v3746, 1.0
    %v3751 = vrcp.pop %v3747
    %v3752 = vmul.f32 %v3747, %v3751
    %v3753 = vsub.f32 1.0, %v3752
    %v3754 = vmul.f32 %v3751, %v3753
    %v3755 = vadd.f32 %v3751, %v3754
    %vm3756 = vweird.f32 %v3747
    %vm3757 = vweird.f32 %v3751
    %vm3758 = vmor %vm3756, %vm3757
    %v3759 = vsel %vm3758, %v3751, %v3755
    %v3760 = vand.u32 2147483647, %v3747
    %vm3761 = vcmp.eq.f32.partialorder %v3760, 8.507059e+37
    %v3762 = vand.u32 %v3747, 2147483648
    %v3763 = vor.u32 1.1754944e-38, %v3762
    %v3764 = vsel %vm3761, %v3763, %v3759
    %v3765 = vmul.f32 1.0, %v3764
    %v3766 = vrcp.pop %v3748
    %v3767 = vmul.f32 %v3748, %v3766
    %v3768 = vsub.f32 1.0, %v3767
    %v3769 = vmul.f32 %v3766, %v3768
    %v3770 = vadd.f32 %v3766, %v3769
    %vm3771 = vweird.f32 %v3748
    %vm3772 = vweird.f32 %v3766
    %vm3773 = vmor %vm3771, %vm3772
    %v3774 = vsel %vm3773, %v3766, %v3770
    %v3775 = vand.u32 2147483647, %v3748
    %vm3776 = vcmp.eq.f32.partialorder %v3775, 8.507059e+37
    %v3777 = vand.u32 %v3748, 2147483648
    %v3778 = vor.u32 1.1754944e-38, %v3777
    %v3779 = vsel %vm3776, %v3778, %v3774
    %v3780 = vmul.f32 1.0, %v3779
    %v3781 = vrcp.pop %v3749
    %v3782 = vmul.f32 %v3749, %v3781
    %v3783 = vsub.f32 1.0, %v3782
    %v3784 = vmul.f32 %v3781, %v3783
    %v3785 = vadd.f32 %v3781, %v3784
    %vm3786 = vweird.f32 %v3749
    %vm3787 = vweird.f32 %v3781
    %vm3788 = vmor %vm3786, %vm3787
    %v3789 = vsel %vm3788, %v3781, %v3785
    %v3790 = vand.u32 2147483647, %v3749
    %vm3791 = vcmp.eq.f32.partialorder %v3790, 8.507059e+37
    %v3792 = vand.u32 %v3749, 2147483648
    %v3793 = vor.u32 1.1754944e-38, %v3792
    %v3794 = vsel %vm3791, %v3793, %v3789
    %v3795 = vmul.f32 1.0, %v3794
    %v3796 = vrcp.pop %v3750
    %v3797 = vmul.f32 %v3750, %v3796
    %v3798 = vsub.f32 1.0, %v3797
    %v3799 = vmul.f32 %v3796, %v3798
    %v3800 = vadd.f32 %v3796, %v3799
    %vm3801 = vweird.f32 %v3750
    %vm3802 = vweird.f32 %v3796
    %vm3803 = vmor %vm3801, %vm3802
    %v3804 = vsel %vm3803, %v3796, %v3800
    %v3805 = vand.u32 2147483647, %v3750
    %vm3806 = vcmp.eq.f32.partialorder %v3805, 8.507059e+37
    %v3807 = vand.u32 %v3750, 2147483648
    %v3808 = vor.u32 1.1754944e-38, %v3807
    %v3809 = vsel %vm3806, %v3808, %v3804
    %v3810 = vmul.f32 1.0, %v3809
    %v3811 = vrot.slane %v3643, 2
    %v3812 = vrot.slane %v3644, 2
    %v3813 = vrot.slane %v3645, 2
    %v3814 = vrot.slane %v3646, 2
    %v3819 = vtanh.pop %v3811
    %v3820 = vtanh.pop %v3812
    %v3821 = vtanh.pop %v3813
    %v3822 = vtanh.pop %v3814
    %v3823 = vrot.slane %v3643, 3
    %v3824 = vrot.slane %v3644, 3
    %v3825 = vrot.slane %v3645, 3
    %v3826 = vrot.slane %v3646, 3
    %v3831 = vxor.u32 %v3823, 2147483648
    %v3832 = vxor.u32 %v3824, 2147483648
    %v3833 = vxor.u32 %v3825, 2147483648
    %v3834 = vxor.u32 %v3826, 2147483648
    %v3835 = vmul.f32 %v3831, 1.442695
    %v3836 = vpow.pop %v3835
    %v3837 = vmul.f32 %v3832, 1.442695
    %v3838 = vpow.pop %v3837
    %v3839 = vmul.f32 %v3833, 1.442695
    %v3840 = vpow.pop %v3839
    %v3841 = vmul.f32 %v3834, 1.442695
    %v3842 = vpow.pop %v3841
    %v3843 = vadd.f32 %v3836, 1.0
    %v3844 = vadd.f32 %v3838, 1.0
    %v3845 = vadd.f32 %v3840, 1.0
    %v3846 = vadd.f32 %v3842, 1.0
    %v3847 = vrcp.pop %v3843
    %v3848 = vmul.f32 %v3843, %v3847
    %v3849 = vsub.f32 1.0, %v3848
    %v3850 = vmul.f32 %v3847, %v3849
    %v3851 = vadd.f32 %v3847, %v3850
    %vm3852 = vweird.f32 %v3843
    %vm3853 = vweird.f32 %v3847
    %vm3854 = vmor %vm3852, %vm3853
    %v3855 = vsel %vm3854, %v3847, %v3851
    %v3856 = vand.u32 2147483647, %v3843
    %vm3857 = vcmp.eq.f32.partialorder %v3856, 8.507059e+37
    %v3858 = vand.u32 %v3843, 2147483648
    %v3859 = vor.u32 1.1754944e-38, %v3858
    %v3860 = vsel %vm3857, %v3859, %v3855
    %v3861 = vmul.f32 1.0, %v3860
    %v3862 = vrcp.pop %v3844
    %v3863 = vmul.f32 %v3844, %v3862
    %v3864 = vsub.f32 1.0, %v3863
    %v3865 = vmul.f32 %v3862, %v3864
    %v3866 = vadd.f32 %v3862, %v3865
    %vm3867 = vweird.f32 %v3844
    %vm3868 = vweird.f32 %v3862
    %vm3869 = vmor %vm3867, %vm3868
    %v3870 = vsel %vm3869, %v3862, %v3866
    %v3871 = vand.u32 2147483647, %v3844
    %vm3872 = vcmp.eq.f32.partialorder %v3871, 8.507059e+37
    %v3873 = vand.u32 %v3844, 2147483648
    %v3874 = vor.u32 1.1754944e-38, %v3873
    %v3875 = vsel %vm3872, %v3874, %v3870
    %v3876 = vmul.f32 1.0, %v3875
    %v3877 = vrcp.pop %v3845
    %v3878 = vmul.f32 %v3845, %v3877
    %v3879 = vsub.f32 1.0, %v3878
    %v3880 = vmul.f32 %v3877, %v3879
    %v3881 = vadd.f32 %v3877, %v3880
    %vm3882 = vweird.f32 %v3845
    %vm3883 = vweird.f32 %v3877
    %vm3884 = vmor %vm3882, %vm3883
    %v3885 = vsel %vm3884, %v3877, %v3881
    %v3886 = vand.u32 2147483647, %v3845
    %vm3887 = vcmp.eq.f32.partialorder %v3886, 8.507059e+37
    %v3888 = vand.u32 %v3845, 2147483648
    %v3889 = vor.u32 1.1754944e-38, %v3888
    %v3890 = vsel %vm3887, %v3889, %v3885
    %v3891 = vmul.f32 1.0, %v3890
    %v3892 = vrcp.pop %v3846
    %v3893 = vmul.f32 %v3846, %v3892
    %v3894 = vsub.f32 1.0, %v3893
    %v3895 = vmul.f32 %v3892, %v3894
    %v3896 = vadd.f32 %v3892, %v3895
    %vm3897 = vweird.f32 %v3846
    %vm3898 = vweird.f32 %v3892
    %vm3899 = vmor %vm3897, %vm3898
    %v3900 = vsel %vm3899, %v3892, %v3896
    %v3901 = vand.u32 2147483647, %v3846
    %vm3902 = vcmp.eq.f32.partialorder %v3901, 8.507059e+37
    %v3903 = vand.u32 %v3846, 2147483648
    %v3904 = vor.u32 1.1754944e-38, %v3903
    %v3905 = vsel %vm3902, %v3904, %v3900
    %v3906 = vmul.f32 1.0, %v3905
    %v3907 = vmul.f32 %v3765, %v3466
    %v3908 = vmul.f32 %v3780, %v3467
    %v3909 = vmul.f32 %v3795, %v3468
    %v3910 = vmul.f32 %v3810, %v3469
    %v3911 = vmul.f32 %v3677, %v3819
    %v3912 = vmul.f32 %v3692, %v3820
    %v3913 = vmul.f32 %v3707, %v3821
    %v3914 = vmul.f32 %v3722, %v3822
    %v3915 = vadd.f32 %v3907, %v3911
    %v3916 = vadd.f32 %v3908, %v3912
    %v3917 = vadd.f32 %v3909, %v3913
    %v3918 = vadd.f32 %v3910, %v3914
    %v3919 = vtanh.pop %v3915
    %v3920 = vtanh.pop %v3916
    %v3921 = vtanh.pop %v3917
    %v3922 = vtanh.pop %v3918
    %v3923 = vmul.f32 %v3861, %v3919
    %v3924 = vmul.f32 %v3876, %v3920
    %v3925 = vmul.f32 %v3891, %v3921
    %v3926 = vmul.f32 %v3906, %v3922
    %v3927 = vld [vmem:[%s4 + $0x7] sm:$0x1]
    %v3928 = vld [vmem:[%s4 + $0xf] sm:$0x1]
    %v3929 = vld [vmem:[%s4 + $0x17] sm:$0x1]
    %v3930 = vld [vmem:[%s4 + $0x1f] sm:$0x1]
    %3932 = vset.pattern.permute.xlu0 0
    %3933 = vperm.xlu0 %3932, %v3927
    %v3934 = vpop.permute.xlu0 %3933
    %3937 = vset.pattern.permute.xlu0 0
    %3938 = vperm.xlu0 %3937, %v3928
    %v3939 = vpop.permute.xlu0 %3938
    %3942 = vset.pattern.permute.xlu0 0
    %3943 = vperm.xlu0 %3942, %v3929
    %v3944 = vpop.permute.xlu0 %3943
    %3947 = vset.pattern.permute.xlu0 0
    %3948 = vperm.xlu0 %3947, %v3930
    %v3949 = vpop.permute.xlu0 %3948
    %v3951 = vmul.f32 %v3923, %v3934
    %v3952 = vmul.f32 %v3924, %v3939
    %v3953 = vmul.f32 %v3925, %v3944
    %v3954 = vmul.f32 %v3926, %v3949
    %v3955 = vpack.c.bf16 %v3951, %v3951
    %v3956 = vpack.c.bf16 %v3952, %v3952
    %v3957 = vpack.c.bf16 %v3953, %v3953
    %v3958 = vpack.c.bf16 %v3954, %v3954
    %v3960 = vshll.u32 %v3955, 16
    %v3962 = vrot.slane %v3960, 5
    %v3964 = vshll.u32 %v3956, 16
    %v3966 = vrot.slane %v3964, 5
    %v3968 = vshll.u32 %v3957, 16
    %v3970 = vrot.slane %v3968, 5
    %v3972 = vshll.u32 %v3958, 16
    %v3974 = vrot.slane %v3972, 5
    %vm3979 = vsmask.f32 7950
    %vm3980 = vmand %vm3522, %vm3979
    %v3981 = vld [vmem:[%s5] sm:$0x8]
    %v3982 = vsel %vm3980, %v3962, %v3981
    %3983 = vst [vmem:[%s5] sm:$0x8] %v3982
    %v3984 = vld [vmem:[%s5 + $0x4] sm:$0x8]
    %v3985 = vsel %vm3980, %v3966, %v3984
    %3986 = vst [vmem:[%s5 + $0x4] sm:$0x8] %v3985
    %v3987 = vld [vmem:[%s5 + $0x8] sm:$0x8]
    %v3988 = vsel %vm3980, %v3970, %v3987
    %3989 = vst [vmem:[%s5 + $0x8] sm:$0x8] %v3988
    %v3990 = vld [vmem:[%s5 + $0xc] sm:$0x8]
    %v3991 = vsel %vm3980, %v3974, %v3990
    %3992 = vst [vmem:[%s5 + $0xc] sm:$0x8] %v3991
    // Predicated region
    $region26: #{esim_forward.5} parent=1 // pred_check
      _
    $region27: #{esim_forward.5} parent=1 // pred_check_branch
      %3994 = sbr.rel (0) target = $region29
    $region28: #{esim_forward.5} parent=1 // pred_region
      _
    $region29: #{esim_forward.5} parent=1 // pred_fallthru
      _
    // Predicated region
    $region30: #{esim_forward.5} parent=1 // pred_check
      _
    $region31: #{esim_forward.5} parent=1 // pred_check_branch
      %3996 = sbr.rel (0) target = $region33
    $region32: #{esim_forward.5} parent=1 // pred_region
      _
    $region33: #{esim_forward.5} parent=1 // pred_fallthru
      _
    %3997 = vsyncpa [#allocation4], 1

// kernel: esim_forward.9
$region0: #{esim_forward.9}
  #allocation0 [shape = 'u32[]', space=smem, size = 0x4, offset = 0x4, fixed_abs, tag = 'smem constant byte address 0x4 - core index']
  #allocation1 [shape = 'u32[72,128]{1,0:T(1,128)}', space=vmem, size = 0x9000, scoped, tag = 'internal scratch']
  %s0 = inlined_call_operand.vmem [shape: bf16[2,8,128], index: 0, kind: input, shape index: {}]
  %s1 = inlined_call_operand.vmem [shape: f32[2,8,1], index: 1, kind: input, shape index: {}]
  %s2 = inlined_call_operand.vmem [shape: bf16[2,8,128], index: 2, kind: input, shape index: {}]
  %s3 = inlined_call_operand.vmem [shape: f32[2,8,1], index: 3, kind: input, shape index: {}]
  %s4 = inlined_call_operand.vmem [shape: bf16[128,128], index: 4, kind: input, shape index: {}]
  %s5 = inlined_call_operand.vmem [shape: bf16[128,128], index: 5, kind: input, shape index: {}]
  %s6 = inlined_call_operand.vmem [shape: bf16[128,128], index: 6, kind: input, shape index: {}]
  %s7 = inlined_call_operand.vmem [shape: bf16[128,128], index: 7, kind: input, shape index: {}]
  %s8 = inlined_call_operand.vmem [shape: f32[1,128], index: 8, kind: input, shape index: {}]
  %s9 = inlined_call_operand.vmem [shape: bf16[128,128], index: 9, kind: input, shape index: {}]
  %s10 = inlined_call_operand.vmem [shape: f32[1,128], index: 10, kind: input, shape index: {}]
  %s11 = inlined_call_operand.vmem [shape: bf16[128,3], index: 11, kind: input, shape index: {}]
  %s12 = inlined_call_operand.vmem [shape: f32[1,3], index: 12, kind: input, shape index: {}]
  %s13 = inlined_call_operand.vmem [shape: f32[2,3], index: 13, kind: output, shape index: {}]
  %s14 = sld [smem:[#allocation0]]
  $region62: #{esim_forward.9} parent=0
    _
  %s16 = ssub.s32 1, %s14
  %s17 = scalar_select 0, %s16, %s14
  // Predicated region
  $region2: #{esim_forward.9} parent=0 // pred_check
    _
  $region3: #{esim_forward.9} parent=0 // pred_check_branch
    %19 = sbr.rel (0) target = $region5
  $region4: #{esim_forward.9} parent=0 // pred_region
    _
  $region5: #{esim_forward.9} parent=0 // pred_fallthru
    _
  // Predicated region
  $region6: #{esim_forward.9} parent=0 // pred_check
    _
  $region7: #{esim_forward.9} parent=0 // pred_check_branch
    %21 = sbr.rel (0) target = $region9
  $region8: #{esim_forward.9} parent=0 // pred_region
    _
  $region9: #{esim_forward.9} parent=0 // pred_fallthru
    _
  // Predicated region
  $region10: #{esim_forward.9} parent=0 // pred_check
    _
  $region11: #{esim_forward.9} parent=0 // pred_check_branch
    %23 = sbr.rel (0) target = $region13
  $region12: #{esim_forward.9} parent=0 // pred_region
    _
  $region13: #{esim_forward.9} parent=0 // pred_fallthru
    _
  // Predicated region
  $region14: #{esim_forward.9} parent=0 // pred_check
    _
  $region15: #{esim_forward.9} parent=0 // pred_check_branch
    %25 = sbr.rel (0) target = $region17
  $region16: #{esim_forward.9} parent=0 // pred_region
    _
  $region17: #{esim_forward.9} parent=0 // pred_fallthru
    _
  // Predicated region
  $region18: #{esim_forward.9} parent=0 // pred_check
    _
  $region19: #{esim_forward.9} parent=0 // pred_check_branch
    %27 = sbr.rel (0) target = $region21
  $region20: #{esim_forward.9} parent=0 // pred_region
    _
  $region21: #{esim_forward.9} parent=0 // pred_fallthru
    _
  // Predicated region
  $region22: #{esim_forward.9} parent=0 // pred_check
    _
  $region23: #{esim_forward.9} parent=0 // pred_check_branch
    %29 = sbr.rel (0) target = $region25
  $region24: #{esim_forward.9} parent=0 // pred_region
    _
  $region25: #{esim_forward.9} parent=0 // pred_fallthru
    _
  // Predicated region
  $region26: #{esim_forward.9} parent=0 // pred_check
    _
  $region27: #{esim_forward.9} parent=0 // pred_check_branch
    %31 = sbr.rel (0) target = $region29
  $region28: #{esim_forward.9} parent=0 // pred_region
    _
  $region29: #{esim_forward.9} parent=0 // pred_fallthru
    _
  // Predicated region
  $region30: #{esim_forward.9} parent=0 // pred_check
    _
  $region31: #{esim_forward.9} parent=0 // pred_check_branch
    %33 = sbr.rel (0) target = $region33
  $region32: #{esim_forward.9} parent=0 // pred_region
    _
  $region33: #{esim_forward.9} parent=0 // pred_fallthru
    _
  // Predicated region
  $region34: #{esim_forward.9} parent=0 // pred_check
    _
  $region35: #{esim_forward.9} parent=0 // pred_check_branch
    %35 = sbr.rel (0) target = $region37
  $region36: #{esim_forward.9} parent=0 // pred_region
    _
  $region37: #{esim_forward.9} parent=0 // pred_fallthru
    _
  // Predicated region
  $region38: #{esim_forward.9} parent=0 // pred_check
    _
  $region39: #{esim_forward.9} parent=0 // pred_check_branch
    %37 = sbr.rel (0) target = $region41
  $region40: #{esim_forward.9} parent=0 // pred_region
    _
  $region41: #{esim_forward.9} parent=0 // pred_fallthru
    _
  // Predicated region
  $region42: #{esim_forward.9} parent=0 // pred_check
    _
  $region43: #{esim_forward.9} parent=0 // pred_check_branch
    %39 = sbr.rel (0) target = $region45
  $region44: #{esim_forward.9} parent=0 // pred_region
    _
  $region45: #{esim_forward.9} parent=0 // pred_fallthru
    _
  // Predicated region
  $region46: #{esim_forward.9} parent=0 // pred_check
    _
  $region47: #{esim_forward.9} parent=0 // pred_check_branch
    %41 = sbr.rel (0) target = $region49
  $region48: #{esim_forward.9} parent=0 // pred_region
    _
  $region49: #{esim_forward.9} parent=0 // pred_fallthru
    _
  // Predicated region
  $region50: #{esim_forward.9} parent=0 // pred_check
    _
  $region51: #{esim_forward.9} parent=0 // pred_check_branch
    %43 = sbr.rel (0) target = $region53
  $region52: #{esim_forward.9} parent=0 // pred_region
    _
  $region53: #{esim_forward.9} parent=0 // pred_fallthru
    _
  %v44 = vld [vmem:[%s0] sm:$0xf]
  %v45 = vld [vmem:[%s0 + $0x4] sm:$0xf]
  %v46 = vunpack.c.l.bf16 %v44
  %v47 = vunpack.c.l.bf16 %v45
  %v48 = vld [vmem:[%s1] sm:$0xff]
  %v49 = vld [vmem:[%s1 + $0x8] sm:$0xff]
  %51 = vset.pattern.permute.xlu0 0
  %52 = vperm.xlu0 %51, %v48
  %v53 = vpop.permute.xlu0 %52
  %56 = vset.pattern.permute.xlu0 0
  %57 = vperm.xlu0 %56, %v49
  %v58 = vpop.permute.xlu0 %57
  %v60 = vmul.f32 %v46, %v53
  %v61 = vmul.f32 %v47, %v58
  %vm62 = vcmask 7168
  %v63 = vsel %vm62, %v48, 0.0
  %v64 = vrot.slane %v63, 4
  %v65 = vadd.f32 %v63, %v64
  %v66 = vrot.slane %v65, 2
  %v67 = vadd.f32 %v65, %v66
  %v68 = vrot.slane %v67, 1
  %v69 = vadd.f32 %v67, %v68
  %v70 = vsel %vm62, %v49, 0.0
  %v71 = vrot.slane %v70, 4
  %v72 = vadd.f32 %v70, %v71
  %v73 = vrot.slane %v72, 2
  %v74 = vadd.f32 %v72, %v73
  %v75 = vrot.slane %v74, 1
  %v76 = vadd.f32 %v74, %v75
  %v77 = vmax.f32 %v69, 1e-13
  %v78 = vmax.f32 %v76, 1e-13
  %v79 = vrcp.pop %v77
  %v80 = vrcp.pop %v78
  %v81 = vrot.slane %v60, 4
  %v82 = vadd.f32 %v60, %v81
  %v83 = vrot.slane %v82, 2
  %v84 = vadd.f32 %v82, %v83
  %v85 = vrot.slane %v84, 1
  %v86 = vadd.f32 %v84, %v85
  %v87 = vrot.slane %v61, 4
  %v88 = vadd.f32 %v61, %v87
  %v89 = vrot.slane %v88, 2
  %v90 = vadd.f32 %v88, %v89
  %v91 = vrot.slane %v90, 1
  %v92 = vadd.f32 %v90, %v91
  %94 = vset.pattern.permute.xlu0 0
  %95 = vperm.xlu0 %94, %v79
  %v96 = vpop.permute.xlu0 %95
  %99 = vset.pattern.permute.xlu0 0
  %100 = vperm.xlu0 %99, %v80
  %v101 = vpop.permute.xlu0 %100
  %v103 = vmul.f32 %v86, %v96
  %v104 = vmul.f32 %v92, %v101
  %v105 = vsub.f32 1.0, %v48
  %v106 = vsub.f32 1.0, %v49
  %v107 = vmul.f32 %v105, -10000000.0
  %v108 = vmul.f32 %v106, -10000000.0
  %110 = vset.pattern.permute.xlu0 0
  %111 = vperm.xlu0 %110, %v107
  %v112 = vpop.permute.xlu0 %111
  %115 = vset.pattern.permute.xlu0 0
  %116 = vperm.xlu0 %115, %v108
  %v117 = vpop.permute.xlu0 %116
  %v119 = vadd.f32 %v60, %v112
  %v120 = vadd.f32 %v61, %v117
  %v121 = vrot.slane %v119, 4
  %v122 = vmax.f32 %v119, %v121
  %v123 = vrot.slane %v122, 2
  %v124 = vmax.f32 %v122, %v123
  %v125 = vrot.slane %v124, 1
  %v126 = vmax.f32 %v124, %v125
  %v127 = vrot.slane %v120, 4
  %v128 = vmax.f32 %v120, %v127
  %v129 = vrot.slane %v128, 2
  %v130 = vmax.f32 %v128, %v129
  %v131 = vrot.slane %v130, 1
  %v132 = vmax.f32 %v130, %v131
  %v133 = vpack.c.bf16 %v103, %v103
  %v134 = vpack.c.bf16 %v104, %v104
  %v135 = vpack.c.bf16 %v126, %v126
  %v136 = vpack.c.bf16 %v132, %v132
  %v137 = vld [vmem:[%s2] sm:$0xf]
  %v138 = vld [vmem:[%s2 + $0x4] sm:$0xf]
  %v139 = vunpack.c.l.bf16 %v137
  %v140 = vunpack.c.l.bf16 %v138
  %v141 = vld [vmem:[%s3] sm:$0xff]
  %v142 = vld [vmem:[%s3 + $0x8] sm:$0xff]
  %144 = vset.pattern.permute.xlu0 0
  %145 = vperm.xlu0 %144, %v141
  %v146 = vpop.permute.xlu0 %145
  %149 = vset.pattern.permute.xlu0 0
  %150 = vperm.xlu0 %149, %v142
  %v151 = vpop.permute.xlu0 %150
  %v153 = vmul.f32 %v139, %v146
  %v154 = vmul.f32 %v140, %v151
  %v155 = vsel %vm62, %v141, 0.0
  %v156 = vrot.slane %v155, 4
  %v157 = vadd.f32 %v155, %v156
  %v158 = vrot.slane %v157, 2
  %v159 = vadd.f32 %v157, %v158
  %v160 = vrot.slane %v159, 1
  %v161 = vadd.f32 %v159, %v160
  %v162 = vsel %vm62, %v142, 0.0
  %v163 = vrot.slane %v162, 4
  %v164 = vadd.f32 %v162, %v163
  %v165 = vrot.slane %v164, 2
  %v166 = vadd.f32 %v164, %v165
  %v167 = vrot.slane %v166, 1
  %v168 = vadd.f32 %v166, %v167
  %v169 = vmax.f32 %v161, 1e-13
  %v170 = vmax.f32 %v168, 1e-13
  %v171 = vrcp.pop %v169
  %v172 = vrcp.pop %v170
  %v173 = vrot.slane %v153, 4
  %v174 = vadd.f32 %v153, %v173
  %v175 = vrot.slane %v174, 2
  %v176 = vadd.f32 %v174, %v175
  %v177 = vrot.slane %v176, 1
  %v178 = vadd.f32 %v176, %v177
  %v179 = vrot.slane %v154, 4
  %v180 = vadd.f32 %v154, %v179
  %v181 = vrot.slane %v180, 2
  %v182 = vadd.f32 %v180, %v181
  %v183 = vrot.slane %v182, 1
  %v184 = vadd.f32 %v182, %v183
  %186 = vset.pattern.permute.xlu0 0
  %187 = vperm.xlu0 %186, %v171
  %v188 = vpop.permute.xlu0 %187
  %191 = vset.pattern.permute.xlu0 0
  %192 = vperm.xlu0 %191, %v172
  %v193 = vpop.permute.xlu0 %192
  %v195 = vmul.f32 %v178, %v188
  %v196 = vmul.f32 %v184, %v193
  %v197 = vsub.f32 1.0, %v141
  %v198 = vsub.f32 1.0, %v142
  %v199 = vmul.f32 %v197, -10000000.0
  %v200 = vmul.f32 %v198, -10000000.0
  %202 = vset.pattern.permute.xlu0 0
  %203 = vperm.xlu0 %202, %v199
  %v204 = vpop.permute.xlu0 %203
  %207 = vset.pattern.permute.xlu0 0
  %208 = vperm.xlu0 %207, %v200
  %v209 = vpop.permute.xlu0 %208
  %v211 = vadd.f32 %v153, %v204
  %v212 = vadd.f32 %v154, %v209
  %v213 = vrot.slane %v211, 4
  %v214 = vmax.f32 %v211, %v213
  %v215 = vrot.slane %v214, 2
  %v216 = vmax.f32 %v214, %v215
  %v217 = vrot.slane %v216, 1
  %v218 = vmax.f32 %v216, %v217
  %v219 = vrot.slane %v212, 4
  %v220 = vmax.f32 %v212, %v219
  %v221 = vrot.slane %v220, 2
  %v222 = vmax.f32 %v220, %v221
  %v223 = vrot.slane %v222, 1
  %v224 = vmax.f32 %v222, %v223
  %v225 = vpack.c.bf16 %v195, %v195
  %v226 = vpack.c.bf16 %v196, %v196
  %v227 = vpack.c.bf16 %v218, %v218
  %v228 = vpack.c.bf16 %v224, %v224
  %v229 = vld [vmem:[%s4] sm:$0xf]
  %v230 = vld [vmem:[%s4 + $0x4] sm:$0xf]
  %v231 = vld [vmem:[%s4 + $0x8] sm:$0xf]
  %v232 = vld [vmem:[%s4 + $0xc] sm:$0xf]
  %v233 = vld [vmem:[%s4 + $0x10] sm:$0xf]
  %v234 = vld [vmem:[%s4 + $0x14] sm:$0xf]
  %v235 = vld [vmem:[%s4 + $0x18] sm:$0xf]
  %v236 = vld [vmem:[%s4 + $0x1c] sm:$0xf]
  %v237 = vld [vmem:[%s4 + $0x20] sm:$0xf]
  %v238 = vld [vmem:[%s4 + $0x24] sm:$0xf]
  %v239 = vld [vmem:[%s4 + $0x28] sm:$0xf]
  %v240 = vld [vmem:[%s4 + $0x2c] sm:$0xf]
  %v241 = vld [vmem:[%s4 + $0x30] sm:$0xf]
  %v242 = vld [vmem:[%s4 + $0x34] sm:$0xf]
  %v243 = vld [vmem:[%s4 + $0x38] sm:$0xf]
  %v244 = vld [vmem:[%s4 + $0x3c] sm:$0xf]
  %v245 = vld [vmem:[%s5] sm:$0xf]
  %v246 = vld [vmem:[%s5 + $0x4] sm:$0xf]
  %v247 = vld [vmem:[%s5 + $0x8] sm:$0xf]
  %v248 = vld [vmem:[%s5 + $0xc] sm:$0xf]
  %v249 = vld [vmem:[%s5 + $0x10] sm:$0xf]
  %v250 = vld [vmem:[%s5 + $0x14] sm:$0xf]
  %v251 = vld [vmem:[%s5 + $0x18] sm:$0xf]
  %v252 = vld [vmem:[%s5 + $0x1c] sm:$0xf]
  %v253 = vld [vmem:[%s5 + $0x20] sm:$0xf]
  %v254 = vld [vmem:[%s5 + $0x24] sm:$0xf]
  %v255 = vld [vmem:[%s5 + $0x28] sm:$0xf]
  %v256 = vld [vmem:[%s5 + $0x2c] sm:$0xf]
  %v257 = vld [vmem:[%s5 + $0x30] sm:$0xf]
  %v258 = vld [vmem:[%s5 + $0x34] sm:$0xf]
  %v259 = vld [vmem:[%s5 + $0x38] sm:$0xf]
  %v260 = vld [vmem:[%s5 + $0x3c] sm:$0xf]
  %v263 = vunpack.c.l.b16 %v135
  %v264 = vunpack.c.l.b16 %v136
  %vm265 = vcmask 1041409
  %v266 = vsel %vm265, %v264, %v263
  %v267 = vpack.c.b16 %v266, %v266
  %v285 = vunpack.c.l.b16 %v245
  %v286 = vunpack.c.l.b16 %v246
  %v287 = vunpack.c.l.b16 %v247
  %v288 = vunpack.c.l.b16 %v248
  %v289 = vunpack.c.l.b16 %v249
  %v290 = vunpack.c.l.b16 %v250
  %v291 = vunpack.c.l.b16 %v251
  %v292 = vunpack.c.l.b16 %v252
  %v293 = vunpack.c.l.b16 %v253
  %v294 = vunpack.c.l.b16 %v254
  %v295 = vunpack.c.l.b16 %v255
  %v296 = vunpack.c.l.b16 %v256
  %v297 = vunpack.c.l.b16 %v257
  %v298 = vunpack.c.l.b16 %v258
  %v299 = vunpack.c.l.b16 %v259
  %v300 = vunpack.c.l.b16 %v260
  %v301 = vpack.c.b16 %v286, %v285
  %v302 = vpack.c.b16 %v288, %v287
  %v303 = vpack.c.b16 %v290, %v289
  %v304 = vpack.c.b16 %v292, %v291
  %v305 = vpack.c.b16 %v294, %v293
  %v306 = vpack.c.b16 %v296, %v295
  %v307 = vpack.c.b16 %v298, %v297
  %v308 = vpack.c.b16 %v300, %v299
  %317 = vmatpush.bf16.msra.mxu0 %v308
  %318 = vmatpush.bf16.msra.mxu0 %v307
  %319 = vmatpush.bf16.msra.mxu0 %v306
  %320 = vmatpush.bf16.msra.mxu0 %v305
  %321 = vmatpush.bf16.msra.mxu0 %v304
  %322 = vmatpush.bf16.msra.mxu0 %v303
  %323 = vmatpush.bf16.msra.mxu0 %v302
  %324 = vmatpush.bf16.msra.mxu0 %v301
  %325 = vmatmul.bf16.gmra.mxu0 %v267
  %v326 = vpop.f32.mrf.mxu0
  %v327 = vadd.f32 0.0, %v326
  %v328 = vpop.f32.mrf.mxu0
  %329 = vdwg.mxu0
  %v332 = vunpack.c.l.b16 %v133
  %v333 = vunpack.c.l.b16 %v134
  %v334 = vsel %vm265, %v333, %v332
  %v335 = vpack.c.b16 %v334, %v334
  %v353 = vunpack.c.l.b16 %v229
  %v354 = vunpack.c.l.b16 %v230
  %v355 = vunpack.c.l.b16 %v231
  %v356 = vunpack.c.l.b16 %v232
  %v357 = vunpack.c.l.b16 %v233
  %v358 = vunpack.c.l.b16 %v234
  %v359 = vunpack.c.l.b16 %v235
  %v360 = vunpack.c.l.b16 %v236
  %v361 = vunpack.c.l.b16 %v237
  %v362 = vunpack.c.l.b16 %v238
  %v363 = vunpack.c.l.b16 %v239
  %v364 = vunpack.c.l.b16 %v240
  %v365 = vunpack.c.l.b16 %v241
  %v366 = vunpack.c.l.b16 %v242
  %v367 = vunpack.c.l.b16 %v243
  %v368 = vunpack.c.l.b16 %v244
  %v369 = vpack.c.b16 %v354, %v353
  %v370 = vpack.c.b16 %v356, %v355
  %v371 = vpack.c.b16 %v358, %v357
  %v372 = vpack.c.b16 %v360, %v359
  %v373 = vpack.c.b16 %v362, %v361
  %v374 = vpack.c.b16 %v364, %v363
  %v375 = vpack.c.b16 %v366, %v365
  %v376 = vpack.c.b16 %v368, %v367
  %385 = vmatpush.bf16.msra.mxu0 %v376
  %386 = vmatpush.bf16.msra.mxu0 %v375
  %387 = vmatpush.bf16.msra.mxu0 %v374
  %388 = vmatpush.bf16.msra.mxu0 %v373
  %389 = vmatpush.bf16.msra.mxu0 %v372
  %390 = vmatpush.bf16.msra.mxu0 %v371
  %391 = vmatpush.bf16.msra.mxu0 %v370
  %392 = vmatpush.bf16.msra.mxu0 %v369
  %393 = vmatmul.bf16.gmra.mxu0 %v335
  %v394 = vpop.f32.mrf.mxu0
  %v395 = vadd.f32 %v327, %v394
  %v396 = vpop.f32.mrf.mxu0
  %397 = vdwg.mxu0
  %v398 = vld [vmem:[%s6] sm:$0xf]
  %v399 = vld [vmem:[%s6 + $0x4] sm:$0xf]
  %v400 = vld [vmem:[%s6 + $0x8] sm:$0xf]
  %v401 = vld [vmem:[%s6 + $0xc] sm:$0xf]
  %v402 = vld [vmem:[%s6 + $0x10] sm:$0xf]
  %v403 = vld [vmem:[%s6 + $0x14] sm:$0xf]
  %v404 = vld [vmem:[%s6 + $0x18] sm:$0xf]
  %v405 = vld [vmem:[%s6 + $0x1c] sm:$0xf]
  %v406 = vld [vmem:[%s6 + $0x20] sm:$0xf]
  %v407 = vld [vmem:[%s6 + $0x24] sm:$0xf]
  %v408 = vld [vmem:[%s6 + $0x28] sm:$0xf]
  %v409 = vld [vmem:[%s6 + $0x2c] sm:$0xf]
  %v410 = vld [vmem:[%s6 + $0x30] sm:$0xf]
  %v411 = vld [vmem:[%s6 + $0x34] sm:$0xf]
  %v412 = vld [vmem:[%s6 + $0x38] sm:$0xf]
  %v413 = vld [vmem:[%s6 + $0x3c] sm:$0xf]
  %v416 = vunpack.c.l.b16 %v225
  %v417 = vunpack.c.l.b16 %v226
  %v418 = vsel %vm265, %v417, %v416
  %v419 = vpack.c.b16 %v418, %v418
  %v437 = vunpack.c.l.b16 %v398
  %v438 = vunpack.c.l.b16 %v399
  %v439 = vunpack.c.l.b16 %v400
  %v440 = vunpack.c.l.b16 %v401
  %v441 = vunpack.c.l.b16 %v402
  %v442 = vunpack.c.l.b16 %v403
  %v443 = vunpack.c.l.b16 %v404
  %v444 = vunpack.c.l.b16 %v405
  %v445 = vunpack.c.l.b16 %v406
  %v446 = vunpack.c.l.b16 %v407
  %v447 = vunpack.c.l.b16 %v408
  %v448 = vunpack.c.l.b16 %v409
  %v449 = vunpack.c.l.b16 %v410
  %v450 = vunpack.c.l.b16 %v411
  %v451 = vunpack.c.l.b16 %v412
  %v452 = vunpack.c.l.b16 %v413
  %v453 = vpack.c.b16 %v438, %v437
  %v454 = vpack.c.b16 %v440, %v439
  %v455 = vpack.c.b16 %v442, %v441
  %v456 = vpack.c.b16 %v444, %v443
  %v457 = vpack.c.b16 %v446, %v445
  %v458 = vpack.c.b16 %v448, %v447
  %v459 = vpack.c.b16 %v450, %v449
  %v460 = vpack.c.b16 %v452, %v451
  %469 = vmatpush.bf16.msra.mxu0 %v460
  %470 = vmatpush.bf16.msra.mxu0 %v459
  %471 = vmatpush.bf16.msra.mxu0 %v458
  %472 = vmatpush.bf16.msra.mxu0 %v457
  %473 = vmatpush.bf16.msra.mxu0 %v456
  %474 = vmatpush.bf16.msra.mxu0 %v455
  %475 = vmatpush.bf16.msra.mxu0 %v454
  %476 = vmatpush.bf16.msra.mxu0 %v453
  %477 = vmatmul.bf16.gmra.mxu0 %v419
  %v478 = vpop.f32.mrf.mxu0
  %v479 = vadd.f32 0.0, %v478
  %v480 = vpop.f32.mrf.mxu0
  %481 = vdwg.mxu0
  %v482 = vadd.f32 %v395, %v479
  %v483 = vld [vmem:[%s7] sm:$0xf]
  %v484 = vld [vmem:[%s7 + $0x4] sm:$0xf]
  %v485 = vld [vmem:[%s7 + $0x8] sm:$0xf]
  %v486 = vld [vmem:[%s7 + $0xc] sm:$0xf]
  %v487 = vld [vmem:[%s7 + $0x10] sm:$0xf]
  %v488 = vld [vmem:[%s7 + $0x14] sm:$0xf]
  %v489 = vld [vmem:[%s7 + $0x18] sm:$0xf]
  %v490 = vld [vmem:[%s7 + $0x1c] sm:$0xf]
  %v491 = vld [vmem:[%s7 + $0x20] sm:$0xf]
  %v492 = vld [vmem:[%s7 + $0x24] sm:$0xf]
  %v493 = vld [vmem:[%s7 + $0x28] sm:$0xf]
  %v494 = vld [vmem:[%s7 + $0x2c] sm:$0xf]
  %v495 = vld [vmem:[%s7 + $0x30] sm:$0xf]
  %v496 = vld [vmem:[%s7 + $0x34] sm:$0xf]
  %v497 = vld [vmem:[%s7 + $0x38] sm:$0xf]
  %v498 = vld [vmem:[%s7 + $0x3c] sm:$0xf]
  %v501 = vunpack.c.l.b16 %v227
  %v502 = vunpack.c.l.b16 %v228
  %v503 = vsel %vm265, %v502, %v501
  %v504 = vpack.c.b16 %v503, %v503
  %v522 = vunpack.c.l.b16 %v483
  %v523 = vunpack.c.l.b16 %v484
  %v524 = vunpack.c.l.b16 %v485
  %v525 = vunpack.c.l.b16 %v486
  %v526 = vunpack.c.l.b16 %v487
  %v527 = vunpack.c.l.b16 %v488
  %v528 = vunpack.c.l.b16 %v489
  %v529 = vunpack.c.l.b16 %v490
  %v530 = vunpack.c.l.b16 %v491
  %v531 = vunpack.c.l.b16 %v492
  %v532 = vunpack.c.l.b16 %v493
  %v533 = vunpack.c.l.b16 %v494
  %v534 = vunpack.c.l.b16 %v495
  %v535 = vunpack.c.l.b16 %v496
  %v536 = vunpack.c.l.b16 %v497
  %v537 = vunpack.c.l.b16 %v498
  %v538 = vpack.c.b16 %v523, %v522
  %v539 = vpack.c.b16 %v525, %v524
  %v540 = vpack.c.b16 %v527, %v526
  %v541 = vpack.c.b16 %v529, %v528
  %v542 = vpack.c.b16 %v531, %v530
  %v543 = vpack.c.b16 %v533, %v532
  %v544 = vpack.c.b16 %v535, %v534
  %v545 = vpack.c.b16 %v537, %v536
  %554 = vmatpush.bf16.msra.mxu0 %v545
  %555 = vmatpush.bf16.msra.mxu0 %v544
  %556 = vmatpush.bf16.msra.mxu0 %v543
  %557 = vmatpush.bf16.msra.mxu0 %v542
  %558 = vmatpush.bf16.msra.mxu0 %v541
  %559 = vmatpush.bf16.msra.mxu0 %v540
  %560 = vmatpush.bf16.msra.mxu0 %v539
  %561 = vmatpush.bf16.msra.mxu0 %v538
  %562 = vmatmul.bf16.gmra.mxu0 %v504
  %v563 = vpop.f32.mrf.mxu0
  %v564 = vadd.f32 0.0, %v563
  %v565 = vpop.f32.mrf.mxu0
  %566 = vdwg.mxu0
  %v567 = vadd.f32 %v482, %v564
  %v568 = vld [vmem:[%s8] sm:$0x1]
  %v570 = vperm.slane %v568, 0
  %v572 = vadd.f32 %v567, %v570
  %v573 = vmax.f32 %v572, 0.0
  %v574 = vpack.c.bf16 %v573, %v573
  %v575 = vld [vmem:[%s9] sm:$0xf]
  %v576 = vld [vmem:[%s9 + $0x4] sm:$0xf]
  %v577 = vld [vmem:[%s9 + $0x8] sm:$0xf]
  %v578 = vld [vmem:[%s9 + $0xc] sm:$0xf]
  %v579 = vld [vmem:[%s9 + $0x10] sm:$0xf]
  %v580 = vld [vmem:[%s9 + $0x14] sm:$0xf]
  %v581 = vld [vmem:[%s9 + $0x18] sm:$0xf]
  %v582 = vld [vmem:[%s9 + $0x1c] sm:$0xf]
  %v583 = vld [vmem:[%s9 + $0x20] sm:$0xf]
  %v584 = vld [vmem:[%s9 + $0x24] sm:$0xf]
  %v585 = vld [vmem:[%s9 + $0x28] sm:$0xf]
  %v586 = vld [vmem:[%s9 + $0x2c] sm:$0xf]
  %v587 = vld [vmem:[%s9 + $0x30] sm:$0xf]
  %v588 = vld [vmem:[%s9 + $0x34] sm:$0xf]
  %v589 = vld [vmem:[%s9 + $0x38] sm:$0xf]
  %v590 = vld [vmem:[%s9 + $0x3c] sm:$0xf]
  %v591 = vld [vmem:[%s10] sm:$0x1]
  %v593 = vperm.slane %v591, 0
  %v611 = vunpack.c.l.b16 %v575
  %v612 = vunpack.c.l.b16 %v576
  %v613 = vunpack.c.l.b16 %v577
  %v614 = vunpack.c.l.b16 %v578
  %v615 = vunpack.c.l.b16 %v579
  %v616 = vunpack.c.l.b16 %v580
  %v617 = vunpack.c.l.b16 %v581
  %v618 = vunpack.c.l.b16 %v582
  %v619 = vunpack.c.l.b16 %v583
  %v620 = vunpack.c.l.b16 %v584
  %v621 = vunpack.c.l.b16 %v585
  %v622 = vunpack.c.l.b16 %v586
  %v623 = vunpack.c.l.b16 %v587
  %v624 = vunpack.c.l.b16 %v588
  %v625 = vunpack.c.l.b16 %v589
  %v626 = vunpack.c.l.b16 %v590
  %v627 = vpack.c.b16 %v612, %v611
  %v628 = vpack.c.b16 %v614, %v613
  %v629 = vpack.c.b16 %v616, %v615
  %v630 = vpack.c.b16 %v618, %v617
  %v631 = vpack.c.b16 %v620, %v619
  %v632 = vpack.c.b16 %v622, %v621
  %v633 = vpack.c.b16 %v624, %v623
  %v634 = vpack.c.b16 %v626, %v625
  %643 = vmatpush.bf16.msra.mxu0 %v634
  %644 = vmatpush.bf16.msra.mxu0 %v633
  %645 = vmatpush.bf16.msra.mxu0 %v632
  %646 = vmatpush.bf16.msra.mxu0 %v631
  %647 = vmatpush.bf16.msra.mxu0 %v630
  %648 = vmatpush.bf16.msra.mxu0 %v629
  %649 = vmatpush.bf16.msra.mxu0 %v628
  %650 = vmatpush.bf16.msra.mxu0 %v627
  %651 = vmatmul.bf16.gmra.mxu0 %v574
  %v652 = vpop.f32.mrf.mxu0
  %v653 = vadd.f32 %v593, %v652
  %v654 = vpop.f32.mrf.mxu0
  %655 = vdwg.mxu0
  %v656 = vmax.f32 %v653, 0.0
  %v657 = vpack.c.bf16 %v656, %v656
  %v658 = vld [vmem:[%s11] sm:$0xf]
  %v659 = vld [vmem:[%s11 + $0x4] sm:$0xf]
  %v660 = vld [vmem:[%s11 + $0x8] sm:$0xf]
  %v661 = vld [vmem:[%s11 + $0xc] sm:$0xf]
  %v662 = vld [vmem:[%s11 + $0x10] sm:$0xf]
  %v663 = vld [vmem:[%s11 + $0x14] sm:$0xf]
  %v664 = vld [vmem:[%s11 + $0x18] sm:$0xf]
  %v665 = vld [vmem:[%s11 + $0x1c] sm:$0xf]
  %v666 = vld [vmem:[%s11 + $0x20] sm:$0xf]
  %v667 = vld [vmem:[%s11 + $0x24] sm:$0xf]
  %v668 = vld [vmem:[%s11 + $0x28] sm:$0xf]
  %v669 = vld [vmem:[%s11 + $0x2c] sm:$0xf]
  %v670 = vld [vmem:[%s11 + $0x30] sm:$0xf]
  %v671 = vld [vmem:[%s11 + $0x34] sm:$0xf]
  %v672 = vld [vmem:[%s11 + $0x38] sm:$0xf]
  %v673 = vld [vmem:[%s11 + $0x3c] sm:$0xf]
  %v674 = vld [vmem:[%s12] sm:$0x1]
  %v676 = vperm.slane %v674, 0
  %v694 = vunpack.c.l.b16 %v658
  %v695 = vunpack.c.l.b16 %v659
  %v696 = vunpack.c.l.b16 %v660
  %v697 = vunpack.c.l.b16 %v661
  %v698 = vunpack.c.l.b16 %v662
  %v699 = vunpack.c.l.b16 %v663
  %v700 = vunpack.c.l.b16 %v664
  %v701 = vunpack.c.l.b16 %v665
  %v702 = vunpack.c.l.b16 %v666
  %v703 = vunpack.c.l.b16 %v667
  %v704 = vunpack.c.l.b16 %v668
  %v705 = vunpack.c.l.b16 %v669
  %v706 = vunpack.c.l.b16 %v670
  %v707 = vunpack.c.l.b16 %v671
  %v708 = vunpack.c.l.b16 %v672
  %v709 = vunpack.c.l.b16 %v673
  %v710 = vpack.c.b16 %v695, %v694
  %v711 = vpack.c.b16 %v697, %v696
  %v712 = vpack.c.b16 %v699, %v698
  %v713 = vpack.c.b16 %v701, %v700
  %v714 = vpack.c.b16 %v703, %v702
  %v715 = vpack.c.b16 %v705, %v704
  %v716 = vpack.c.b16 %v707, %v706
  %v717 = vpack.c.b16 %v709, %v708
  %726 = vmatpush.bf16.msra.mxu0 %v717
  %727 = vmatpush.bf16.msra.mxu0 %v716
  %728 = vmatpush.bf16.msra.mxu0 %v715
  %729 = vmatpush.bf16.msra.mxu0 %v714
  %730 = vmatpush.bf16.msra.mxu0 %v713
  %731 = vmatpush.bf16.msra.mxu0 %v712
  %732 = vmatpush.bf16.msra.mxu0 %v711
  %733 = vmatpush.bf16.msra.mxu0 %v710
  %734 = vmatmul.bf16.gmra.mxu0 %v657
  %v735 = vpop.f32.mrf.mxu0
  %v736 = vadd.f32 %v676, %v735
  %v737 = vpop.f32.mrf.mxu0
  %738 = vdwg.mxu0
  %vm739 = vcmask 17408
  %740 = vst.msk [vmem:[%s13] sm:$0x3] %vm739, %v736
  // Predicated region
  $region54: #{esim_forward.9} parent=0 // pred_check
    _
  $region55: #{esim_forward.9} parent=0 // pred_check_branch
    %742 = sbr.rel (0) target = $region57
  $region56: #{esim_forward.9} parent=0 // pred_region
    _
  $region57: #{esim_forward.9} parent=0 // pred_fallthru
    _
  // Predicated region
  $region58: #{esim_forward.9} parent=0 // pred_check
    _
  $region59: #{esim_forward.9} parent=0 // pred_check_branch
    %744 = sbr.rel (0) target = $region61
  $region60: #{esim_forward.9} parent=0 // pred_region
    _
  $region61: #{esim_forward.9} parent=0 // pred_fallthru
    _

// kernel: esim_forward.8
$region0: #{esim_forward.8}
  #allocation0 [shape = 'u32[]', space=smem, size = 0x4, offset = 0x4, fixed_abs, tag = 'smem constant byte address 0x4 - core index']
  #allocation1 [shape = 'u32[72,128]{1,0:T(1,128)}', space=vmem, size = 0x9000, scoped, tag = 'internal scratch']
  #allocation2 [shape = 'f32[4,8,512]{2,1,0:T(8,128)}', space=vmem, size = 0x10000, scoped, tag = 'scratch operand']
  %s0 = inlined_call_operand.vmem [shape: bf16[4,8,128], index: 0, kind: input, shape index: {}]
  %s1 = inlined_call_operand.vmem [shape: bf16[128,512], index: 1, kind: input, shape index: {}]
  %s2 = inlined_call_operand.hbm [shape: bf16[128,512], index: 2, kind: input, shape index: {}]
  %s3 = inlined_call_operand.vmem [shape: f32[1,512], index: 3, kind: input, shape index: {}]
  %s4 = inlined_call_operand.vmem [shape: f32[4,8,1], index: 4, kind: input, shape index: {}]
  %s5 = inlined_call_operand.vmem [shape: bf16[4,8,128], index: 5, kind: output, shape index: {}]
  %s6 = sld [smem:[#allocation0]]
  $region34: #{esim_forward.8} parent=0
    _
  %s8 = ssub.s32 1, %s6
  %s9 = scalar_select 0, %s8, %s6
  $region1: #{esim_forward.8} parent=0
    #allocation3 [shape = 'u8[131072]{0}', space=vmem, size = 0x20000, scoped, tag = 'input window, operand 2, single buffered']
    #allocation4 [shape = 's32[1]{0}', space=sflag, size = 0x4, scoped, tag = 'scoped memory for esim_forward.8']
    %10 = vsyncpa [#allocation4], 0
    // Predicated region
    $region2: #{esim_forward.8} parent=1 // pred_check
      _
    $region3: #{esim_forward.8} parent=1 // pred_check_branch
      %12 = sbr.rel (0) target = $region5
    $region4: #{esim_forward.8} parent=1 // pred_region
      _
    $region5: #{esim_forward.8} parent=1 // pred_fallthru
      _
    // Predicated region
    $region6: #{esim_forward.8} parent=1 // pred_check
      _
    $region7: #{esim_forward.8} parent=1 // pred_check_branch
      %14 = sbr.rel (0) target = $region9
    $region8: #{esim_forward.8} parent=1 // pred_region
      _
    $region9: #{esim_forward.8} parent=1 // pred_fallthru
      _
    // Predicated region
    $region10: #{esim_forward.8} parent=1 // pred_check
      _
    $region11: #{esim_forward.8} parent=1 // pred_check_branch
      %16 = sbr.rel (0) target = $region13
    $region12: #{esim_forward.8} parent=1 // pred_region
      %18 = vsyncadd [#allocation4], 0
      %s19 = sshll.u32 %s2, 4
      %s20 = int_to_ptr.hbm [resolvable:$true] %s19
      %s21 = sshll.u32 [#allocation3], 4
      %s22 = int_to_ptr.vmem [resolvable:$true] %s21
      %27 = dma.hbm_to_vmem [thread:$0]  %s20, 4096, %s22, [#allocation4], 256, 256, 16
    $region13: #{esim_forward.8} parent=1 // pred_fallthru
      _
    // Predicated region
    $region14: #{esim_forward.8} parent=1 // pred_check
      _
    $region15: #{esim_forward.8} parent=1 // pred_check_branch
      %29 = sbr.rel (0) target = $region17
    $region16: #{esim_forward.8} parent=1 // pred_region
      _
    $region17: #{esim_forward.8} parent=1 // pred_fallthru
      _
    // Predicated region
    $region18: #{esim_forward.8} parent=1 // pred_check
      _
    $region19: #{esim_forward.8} parent=1 // pred_check_branch
      %31 = sbr.rel (0) target = $region21
    $region20: #{esim_forward.8} parent=1 // pred_region
      _
    $region21: #{esim_forward.8} parent=1 // pred_fallthru
      _
    // Predicated region
    $region22: #{esim_forward.8} parent=1 // pred_check
      _
    $region23: #{esim_forward.8} parent=1 // pred_check_branch
      %33 = sbr.rel (0) target = $region25
    $region24: #{esim_forward.8} parent=1 // pred_region
      %35 = dma.done [#allocation4], 4096
    $region25: #{esim_forward.8} parent=1 // pred_fallthru
      _
    %v37 = vld [vmem:[%s0] sm:$0xf]
    %v38 = vld [vmem:[%s0 + $0x4] sm:$0xf]
    %v39 = vld [vmem:[%s0 + $0x8] sm:$0xf]
    %v40 = vld [vmem:[%s0 + $0xc] sm:$0xf]
    %v41 = vld [vmem:[%s1] sm:$0xff]
    %v42 = vld [vmem:[%s1 + $0x8] sm:$0xff]
    %v43 = vld [vmem:[%s1 + $0x10] sm:$0xff]
    %v44 = vld [vmem:[%s1 + $0x18] sm:$0xff]
    %v45 = vld [vmem:[%s1 + $0x20] sm:$0xff]
    %v46 = vld [vmem:[%s1 + $0x28] sm:$0xff]
    %v47 = vld [vmem:[%s1 + $0x30] sm:$0xff]
    %v48 = vld [vmem:[%s1 + $0x38] sm:$0xff]
    %v49 = vld [vmem:[%s1 + $0x40] sm:$0xff]
    %v50 = vld [vmem:[%s1 + $0x48] sm:$0xff]
    %v51 = vld [vmem:[%s1 + $0x50] sm:$0xff]
    %v52 = vld [vmem:[%s1 + $0x58] sm:$0xff]
    %v53 = vld [vmem:[%s1 + $0x60] sm:$0xff]
    %v54 = vld [vmem:[%s1 + $0x68] sm:$0xff]
    %v55 = vld [vmem:[%s1 + $0x70] sm:$0xff]
    %v56 = vld [vmem:[%s1 + $0x78] sm:$0xff]
    %v57 = vld [vmem:[%s1 + $0x80] sm:$0xff]
    %v58 = vld [vmem:[%s1 + $0x88] sm:$0xff]
    %v59 = vld [vmem:[%s1 + $0x90] sm:$0xff]
    %v60 = vld [vmem:[%s1 + $0x98] sm:$0xff]
    %v61 = vld [vmem:[%s1 + $0xa0] sm:$0xff]
    %v62 = vld [vmem:[%s1 + $0xa8] sm:$0xff]
    %v63 = vld [vmem:[%s1 + $0xb0] sm:$0xff]
    %v64 = vld [vmem:[%s1 + $0xb8] sm:$0xff]
    %v65 = vld [vmem:[%s1 + $0xc0] sm:$0xff]
    %v66 = vld [vmem:[%s1 + $0xc8] sm:$0xff]
    %v67 = vld [vmem:[%s1 + $0xd0] sm:$0xff]
    %v68 = vld [vmem:[%s1 + $0xd8] sm:$0xff]
    %v69 = vld [vmem:[%s1 + $0xe0] sm:$0xff]
    %v70 = vld [vmem:[%s1 + $0xe8] sm:$0xff]
    %v71 = vld [vmem:[%s1 + $0xf0] sm:$0xff]
    %v72 = vld [vmem:[%s1 + $0xf8] sm:$0xff]
    %v73 = vld [vmem:[%s3] sm:$0xf]
    %v75 = vperm.slane %v73, 0
    %v76 = vperm.slane %v73, 1
    %v77 = vperm.slane %v73, 2
    %v78 = vperm.slane %v73, 3
    %v87 = vunpack.c.l.b16 %v37
    %v88 = vunpack.c.l.b16 %v38
    %v89 = vunpack.c.l.b16 %v39
    %v90 = vunpack.c.l.b16 %v40
    %v91 = vpack.c.b16 %v88, %v87
    %v92 = vpack.c.b16 %v90, %v89
    %v127 = vunpack.c.l.b16 %v41
    %v128 = vunpack.c.h.b16 %v41
    %v129 = vunpack.c.l.b16 %v42
    %v130 = vunpack.c.h.b16 %v42
    %v131 = vunpack.c.l.b16 %v43
    %v132 = vunpack.c.h.b16 %v43
    %v133 = vunpack.c.l.b16 %v44
    %v134 = vunpack.c.h.b16 %v44
    %v135 = vunpack.c.l.b16 %v45
    %v136 = vunpack.c.h.b16 %v45
    %v137 = vunpack.c.l.b16 %v46
    %v138 = vunpack.c.h.b16 %v46
    %v139 = vunpack.c.l.b16 %v47
    %v140 = vunpack.c.h.b16 %v47
    %v141 = vunpack.c.l.b16 %v48
    %v142 = vunpack.c.h.b16 %v48
    %v143 = vunpack.c.l.b16 %v49
    %v144 = vunpack.c.h.b16 %v49
    %v145 = vunpack.c.l.b16 %v50
    %v146 = vunpack.c.h.b16 %v50
    %v147 = vunpack.c.l.b16 %v51
    %v148 = vunpack.c.h.b16 %v51
    %v149 = vunpack.c.l.b16 %v52
    %v150 = vunpack.c.h.b16 %v52
    %v151 = vunpack.c.l.b16 %v53
    %v152 = vunpack.c.h.b16 %v53
    %v153 = vunpack.c.l.b16 %v54
    %v154 = vunpack.c.h.b16 %v54
    %v155 = vunpack.c.l.b16 %v55
    %v156 = vunpack.c.h.b16 %v55
    %v157 = vunpack.c.l.b16 %v56
    %v158 = vunpack.c.h.b16 %v56
    %v159 = vunpack.c.l.b16 %v57
    %v160 = vunpack.c.h.b16 %v57
    %v161 = vunpack.c.l.b16 %v58
    %v162 = vunpack.c.h.b16 %v58
    %v163 = vunpack.c.l.b16 %v59
    %v164 = vunpack.c.h.b16 %v59
    %v165 = vunpack.c.l.b16 %v60
    %v166 = vunpack.c.h.b16 %v60
    %v167 = vunpack.c.l.b16 %v61
    %v168 = vunpack.c.h.b16 %v61
    %v169 = vunpack.c.l.b16 %v62
    %v170 = vunpack.c.h.b16 %v62
    %v171 = vunpack.c.l.b16 %v63
    %v172 = vunpack.c.h.b16 %v63
    %v173 = vunpack.c.l.b16 %v64
    %v174 = vunpack.c.h.b16 %v64
    %v175 = vunpack.c.l.b16 %v65
    %v176 = vunpack.c.h.b16 %v65
    %v177 = vunpack.c.l.b16 %v66
    %v178 = vunpack.c.h.b16 %v66
    %v179 = vunpack.c.l.b16 %v67
    %v180 = vunpack.c.h.b16 %v67
    %v181 = vunpack.c.l.b16 %v68
    %v182 = vunpack.c.h.b16 %v68
    %v183 = vunpack.c.l.b16 %v69
    %v184 = vunpack.c.h.b16 %v69
    %v185 = vunpack.c.l.b16 %v70
    %v186 = vunpack.c.h.b16 %v70
    %v187 = vunpack.c.l.b16 %v71
    %v188 = vunpack.c.h.b16 %v71
    %v189 = vunpack.c.l.b16 %v72
    %v190 = vunpack.c.h.b16 %v72
    %v191 = vpack.c.b16 %v131, %v127
    %v192 = vpack.c.b16 %v132, %v128
    %v193 = vpack.c.b16 %v133, %v129
    %v194 = vpack.c.b16 %v134, %v130
    %v195 = vpack.c.b16 %v139, %v135
    %v196 = vpack.c.b16 %v140, %v136
    %v197 = vpack.c.b16 %v141, %v137
    %v198 = vpack.c.b16 %v142, %v138
    %v199 = vpack.c.b16 %v147, %v143
    %v200 = vpack.c.b16 %v148, %v144
    %v201 = vpack.c.b16 %v149, %v145
    %v202 = vpack.c.b16 %v150, %v146
    %v203 = vpack.c.b16 %v155, %v151
    %v204 = vpack.c.b16 %v156, %v152
    %v205 = vpack.c.b16 %v157, %v153
    %v206 = vpack.c.b16 %v158, %v154
    %v207 = vpack.c.b16 %v163, %v159
    %v208 = vpack.c.b16 %v164, %v160
    %v209 = vpack.c.b16 %v165, %v161
    %v210 = vpack.c.b16 %v166, %v162
    %v211 = vpack.c.b16 %v171, %v167
    %v212 = vpack.c.b16 %v172, %v168
    %v213 = vpack.c.b16 %v173, %v169
    %v214 = vpack.c.b16 %v174, %v170
    %v215 = vpack.c.b16 %v179, %v175
    %v216 = vpack.c.b16 %v180, %v176
    %v217 = vpack.c.b16 %v181, %v177
    %v218 = vpack.c.b16 %v182, %v178
    %v219 = vpack.c.b16 %v187, %v183
    %v220 = vpack.c.b16 %v188, %v184
    %v221 = vpack.c.b16 %v189, %v185
    %v222 = vpack.c.b16 %v190, %v186
    %255 = vmatpush.bf16.msra.mxu0 %v219
    %256 = vmatpush.bf16.msra.mxu0 %v215
    %257 = vmatpush.bf16.msra.mxu0 %v211
    %258 = vmatpush.bf16.msra.mxu0 %v207
    %259 = vmatpush.bf16.msra.mxu0 %v203
    %260 = vmatpush.bf16.msra.mxu0 %v199
    %261 = vmatpush.bf16.msra.mxu0 %v195
    %262 = vmatpush.bf16.msra.mxu0 %v191
    %263 = vmatmul.bf16.gmra.mxu0 %v91
    %v264 = vpop.f32.mrf.mxu0
    %v265 = vadd.f32 %v75, %v264
    %v266 = vpop.f32.mrf.mxu0
    %v267 = vadd.f32 %v75, %v266
    %268 = vmatmul.bf16.gmra.mxu0 %v92
    %v269 = vpop.f32.mrf.mxu0
    %v270 = vadd.f32 %v75, %v269
    %v271 = vpop.f32.mrf.mxu0
    %v272 = vadd.f32 %v75, %v271
    %273 = vdwg.mxu0
    %274 = vmatpush.bf16.msra.mxu0 %v220
    %275 = vmatpush.bf16.msra.mxu0 %v216
    %276 = vmatpush.bf16.msra.mxu0 %v212
    %277 = vmatpush.bf16.msra.mxu0 %v208
    %278 = vmatpush.bf16.msra.mxu0 %v204
    %279 = vmatpush.bf16.msra.mxu0 %v200
    %280 = vmatpush.bf16.msra.mxu0 %v196
    %281 = vmatpush.bf16.msra.mxu0 %v192
    %282 = vmatmul.bf16.gmra.mxu0 %v91
    %v283 = vpop.f32.mrf.mxu0
    %v284 = vadd.f32 %v76, %v283
    %v285 = vpop.f32.mrf.mxu0
    %v286 = vadd.f32 %v76, %v285
    %287 = vmatmul.bf16.gmra.mxu0 %v92
    %v288 = vpop.f32.mrf.mxu0
    %v289 = vadd.f32 %v76, %v288
    %v290 = vpop.f32.mrf.mxu0
    %v291 = vadd.f32 %v76, %v290
    %292 = vdwg.mxu0
    %293 = vmatpush.bf16.msra.mxu0 %v221
    %294 = vmatpush.bf16.msra.mxu0 %v217
    %295 = vmatpush.bf16.msra.mxu0 %v213
    %296 = vmatpush.bf16.msra.mxu0 %v209
    %297 = vmatpush.bf16.msra.mxu0 %v205
    %298 = vmatpush.bf16.msra.mxu0 %v201
    %299 = vmatpush.bf16.msra.mxu0 %v197
    %300 = vmatpush.bf16.msra.mxu0 %v193
    %301 = vmatmul.bf16.gmra.mxu0 %v91
    %v302 = vpop.f32.mrf.mxu0
    %v303 = vadd.f32 %v77, %v302
    %v304 = vpop.f32.mrf.mxu0
    %v305 = vadd.f32 %v77, %v304
    %306 = vmatmul.bf16.gmra.mxu0 %v92
    %v307 = vpop.f32.mrf.mxu0
    %v308 = vadd.f32 %v77, %v307
    %v309 = vpop.f32.mrf.mxu0
    %v310 = vadd.f32 %v77, %v309
    %311 = vdwg.mxu0
    %312 = vmatpush.bf16.msra.mxu0 %v222
    %313 = vmatpush.bf16.msra.mxu0 %v218
    %314 = vmatpush.bf16.msra.mxu0 %v214
    %315 = vmatpush.bf16.msra.mxu0 %v210
    %316 = vmatpush.bf16.msra.mxu0 %v206
    %317 = vmatpush.bf16.msra.mxu0 %v202
    %318 = vmatpush.bf16.msra.mxu0 %v198
    %319 = vmatpush.bf16.msra.mxu0 %v194
    %320 = vmatmul.bf16.gmra.mxu0 %v91
    %v321 = vpop.f32.mrf.mxu0
    %v322 = vadd.f32 %v78, %v321
    %v323 = vpop.f32.mrf.mxu0
    %v324 = vadd.f32 %v78, %v323
    %325 = vmatmul.bf16.gmra.mxu0 %v92
    %v326 = vpop.f32.mrf.mxu0
    %v327 = vadd.f32 %v78, %v326
    %v328 = vpop.f32.mrf.mxu0
    %v329 = vadd.f32 %v78, %v328
    %330 = vdwg.mxu0
    %331 = vst [vmem:[#allocation2] sm:$0xff] %v265
    %332 = vst [vmem:[#allocation2 + $0x8] sm:$0xff] %v284
    %333 = vst [vmem:[#allocation2 + $0x10] sm:$0xff] %v303
    %334 = vst [vmem:[#allocation2 + $0x18] sm:$0xff] %v322
    %335 = vst [vmem:[#allocation2 + $0x20] sm:$0xff] %v267
    %336 = vst [vmem:[#allocation2 + $0x28] sm:$0xff] %v286
    %337 = vst [vmem:[#allocation2 + $0x30] sm:$0xff] %v305
    %338 = vst [vmem:[#allocation2 + $0x38] sm:$0xff] %v324
    %339 = vst [vmem:[#allocation2 + $0x40] sm:$0xff] %v270
    %340 = vst [vmem:[#allocation2 + $0x48] sm:$0xff] %v289
    %341 = vst [vmem:[#allocation2 + $0x50] sm:$0xff] %v308
    %342 = vst [vmem:[#allocation2 + $0x58] sm:$0xff] %v327
    %343 = vst [vmem:[#allocation2 + $0x60] sm:$0xff] %v272
    %344 = vst [vmem:[#allocation2 + $0x68] sm:$0xff] %v291
    %345 = vst [vmem:[#allocation2 + $0x70] sm:$0xff] %v310
    %346 = vst [vmem:[#allocation2 + $0x78] sm:$0xff] %v329
    %v347 = vld [vmem:[#allocation3] sm:$0xff]
    %v348 = vld [vmem:[#allocation3 + $0x8] sm:$0xff]
    %v349 = vld [vmem:[#allocation3 + $0x10] sm:$0xff]
    %v350 = vld [vmem:[#allocation3 + $0x18] sm:$0xff]
    %v351 = vld [vmem:[#allocation3 + $0x20] sm:$0xff]
    %v352 = vld [vmem:[#allocation3 + $0x28] sm:$0xff]
    %v353 = vld [vmem:[#allocation3 + $0x30] sm:$0xff]
    %v354 = vld [vmem:[#allocation3 + $0x38] sm:$0xff]
    %v355 = vld [vmem:[#allocation3 + $0x40] sm:$0xff]
    %v356 = vld [vmem:[#allocation3 + $0x48] sm:$0xff]
    %v357 = vld [vmem:[#allocation3 + $0x50] sm:$0xff]
    %v358 = vld [vmem:[#allocation3 + $0x58] sm:$0xff]
    %v359 = vld [vmem:[#allocation3 + $0x60] sm:$0xff]
    %v360 = vld [vmem:[#allocation3 + $0x68] sm:$0xff]
    %v361 = vld [vmem:[#allocation3 + $0x70] sm:$0xff]
    %v362 = vld [vmem:[#allocation3 + $0x78] sm:$0xff]
    %v363 = vld [vmem:[#allocation3 + $0x80] sm:$0xff]
    %v364 = vld [vmem:[#allocation3 + $0x88] sm:$0xff]
    %v365 = vld [vmem:[#allocation3 + $0x90] sm:$0xff]
    %v366 = vld [vmem:[#allocation3 + $0x98] sm:$0xff]
    %v367 = vld [vmem:[#allocation3 + $0xa0] sm:$0xff]
    %v368 = vld [vmem:[#allocation3 + $0xa8] sm:$0xff]
    %v369 = vld [vmem:[#allocation3 + $0xb0] sm:$0xff]
    %v370 = vld [vmem:[#allocation3 + $0xb8] sm:$0xff]
    %v371 = vld [vmem:[#allocation3 + $0xc0] sm:$0xff]
    %v372 = vld [vmem:[#allocation3 + $0xc8] sm:$0xff]
    %v373 = vld [vmem:[#allocation3 + $0xd0] sm:$0xff]
    %v374 = vld [vmem:[#allocation3 + $0xd8] sm:$0xff]
    %v375 = vld [vmem:[#allocation3 + $0xe0] sm:$0xff]
    %v376 = vld [vmem:[#allocation3 + $0xe8] sm:$0xff]
    %v377 = vld [vmem:[#allocation3 + $0xf0] sm:$0xff]
    %v378 = vld [vmem:[#allocation3 + $0xf8] sm:$0xff]
    %v379 = vld [vmem:[#allocation2] ss:$8 sm:$0xf]
    %s380 = scalar_lea.vmem [#allocation2], 32
    %v381 = vld [vmem:[%s380] ss:$8 sm:$0xf]
    %s382 = scalar_lea.vmem [#allocation2], 64
    %v383 = vld [vmem:[%s382] ss:$8 sm:$0xf]
    %s384 = scalar_lea.vmem [#allocation2], 96
    %v385 = vld [vmem:[%s384] ss:$8 sm:$0xf]
    %v418 = vunpack.c.l.b16 %v347
    %v419 = vunpack.c.h.b16 %v347
    %v420 = vunpack.c.l.b16 %v348
    %v421 = vunpack.c.h.b16 %v348
    %v422 = vunpack.c.l.b16 %v349
    %v423 = vunpack.c.h.b16 %v349
    %v424 = vunpack.c.l.b16 %v350
    %v425 = vunpack.c.h.b16 %v350
    %v426 = vunpack.c.l.b16 %v351
    %v427 = vunpack.c.h.b16 %v351
    %v428 = vunpack.c.l.b16 %v352
    %v429 = vunpack.c.h.b16 %v352
    %v430 = vunpack.c.l.b16 %v353
    %v431 = vunpack.c.h.b16 %v353
    %v432 = vunpack.c.l.b16 %v354
    %v433 = vunpack.c.h.b16 %v354
    %v434 = vunpack.c.l.b16 %v355
    %v435 = vunpack.c.h.b16 %v355
    %v436 = vunpack.c.l.b16 %v356
    %v437 = vunpack.c.h.b16 %v356
    %v438 = vunpack.c.l.b16 %v357
    %v439 = vunpack.c.h.b16 %v357
    %v440 = vunpack.c.l.b16 %v358
    %v441 = vunpack.c.h.b16 %v358
    %v442 = vunpack.c.l.b16 %v359
    %v443 = vunpack.c.h.b16 %v359
    %v444 = vunpack.c.l.b16 %v360
    %v445 = vunpack.c.h.b16 %v360
    %v446 = vunpack.c.l.b16 %v361
    %v447 = vunpack.c.h.b16 %v361
    %v448 = vunpack.c.l.b16 %v362
    %v449 = vunpack.c.h.b16 %v362
    %v450 = vunpack.c.l.b16 %v363
    %v451 = vunpack.c.h.b16 %v363
    %v452 = vunpack.c.l.b16 %v364
    %v453 = vunpack.c.h.b16 %v364
    %v454 = vunpack.c.l.b16 %v365
    %v455 = vunpack.c.h.b16 %v365
    %v456 = vunpack.c.l.b16 %v366
    %v457 = vunpack.c.h.b16 %v366
    %v458 = vunpack.c.l.b16 %v367
    %v459 = vunpack.c.h.b16 %v367
    %v460 = vunpack.c.l.b16 %v368
    %v461 = vunpack.c.h.b16 %v368
    %v462 = vunpack.c.l.b16 %v369
    %v463 = vunpack.c.h.b16 %v369
    %v464 = vunpack.c.l.b16 %v370
    %v465 = vunpack.c.h.b16 %v370
    %v466 = vunpack.c.l.b16 %v371
    %v467 = vunpack.c.h.b16 %v371
    %v468 = vunpack.c.l.b16 %v372
    %v469 = vunpack.c.h.b16 %v372
    %v470 = vunpack.c.l.b16 %v373
    %v471 = vunpack.c.h.b16 %v373
    %v472 = vunpack.c.l.b16 %v374
    %v473 = vunpack.c.h.b16 %v374
    %v474 = vunpack.c.l.b16 %v375
    %v475 = vunpack.c.h.b16 %v375
    %v476 = vunpack.c.l.b16 %v376
    %v477 = vunpack.c.h.b16 %v376
    %v478 = vunpack.c.l.b16 %v377
    %v479 = vunpack.c.h.b16 %v377
    %v480 = vunpack.c.l.b16 %v378
    %v481 = vunpack.c.h.b16 %v378
    %v482 = vpack.c.b16 %v422, %v418
    %v483 = vpack.c.b16 %v423, %v419
    %v484 = vpack.c.b16 %v424, %v420
    %v485 = vpack.c.b16 %v425, %v421
    %v486 = vpack.c.b16 %v430, %v426
    %v487 = vpack.c.b16 %v431, %v427
    %v488 = vpack.c.b16 %v432, %v428
    %v489 = vpack.c.b16 %v433, %v429
    %v490 = vpack.c.b16 %v438, %v434
    %v491 = vpack.c.b16 %v439, %v435
    %v492 = vpack.c.b16 %v440, %v436
    %v493 = vpack.c.b16 %v441, %v437
    %v494 = vpack.c.b16 %v446, %v442
    %v495 = vpack.c.b16 %v447, %v443
    %v496 = vpack.c.b16 %v448, %v444
    %v497 = vpack.c.b16 %v449, %v445
    %v498 = vpack.c.b16 %v454, %v450
    %v499 = vpack.c.b16 %v455, %v451
    %v500 = vpack.c.b16 %v456, %v452
    %v501 = vpack.c.b16 %v457, %v453
    %v502 = vpack.c.b16 %v462, %v458
    %v503 = vpack.c.b16 %v463, %v459
    %v504 = vpack.c.b16 %v464, %v460
    %v505 = vpack.c.b16 %v465, %v461
    %v506 = vpack.c.b16 %v470, %v466
    %v507 = vpack.c.b16 %v471, %v467
    %v508 = vpack.c.b16 %v472, %v468
    %v509 = vpack.c.b16 %v473, %v469
    %v510 = vpack.c.b16 %v478, %v474
    %v511 = vpack.c.b16 %v479, %v475
    %v512 = vpack.c.b16 %v480, %v476
    %v513 = vpack.c.b16 %v481, %v477
    %546 = vmatpush.bf16.msra.mxu0 %v510
    %547 = vmatpush.bf16.msra.mxu0 %v506
    %548 = vmatpush.bf16.msra.mxu0 %v502
    %549 = vmatpush.bf16.msra.mxu0 %v498
    %550 = vmatpush.bf16.msra.mxu0 %v494
    %551 = vmatpush.bf16.msra.mxu0 %v490
    %552 = vmatpush.bf16.msra.mxu0 %v486
    %553 = vmatpush.bf16.msra.mxu0 %v482
    %554 = vmatmul.bf16.gmra.mxu0 0
    %v555 = vpop.f32.mrf.mxu0
    %v556 = vadd.f32 0.0, %v555
    %v557 = vpop.f32.mrf.mxu0
    %558 = vdwg.mxu0
    %559 = vmatpush.bf16.msra.mxu0 %v511
    %560 = vmatpush.bf16.msra.mxu0 %v507
    %561 = vmatpush.bf16.msra.mxu0 %v503
    %562 = vmatpush.bf16.msra.mxu0 %v499
    %563 = vmatpush.bf16.msra.mxu0 %v495
    %564 = vmatpush.bf16.msra.mxu0 %v491
    %565 = vmatpush.bf16.msra.mxu0 %v487
    %566 = vmatpush.bf16.msra.mxu0 %v483
    %567 = vmatmul.bf16.gmra.mxu0 0
    %v568 = vpop.f32.mrf.mxu0
    %v569 = vadd.f32 0.0, %v568
    %v570 = vpop.f32.mrf.mxu0
    %571 = vdwg.mxu0
    %572 = vmatpush.bf16.msra.mxu0 %v512
    %573 = vmatpush.bf16.msra.mxu0 %v508
    %574 = vmatpush.bf16.msra.mxu0 %v504
    %575 = vmatpush.bf16.msra.mxu0 %v500
    %576 = vmatpush.bf16.msra.mxu0 %v496
    %577 = vmatpush.bf16.msra.mxu0 %v492
    %578 = vmatpush.bf16.msra.mxu0 %v488
    %579 = vmatpush.bf16.msra.mxu0 %v484
    %580 = vmatmul.bf16.gmra.mxu0 0
    %v581 = vpop.f32.mrf.mxu0
    %v582 = vadd.f32 0.0, %v581
    %v583 = vpop.f32.mrf.mxu0
    %584 = vdwg.mxu0
    %585 = vmatpush.bf16.msra.mxu0 %v513
    %586 = vmatpush.bf16.msra.mxu0 %v509
    %587 = vmatpush.bf16.msra.mxu0 %v505
    %588 = vmatpush.bf16.msra.mxu0 %v501
    %589 = vmatpush.bf16.msra.mxu0 %v497
    %590 = vmatpush.bf16.msra.mxu0 %v493
    %591 = vmatpush.bf16.msra.mxu0 %v489
    %592 = vmatpush.bf16.msra.mxu0 %v485
    %593 = vmatmul.bf16.gmra.mxu0 0
    %v594 = vpop.f32.mrf.mxu0
    %v595 = vadd.f32 0.0, %v594
    %v596 = vpop.f32.mrf.mxu0
    %597 = vdwg.mxu0
    %v602 = vrot.slane %v569, 7
    %v603 = vrot.slane %v582, 6
    %v604 = vrot.slane %v595, 5
    %vm605 = vcmask 1040384
    %v606 = vsel %vm605, %v556, %v602
    %vm607 = vcmask 1042434
    %v608 = vsel %vm607, %v603, %v604
    %vm609 = vcmask 1041408
    %v610 = vsel %vm609, %v606, %v608
    %vm611 = vcmask 1041409
    %v612 = vsel %vm611, %v556, %v602
    %vm613 = vcmask 1043459
    %v614 = vsel %vm613, %v603, %v604
    %vm615 = vcmask 1042433
    %v616 = vsel %vm615, %v612, %v614
    %v617 = vrot.slane %v616, 1
    %v618 = vsel %vm607, %v556, %v602
    %vm619 = vcmask 1044484
    %v620 = vsel %vm619, %v603, %v604
    %vm621 = vcmask 1043458
    %v622 = vsel %vm621, %v618, %v620
    %v623 = vrot.slane %v622, 2
    %v624 = vsel %vm613, %v556, %v602
    %vm625 = vcmask 1045509
    %v626 = vsel %vm625, %v603, %v604
    %vm627 = vcmask 1044483
    %v628 = vsel %vm627, %v624, %v626
    %v629 = vrot.slane %v628, 3
    %v634 = vadd.f32 %v379, %v610
    %v635 = vadd.f32 %v381, %v617
    %v636 = vadd.f32 %v383, %v623
    %v637 = vadd.f32 %v385, %v629
    %v638 = vxor.u32 %v634, 2147483648
    %v639 = vxor.u32 %v635, 2147483648
    %v640 = vxor.u32 %v636, 2147483648
    %v641 = vxor.u32 %v637, 2147483648
    %v642 = vmul.f32 %v638, 1.442695
    %v643 = vpow.pop %v642
    %v644 = vmul.f32 %v639, 1.442695
    %v645 = vpow.pop %v644
    %v646 = vmul.f32 %v640, 1.442695
    %v647 = vpow.pop %v646
    %v648 = vmul.f32 %v641, 1.442695
    %v649 = vpow.pop %v648
    %v650 = vadd.f32 %v643, 1.0
    %v651 = vadd.f32 %v645, 1.0
    %v652 = vadd.f32 %v647, 1.0
    %v653 = vadd.f32 %v649, 1.0
    %v654 = vrcp.pop %v650
    %v655 = vmul.f32 %v650, %v654
    %v656 = vsub.f32 1.0, %v655
    %v657 = vmul.f32 %v654, %v656
    %v658 = vadd.f32 %v654, %v657
    %vm659 = vweird.f32 %v650
    %vm660 = vweird.f32 %v654
    %vm661 = vmor %vm659, %vm660
    %v662 = vsel %vm661, %v654, %v658
    %v663 = vand.u32 2147483647, %v650
    %vm664 = vcmp.eq.f32.partialorder %v663, 8.507059e+37
    %v665 = vand.u32 %v650, 2147483648
    %v666 = vor.u32 1.1754944e-38, %v665
    %v667 = vsel %vm664, %v666, %v662
    %v668 = vmul.f32 1.0, %v667
    %v669 = vrcp.pop %v651
    %v670 = vmul.f32 %v651, %v669
    %v671 = vsub.f32 1.0, %v670
    %v672 = vmul.f32 %v669, %v671
    %v673 = vadd.f32 %v669, %v672
    %vm674 = vweird.f32 %v651
    %vm675 = vweird.f32 %v669
    %vm676 = vmor %vm674, %vm675
    %v677 = vsel %vm676, %v669, %v673
    %v678 = vand.u32 2147483647, %v651
    %vm679 = vcmp.eq.f32.partialorder %v678, 8.507059e+37
    %v680 = vand.u32 %v651, 2147483648
    %v681 = vor.u32 1.1754944e-38, %v680
    %v682 = vsel %vm679, %v681, %v677
    %v683 = vmul.f32 1.0, %v682
    %v684 = vrcp.pop %v652
    %v685 = vmul.f32 %v652, %v684
    %v686 = vsub.f32 1.0, %v685
    %v687 = vmul.f32 %v684, %v686
    %v688 = vadd.f32 %v684, %v687
    %vm689 = vweird.f32 %v652
    %vm690 = vweird.f32 %v684
    %vm691 = vmor %vm689, %vm690
    %v692 = vsel %vm691, %v684, %v688
    %v693 = vand.u32 2147483647, %v652
    %vm694 = vcmp.eq.f32.partialorder %v693, 8.507059e+37
    %v695 = vand.u32 %v652, 2147483648
    %v696 = vor.u32 1.1754944e-38, %v695
    %v697 = vsel %vm694, %v696, %v692
    %v698 = vmul.f32 1.0, %v697
    %v699 = vrcp.pop %v653
    %v700 = vmul.f32 %v653, %v699
    %v701 = vsub.f32 1.0, %v700
    %v702 = vmul.f32 %v699, %v701
    %v703 = vadd.f32 %v699, %v702
    %vm704 = vweird.f32 %v653
    %vm705 = vweird.f32 %v699
    %vm706 = vmor %vm704, %vm705
    %v707 = vsel %vm706, %v699, %v703
    %v708 = vand.u32 2147483647, %v653
    %vm709 = vcmp.eq.f32.partialorder %v708, 8.507059e+37
    %v710 = vand.u32 %v653, 2147483648
    %v711 = vor.u32 1.1754944e-38, %v710
    %v712 = vsel %vm709, %v711, %v707
    %v713 = vmul.f32 1.0, %v712
    %v718 = vrot.slane %v634, 1
    %v719 = vrot.slane %v635, 1
    %v720 = vrot.slane %v636, 1
    %v721 = vrot.slane %v637, 1
    %v726 = vxor.u32 %v718, 2147483648
    %v727 = vxor.u32 %v719, 2147483648
    %v728 = vxor.u32 %v720, 2147483648
    %v729 = vxor.u32 %v721, 2147483648
    %v730 = vmul.f32 %v726, 1.442695
    %v731 = vpow.pop %v730
    %v732 = vmul.f32 %v727, 1.442695
    %v733 = vpow.pop %v732
    %v734 = vmul.f32 %v728, 1.442695
    %v735 = vpow.pop %v734
    %v736 = vmul.f32 %v729, 1.442695
    %v737 = vpow.pop %v736
    %v738 = vadd.f32 %v731, 1.0
    %v739 = vadd.f32 %v733, 1.0
    %v740 = vadd.f32 %v735, 1.0
    %v741 = vadd.f32 %v737, 1.0
    %v742 = vrcp.pop %v738
    %v743 = vmul.f32 %v738, %v742
    %v744 = vsub.f32 1.0, %v743
    %v745 = vmul.f32 %v742, %v744
    %v746 = vadd.f32 %v742, %v745
    %vm747 = vweird.f32 %v738
    %vm748 = vweird.f32 %v742
    %vm749 = vmor %vm747, %vm748
    %v750 = vsel %vm749, %v742, %v746
    %v751 = vand.u32 2147483647, %v738
    %vm752 = vcmp.eq.f32.partialorder %v751, 8.507059e+37
    %v753 = vand.u32 %v738, 2147483648
    %v754 = vor.u32 1.1754944e-38, %v753
    %v755 = vsel %vm752, %v754, %v750
    %v756 = vmul.f32 1.0, %v755
    %v757 = vrcp.pop %v739
    %v758 = vmul.f32 %v739, %v757
    %v759 = vsub.f32 1.0, %v758
    %v760 = vmul.f32 %v757, %v759
    %v761 = vadd.f32 %v757, %v760
    %vm762 = vweird.f32 %v739
    %vm763 = vweird.f32 %v757
    %vm764 = vmor %vm762, %vm763
    %v765 = vsel %vm764, %v757, %v761
    %v766 = vand.u32 2147483647, %v739
    %vm767 = vcmp.eq.f32.partialorder %v766, 8.507059e+37
    %v768 = vand.u32 %v739, 2147483648
    %v769 = vor.u32 1.1754944e-38, %v768
    %v770 = vsel %vm767, %v769, %v765
    %v771 = vmul.f32 1.0, %v770
    %v772 = vrcp.pop %v740
    %v773 = vmul.f32 %v740, %v772
    %v774 = vsub.f32 1.0, %v773
    %v775 = vmul.f32 %v772, %v774
    %v776 = vadd.f32 %v772, %v775
    %vm777 = vweird.f32 %v740
    %vm778 = vweird.f32 %v772
    %vm779 = vmor %vm777, %vm778
    %v780 = vsel %vm779, %v772, %v776
    %v781 = vand.u32 2147483647, %v740
    %vm782 = vcmp.eq.f32.partialorder %v781, 8.507059e+37
    %v783 = vand.u32 %v740, 2147483648
    %v784 = vor.u32 1.1754944e-38, %v783
    %v785 = vsel %vm782, %v784, %v780
    %v786 = vmul.f32 1.0, %v785
    %v787 = vrcp.pop %v741
    %v788 = vmul.f32 %v741, %v787
    %v789 = vsub.f32 1.0, %v788
    %v790 = vmul.f32 %v787, %v789
    %v791 = vadd.f32 %v787, %v790
    %vm792 = vweird.f32 %v741
    %vm793 = vweird.f32 %v787
    %vm794 = vmor %vm792, %vm793
    %v795 = vsel %vm794, %v787, %v791
    %v796 = vand.u32 2147483647, %v741
    %vm797 = vcmp.eq.f32.partialorder %v796, 8.507059e+37
    %v798 = vand.u32 %v741, 2147483648
    %v799 = vor.u32 1.1754944e-38, %v798
    %v800 = vsel %vm797, %v799, %v795
    %v801 = vmul.f32 1.0, %v800
    %v802 = vrot.slane %v634, 2
    %v803 = vrot.slane %v635, 2
    %v804 = vrot.slane %v636, 2
    %v805 = vrot.slane %v637, 2
    %v810 = vtanh.pop %v802
    %v811 = vtanh.pop %v803
    %v812 = vtanh.pop %v804
    %v813 = vtanh.pop %v805
    %v814 = vrot.slane %v634, 3
    %v815 = vrot.slane %v635, 3
    %v816 = vrot.slane %v636, 3
    %v817 = vrot.slane %v637, 3
    %v822 = vxor.u32 %v814, 2147483648
    %v823 = vxor.u32 %v815, 2147483648
    %v824 = vxor.u32 %v816, 2147483648
    %v825 = vxor.u32 %v817, 2147483648
    %v826 = vmul.f32 %v822, 1.442695
    %v827 = vpow.pop %v826
    %v828 = vmul.f32 %v823, 1.442695
    %v829 = vpow.pop %v828
    %v830 = vmul.f32 %v824, 1.442695
    %v831 = vpow.pop %v830
    %v832 = vmul.f32 %v825, 1.442695
    %v833 = vpow.pop %v832
    %v834 = vadd.f32 %v827, 1.0
    %v835 = vadd.f32 %v829, 1.0
    %v836 = vadd.f32 %v831, 1.0
    %v837 = vadd.f32 %v833, 1.0
    %v838 = vrcp.pop %v834
    %v839 = vmul.f32 %v834, %v838
    %v840 = vsub.f32 1.0, %v839
    %v841 = vmul.f32 %v838, %v840
    %v842 = vadd.f32 %v838, %v841
    %vm843 = vweird.f32 %v834
    %vm844 = vweird.f32 %v838
    %vm845 = vmor %vm843, %vm844
    %v846 = vsel %vm845, %v838, %v842
    %v847 = vand.u32 2147483647, %v834
    %vm848 = vcmp.eq.f32.partialorder %v847, 8.507059e+37
    %v849 = vand.u32 %v834, 2147483648
    %v850 = vor.u32 1.1754944e-38, %v849
    %v851 = vsel %vm848, %v850, %v846
    %v852 = vmul.f32 1.0, %v851
    %v853 = vrcp.pop %v835
    %v854 = vmul.f32 %v835, %v853
    %v855 = vsub.f32 1.0, %v854
    %v856 = vmul.f32 %v853, %v855
    %v857 = vadd.f32 %v853, %v856
    %vm858 = vweird.f32 %v835
    %vm859 = vweird.f32 %v853
    %vm860 = vmor %vm858, %vm859
    %v861 = vsel %vm860, %v853, %v857
    %v862 = vand.u32 2147483647, %v835
    %vm863 = vcmp.eq.f32.partialorder %v862, 8.507059e+37
    %v864 = vand.u32 %v835, 2147483648
    %v865 = vor.u32 1.1754944e-38, %v864
    %v866 = vsel %vm863, %v865, %v861
    %v867 = vmul.f32 1.0, %v866
    %v868 = vrcp.pop %v836
    %v869 = vmul.f32 %v836, %v868
    %v870 = vsub.f32 1.0, %v869
    %v871 = vmul.f32 %v868, %v870
    %v872 = vadd.f32 %v868, %v871
    %vm873 = vweird.f32 %v836
    %vm874 = vweird.f32 %v868
    %vm875 = vmor %vm873, %vm874
    %v876 = vsel %vm875, %v868, %v872
    %v877 = vand.u32 2147483647, %v836
    %vm878 = vcmp.eq.f32.partialorder %v877, 8.507059e+37
    %v879 = vand.u32 %v836, 2147483648
    %v880 = vor.u32 1.1754944e-38, %v879
    %v881 = vsel %vm878, %v880, %v876
    %v882 = vmul.f32 1.0, %v881
    %v883 = vrcp.pop %v837
    %v884 = vmul.f32 %v837, %v883
    %v885 = vsub.f32 1.0, %v884
    %v886 = vmul.f32 %v883, %v885
    %v887 = vadd.f32 %v883, %v886
    %vm888 = vweird.f32 %v837
    %vm889 = vweird.f32 %v883
    %vm890 = vmor %vm888, %vm889
    %v891 = vsel %vm890, %v883, %v887
    %v892 = vand.u32 2147483647, %v837
    %vm893 = vcmp.eq.f32.partialorder %v892, 8.507059e+37
    %v894 = vand.u32 %v837, 2147483648
    %v895 = vor.u32 1.1754944e-38, %v894
    %v896 = vsel %vm893, %v895, %v891
    %v897 = vmul.f32 1.0, %v896
    %v898 = vmul.f32 %v756, 0.0
    %v899 = vmul.f32 %v771, 0.0
    %v900 = vmul.f32 %v786, 0.0
    %v901 = vmul.f32 %v801, 0.0
    %v902 = vmul.f32 %v668, %v810
    %v903 = vmul.f32 %v683, %v811
    %v904 = vmul.f32 %v698, %v812
    %v905 = vmul.f32 %v713, %v813
    %v906 = vadd.f32 %v898, %v902
    %v907 = vadd.f32 %v899, %v903
    %v908 = vadd.f32 %v900, %v904
    %v909 = vadd.f32 %v901, %v905
    %v910 = vtanh.pop %v906
    %v911 = vtanh.pop %v907
    %v912 = vtanh.pop %v908
    %v913 = vtanh.pop %v909
    %v914 = vmul.f32 %v852, %v910
    %v915 = vmul.f32 %v867, %v911
    %v916 = vmul.f32 %v882, %v912
    %v917 = vmul.f32 %v897, %v913
    %v918 = vld [vmem:[%s4] sm:$0x1]
    %v919 = vld [vmem:[%s4 + $0x8] sm:$0x1]
    %v920 = vld [vmem:[%s4 + $0x10] sm:$0x1]
    %v921 = vld [vmem:[%s4 + $0x18] sm:$0x1]
    %923 = vset.pattern.permute.xlu0 0
    %924 = vperm.xlu0 %923, %v918
    %v925 = vpop.permute.xlu0 %924
    %928 = vset.pattern.permute.xlu0 0
    %929 = vperm.xlu0 %928, %v919
    %v930 = vpop.permute.xlu0 %929
    %933 = vset.pattern.permute.xlu0 0
    %934 = vperm.xlu0 %933, %v920
    %v935 = vpop.permute.xlu0 %934
    %938 = vset.pattern.permute.xlu0 0
    %939 = vperm.xlu0 %938, %v921
    %v940 = vpop.permute.xlu0 %939
    %v942 = vmul.f32 %v914, %v925
    %v943 = vmul.f32 %v915, %v930
    %v944 = vmul.f32 %v916, %v935
    %v945 = vmul.f32 %v917, %v940
    %v946 = vpack.c.bf16 %v942, %v942
    %v947 = vpack.c.bf16 %v943, %v943
    %v948 = vpack.c.bf16 %v944, %v944
    %v949 = vpack.c.bf16 %v945, %v945
    %vm950 = vcmask 1040384
    %vm951 = vsmask.f32 256
    %vm952 = vmand %vm950, %vm951
    %v953 = vld [vmem:[%s5] sm:$0x1]
    %v954 = vsel %vm952, %v946, %v953
    %955 = vst [vmem:[%s5] sm:$0x1] %v954
    %v956 = vld [vmem:[%s5 + $0x4] sm:$0x1]
    %v957 = vsel %vm952, %v947, %v956
    %958 = vst [vmem:[%s5 + $0x4] sm:$0x1] %v957
    %v959 = vld [vmem:[%s5 + $0x8] sm:$0x1]
    %v960 = vsel %vm952, %v948, %v959
    %961 = vst [vmem:[%s5 + $0x8] sm:$0x1] %v960
    %v962 = vld [vmem:[%s5 + $0xc] sm:$0x1]
    %v963 = vsel %vm952, %v949, %v962
    %964 = vst [vmem:[%s5 + $0xc] sm:$0x1] %v963
    %s965 = scalar_lea.vmem [#allocation2], 1
    %v966 = vld [vmem:[%s965] ss:$8 sm:$0xf]
    %s967 = scalar_lea.vmem [#allocation2], 33
    %v968 = vld [vmem:[%s967] ss:$8 sm:$0xf]
    %s969 = scalar_lea.vmem [#allocation2], 65
    %v970 = vld [vmem:[%s969] ss:$8 sm:$0xf]
    %s971 = scalar_lea.vmem [#allocation2], 97
    %v972 = vld [vmem:[%s971] ss:$8 sm:$0xf]
    %v973 = vpack.c.bf16 %v914, %v914
    %v974 = vpack.c.bf16 %v915, %v915
    %v975 = vpack.c.bf16 %v916, %v916
    %v976 = vpack.c.bf16 %v917, %v917
    %v981 = vunpack.c.l.b16 %v973
    %v982 = vunpack.c.l.b16 %v974
    %v983 = vunpack.c.l.b16 %v975
    %v984 = vunpack.c.l.b16 %v976
    %v985 = vrot.slane %v982, 7
    %v986 = vsel %vm611, %v985, %v981
    %v987 = vrot.slane %v983, 6
    %v988 = vsel %vm607, %v987, %v986
    %v989 = vrot.slane %v984, 5
    %v990 = vsel %vm613, %v989, %v988
    %v991 = vpack.c.b16 %v990, %v990
    %993 = vmatpush.bf16.msra.mxu0 %v510
    %994 = vmatpush.bf16.msra.mxu0 %v506
    %995 = vmatpush.bf16.msra.mxu0 %v502
    %996 = vmatpush.bf16.msra.mxu0 %v498
    %997 = vmatpush.bf16.msra.mxu0 %v494
    %998 = vmatpush.bf16.msra.mxu0 %v490
    %999 = vmatpush.bf16.msra.mxu0 %v486
    %1000 = vmatpush.bf16.msra.mxu0 %v482
    %1001 = vmatmul.bf16.gmra.mxu0 %v991
    %v1002 = vpop.f32.mrf.mxu0
    %v1003 = vadd.f32 0.0, %v1002
    %v1004 = vpop.f32.mrf.mxu0
    %1005 = vdwg.mxu0
    %1006 = vmatpush.bf16.msra.mxu0 %v511
    %1007 = vmatpush.bf16.msra.mxu0 %v507
    %1008 = vmatpush.bf16.msra.mxu0 %v503
    %1009 = vmatpush.bf16.msra.mxu0 %v499
    %1010 = vmatpush.bf16.msra.mxu0 %v495
    %1011 = vmatpush.bf16.msra.mxu0 %v491
    %1012 = vmatpush.bf16.msra.mxu0 %v487
    %1013 = vmatpush.bf16.msra.mxu0 %v483
    %1014 = vmatmul.bf16.gmra.mxu0 %v991
    %v1015 = vpop.f32.mrf.mxu0
    %v1016 = vadd.f32 0.0, %v1015
    %v1017 = vpop.f32.mrf.mxu0
    %1018 = vdwg.mxu0
    %1019 = vmatpush.bf16.msra.mxu0 %v512
    %1020 = vmatpush.bf16.msra.mxu0 %v508
    %1021 = vmatpush.bf16.msra.mxu0 %v504
    %1022 = vmatpush.bf16.msra.mxu0 %v500
    %1023 = vmatpush.bf16.msra.mxu0 %v496
    %1024 = vmatpush.bf16.msra.mxu0 %v492
    %1025 = vmatpush.bf16.msra.mxu0 %v488
    %1026 = vmatpush.bf16.msra.mxu0 %v484
    %1027 = vmatmul.bf16.gmra.mxu0 %v991
    %v1028 = vpop.f32.mrf.mxu0
    %v1029 = vadd.f32 0.0, %v1028
    %v1030 = vpop.f32.mrf.mxu0
    %1031 = vdwg.mxu0
    %1032 = vmatpush.bf16.msra.mxu0 %v513
    %1033 = vmatpush.bf16.msra.mxu0 %v509
    %1034 = vmatpush.bf16.msra.mxu0 %v505
    %1035 = vmatpush.bf16.msra.mxu0 %v501
    %1036 = vmatpush.bf16.msra.mxu0 %v497
    %1037 = vmatpush.bf16.msra.mxu0 %v493
    %1038 = vmatpush.bf16.msra.mxu0 %v489
    %1039 = vmatpush.bf16.msra.mxu0 %v485
    %1040 = vmatmul.bf16.gmra.mxu0 %v991
    %v1041 = vpop.f32.mrf.mxu0
    %v1042 = vadd.f32 0.0, %v1041
    %v1043 = vpop.f32.mrf.mxu0
    %1044 = vdwg.mxu0
    %v1049 = vrot.slane %v1016, 7
    %v1050 = vrot.slane %v1029, 6
    %v1051 = vrot.slane %v1042, 5
    %v1052 = vsel %vm605, %v1003, %v1049
    %v1053 = vsel %vm607, %v1050, %v1051
    %v1054 = vsel %vm609, %v1052, %v1053
    %v1055 = vsel %vm611, %v1003, %v1049
    %v1056 = vsel %vm613, %v1050, %v1051
    %v1057 = vsel %vm615, %v1055, %v1056
    %v1058 = vrot.slane %v1057, 1
    %v1059 = vsel %vm607, %v1003, %v1049
    %v1060 = vsel %vm619, %v1050, %v1051
    %v1061 = vsel %vm621, %v1059, %v1060
    %v1062 = vrot.slane %v1061, 2
    %v1063 = vsel %vm613, %v1003, %v1049
    %v1064 = vsel %vm625, %v1050, %v1051
    %v1065 = vsel %vm627, %v1063, %v1064
    %v1066 = vrot.slane %v1065, 3
    %v1071 = vadd.f32 %v966, %v1054
    %v1072 = vadd.f32 %v968, %v1058
    %v1073 = vadd.f32 %v970, %v1062
    %v1074 = vadd.f32 %v972, %v1066
    %v1075 = vxor.u32 %v1071, 2147483648
    %v1076 = vxor.u32 %v1072, 2147483648
    %v1077 = vxor.u32 %v1073, 2147483648
    %v1078 = vxor.u32 %v1074, 2147483648
    %v1079 = vmul.f32 %v1075, 1.442695
    %v1080 = vpow.pop %v1079
    %v1081 = vmul.f32 %v1076, 1.442695
    %v1082 = vpow.pop %v1081
    %v1083 = vmul.f32 %v1077, 1.442695
    %v1084 = vpow.pop %v1083
    %v1085 = vmul.f32 %v1078, 1.442695
    %v1086 = vpow.pop %v1085
    %v1087 = vadd.f32 %v1080, 1.0
    %v1088 = vadd.f32 %v1082, 1.0
    %v1089 = vadd.f32 %v1084, 1.0
    %v1090 = vadd.f32 %v1086, 1.0
    %v1091 = vrcp.pop %v1087
    %v1092 = vmul.f32 %v1087, %v1091
    %v1093 = vsub.f32 1.0, %v1092
    %v1094 = vmul.f32 %v1091, %v1093
    %v1095 = vadd.f32 %v1091, %v1094
    %vm1096 = vweird.f32 %v1087
    %vm1097 = vweird.f32 %v1091
    %vm1098 = vmor %vm1096, %vm1097
    %v1099 = vsel %vm1098, %v1091, %v1095
    %v1100 = vand.u32 2147483647, %v1087
    %vm1101 = vcmp.eq.f32.partialorder %v1100, 8.507059e+37
    %v1102 = vand.u32 %v1087, 2147483648
    %v1103 = vor.u32 1.1754944e-38, %v1102
    %v1104 = vsel %vm1101, %v1103, %v1099
    %v1105 = vmul.f32 1.0, %v1104
    %v1106 = vrcp.pop %v1088
    %v1107 = vmul.f32 %v1088, %v1106
    %v1108 = vsub.f32 1.0, %v1107
    %v1109 = vmul.f32 %v1106, %v1108
    %v1110 = vadd.f32 %v1106, %v1109
    %vm1111 = vweird.f32 %v1088
    %vm1112 = vweird.f32 %v1106
    %vm1113 = vmor %vm1111, %vm1112
    %v1114 = vsel %vm1113, %v1106, %v1110
    %v1115 = vand.u32 2147483647, %v1088
    %vm1116 = vcmp.eq.f32.partialorder %v1115, 8.507059e+37
    %v1117 = vand.u32 %v1088, 2147483648
    %v1118 = vor.u32 1.1754944e-38, %v1117
    %v1119 = vsel %vm1116, %v1118, %v1114
    %v1120 = vmul.f32 1.0, %v1119
    %v1121 = vrcp.pop %v1089
    %v1122 = vmul.f32 %v1089, %v1121
    %v1123 = vsub.f32 1.0, %v1122
    %v1124 = vmul.f32 %v1121, %v1123
    %v1125 = vadd.f32 %v1121, %v1124
    %vm1126 = vweird.f32 %v1089
    %vm1127 = vweird.f32 %v1121
    %vm1128 = vmor %vm1126, %vm1127
    %v1129 = vsel %vm1128, %v1121, %v1125
    %v1130 = vand.u32 2147483647, %v1089
    %vm1131 = vcmp.eq.f32.partialorder %v1130, 8.507059e+37
    %v1132 = vand.u32 %v1089, 2147483648
    %v1133 = vor.u32 1.1754944e-38, %v1132
    %v1134 = vsel %vm1131, %v1133, %v1129
    %v1135 = vmul.f32 1.0, %v1134
    %v1136 = vrcp.pop %v1090
    %v1137 = vmul.f32 %v1090, %v1136
    %v1138 = vsub.f32 1.0, %v1137
    %v1139 = vmul.f32 %v1136, %v1138
    %v1140 = vadd.f32 %v1136, %v1139
    %vm1141 = vweird.f32 %v1090
    %vm1142 = vweird.f32 %v1136
    %vm1143 = vmor %vm1141, %vm1142
    %v1144 = vsel %vm1143, %v1136, %v1140
    %v1145 = vand.u32 2147483647, %v1090
    %vm1146 = vcmp.eq.f32.partialorder %v1145, 8.507059e+37
    %v1147 = vand.u32 %v1090, 2147483648
    %v1148 = vor.u32 1.1754944e-38, %v1147
    %v1149 = vsel %vm1146, %v1148, %v1144
    %v1150 = vmul.f32 1.0, %v1149
    %v1155 = vrot.slane %v1071, 1
    %v1156 = vrot.slane %v1072, 1
    %v1157 = vrot.slane %v1073, 1
    %v1158 = vrot.slane %v1074, 1
    %v1163 = vxor.u32 %v1155, 2147483648
    %v1164 = vxor.u32 %v1156, 2147483648
    %v1165 = vxor.u32 %v1157, 2147483648
    %v1166 = vxor.u32 %v1158, 2147483648
    %v1167 = vmul.f32 %v1163, 1.442695
    %v1168 = vpow.pop %v1167
    %v1169 = vmul.f32 %v1164, 1.442695
    %v1170 = vpow.pop %v1169
    %v1171 = vmul.f32 %v1165, 1.442695
    %v1172 = vpow.pop %v1171
    %v1173 = vmul.f32 %v1166, 1.442695
    %v1174 = vpow.pop %v1173
    %v1175 = vadd.f32 %v1168, 1.0
    %v1176 = vadd.f32 %v1170, 1.0
    %v1177 = vadd.f32 %v1172, 1.0
    %v1178 = vadd.f32 %v1174, 1.0
    %v1179 = vrcp.pop %v1175
    %v1180 = vmul.f32 %v1175, %v1179
    %v1181 = vsub.f32 1.0, %v1180
    %v1182 = vmul.f32 %v1179, %v1181
    %v1183 = vadd.f32 %v1179, %v1182
    %vm1184 = vweird.f32 %v1175
    %vm1185 = vweird.f32 %v1179
    %vm1186 = vmor %vm1184, %vm1185
    %v1187 = vsel %vm1186, %v1179, %v1183
    %v1188 = vand.u32 2147483647, %v1175
    %vm1189 = vcmp.eq.f32.partialorder %v1188, 8.507059e+37
    %v1190 = vand.u32 %v1175, 2147483648
    %v1191 = vor.u32 1.1754944e-38, %v1190
    %v1192 = vsel %vm1189, %v1191, %v1187
    %v1193 = vmul.f32 1.0, %v1192
    %v1194 = vrcp.pop %v1176
    %v1195 = vmul.f32 %v1176, %v1194
    %v1196 = vsub.f32 1.0, %v1195
    %v1197 = vmul.f32 %v1194, %v1196
    %v1198 = vadd.f32 %v1194, %v1197
    %vm1199 = vweird.f32 %v1176
    %vm1200 = vweird.f32 %v1194
    %vm1201 = vmor %vm1199, %vm1200
    %v1202 = vsel %vm1201, %v1194, %v1198
    %v1203 = vand.u32 2147483647, %v1176
    %vm1204 = vcmp.eq.f32.partialorder %v1203, 8.507059e+37
    %v1205 = vand.u32 %v1176, 2147483648
    %v1206 = vor.u32 1.1754944e-38, %v1205
    %v1207 = vsel %vm1204, %v1206, %v1202
    %v1208 = vmul.f32 1.0, %v1207
    %v1209 = vrcp.pop %v1177
    %v1210 = vmul.f32 %v1177, %v1209
    %v1211 = vsub.f32 1.0, %v1210
    %v1212 = vmul.f32 %v1209, %v1211
    %v1213 = vadd.f32 %v1209, %v1212
    %vm1214 = vweird.f32 %v1177
    %vm1215 = vweird.f32 %v1209
    %vm1216 = vmor %vm1214, %vm1215
    %v1217 = vsel %vm1216, %v1209, %v1213
    %v1218 = vand.u32 2147483647, %v1177
    %vm1219 = vcmp.eq.f32.partialorder %v1218, 8.507059e+37
    %v1220 = vand.u32 %v1177, 2147483648
    %v1221 = vor.u32 1.1754944e-38, %v1220
    %v1222 = vsel %vm1219, %v1221, %v1217
    %v1223 = vmul.f32 1.0, %v1222
    %v1224 = vrcp.pop %v1178
    %v1225 = vmul.f32 %v1178, %v1224
    %v1226 = vsub.f32 1.0, %v1225
    %v1227 = vmul.f32 %v1224, %v1226
    %v1228 = vadd.f32 %v1224, %v1227
    %vm1229 = vweird.f32 %v1178
    %vm1230 = vweird.f32 %v1224
    %vm1231 = vmor %vm1229, %vm1230
    %v1232 = vsel %vm1231, %v1224, %v1228
    %v1233 = vand.u32 2147483647, %v1178
    %vm1234 = vcmp.eq.f32.partialorder %v1233, 8.507059e+37
    %v1235 = vand.u32 %v1178, 2147483648
    %v1236 = vor.u32 1.1754944e-38, %v1235
    %v1237 = vsel %vm1234, %v1236, %v1232
    %v1238 = vmul.f32 1.0, %v1237
    %v1239 = vrot.slane %v1071, 2
    %v1240 = vrot.slane %v1072, 2
    %v1241 = vrot.slane %v1073, 2
    %v1242 = vrot.slane %v1074, 2
    %v1247 = vtanh.pop %v1239
    %v1248 = vtanh.pop %v1240
    %v1249 = vtanh.pop %v1241
    %v1250 = vtanh.pop %v1242
    %v1251 = vrot.slane %v1071, 3
    %v1252 = vrot.slane %v1072, 3
    %v1253 = vrot.slane %v1073, 3
    %v1254 = vrot.slane %v1074, 3
    %v1259 = vxor.u32 %v1251, 2147483648
    %v1260 = vxor.u32 %v1252, 2147483648
    %v1261 = vxor.u32 %v1253, 2147483648
    %v1262 = vxor.u32 %v1254, 2147483648
    %v1263 = vmul.f32 %v1259, 1.442695
    %v1264 = vpow.pop %v1263
    %v1265 = vmul.f32 %v1260, 1.442695
    %v1266 = vpow.pop %v1265
    %v1267 = vmul.f32 %v1261, 1.442695
    %v1268 = vpow.pop %v1267
    %v1269 = vmul.f32 %v1262, 1.442695
    %v1270 = vpow.pop %v1269
    %v1271 = vadd.f32 %v1264, 1.0
    %v1272 = vadd.f32 %v1266, 1.0
    %v1273 = vadd.f32 %v1268, 1.0
    %v1274 = vadd.f32 %v1270, 1.0
    %v1275 = vrcp.pop %v1271
    %v1276 = vmul.f32 %v1271, %v1275
    %v1277 = vsub.f32 1.0, %v1276
    %v1278 = vmul.f32 %v1275, %v1277
    %v1279 = vadd.f32 %v1275, %v1278
    %vm1280 = vweird.f32 %v1271
    %vm1281 = vweird.f32 %v1275
    %vm1282 = vmor %vm1280, %vm1281
    %v1283 = vsel %vm1282, %v1275, %v1279
    %v1284 = vand.u32 2147483647, %v1271
    %vm1285 = vcmp.eq.f32.partialorder %v1284, 8.507059e+37
    %v1286 = vand.u32 %v1271, 2147483648
    %v1287 = vor.u32 1.1754944e-38, %v1286
    %v1288 = vsel %vm1285, %v1287, %v1283
    %v1289 = vmul.f32 1.0, %v1288
    %v1290 = vrcp.pop %v1272
    %v1291 = vmul.f32 %v1272, %v1290
    %v1292 = vsub.f32 1.0, %v1291
    %v1293 = vmul.f32 %v1290, %v1292
    %v1294 = vadd.f32 %v1290, %v1293
    %vm1295 = vweird.f32 %v1272
    %vm1296 = vweird.f32 %v1290
    %vm1297 = vmor %vm1295, %vm1296
    %v1298 = vsel %vm1297, %v1290, %v1294
    %v1299 = vand.u32 2147483647, %v1272
    %vm1300 = vcmp.eq.f32.partialorder %v1299, 8.507059e+37
    %v1301 = vand.u32 %v1272, 2147483648
    %v1302 = vor.u32 1.1754944e-38, %v1301
    %v1303 = vsel %vm1300, %v1302, %v1298
    %v1304 = vmul.f32 1.0, %v1303
    %v1305 = vrcp.pop %v1273
    %v1306 = vmul.f32 %v1273, %v1305
    %v1307 = vsub.f32 1.0, %v1306
    %v1308 = vmul.f32 %v1305, %v1307
    %v1309 = vadd.f32 %v1305, %v1308
    %vm1310 = vweird.f32 %v1273
    %vm1311 = vweird.f32 %v1305
    %vm1312 = vmor %vm1310, %vm1311
    %v1313 = vsel %vm1312, %v1305, %v1309
    %v1314 = vand.u32 2147483647, %v1273
    %vm1315 = vcmp.eq.f32.partialorder %v1314, 8.507059e+37
    %v1316 = vand.u32 %v1273, 2147483648
    %v1317 = vor.u32 1.1754944e-38, %v1316
    %v1318 = vsel %vm1315, %v1317, %v1313
    %v1319 = vmul.f32 1.0, %v1318
    %v1320 = vrcp.pop %v1274
    %v1321 = vmul.f32 %v1274, %v1320
    %v1322 = vsub.f32 1.0, %v1321
    %v1323 = vmul.f32 %v1320, %v1322
    %v1324 = vadd.f32 %v1320, %v1323
    %vm1325 = vweird.f32 %v1274
    %vm1326 = vweird.f32 %v1320
    %vm1327 = vmor %vm1325, %vm1326
    %v1328 = vsel %vm1327, %v1320, %v1324
    %v1329 = vand.u32 2147483647, %v1274
    %vm1330 = vcmp.eq.f32.partialorder %v1329, 8.507059e+37
    %v1331 = vand.u32 %v1274, 2147483648
    %v1332 = vor.u32 1.1754944e-38, %v1331
    %v1333 = vsel %vm1330, %v1332, %v1328
    %v1334 = vmul.f32 1.0, %v1333
    %v1335 = vmul.f32 %v1193, %v906
    %v1336 = vmul.f32 %v1208, %v907
    %v1337 = vmul.f32 %v1223, %v908
    %v1338 = vmul.f32 %v1238, %v909
    %v1339 = vmul.f32 %v1105, %v1247
    %v1340 = vmul.f32 %v1120, %v1248
    %v1341 = vmul.f32 %v1135, %v1249
    %v1342 = vmul.f32 %v1150, %v1250
    %v1343 = vadd.f32 %v1335, %v1339
    %v1344 = vadd.f32 %v1336, %v1340
    %v1345 = vadd.f32 %v1337, %v1341
    %v1346 = vadd.f32 %v1338, %v1342
    %v1347 = vtanh.pop %v1343
    %v1348 = vtanh.pop %v1344
    %v1349 = vtanh.pop %v1345
    %v1350 = vtanh.pop %v1346
    %v1351 = vmul.f32 %v1289, %v1347
    %v1352 = vmul.f32 %v1304, %v1348
    %v1353 = vmul.f32 %v1319, %v1349
    %v1354 = vmul.f32 %v1334, %v1350
    %v1355 = vld [vmem:[%s4 + $0x1] sm:$0x1]
    %v1356 = vld [vmem:[%s4 + $0x9] sm:$0x1]
    %v1357 = vld [vmem:[%s4 + $0x11] sm:$0x1]
    %v1358 = vld [vmem:[%s4 + $0x19] sm:$0x1]
    %1360 = vset.pattern.permute.xlu0 0
    %1361 = vperm.xlu0 %1360, %v1355
    %v1362 = vpop.permute.xlu0 %1361
    %1365 = vset.pattern.permute.xlu0 0
    %1366 = vperm.xlu0 %1365, %v1356
    %v1367 = vpop.permute.xlu0 %1366
    %1370 = vset.pattern.permute.xlu0 0
    %1371 = vperm.xlu0 %1370, %v1357
    %v1372 = vpop.permute.xlu0 %1371
    %1375 = vset.pattern.permute.xlu0 0
    %1376 = vperm.xlu0 %1375, %v1358
    %v1377 = vpop.permute.xlu0 %1376
    %v1379 = vmul.f32 %v1351, %v1362
    %v1380 = vmul.f32 %v1352, %v1367
    %v1381 = vmul.f32 %v1353, %v1372
    %v1382 = vmul.f32 %v1354, %v1377
    %v1383 = vpack.c.bf16 %v1379, %v1379
    %v1384 = vpack.c.bf16 %v1380, %v1380
    %v1385 = vpack.c.bf16 %v1381, %v1381
    %v1386 = vpack.c.bf16 %v1382, %v1382
    %v1388 = vshll.u32 %v1383, 16
    %v1391 = vshll.u32 %v1384, 16
    %v1394 = vshll.u32 %v1385, 16
    %v1397 = vshll.u32 %v1386, 16
    %vm1403 = vsmask.f32 7938
    %vm1404 = vmand %vm950, %vm1403
    %v1405 = vld [vmem:[%s5] sm:$0x1]
    %v1406 = vsel %vm1404, %v1388, %v1405
    %1407 = vst [vmem:[%s5] sm:$0x1] %v1406
    %v1408 = vld [vmem:[%s5 + $0x4] sm:$0x1]
    %v1409 = vsel %vm1404, %v1391, %v1408
    %1410 = vst [vmem:[%s5 + $0x4] sm:$0x1] %v1409
    %v1411 = vld [vmem:[%s5 + $0x8] sm:$0x1]
    %v1412 = vsel %vm1404, %v1394, %v1411
    %1413 = vst [vmem:[%s5 + $0x8] sm:$0x1] %v1412
    %v1414 = vld [vmem:[%s5 + $0xc] sm:$0x1]
    %v1415 = vsel %vm1404, %v1397, %v1414
    %1416 = vst [vmem:[%s5 + $0xc] sm:$0x1] %v1415
    %s1417 = scalar_lea.vmem [#allocation2], 2
    %v1418 = vld [vmem:[%s1417] ss:$8 sm:$0xf]
    %s1419 = scalar_lea.vmem [#allocation2], 34
    %v1420 = vld [vmem:[%s1419] ss:$8 sm:$0xf]
    %s1421 = scalar_lea.vmem [#allocation2], 66
    %v1422 = vld [vmem:[%s1421] ss:$8 sm:$0xf]
    %s1423 = scalar_lea.vmem [#allocation2], 98
    %v1424 = vld [vmem:[%s1423] ss:$8 sm:$0xf]
    %v1425 = vpack.c.bf16 %v1351, %v1351
    %v1426 = vpack.c.bf16 %v1352, %v1352
    %v1427 = vpack.c.bf16 %v1353, %v1353
    %v1428 = vpack.c.bf16 %v1354, %v1354
    %v1433 = vunpack.c.l.b16 %v1425
    %v1434 = vunpack.c.l.b16 %v1426
    %v1435 = vunpack.c.l.b16 %v1427
    %v1436 = vunpack.c.l.b16 %v1428
    %v1437 = vrot.slane %v1434, 7
    %v1438 = vsel %vm611, %v1437, %v1433
    %v1439 = vrot.slane %v1435, 6
    %v1440 = vsel %vm607, %v1439, %v1438
    %v1441 = vrot.slane %v1436, 5
    %v1442 = vsel %vm613, %v1441, %v1440
    %v1443 = vpack.c.b16 %v1442, %v1442
    %1445 = vmatpush.bf16.msra.mxu0 %v510
    %1446 = vmatpush.bf16.msra.mxu0 %v506
    %1447 = vmatpush.bf16.msra.mxu0 %v502
    %1448 = vmatpush.bf16.msra.mxu0 %v498
    %1449 = vmatpush.bf16.msra.mxu0 %v494
    %1450 = vmatpush.bf16.msra.mxu0 %v490
    %1451 = vmatpush.bf16.msra.mxu0 %v486
    %1452 = vmatpush.bf16.msra.mxu0 %v482
    %1453 = vmatmul.bf16.gmra.mxu0 %v1443
    %v1454 = vpop.f32.mrf.mxu0
    %v1455 = vadd.f32 0.0, %v1454
    %v1456 = vpop.f32.mrf.mxu0
    %1457 = vdwg.mxu0
    %1458 = vmatpush.bf16.msra.mxu0 %v511
    %1459 = vmatpush.bf16.msra.mxu0 %v507
    %1460 = vmatpush.bf16.msra.mxu0 %v503
    %1461 = vmatpush.bf16.msra.mxu0 %v499
    %1462 = vmatpush.bf16.msra.mxu0 %v495
    %1463 = vmatpush.bf16.msra.mxu0 %v491
    %1464 = vmatpush.bf16.msra.mxu0 %v487
    %1465 = vmatpush.bf16.msra.mxu0 %v483
    %1466 = vmatmul.bf16.gmra.mxu0 %v1443
    %v1467 = vpop.f32.mrf.mxu0
    %v1468 = vadd.f32 0.0, %v1467
    %v1469 = vpop.f32.mrf.mxu0
    %1470 = vdwg.mxu0
    %1471 = vmatpush.bf16.msra.mxu0 %v512
    %1472 = vmatpush.bf16.msra.mxu0 %v508
    %1473 = vmatpush.bf16.msra.mxu0 %v504
    %1474 = vmatpush.bf16.msra.mxu0 %v500
    %1475 = vmatpush.bf16.msra.mxu0 %v496
    %1476 = vmatpush.bf16.msra.mxu0 %v492
    %1477 = vmatpush.bf16.msra.mxu0 %v488
    %1478 = vmatpush.bf16.msra.mxu0 %v484
    %1479 = vmatmul.bf16.gmra.mxu0 %v1443
    %v1480 = vpop.f32.mrf.mxu0
    %v1481 = vadd.f32 0.0, %v1480
    %v1482 = vpop.f32.mrf.mxu0
    %1483 = vdwg.mxu0
    %1484 = vmatpush.bf16.msra.mxu0 %v513
    %1485 = vmatpush.bf16.msra.mxu0 %v509
    %1486 = vmatpush.bf16.msra.mxu0 %v505
    %1487 = vmatpush.bf16.msra.mxu0 %v501
    %1488 = vmatpush.bf16.msra.mxu0 %v497
    %1489 = vmatpush.bf16.msra.mxu0 %v493
    %1490 = vmatpush.bf16.msra.mxu0 %v489
    %1491 = vmatpush.bf16.msra.mxu0 %v485
    %1492 = vmatmul.bf16.gmra.mxu0 %v1443
    %v1493 = vpop.f32.mrf.mxu0
    %v1494 = vadd.f32 0.0, %v1493
    %v1495 = vpop.f32.mrf.mxu0
    %1496 = vdwg.mxu0
    %v1501 = vrot.slane %v1468, 7
    %v1502 = vrot.slane %v1481, 6
    %v1503 = vrot.slane %v1494, 5
    %v1504 = vsel %vm605, %v1455, %v1501
    %v1505 = vsel %vm607, %v1502, %v1503
    %v1506 = vsel %vm609, %v1504, %v1505
    %v1507 = vsel %vm611, %v1455, %v1501
    %v1508 = vsel %vm613, %v1502, %v1503
    %v1509 = vsel %vm615, %v1507, %v1508
    %v1510 = vrot.slane %v1509, 1
    %v1511 = vsel %vm607, %v1455, %v1501
    %v1512 = vsel %vm619, %v1502, %v1503
    %v1513 = vsel %vm621, %v1511, %v1512
    %v1514 = vrot.slane %v1513, 2
    %v1515 = vsel %vm613, %v1455, %v1501
    %v1516 = vsel %vm625, %v1502, %v1503
    %v1517 = vsel %vm627, %v1515, %v1516
    %v1518 = vrot.slane %v1517, 3
    %v1523 = vadd.f32 %v1418, %v1506
    %v1524 = vadd.f32 %v1420, %v1510
    %v1525 = vadd.f32 %v1422, %v1514
    %v1526 = vadd.f32 %v1424, %v1518
    %v1527 = vxor.u32 %v1523, 2147483648
    %v1528 = vxor.u32 %v1524, 2147483648
    %v1529 = vxor.u32 %v1525, 2147483648
    %v1530 = vxor.u32 %v1526, 2147483648
    %v1531 = vmul.f32 %v1527, 1.442695
    %v1532 = vpow.pop %v1531
    %v1533 = vmul.f32 %v1528, 1.442695
    %v1534 = vpow.pop %v1533
    %v1535 = vmul.f32 %v1529, 1.442695
    %v1536 = vpow.pop %v1535
    %v1537 = vmul.f32 %v1530, 1.442695
    %v1538 = vpow.pop %v1537
    %v1539 = vadd.f32 %v1532, 1.0
    %v1540 = vadd.f32 %v1534, 1.0
    %v1541 = vadd.f32 %v1536, 1.0
    %v1542 = vadd.f32 %v1538, 1.0
    %v1543 = vrcp.pop %v1539
    %v1544 = vmul.f32 %v1539, %v1543
    %v1545 = vsub.f32 1.0, %v1544
    %v1546 = vmul.f32 %v1543, %v1545
    %v1547 = vadd.f32 %v1543, %v1546
    %vm1548 = vweird.f32 %v1539
    %vm1549 = vweird.f32 %v1543
    %vm1550 = vmor %vm1548, %vm1549
    %v1551 = vsel %vm1550, %v1543, %v1547
    %v1552 = vand.u32 2147483647, %v1539
    %vm1553 = vcmp.eq.f32.partialorder %v1552, 8.507059e+37
    %v1554 = vand.u32 %v1539, 2147483648
    %v1555 = vor.u32 1.1754944e-38, %v1554
    %v1556 = vsel %vm1553, %v1555, %v1551
    %v1557 = vmul.f32 1.0, %v1556
    %v1558 = vrcp.pop %v1540
    %v1559 = vmul.f32 %v1540, %v1558
    %v1560 = vsub.f32 1.0, %v1559
    %v1561 = vmul.f32 %v1558, %v1560
    %v1562 = vadd.f32 %v1558, %v1561
    %vm1563 = vweird.f32 %v1540
    %vm1564 = vweird.f32 %v1558
    %vm1565 = vmor %vm1563, %vm1564
    %v1566 = vsel %vm1565, %v1558, %v1562
    %v1567 = vand.u32 2147483647, %v1540
    %vm1568 = vcmp.eq.f32.partialorder %v1567, 8.507059e+37
    %v1569 = vand.u32 %v1540, 2147483648
    %v1570 = vor.u32 1.1754944e-38, %v1569
    %v1571 = vsel %vm1568, %v1570, %v1566
    %v1572 = vmul.f32 1.0, %v1571
    %v1573 = vrcp.pop %v1541
    %v1574 = vmul.f32 %v1541, %v1573
    %v1575 = vsub.f32 1.0, %v1574
    %v1576 = vmul.f32 %v1573, %v1575
    %v1577 = vadd.f32 %v1573, %v1576
    %vm1578 = vweird.f32 %v1541
    %vm1579 = vweird.f32 %v1573
    %vm1580 = vmor %vm1578, %vm1579
    %v1581 = vsel %vm1580, %v1573, %v1577
    %v1582 = vand.u32 2147483647, %v1541
    %vm1583 = vcmp.eq.f32.partialorder %v1582, 8.507059e+37
    %v1584 = vand.u32 %v1541, 2147483648
    %v1585 = vor.u32 1.1754944e-38, %v1584
    %v1586 = vsel %vm1583, %v1585, %v1581
    %v1587 = vmul.f32 1.0, %v1586
    %v1588 = vrcp.pop %v1542
    %v1589 = vmul.f32 %v1542, %v1588
    %v1590 = vsub.f32 1.0, %v1589
    %v1591 = vmul.f32 %v1588, %v1590
    %v1592 = vadd.f32 %v1588, %v1591
    %vm1593 = vweird.f32 %v1542
    %vm1594 = vweird.f32 %v1588
    %vm1595 = vmor %vm1593, %vm1594
    %v1596 = vsel %vm1595, %v1588, %v1592
    %v1597 = vand.u32 2147483647, %v1542
    %vm1598 = vcmp.eq.f32.partialorder %v1597, 8.507059e+37
    %v1599 = vand.u32 %v1542, 2147483648
    %v1600 = vor.u32 1.1754944e-38, %v1599
    %v1601 = vsel %vm1598, %v1600, %v1596
    %v1602 = vmul.f32 1.0, %v1601
    %v1607 = vrot.slane %v1523, 1
    %v1608 = vrot.slane %v1524, 1
    %v1609 = vrot.slane %v1525, 1
    %v1610 = vrot.slane %v1526, 1
    %v1615 = vxor.u32 %v1607, 2147483648
    %v1616 = vxor.u32 %v1608, 2147483648
    %v1617 = vxor.u32 %v1609, 2147483648
    %v1618 = vxor.u32 %v1610, 2147483648
    %v1619 = vmul.f32 %v1615, 1.442695
    %v1620 = vpow.pop %v1619
    %v1621 = vmul.f32 %v1616, 1.442695
    %v1622 = vpow.pop %v1621
    %v1623 = vmul.f32 %v1617, 1.442695
    %v1624 = vpow.pop %v1623
    %v1625 = vmul.f32 %v1618, 1.442695
    %v1626 = vpow.pop %v1625
    %v1627 = vadd.f32 %v1620, 1.0
    %v1628 = vadd.f32 %v1622, 1.0
    %v1629 = vadd.f32 %v1624, 1.0
    %v1630 = vadd.f32 %v1626, 1.0
    %v1631 = vrcp.pop %v1627
    %v1632 = vmul.f32 %v1627, %v1631
    %v1633 = vsub.f32 1.0, %v1632
    %v1634 = vmul.f32 %v1631, %v1633
    %v1635 = vadd.f32 %v1631, %v1634
    %vm1636 = vweird.f32 %v1627
    %vm1637 = vweird.f32 %v1631
    %vm1638 = vmor %vm1636, %vm1637
    %v1639 = vsel %vm1638, %v1631, %v1635
    %v1640 = vand.u32 2147483647, %v1627
    %vm1641 = vcmp.eq.f32.partialorder %v1640, 8.507059e+37
    %v1642 = vand.u32 %v1627, 2147483648
    %v1643 = vor.u32 1.1754944e-38, %v1642
    %v1644 = vsel %vm1641, %v1643, %v1639
    %v1645 = vmul.f32 1.0, %v1644
    %v1646 = vrcp.pop %v1628
    %v1647 = vmul.f32 %v1628, %v1646
    %v1648 = vsub.f32 1.0, %v1647
    %v1649 = vmul.f32 %v1646, %v1648
    %v1650 = vadd.f32 %v1646, %v1649
    %vm1651 = vweird.f32 %v1628
    %vm1652 = vweird.f32 %v1646
    %vm1653 = vmor %vm1651, %vm1652
    %v1654 = vsel %vm1653, %v1646, %v1650
    %v1655 = vand.u32 2147483647, %v1628
    %vm1656 = vcmp.eq.f32.partialorder %v1655, 8.507059e+37
    %v1657 = vand.u32 %v1628, 2147483648
    %v1658 = vor.u32 1.1754944e-38, %v1657
    %v1659 = vsel %vm1656, %v1658, %v1654
    %v1660 = vmul.f32 1.0, %v1659
    %v1661 = vrcp.pop %v1629
    %v1662 = vmul.f32 %v1629, %v1661
    %v1663 = vsub.f32 1.0, %v1662
    %v1664 = vmul.f32 %v1661, %v1663
    %v1665 = vadd.f32 %v1661, %v1664
    %vm1666 = vweird.f32 %v1629
    %vm1667 = vweird.f32 %v1661
    %vm1668 = vmor %vm1666, %vm1667
    %v1669 = vsel %vm1668, %v1661, %v1665
    %v1670 = vand.u32 2147483647, %v1629
    %vm1671 = vcmp.eq.f32.partialorder %v1670, 8.507059e+37
    %v1672 = vand.u32 %v1629, 2147483648
    %v1673 = vor.u32 1.1754944e-38, %v1672
    %v1674 = vsel %vm1671, %v1673, %v1669
    %v1675 = vmul.f32 1.0, %v1674
    %v1676 = vrcp.pop %v1630
    %v1677 = vmul.f32 %v1630, %v1676
    %v1678 = vsub.f32 1.0, %v1677
    %v1679 = vmul.f32 %v1676, %v1678
    %v1680 = vadd.f32 %v1676, %v1679
    %vm1681 = vweird.f32 %v1630
    %vm1682 = vweird.f32 %v1676
    %vm1683 = vmor %vm1681, %vm1682
    %v1684 = vsel %vm1683, %v1676, %v1680
    %v1685 = vand.u32 2147483647, %v1630
    %vm1686 = vcmp.eq.f32.partialorder %v1685, 8.507059e+37
    %v1687 = vand.u32 %v1630, 2147483648
    %v1688 = vor.u32 1.1754944e-38, %v1687
    %v1689 = vsel %vm1686, %v1688, %v1684
    %v1690 = vmul.f32 1.0, %v1689
    %v1691 = vrot.slane %v1523, 2
    %v1692 = vrot.slane %v1524, 2
    %v1693 = vrot.slane %v1525, 2
    %v1694 = vrot.slane %v1526, 2
    %v1699 = vtanh.pop %v1691
    %v1700 = vtanh.pop %v1692
    %v1701 = vtanh.pop %v1693
    %v1702 = vtanh.pop %v1694
    %v1703 = vrot.slane %v1523, 3
    %v1704 = vrot.slane %v1524, 3
    %v1705 = vrot.slane %v1525, 3
    %v1706 = vrot.slane %v1526, 3
    %v1711 = vxor.u32 %v1703, 2147483648
    %v1712 = vxor.u32 %v1704, 2147483648
    %v1713 = vxor.u32 %v1705, 2147483648
    %v1714 = vxor.u32 %v1706, 2147483648
    %v1715 = vmul.f32 %v1711, 1.442695
    %v1716 = vpow.pop %v1715
    %v1717 = vmul.f32 %v1712, 1.442695
    %v1718 = vpow.pop %v1717
    %v1719 = vmul.f32 %v1713, 1.442695
    %v1720 = vpow.pop %v1719
    %v1721 = vmul.f32 %v1714, 1.442695
    %v1722 = vpow.pop %v1721
    %v1723 = vadd.f32 %v1716, 1.0
    %v1724 = vadd.f32 %v1718, 1.0
    %v1725 = vadd.f32 %v1720, 1.0
    %v1726 = vadd.f32 %v1722, 1.0
    %v1727 = vrcp.pop %v1723
    %v1728 = vmul.f32 %v1723, %v1727
    %v1729 = vsub.f32 1.0, %v1728
    %v1730 = vmul.f32 %v1727, %v1729
    %v1731 = vadd.f32 %v1727, %v1730
    %vm1732 = vweird.f32 %v1723
    %vm1733 = vweird.f32 %v1727
    %vm1734 = vmor %vm1732, %vm1733
    %v1735 = vsel %vm1734, %v1727, %v1731
    %v1736 = vand.u32 2147483647, %v1723
    %vm1737 = vcmp.eq.f32.partialorder %v1736, 8.507059e+37
    %v1738 = vand.u32 %v1723, 2147483648
    %v1739 = vor.u32 1.1754944e-38, %v1738
    %v1740 = vsel %vm1737, %v1739, %v1735
    %v1741 = vmul.f32 1.0, %v1740
    %v1742 = vrcp.pop %v1724
    %v1743 = vmul.f32 %v1724, %v1742
    %v1744 = vsub.f32 1.0, %v1743
    %v1745 = vmul.f32 %v1742, %v1744
    %v1746 = vadd.f32 %v1742, %v1745
    %vm1747 = vweird.f32 %v1724
    %vm1748 = vweird.f32 %v1742
    %vm1749 = vmor %vm1747, %vm1748
    %v1750 = vsel %vm1749, %v1742, %v1746
    %v1751 = vand.u32 2147483647, %v1724
    %vm1752 = vcmp.eq.f32.partialorder %v1751, 8.507059e+37
    %v1753 = vand.u32 %v1724, 2147483648
    %v1754 = vor.u32 1.1754944e-38, %v1753
    %v1755 = vsel %vm1752, %v1754, %v1750
    %v1756 = vmul.f32 1.0, %v1755
    %v1757 = vrcp.pop %v1725
    %v1758 = vmul.f32 %v1725, %v1757
    %v1759 = vsub.f32 1.0, %v1758
    %v1760 = vmul.f32 %v1757, %v1759
    %v1761 = vadd.f32 %v1757, %v1760
    %vm1762 = vweird.f32 %v1725
    %vm1763 = vweird.f32 %v1757
    %vm1764 = vmor %vm1762, %vm1763
    %v1765 = vsel %vm1764, %v1757, %v1761
    %v1766 = vand.u32 2147483647, %v1725
    %vm1767 = vcmp.eq.f32.partialorder %v1766, 8.507059e+37
    %v1768 = vand.u32 %v1725, 2147483648
    %v1769 = vor.u32 1.1754944e-38, %v1768
    %v1770 = vsel %vm1767, %v1769, %v1765
    %v1771 = vmul.f32 1.0, %v1770
    %v1772 = vrcp.pop %v1726
    %v1773 = vmul.f32 %v1726, %v1772
    %v1774 = vsub.f32 1.0, %v1773
    %v1775 = vmul.f32 %v1772, %v1774
    %v1776 = vadd.f32 %v1772, %v1775
    %vm1777 = vweird.f32 %v1726
    %vm1778 = vweird.f32 %v1772
    %vm1779 = vmor %vm1777, %vm1778
    %v1780 = vsel %vm1779, %v1772, %v1776
    %v1781 = vand.u32 2147483647, %v1726
    %vm1782 = vcmp.eq.f32.partialorder %v1781, 8.507059e+37
    %v1783 = vand.u32 %v1726, 2147483648
    %v1784 = vor.u32 1.1754944e-38, %v1783
    %v1785 = vsel %vm1782, %v1784, %v1780
    %v1786 = vmul.f32 1.0, %v1785
    %v1787 = vmul.f32 %v1645, %v1343
    %v1788 = vmul.f32 %v1660, %v1344
    %v1789 = vmul.f32 %v1675, %v1345
    %v1790 = vmul.f32 %v1690, %v1346
    %v1791 = vmul.f32 %v1557, %v1699
    %v1792 = vmul.f32 %v1572, %v1700
    %v1793 = vmul.f32 %v1587, %v1701
    %v1794 = vmul.f32 %v1602, %v1702
    %v1795 = vadd.f32 %v1787, %v1791
    %v1796 = vadd.f32 %v1788, %v1792
    %v1797 = vadd.f32 %v1789, %v1793
    %v1798 = vadd.f32 %v1790, %v1794
    %v1799 = vtanh.pop %v1795
    %v1800 = vtanh.pop %v1796
    %v1801 = vtanh.pop %v1797
    %v1802 = vtanh.pop %v1798
    %v1803 = vmul.f32 %v1741, %v1799
    %v1804 = vmul.f32 %v1756, %v1800
    %v1805 = vmul.f32 %v1771, %v1801
    %v1806 = vmul.f32 %v1786, %v1802
    %v1807 = vld [vmem:[%s4 + $0x2] sm:$0x1]
    %v1808 = vld [vmem:[%s4 + $0xa] sm:$0x1]
    %v1809 = vld [vmem:[%s4 + $0x12] sm:$0x1]
    %v1810 = vld [vmem:[%s4 + $0x1a] sm:$0x1]
    %1812 = vset.pattern.permute.xlu0 0
    %1813 = vperm.xlu0 %1812, %v1807
    %v1814 = vpop.permute.xlu0 %1813
    %1817 = vset.pattern.permute.xlu0 0
    %1818 = vperm.xlu0 %1817, %v1808
    %v1819 = vpop.permute.xlu0 %1818
    %1822 = vset.pattern.permute.xlu0 0
    %1823 = vperm.xlu0 %1822, %v1809
    %v1824 = vpop.permute.xlu0 %1823
    %1827 = vset.pattern.permute.xlu0 0
    %1828 = vperm.xlu0 %1827, %v1810
    %v1829 = vpop.permute.xlu0 %1828
    %v1831 = vmul.f32 %v1803, %v1814
    %v1832 = vmul.f32 %v1804, %v1819
    %v1833 = vmul.f32 %v1805, %v1824
    %v1834 = vmul.f32 %v1806, %v1829
    %v1835 = vpack.c.bf16 %v1831, %v1831
    %v1836 = vpack.c.bf16 %v1832, %v1832
    %v1837 = vpack.c.bf16 %v1833, %v1833
    %v1838 = vpack.c.bf16 %v1834, %v1834
    %v1843 = vrot.slane %v1835, 7
    %v1844 = vrot.slane %v1836, 7
    %v1845 = vrot.slane %v1837, 7
    %v1846 = vrot.slane %v1838, 7
    %vm1851 = vcmask 1041409
    %vm1852 = vsmask.f32 1280
    %vm1853 = vmand %vm1851, %vm1852
    %v1854 = vld [vmem:[%s5] sm:$0x2]
    %v1855 = vsel %vm1853, %v1843, %v1854
    %1856 = vst [vmem:[%s5] sm:$0x2] %v1855
    %v1857 = vld [vmem:[%s5 + $0x4] sm:$0x2]
    %v1858 = vsel %vm1853, %v1844, %v1857
    %1859 = vst [vmem:[%s5 + $0x4] sm:$0x2] %v1858
    %v1860 = vld [vmem:[%s5 + $0x8] sm:$0x2]
    %v1861 = vsel %vm1853, %v1845, %v1860
    %1862 = vst [vmem:[%s5 + $0x8] sm:$0x2] %v1861
    %v1863 = vld [vmem:[%s5 + $0xc] sm:$0x2]
    %v1864 = vsel %vm1853, %v1846, %v1863
    %1865 = vst [vmem:[%s5 + $0xc] sm:$0x2] %v1864
    %s1866 = scalar_lea.vmem [#allocation2], 3
    %v1867 = vld [vmem:[%s1866] ss:$8 sm:$0xf]
    %s1868 = scalar_lea.vmem [#allocation2], 35
    %v1869 = vld [vmem:[%s1868] ss:$8 sm:$0xf]
    %s1870 = scalar_lea.vmem [#allocation2], 67
    %v1871 = vld [vmem:[%s1870] ss:$8 sm:$0xf]
    %s1872 = scalar_lea.vmem [#allocation2], 99
    %v1873 = vld [vmem:[%s1872] ss:$8 sm:$0xf]
    %v1874 = vpack.c.bf16 %v1803, %v1803
    %v1875 = vpack.c.bf16 %v1804, %v1804
    %v1876 = vpack.c.bf16 %v1805, %v1805
    %v1877 = vpack.c.bf16 %v1806, %v1806
    %v1882 = vunpack.c.l.b16 %v1874
    %v1883 = vunpack.c.l.b16 %v1875
    %v1884 = vunpack.c.l.b16 %v1876
    %v1885 = vunpack.c.l.b16 %v1877
    %v1886 = vrot.slane %v1883, 7
    %v1887 = vsel %vm611, %v1886, %v1882
    %v1888 = vrot.slane %v1884, 6
    %v1889 = vsel %vm607, %v1888, %v1887
    %v1890 = vrot.slane %v1885, 5
    %v1891 = vsel %vm613, %v1890, %v1889
    %v1892 = vpack.c.b16 %v1891, %v1891
    %1894 = vmatpush.bf16.msra.mxu0 %v510
    %1895 = vmatpush.bf16.msra.mxu0 %v506
    %1896 = vmatpush.bf16.msra.mxu0 %v502
    %1897 = vmatpush.bf16.msra.mxu0 %v498
    %1898 = vmatpush.bf16.msra.mxu0 %v494
    %1899 = vmatpush.bf16.msra.mxu0 %v490
    %1900 = vmatpush.bf16.msra.mxu0 %v486
    %1901 = vmatpush.bf16.msra.mxu0 %v482
    %1902 = vmatmul.bf16.gmra.mxu0 %v1892
    %v1903 = vpop.f32.mrf.mxu0
    %v1904 = vadd.f32 0.0, %v1903
    %v1905 = vpop.f32.mrf.mxu0
    %1906 = vdwg.mxu0
    %1907 = vmatpush.bf16.msra.mxu0 %v511
    %1908 = vmatpush.bf16.msra.mxu0 %v507
    %1909 = vmatpush.bf16.msra.mxu0 %v503
    %1910 = vmatpush.bf16.msra.mxu0 %v499
    %1911 = vmatpush.bf16.msra.mxu0 %v495
    %1912 = vmatpush.bf16.msra.mxu0 %v491
    %1913 = vmatpush.bf16.msra.mxu0 %v487
    %1914 = vmatpush.bf16.msra.mxu0 %v483
    %1915 = vmatmul.bf16.gmra.mxu0 %v1892
    %v1916 = vpop.f32.mrf.mxu0
    %v1917 = vadd.f32 0.0, %v1916
    %v1918 = vpop.f32.mrf.mxu0
    %1919 = vdwg.mxu0
    %1920 = vmatpush.bf16.msra.mxu0 %v512
    %1921 = vmatpush.bf16.msra.mxu0 %v508
    %1922 = vmatpush.bf16.msra.mxu0 %v504
    %1923 = vmatpush.bf16.msra.mxu0 %v500
    %1924 = vmatpush.bf16.msra.mxu0 %v496
    %1925 = vmatpush.bf16.msra.mxu0 %v492
    %1926 = vmatpush.bf16.msra.mxu0 %v488
    %1927 = vmatpush.bf16.msra.mxu0 %v484
    %1928 = vmatmul.bf16.gmra.mxu0 %v1892
    %v1929 = vpop.f32.mrf.mxu0
    %v1930 = vadd.f32 0.0, %v1929
    %v1931 = vpop.f32.mrf.mxu0
    %1932 = vdwg.mxu0
    %1933 = vmatpush.bf16.msra.mxu0 %v513
    %1934 = vmatpush.bf16.msra.mxu0 %v509
    %1935 = vmatpush.bf16.msra.mxu0 %v505
    %1936 = vmatpush.bf16.msra.mxu0 %v501
    %1937 = vmatpush.bf16.msra.mxu0 %v497
    %1938 = vmatpush.bf16.msra.mxu0 %v493
    %1939 = vmatpush.bf16.msra.mxu0 %v489
    %1940 = vmatpush.bf16.msra.mxu0 %v485
    %1941 = vmatmul.bf16.gmra.mxu0 %v1892
    %v1942 = vpop.f32.mrf.mxu0
    %v1943 = vadd.f32 0.0, %v1942
    %v1944 = vpop.f32.mrf.mxu0
    %1945 = vdwg.mxu0
    %v1950 = vrot.slane %v1917, 7
    %v1951 = vrot.slane %v1930, 6
    %v1952 = vrot.slane %v1943, 5
    %v1953 = vsel %vm605, %v1904, %v1950
    %v1954 = vsel %vm607, %v1951, %v1952
    %v1955 = vsel %vm609, %v1953, %v1954
    %v1956 = vsel %vm611, %v1904, %v1950
    %v1957 = vsel %vm613, %v1951, %v1952
    %v1958 = vsel %vm615, %v1956, %v1957
    %v1959 = vrot.slane %v1958, 1
    %v1960 = vsel %vm607, %v1904, %v1950
    %v1961 = vsel %vm619, %v1951, %v1952
    %v1962 = vsel %vm621, %v1960, %v1961
    %v1963 = vrot.slane %v1962, 2
    %v1964 = vsel %vm613, %v1904, %v1950
    %v1965 = vsel %vm625, %v1951, %v1952
    %v1966 = vsel %vm627, %v1964, %v1965
    %v1967 = vrot.slane %v1966, 3
    %v1972 = vadd.f32 %v1867, %v1955
    %v1973 = vadd.f32 %v1869, %v1959
    %v1974 = vadd.f32 %v1871, %v1963
    %v1975 = vadd.f32 %v1873, %v1967
    %v1976 = vxor.u32 %v1972, 2147483648
    %v1977 = vxor.u32 %v1973, 2147483648
    %v1978 = vxor.u32 %v1974, 2147483648
    %v1979 = vxor.u32 %v1975, 2147483648
    %v1980 = vmul.f32 %v1976, 1.442695
    %v1981 = vpow.pop %v1980
    %v1982 = vmul.f32 %v1977, 1.442695
    %v1983 = vpow.pop %v1982
    %v1984 = vmul.f32 %v1978, 1.442695
    %v1985 = vpow.pop %v1984
    %v1986 = vmul.f32 %v1979, 1.442695
    %v1987 = vpow.pop %v1986
    %v1988 = vadd.f32 %v1981, 1.0
    %v1989 = vadd.f32 %v1983, 1.0
    %v1990 = vadd.f32 %v1985, 1.0
    %v1991 = vadd.f32 %v1987, 1.0
    %v1992 = vrcp.pop %v1988
    %v1993 = vmul.f32 %v1988, %v1992
    %v1994 = vsub.f32 1.0, %v1993
    %v1995 = vmul.f32 %v1992, %v1994
    %v1996 = vadd.f32 %v1992, %v1995
    %vm1997 = vweird.f32 %v1988
    %vm1998 = vweird.f32 %v1992
    %vm1999 = vmor %vm1997, %vm1998
    %v2000 = vsel %vm1999, %v1992, %v1996
    %v2001 = vand.u32 2147483647, %v1988
    %vm2002 = vcmp.eq.f32.partialorder %v2001, 8.507059e+37
    %v2003 = vand.u32 %v1988, 2147483648
    %v2004 = vor.u32 1.1754944e-38, %v2003
    %v2005 = vsel %vm2002, %v2004, %v2000
    %v2006 = vmul.f32 1.0, %v2005
    %v2007 = vrcp.pop %v1989
    %v2008 = vmul.f32 %v1989, %v2007
    %v2009 = vsub.f32 1.0, %v2008
    %v2010 = vmul.f32 %v2007, %v2009
    %v2011 = vadd.f32 %v2007, %v2010
    %vm2012 = vweird.f32 %v1989
    %vm2013 = vweird.f32 %v2007
    %vm2014 = vmor %vm2012, %vm2013
    %v2015 = vsel %vm2014, %v2007, %v2011
    %v2016 = vand.u32 2147483647, %v1989
    %vm2017 = vcmp.eq.f32.partialorder %v2016, 8.507059e+37
    %v2018 = vand.u32 %v1989, 2147483648
    %v2019 = vor.u32 1.1754944e-38, %v2018
    %v2020 = vsel %vm2017, %v2019, %v2015
    %v2021 = vmul.f32 1.0, %v2020
    %v2022 = vrcp.pop %v1990
    %v2023 = vmul.f32 %v1990, %v2022
    %v2024 = vsub.f32 1.0, %v2023
    %v2025 = vmul.f32 %v2022, %v2024
    %v2026 = vadd.f32 %v2022, %v2025
    %vm2027 = vweird.f32 %v1990
    %vm2028 = vweird.f32 %v2022
    %vm2029 = vmor %vm2027, %vm2028
    %v2030 = vsel %vm2029, %v2022, %v2026
    %v2031 = vand.u32 2147483647, %v1990
    %vm2032 = vcmp.eq.f32.partialorder %v2031, 8.507059e+37
    %v2033 = vand.u32 %v1990, 2147483648
    %v2034 = vor.u32 1.1754944e-38, %v2033
    %v2035 = vsel %vm2032, %v2034, %v2030
    %v2036 = vmul.f32 1.0, %v2035
    %v2037 = vrcp.pop %v1991
    %v2038 = vmul.f32 %v1991, %v2037
    %v2039 = vsub.f32 1.0, %v2038
    %v2040 = vmul.f32 %v2037, %v2039
    %v2041 = vadd.f32 %v2037, %v2040
    %vm2042 = vweird.f32 %v1991
    %vm2043 = vweird.f32 %v2037
    %vm2044 = vmor %vm2042, %vm2043
    %v2045 = vsel %vm2044, %v2037, %v2041
    %v2046 = vand.u32 2147483647, %v1991
    %vm2047 = vcmp.eq.f32.partialorder %v2046, 8.507059e+37
    %v2048 = vand.u32 %v1991, 2147483648
    %v2049 = vor.u32 1.1754944e-38, %v2048
    %v2050 = vsel %vm2047, %v2049, %v2045
    %v2051 = vmul.f32 1.0, %v2050
    %v2056 = vrot.slane %v1972, 1
    %v2057 = vrot.slane %v1973, 1
    %v2058 = vrot.slane %v1974, 1
    %v2059 = vrot.slane %v1975, 1
    %v2064 = vxor.u32 %v2056, 2147483648
    %v2065 = vxor.u32 %v2057, 2147483648
    %v2066 = vxor.u32 %v2058, 2147483648
    %v2067 = vxor.u32 %v2059, 2147483648
    %v2068 = vmul.f32 %v2064, 1.442695
    %v2069 = vpow.pop %v2068
    %v2070 = vmul.f32 %v2065, 1.442695
    %v2071 = vpow.pop %v2070
    %v2072 = vmul.f32 %v2066, 1.442695
    %v2073 = vpow.pop %v2072
    %v2074 = vmul.f32 %v2067, 1.442695
    %v2075 = vpow.pop %v2074
    %v2076 = vadd.f32 %v2069, 1.0
    %v2077 = vadd.f32 %v2071, 1.0
    %v2078 = vadd.f32 %v2073, 1.0
    %v2079 = vadd.f32 %v2075, 1.0
    %v2080 = vrcp.pop %v2076
    %v2081 = vmul.f32 %v2076, %v2080
    %v2082 = vsub.f32 1.0, %v2081
    %v2083 = vmul.f32 %v2080, %v2082
    %v2084 = vadd.f32 %v2080, %v2083
    %vm2085 = vweird.f32 %v2076
    %vm2086 = vweird.f32 %v2080
    %vm2087 = vmor %vm2085, %vm2086
    %v2088 = vsel %vm2087, %v2080, %v2084
    %v2089 = vand.u32 2147483647, %v2076
    %vm2090 = vcmp.eq.f32.partialorder %v2089, 8.507059e+37
    %v2091 = vand.u32 %v2076, 2147483648
    %v2092 = vor.u32 1.1754944e-38, %v2091
    %v2093 = vsel %vm2090, %v2092, %v2088
    %v2094 = vmul.f32 1.0, %v2093
    %v2095 = vrcp.pop %v2077
    %v2096 = vmul.f32 %v2077, %v2095
    %v2097 = vsub.f32 1.0, %v2096
    %v2098 = vmul.f32 %v2095, %v2097
    %v2099 = vadd.f32 %v2095, %v2098
    %vm2100 = vweird.f32 %v2077
    %vm2101 = vweird.f32 %v2095
    %vm2102 = vmor %vm2100, %vm2101
    %v2103 = vsel %vm2102, %v2095, %v2099
    %v2104 = vand.u32 2147483647, %v2077
    %vm2105 = vcmp.eq.f32.partialorder %v2104, 8.507059e+37
    %v2106 = vand.u32 %v2077, 2147483648
    %v2107 = vor.u32 1.1754944e-38, %v2106
    %v2108 = vsel %vm2105, %v2107, %v2103
    %v2109 = vmul.f32 1.0, %v2108
    %v2110 = vrcp.pop %v2078
    %v2111 = vmul.f32 %v2078, %v2110
    %v2112 = vsub.f32 1.0, %v2111
    %v2113 = vmul.f32 %v2110, %v2112
    %v2114 = vadd.f32 %v2110, %v2113
    %vm2115 = vweird.f32 %v2078
    %vm2116 = vweird.f32 %v2110
    %vm2117 = vmor %vm2115, %vm2116
    %v2118 = vsel %vm2117, %v2110, %v2114
    %v2119 = vand.u32 2147483647, %v2078
    %vm2120 = vcmp.eq.f32.partialorder %v2119, 8.507059e+37
    %v2121 = vand.u32 %v2078, 2147483648
    %v2122 = vor.u32 1.1754944e-38, %v2121
    %v2123 = vsel %vm2120, %v2122, %v2118
    %v2124 = vmul.f32 1.0, %v2123
    %v2125 = vrcp.pop %v2079
    %v2126 = vmul.f32 %v2079, %v2125
    %v2127 = vsub.f32 1.0, %v2126
    %v2128 = vmul.f32 %v2125, %v2127
    %v2129 = vadd.f32 %v2125, %v2128
    %vm2130 = vweird.f32 %v2079
    %vm2131 = vweird.f32 %v2125
    %vm2132 = vmor %vm2130, %vm2131
    %v2133 = vsel %vm2132, %v2125, %v2129
    %v2134 = vand.u32 2147483647, %v2079
    %vm2135 = vcmp.eq.f32.partialorder %v2134, 8.507059e+37
    %v2136 = vand.u32 %v2079, 2147483648
    %v2137 = vor.u32 1.1754944e-38, %v2136
    %v2138 = vsel %vm2135, %v2137, %v2133
    %v2139 = vmul.f32 1.0, %v2138
    %v2140 = vrot.slane %v1972, 2
    %v2141 = vrot.slane %v1973, 2
    %v2142 = vrot.slane %v1974, 2
    %v2143 = vrot.slane %v1975, 2
    %v2148 = vtanh.pop %v2140
    %v2149 = vtanh.pop %v2141
    %v2150 = vtanh.pop %v2142
    %v2151 = vtanh.pop %v2143
    %v2152 = vrot.slane %v1972, 3
    %v2153 = vrot.slane %v1973, 3
    %v2154 = vrot.slane %v1974, 3
    %v2155 = vrot.slane %v1975, 3
    %v2160 = vxor.u32 %v2152, 2147483648
    %v2161 = vxor.u32 %v2153, 2147483648
    %v2162 = vxor.u32 %v2154, 2147483648
    %v2163 = vxor.u32 %v2155, 2147483648
    %v2164 = vmul.f32 %v2160, 1.442695
    %v2165 = vpow.pop %v2164
    %v2166 = vmul.f32 %v2161, 1.442695
    %v2167 = vpow.pop %v2166
    %v2168 = vmul.f32 %v2162, 1.442695
    %v2169 = vpow.pop %v2168
    %v2170 = vmul.f32 %v2163, 1.442695
    %v2171 = vpow.pop %v2170
    %v2172 = vadd.f32 %v2165, 1.0
    %v2173 = vadd.f32 %v2167, 1.0
    %v2174 = vadd.f32 %v2169, 1.0
    %v2175 = vadd.f32 %v2171, 1.0
    %v2176 = vrcp.pop %v2172
    %v2177 = vmul.f32 %v2172, %v2176
    %v2178 = vsub.f32 1.0, %v2177
    %v2179 = vmul.f32 %v2176, %v2178
    %v2180 = vadd.f32 %v2176, %v2179
    %vm2181 = vweird.f32 %v2172
    %vm2182 = vweird.f32 %v2176
    %vm2183 = vmor %vm2181, %vm2182
    %v2184 = vsel %vm2183, %v2176, %v2180
    %v2185 = vand.u32 2147483647, %v2172
    %vm2186 = vcmp.eq.f32.partialorder %v2185, 8.507059e+37
    %v2187 = vand.u32 %v2172, 2147483648
    %v2188 = vor.u32 1.1754944e-38, %v2187
    %v2189 = vsel %vm2186, %v2188, %v2184
    %v2190 = vmul.f32 1.0, %v2189
    %v2191 = vrcp.pop %v2173
    %v2192 = vmul.f32 %v2173, %v2191
    %v2193 = vsub.f32 1.0, %v2192
    %v2194 = vmul.f32 %v2191, %v2193
    %v2195 = vadd.f32 %v2191, %v2194
    %vm2196 = vweird.f32 %v2173
    %vm2197 = vweird.f32 %v2191
    %vm2198 = vmor %vm2196, %vm2197
    %v2199 = vsel %vm2198, %v2191, %v2195
    %v2200 = vand.u32 2147483647, %v2173
    %vm2201 = vcmp.eq.f32.partialorder %v2200, 8.507059e+37
    %v2202 = vand.u32 %v2173, 2147483648
    %v2203 = vor.u32 1.1754944e-38, %v2202
    %v2204 = vsel %vm2201, %v2203, %v2199
    %v2205 = vmul.f32 1.0, %v2204
    %v2206 = vrcp.pop %v2174
    %v2207 = vmul.f32 %v2174, %v2206
    %v2208 = vsub.f32 1.0, %v2207
    %v2209 = vmul.f32 %v2206, %v2208
    %v2210 = vadd.f32 %v2206, %v2209
    %vm2211 = vweird.f32 %v2174
    %vm2212 = vweird.f32 %v2206
    %vm2213 = vmor %vm2211, %vm2212
    %v2214 = vsel %vm2213, %v2206, %v2210
    %v2215 = vand.u32 2147483647, %v2174
    %vm2216 = vcmp.eq.f32.partialorder %v2215, 8.507059e+37
    %v2217 = vand.u32 %v2174, 2147483648
    %v2218 = vor.u32 1.1754944e-38, %v2217
    %v2219 = vsel %vm2216, %v2218, %v2214
    %v2220 = vmul.f32 1.0, %v2219
    %v2221 = vrcp.pop %v2175
    %v2222 = vmul.f32 %v2175, %v2221
    %v2223 = vsub.f32 1.0, %v2222
    %v2224 = vmul.f32 %v2221, %v2223
    %v2225 = vadd.f32 %v2221, %v2224
    %vm2226 = vweird.f32 %v2175
    %vm2227 = vweird.f32 %v2221
    %vm2228 = vmor %vm2226, %vm2227
    %v2229 = vsel %vm2228, %v2221, %v2225
    %v2230 = vand.u32 2147483647, %v2175
    %vm2231 = vcmp.eq.f32.partialorder %v2230, 8.507059e+37
    %v2232 = vand.u32 %v2175, 2147483648
    %v2233 = vor.u32 1.1754944e-38, %v2232
    %v2234 = vsel %vm2231, %v2233, %v2229
    %v2235 = vmul.f32 1.0, %v2234
    %v2236 = vmul.f32 %v2094, %v1795
    %v2237 = vmul.f32 %v2109, %v1796
    %v2238 = vmul.f32 %v2124, %v1797
    %v2239 = vmul.f32 %v2139, %v1798
    %v2240 = vmul.f32 %v2006, %v2148
    %v2241 = vmul.f32 %v2021, %v2149
    %v2242 = vmul.f32 %v2036, %v2150
    %v2243 = vmul.f32 %v2051, %v2151
    %v2244 = vadd.f32 %v2236, %v2240
    %v2245 = vadd.f32 %v2237, %v2241
    %v2246 = vadd.f32 %v2238, %v2242
    %v2247 = vadd.f32 %v2239, %v2243
    %v2248 = vtanh.pop %v2244
    %v2249 = vtanh.pop %v2245
    %v2250 = vtanh.pop %v2246
    %v2251 = vtanh.pop %v2247
    %v2252 = vmul.f32 %v2190, %v2248
    %v2253 = vmul.f32 %v2205, %v2249
    %v2254 = vmul.f32 %v2220, %v2250
    %v2255 = vmul.f32 %v2235, %v2251
    %v2256 = vld [vmem:[%s4 + $0x3] sm:$0x1]
    %v2257 = vld [vmem:[%s4 + $0xb] sm:$0x1]
    %v2258 = vld [vmem:[%s4 + $0x13] sm:$0x1]
    %v2259 = vld [vmem:[%s4 + $0x1b] sm:$0x1]
    %2261 = vset.pattern.permute.xlu0 0
    %2262 = vperm.xlu0 %2261, %v2256
    %v2263 = vpop.permute.xlu0 %2262
    %2266 = vset.pattern.permute.xlu0 0
    %2267 = vperm.xlu0 %2266, %v2257
    %v2268 = vpop.permute.xlu0 %2267
    %2271 = vset.pattern.permute.xlu0 0
    %2272 = vperm.xlu0 %2271, %v2258
    %v2273 = vpop.permute.xlu0 %2272
    %2276 = vset.pattern.permute.xlu0 0
    %2277 = vperm.xlu0 %2276, %v2259
    %v2278 = vpop.permute.xlu0 %2277
    %v2280 = vmul.f32 %v2252, %v2263
    %v2281 = vmul.f32 %v2253, %v2268
    %v2282 = vmul.f32 %v2254, %v2273
    %v2283 = vmul.f32 %v2255, %v2278
    %v2284 = vpack.c.bf16 %v2280, %v2280
    %v2285 = vpack.c.bf16 %v2281, %v2281
    %v2286 = vpack.c.bf16 %v2282, %v2282
    %v2287 = vpack.c.bf16 %v2283, %v2283
    %v2289 = vshll.u32 %v2284, 16
    %v2291 = vrot.slane %v2289, 7
    %v2293 = vshll.u32 %v2285, 16
    %v2295 = vrot.slane %v2293, 7
    %v2297 = vshll.u32 %v2286, 16
    %v2299 = vrot.slane %v2297, 7
    %v2301 = vshll.u32 %v2287, 16
    %v2303 = vrot.slane %v2301, 7
    %vm2308 = vsmask.f32 7942
    %vm2309 = vmand %vm1851, %vm2308
    %v2310 = vld [vmem:[%s5] sm:$0x2]
    %v2311 = vsel %vm2309, %v2291, %v2310
    %2312 = vst [vmem:[%s5] sm:$0x2] %v2311
    %v2313 = vld [vmem:[%s5 + $0x4] sm:$0x2]
    %v2314 = vsel %vm2309, %v2295, %v2313
    %2315 = vst [vmem:[%s5 + $0x4] sm:$0x2] %v2314
    %v2316 = vld [vmem:[%s5 + $0x8] sm:$0x2]
    %v2317 = vsel %vm2309, %v2299, %v2316
    %2318 = vst [vmem:[%s5 + $0x8] sm:$0x2] %v2317
    %v2319 = vld [vmem:[%s5 + $0xc] sm:$0x2]
    %v2320 = vsel %vm2309, %v2303, %v2319
    %2321 = vst [vmem:[%s5 + $0xc] sm:$0x2] %v2320
    %s2322 = scalar_lea.vmem [#allocation2], 4
    %v2323 = vld [vmem:[%s2322] ss:$8 sm:$0xf]
    %s2324 = scalar_lea.vmem [#allocation2], 36
    %v2325 = vld [vmem:[%s2324] ss:$8 sm:$0xf]
    %s2326 = scalar_lea.vmem [#allocation2], 68
    %v2327 = vld [vmem:[%s2326] ss:$8 sm:$0xf]
    %s2328 = scalar_lea.vmem [#allocation2], 100
    %v2329 = vld [vmem:[%s2328] ss:$8 sm:$0xf]
    %v2330 = vpack.c.bf16 %v2252, %v2252
    %v2331 = vpack.c.bf16 %v2253, %v2253
    %v2332 = vpack.c.bf16 %v2254, %v2254
    %v2333 = vpack.c.bf16 %v2255, %v2255
    %v2338 = vunpack.c.l.b16 %v2330
    %v2339 = vunpack.c.l.b16 %v2331
    %v2340 = vunpack.c.l.b16 %v2332
    %v2341 = vunpack.c.l.b16 %v2333
    %v2342 = vrot.slane %v2339, 7
    %v2343 = vsel %vm611, %v2342, %v2338
    %v2344 = vrot.slane %v2340, 6
    %v2345 = vsel %vm607, %v2344, %v2343
    %v2346 = vrot.slane %v2341, 5
    %v2347 = vsel %vm613, %v2346, %v2345
    %v2348 = vpack.c.b16 %v2347, %v2347
    %2350 = vmatpush.bf16.msra.mxu0 %v510
    %2351 = vmatpush.bf16.msra.mxu0 %v506
    %2352 = vmatpush.bf16.msra.mxu0 %v502
    %2353 = vmatpush.bf16.msra.mxu0 %v498
    %2354 = vmatpush.bf16.msra.mxu0 %v494
    %2355 = vmatpush.bf16.msra.mxu0 %v490
    %2356 = vmatpush.bf16.msra.mxu0 %v486
    %2357 = vmatpush.bf16.msra.mxu0 %v482
    %2358 = vmatmul.bf16.gmra.mxu0 %v2348
    %v2359 = vpop.f32.mrf.mxu0
    %v2360 = vadd.f32 0.0, %v2359
    %v2361 = vpop.f32.mrf.mxu0
    %2362 = vdwg.mxu0
    %2363 = vmatpush.bf16.msra.mxu0 %v511
    %2364 = vmatpush.bf16.msra.mxu0 %v507
    %2365 = vmatpush.bf16.msra.mxu0 %v503
    %2366 = vmatpush.bf16.msra.mxu0 %v499
    %2367 = vmatpush.bf16.msra.mxu0 %v495
    %2368 = vmatpush.bf16.msra.mxu0 %v491
    %2369 = vmatpush.bf16.msra.mxu0 %v487
    %2370 = vmatpush.bf16.msra.mxu0 %v483
    %2371 = vmatmul.bf16.gmra.mxu0 %v2348
    %v2372 = vpop.f32.mrf.mxu0
    %v2373 = vadd.f32 0.0, %v2372
    %v2374 = vpop.f32.mrf.mxu0
    %2375 = vdwg.mxu0
    %2376 = vmatpush.bf16.msra.mxu0 %v512
    %2377 = vmatpush.bf16.msra.mxu0 %v508
    %2378 = vmatpush.bf16.msra.mxu0 %v504
    %2379 = vmatpush.bf16.msra.mxu0 %v500
    %2380 = vmatpush.bf16.msra.mxu0 %v496
    %2381 = vmatpush.bf16.msra.mxu0 %v492
    %2382 = vmatpush.bf16.msra.mxu0 %v488
    %2383 = vmatpush.bf16.msra.mxu0 %v484
    %2384 = vmatmul.bf16.gmra.mxu0 %v2348
    %v2385 = vpop.f32.mrf.mxu0
    %v2386 = vadd.f32 0.0, %v2385
    %v2387 = vpop.f32.mrf.mxu0
    %2388 = vdwg.mxu0
    %2389 = vmatpush.bf16.msra.mxu0 %v513
    %2390 = vmatpush.bf16.msra.mxu0 %v509
    %2391 = vmatpush.bf16.msra.mxu0 %v505
    %2392 = vmatpush.bf16.msra.mxu0 %v501
    %2393 = vmatpush.bf16.msra.mxu0 %v497
    %2394 = vmatpush.bf16.msra.mxu0 %v493
    %2395 = vmatpush.bf16.msra.mxu0 %v489
    %2396 = vmatpush.bf16.msra.mxu0 %v485
    %2397 = vmatmul.bf16.gmra.mxu0 %v2348
    %v2398 = vpop.f32.mrf.mxu0
    %v2399 = vadd.f32 0.0, %v2398
    %v2400 = vpop.f32.mrf.mxu0
    %2401 = vdwg.mxu0
    %v2406 = vrot.slane %v2373, 7
    %v2407 = vrot.slane %v2386, 6
    %v2408 = vrot.slane %v2399, 5
    %v2409 = vsel %vm605, %v2360, %v2406
    %v2410 = vsel %vm607, %v2407, %v2408
    %v2411 = vsel %vm609, %v2409, %v2410
    %v2412 = vsel %vm611, %v2360, %v2406
    %v2413 = vsel %vm613, %v2407, %v2408
    %v2414 = vsel %vm615, %v2412, %v2413
    %v2415 = vrot.slane %v2414, 1
    %v2416 = vsel %vm607, %v2360, %v2406
    %v2417 = vsel %vm619, %v2407, %v2408
    %v2418 = vsel %vm621, %v2416, %v2417
    %v2419 = vrot.slane %v2418, 2
    %v2420 = vsel %vm613, %v2360, %v2406
    %v2421 = vsel %vm625, %v2407, %v2408
    %v2422 = vsel %vm627, %v2420, %v2421
    %v2423 = vrot.slane %v2422, 3
    %v2428 = vadd.f32 %v2323, %v2411
    %v2429 = vadd.f32 %v2325, %v2415
    %v2430 = vadd.f32 %v2327, %v2419
    %v2431 = vadd.f32 %v2329, %v2423
    %v2432 = vxor.u32 %v2428, 2147483648
    %v2433 = vxor.u32 %v2429, 2147483648
    %v2434 = vxor.u32 %v2430, 2147483648
    %v2435 = vxor.u32 %v2431, 2147483648
    %v2436 = vmul.f32 %v2432, 1.442695
    %v2437 = vpow.pop %v2436
    %v2438 = vmul.f32 %v2433, 1.442695
    %v2439 = vpow.pop %v2438
    %v2440 = vmul.f32 %v2434, 1.442695
    %v2441 = vpow.pop %v2440
    %v2442 = vmul.f32 %v2435, 1.442695
    %v2443 = vpow.pop %v2442
    %v2444 = vadd.f32 %v2437, 1.0
    %v2445 = vadd.f32 %v2439, 1.0
    %v2446 = vadd.f32 %v2441, 1.0
    %v2447 = vadd.f32 %v2443, 1.0
    %v2448 = vrcp.pop %v2444
    %v2449 = vmul.f32 %v2444, %v2448
    %v2450 = vsub.f32 1.0, %v2449
    %v2451 = vmul.f32 %v2448, %v2450
    %v2452 = vadd.f32 %v2448, %v2451
    %vm2453 = vweird.f32 %v2444
    %vm2454 = vweird.f32 %v2448
    %vm2455 = vmor %vm2453, %vm2454
    %v2456 = vsel %vm2455, %v2448, %v2452
    %v2457 = vand.u32 2147483647, %v2444
    %vm2458 = vcmp.eq.f32.partialorder %v2457, 8.507059e+37
    %v2459 = vand.u32 %v2444, 2147483648
    %v2460 = vor.u32 1.1754944e-38, %v2459
    %v2461 = vsel %vm2458, %v2460, %v2456
    %v2462 = vmul.f32 1.0, %v2461
    %v2463 = vrcp.pop %v2445
    %v2464 = vmul.f32 %v2445, %v2463
    %v2465 = vsub.f32 1.0, %v2464
    %v2466 = vmul.f32 %v2463, %v2465
    %v2467 = vadd.f32 %v2463, %v2466
    %vm2468 = vweird.f32 %v2445
    %vm2469 = vweird.f32 %v2463
    %vm2470 = vmor %vm2468, %vm2469
    %v2471 = vsel %vm2470, %v2463, %v2467
    %v2472 = vand.u32 2147483647, %v2445
    %vm2473 = vcmp.eq.f32.partialorder %v2472, 8.507059e+37
    %v2474 = vand.u32 %v2445, 2147483648
    %v2475 = vor.u32 1.1754944e-38, %v2474
    %v2476 = vsel %vm2473, %v2475, %v2471
    %v2477 = vmul.f32 1.0, %v2476
    %v2478 = vrcp.pop %v2446
    %v2479 = vmul.f32 %v2446, %v2478
    %v2480 = vsub.f32 1.0, %v2479
    %v2481 = vmul.f32 %v2478, %v2480
    %v2482 = vadd.f32 %v2478, %v2481
    %vm2483 = vweird.f32 %v2446
    %vm2484 = vweird.f32 %v2478
    %vm2485 = vmor %vm2483, %vm2484
    %v2486 = vsel %vm2485, %v2478, %v2482
    %v2487 = vand.u32 2147483647, %v2446
    %vm2488 = vcmp.eq.f32.partialorder %v2487, 8.507059e+37
    %v2489 = vand.u32 %v2446, 2147483648
    %v2490 = vor.u32 1.1754944e-38, %v2489
    %v2491 = vsel %vm2488, %v2490, %v2486
    %v2492 = vmul.f32 1.0, %v2491
    %v2493 = vrcp.pop %v2447
    %v2494 = vmul.f32 %v2447, %v2493
    %v2495 = vsub.f32 1.0, %v2494
    %v2496 = vmul.f32 %v2493, %v2495
    %v2497 = vadd.f32 %v2493, %v2496
    %vm2498 = vweird.f32 %v2447
    %vm2499 = vweird.f32 %v2493
    %vm2500 = vmor %vm2498, %vm2499
    %v2501 = vsel %vm2500, %v2493, %v2497
    %v2502 = vand.u32 2147483647, %v2447
    %vm2503 = vcmp.eq.f32.partialorder %v2502, 8.507059e+37
    %v2504 = vand.u32 %v2447, 2147483648
    %v2505 = vor.u32 1.1754944e-38, %v2504
    %v2506 = vsel %vm2503, %v2505, %v2501
    %v2507 = vmul.f32 1.0, %v2506
    %v2512 = vrot.slane %v2428, 1
    %v2513 = vrot.slane %v2429, 1
    %v2514 = vrot.slane %v2430, 1
    %v2515 = vrot.slane %v2431, 1
    %v2520 = vxor.u32 %v2512, 2147483648
    %v2521 = vxor.u32 %v2513, 2147483648
    %v2522 = vxor.u32 %v2514, 2147483648
    %v2523 = vxor.u32 %v2515, 2147483648
    %v2524 = vmul.f32 %v2520, 1.442695
    %v2525 = vpow.pop %v2524
    %v2526 = vmul.f32 %v2521, 1.442695
    %v2527 = vpow.pop %v2526
    %v2528 = vmul.f32 %v2522, 1.442695
    %v2529 = vpow.pop %v2528
    %v2530 = vmul.f32 %v2523, 1.442695
    %v2531 = vpow.pop %v2530
    %v2532 = vadd.f32 %v2525, 1.0
    %v2533 = vadd.f32 %v2527, 1.0
    %v2534 = vadd.f32 %v2529, 1.0
    %v2535 = vadd.f32 %v2531, 1.0
    %v2536 = vrcp.pop %v2532
    %v2537 = vmul.f32 %v2532, %v2536
    %v2538 = vsub.f32 1.0, %v2537
    %v2539 = vmul.f32 %v2536, %v2538
    %v2540 = vadd.f32 %v2536, %v2539
    %vm2541 = vweird.f32 %v2532
    %vm2542 = vweird.f32 %v2536
    %vm2543 = vmor %vm2541, %vm2542
    %v2544 = vsel %vm2543, %v2536, %v2540
    %v2545 = vand.u32 2147483647, %v2532
    %vm2546 = vcmp.eq.f32.partialorder %v2545, 8.507059e+37
    %v2547 = vand.u32 %v2532, 2147483648
    %v2548 = vor.u32 1.1754944e-38, %v2547
    %v2549 = vsel %vm2546, %v2548, %v2544
    %v2550 = vmul.f32 1.0, %v2549
    %v2551 = vrcp.pop %v2533
    %v2552 = vmul.f32 %v2533, %v2551
    %v2553 = vsub.f32 1.0, %v2552
    %v2554 = vmul.f32 %v2551, %v2553
    %v2555 = vadd.f32 %v2551, %v2554
    %vm2556 = vweird.f32 %v2533
    %vm2557 = vweird.f32 %v2551
    %vm2558 = vmor %vm2556, %vm2557
    %v2559 = vsel %vm2558, %v2551, %v2555
    %v2560 = vand.u32 2147483647, %v2533
    %vm2561 = vcmp.eq.f32.partialorder %v2560, 8.507059e+37
    %v2562 = vand.u32 %v2533, 2147483648
    %v2563 = vor.u32 1.1754944e-38, %v2562
    %v2564 = vsel %vm2561, %v2563, %v2559
    %v2565 = vmul.f32 1.0, %v2564
    %v2566 = vrcp.pop %v2534
    %v2567 = vmul.f32 %v2534, %v2566
    %v2568 = vsub.f32 1.0, %v2567
    %v2569 = vmul.f32 %v2566, %v2568
    %v2570 = vadd.f32 %v2566, %v2569
    %vm2571 = vweird.f32 %v2534
    %vm2572 = vweird.f32 %v2566
    %vm2573 = vmor %vm2571, %vm2572
    %v2574 = vsel %vm2573, %v2566, %v2570
    %v2575 = vand.u32 2147483647, %v2534
    %vm2576 = vcmp.eq.f32.partialorder %v2575, 8.507059e+37
    %v2577 = vand.u32 %v2534, 2147483648
    %v2578 = vor.u32 1.1754944e-38, %v2577
    %v2579 = vsel %vm2576, %v2578, %v2574
    %v2580 = vmul.f32 1.0, %v2579
    %v2581 = vrcp.pop %v2535
    %v2582 = vmul.f32 %v2535, %v2581
    %v2583 = vsub.f32 1.0, %v2582
    %v2584 = vmul.f32 %v2581, %v2583
    %v2585 = vadd.f32 %v2581, %v2584
    %vm2586 = vweird.f32 %v2535
    %vm2587 = vweird.f32 %v2581
    %vm2588 = vmor %vm2586, %vm2587
    %v2589 = vsel %vm2588, %v2581, %v2585
    %v2590 = vand.u32 2147483647, %v2535
    %vm2591 = vcmp.eq.f32.partialorder %v2590, 8.507059e+37
    %v2592 = vand.u32 %v2535, 2147483648
    %v2593 = vor.u32 1.1754944e-38, %v2592
    %v2594 = vsel %vm2591, %v2593, %v2589
    %v2595 = vmul.f32 1.0, %v2594
    %v2596 = vrot.slane %v2428, 2
    %v2597 = vrot.slane %v2429, 2
    %v2598 = vrot.slane %v2430, 2
    %v2599 = vrot.slane %v2431, 2
    %v2604 = vtanh.pop %v2596
    %v2605 = vtanh.pop %v2597
    %v2606 = vtanh.pop %v2598
    %v2607 = vtanh.pop %v2599
    %v2608 = vrot.slane %v2428, 3
    %v2609 = vrot.slane %v2429, 3
    %v2610 = vrot.slane %v2430, 3
    %v2611 = vrot.slane %v2431, 3
    %v2616 = vxor.u32 %v2608, 2147483648
    %v2617 = vxor.u32 %v2609, 2147483648
    %v2618 = vxor.u32 %v2610, 2147483648
    %v2619 = vxor.u32 %v2611, 2147483648
    %v2620 = vmul.f32 %v2616, 1.442695
    %v2621 = vpow.pop %v2620
    %v2622 = vmul.f32 %v2617, 1.442695
    %v2623 = vpow.pop %v2622
    %v2624 = vmul.f32 %v2618, 1.442695
    %v2625 = vpow.pop %v2624
    %v2626 = vmul.f32 %v2619, 1.442695
    %v2627 = vpow.pop %v2626
    %v2628 = vadd.f32 %v2621, 1.0
    %v2629 = vadd.f32 %v2623, 1.0
    %v2630 = vadd.f32 %v2625, 1.0
    %v2631 = vadd.f32 %v2627, 1.0
    %v2632 = vrcp.pop %v2628
    %v2633 = vmul.f32 %v2628, %v2632
    %v2634 = vsub.f32 1.0, %v2633
    %v2635 = vmul.f32 %v2632, %v2634
    %v2636 = vadd.f32 %v2632, %v2635
    %vm2637 = vweird.f32 %v2628
    %vm2638 = vweird.f32 %v2632
    %vm2639 = vmor %vm2637, %vm2638
    %v2640 = vsel %vm2639, %v2632, %v2636
    %v2641 = vand.u32 2147483647, %v2628
    %vm2642 = vcmp.eq.f32.partialorder %v2641, 8.507059e+37
    %v2643 = vand.u32 %v2628, 2147483648
    %v2644 = vor.u32 1.1754944e-38, %v2643
    %v2645 = vsel %vm2642, %v2644, %v2640
    %v2646 = vmul.f32 1.0, %v2645
    %v2647 = vrcp.pop %v2629
    %v2648 = vmul.f32 %v2629, %v2647
    %v2649 = vsub.f32 1.0, %v2648
    %v2650 = vmul.f32 %v2647, %v2649
    %v2651 = vadd.f32 %v2647, %v2650
    %vm2652 = vweird.f32 %v2629
    %vm2653 = vweird.f32 %v2647
    %vm2654 = vmor %vm2652, %vm2653
    %v2655 = vsel %vm2654, %v2647, %v2651
    %v2656 = vand.u32 2147483647, %v2629
    %vm2657 = vcmp.eq.f32.partialorder %v2656, 8.507059e+37
    %v2658 = vand.u32 %v2629, 2147483648
    %v2659 = vor.u32 1.1754944e-38, %v2658
    %v2660 = vsel %vm2657, %v2659, %v2655
    %v2661 = vmul.f32 1.0, %v2660
    %v2662 = vrcp.pop %v2630
    %v2663 = vmul.f32 %v2630, %v2662
    %v2664 = vsub.f32 1.0, %v2663
    %v2665 = vmul.f32 %v2662, %v2664
    %v2666 = vadd.f32 %v2662, %v2665
    %vm2667 = vweird.f32 %v2630
    %vm2668 = vweird.f32 %v2662
    %vm2669 = vmor %vm2667, %vm2668
    %v2670 = vsel %vm2669, %v2662, %v2666
    %v2671 = vand.u32 2147483647, %v2630
    %vm2672 = vcmp.eq.f32.partialorder %v2671, 8.507059e+37
    %v2673 = vand.u32 %v2630, 2147483648
    %v2674 = vor.u32 1.1754944e-38, %v2673
    %v2675 = vsel %vm2672, %v2674, %v2670
    %v2676 = vmul.f32 1.0, %v2675
    %v2677 = vrcp.pop %v2631
    %v2678 = vmul.f32 %v2631, %v2677
    %v2679 = vsub.f32 1.0, %v2678
    %v2680 = vmul.f32 %v2677, %v2679
    %v2681 = vadd.f32 %v2677, %v2680
    %vm2682 = vweird.f32 %v2631
    %vm2683 = vweird.f32 %v2677
    %vm2684 = vmor %vm2682, %vm2683
    %v2685 = vsel %vm2684, %v2677, %v2681
    %v2686 = vand.u32 2147483647, %v2631
    %vm2687 = vcmp.eq.f32.partialorder %v2686, 8.507059e+37
    %v2688 = vand.u32 %v2631, 2147483648
    %v2689 = vor.u32 1.1754944e-38, %v2688
    %v2690 = vsel %vm2687, %v2689, %v2685
    %v2691 = vmul.f32 1.0, %v2690
    %v2692 = vmul.f32 %v2550, %v2244
    %v2693 = vmul.f32 %v2565, %v2245
    %v2694 = vmul.f32 %v2580, %v2246
    %v2695 = vmul.f32 %v2595, %v2247
    %v2696 = vmul.f32 %v2462, %v2604
    %v2697 = vmul.f32 %v2477, %v2605
    %v2698 = vmul.f32 %v2492, %v2606
    %v2699 = vmul.f32 %v2507, %v2607
    %v2700 = vadd.f32 %v2692, %v2696
    %v2701 = vadd.f32 %v2693, %v2697
    %v2702 = vadd.f32 %v2694, %v2698
    %v2703 = vadd.f32 %v2695, %v2699
    %v2704 = vtanh.pop %v2700
    %v2705 = vtanh.pop %v2701
    %v2706 = vtanh.pop %v2702
    %v2707 = vtanh.pop %v2703
    %v2708 = vmul.f32 %v2646, %v2704
    %v2709 = vmul.f32 %v2661, %v2705
    %v2710 = vmul.f32 %v2676, %v2706
    %v2711 = vmul.f32 %v2691, %v2707
    %v2712 = vld [vmem:[%s4 + $0x4] sm:$0x1]
    %v2713 = vld [vmem:[%s4 + $0xc] sm:$0x1]
    %v2714 = vld [vmem:[%s4 + $0x14] sm:$0x1]
    %v2715 = vld [vmem:[%s4 + $0x1c] sm:$0x1]
    %2717 = vset.pattern.permute.xlu0 0
    %2718 = vperm.xlu0 %2717, %v2712
    %v2719 = vpop.permute.xlu0 %2718
    %2722 = vset.pattern.permute.xlu0 0
    %2723 = vperm.xlu0 %2722, %v2713
    %v2724 = vpop.permute.xlu0 %2723
    %2727 = vset.pattern.permute.xlu0 0
    %2728 = vperm.xlu0 %2727, %v2714
    %v2729 = vpop.permute.xlu0 %2728
    %2732 = vset.pattern.permute.xlu0 0
    %2733 = vperm.xlu0 %2732, %v2715
    %v2734 = vpop.permute.xlu0 %2733
    %v2736 = vmul.f32 %v2708, %v2719
    %v2737 = vmul.f32 %v2709, %v2724
    %v2738 = vmul.f32 %v2710, %v2729
    %v2739 = vmul.f32 %v2711, %v2734
    %v2740 = vpack.c.bf16 %v2736, %v2736
    %v2741 = vpack.c.bf16 %v2737, %v2737
    %v2742 = vpack.c.bf16 %v2738, %v2738
    %v2743 = vpack.c.bf16 %v2739, %v2739
    %v2748 = vrot.slane %v2740, 6
    %v2749 = vrot.slane %v2741, 6
    %v2750 = vrot.slane %v2742, 6
    %v2751 = vrot.slane %v2743, 6
    %vm2756 = vcmask 1042434
    %vm2757 = vsmask.f32 2304
    %vm2758 = vmand %vm2756, %vm2757
    %v2759 = vld [vmem:[%s5] sm:$0x4]
    %v2760 = vsel %vm2758, %v2748, %v2759
    %2761 = vst [vmem:[%s5] sm:$0x4] %v2760
    %v2762 = vld [vmem:[%s5 + $0x4] sm:$0x4]
    %v2763 = vsel %vm2758, %v2749, %v2762
    %2764 = vst [vmem:[%s5 + $0x4] sm:$0x4] %v2763
    %v2765 = vld [vmem:[%s5 + $0x8] sm:$0x4]
    %v2766 = vsel %vm2758, %v2750, %v2765
    %2767 = vst [vmem:[%s5 + $0x8] sm:$0x4] %v2766
    %v2768 = vld [vmem:[%s5 + $0xc] sm:$0x4]
    %v2769 = vsel %vm2758, %v2751, %v2768
    %2770 = vst [vmem:[%s5 + $0xc] sm:$0x4] %v2769
    %s2771 = scalar_lea.vmem [#allocation2], 5
    %v2772 = vld [vmem:[%s2771] ss:$8 sm:$0xf]
    %s2773 = scalar_lea.vmem [#allocation2], 37
    %v2774 = vld [vmem:[%s2773] ss:$8 sm:$0xf]
    %s2775 = scalar_lea.vmem [#allocation2], 69
    %v2776 = vld [vmem:[%s2775] ss:$8 sm:$0xf]
    %s2777 = scalar_lea.vmem [#allocation2], 101
    %v2778 = vld [vmem:[%s2777] ss:$8 sm:$0xf]
    %v2779 = vpack.c.bf16 %v2708, %v2708
    %v2780 = vpack.c.bf16 %v2709, %v2709
    %v2781 = vpack.c.bf16 %v2710, %v2710
    %v2782 = vpack.c.bf16 %v2711, %v2711
    %v2787 = vunpack.c.l.b16 %v2779
    %v2788 = vunpack.c.l.b16 %v2780
    %v2789 = vunpack.c.l.b16 %v2781
    %v2790 = vunpack.c.l.b16 %v2782
    %v2791 = vrot.slane %v2788, 7
    %v2792 = vsel %vm611, %v2791, %v2787
    %v2793 = vrot.slane %v2789, 6
    %v2794 = vsel %vm607, %v2793, %v2792
    %v2795 = vrot.slane %v2790, 5
    %v2796 = vsel %vm613, %v2795, %v2794
    %v2797 = vpack.c.b16 %v2796, %v2796
    %2799 = vmatpush.bf16.msra.mxu0 %v510
    %2800 = vmatpush.bf16.msra.mxu0 %v506
    %2801 = vmatpush.bf16.msra.mxu0 %v502
    %2802 = vmatpush.bf16.msra.mxu0 %v498
    %2803 = vmatpush.bf16.msra.mxu0 %v494
    %2804 = vmatpush.bf16.msra.mxu0 %v490
    %2805 = vmatpush.bf16.msra.mxu0 %v486
    %2806 = vmatpush.bf16.msra.mxu0 %v482
    %2807 = vmatmul.bf16.gmra.mxu0 %v2797
    %v2808 = vpop.f32.mrf.mxu0
    %v2809 = vadd.f32 0.0, %v2808
    %v2810 = vpop.f32.mrf.mxu0
    %2811 = vdwg.mxu0
    %2812 = vmatpush.bf16.msra.mxu0 %v511
    %2813 = vmatpush.bf16.msra.mxu0 %v507
    %2814 = vmatpush.bf16.msra.mxu0 %v503
    %2815 = vmatpush.bf16.msra.mxu0 %v499
    %2816 = vmatpush.bf16.msra.mxu0 %v495
    %2817 = vmatpush.bf16.msra.mxu0 %v491
    %2818 = vmatpush.bf16.msra.mxu0 %v487
    %2819 = vmatpush.bf16.msra.mxu0 %v483
    %2820 = vmatmul.bf16.gmra.mxu0 %v2797
    %v2821 = vpop.f32.mrf.mxu0
    %v2822 = vadd.f32 0.0, %v2821
    %v2823 = vpop.f32.mrf.mxu0
    %2824 = vdwg.mxu0
    %2825 = vmatpush.bf16.msra.mxu0 %v512
    %2826 = vmatpush.bf16.msra.mxu0 %v508
    %2827 = vmatpush.bf16.msra.mxu0 %v504
    %2828 = vmatpush.bf16.msra.mxu0 %v500
    %2829 = vmatpush.bf16.msra.mxu0 %v496
    %2830 = vmatpush.bf16.msra.mxu0 %v492
    %2831 = vmatpush.bf16.msra.mxu0 %v488
    %2832 = vmatpush.bf16.msra.mxu0 %v484
    %2833 = vmatmul.bf16.gmra.mxu0 %v2797
    %v2834 = vpop.f32.mrf.mxu0
    %v2835 = vadd.f32 0.0, %v2834
    %v2836 = vpop.f32.mrf.mxu0
    %2837 = vdwg.mxu0
    %2838 = vmatpush.bf16.msra.mxu0 %v513
    %2839 = vmatpush.bf16.msra.mxu0 %v509
    %2840 = vmatpush.bf16.msra.mxu0 %v505
    %2841 = vmatpush.bf16.msra.mxu0 %v501
    %2842 = vmatpush.bf16.msra.mxu0 %v497
    %2843 = vmatpush.bf16.msra.mxu0 %v493
    %2844 = vmatpush.bf16.msra.mxu0 %v489
    %2845 = vmatpush.bf16.msra.mxu0 %v485
    %2846 = vmatmul.bf16.gmra.mxu0 %v2797
    %v2847 = vpop.f32.mrf.mxu0
    %v2848 = vadd.f32 0.0, %v2847
    %v2849 = vpop.f32.mrf.mxu0
    %2850 = vdwg.mxu0
    %v2855 = vrot.slane %v2822, 7
    %v2856 = vrot.slane %v2835, 6
    %v2857 = vrot.slane %v2848, 5
    %v2858 = vsel %vm605, %v2809, %v2855
    %v2859 = vsel %vm607, %v2856, %v2857
    %v2860 = vsel %vm609, %v2858, %v2859
    %v2861 = vsel %vm611, %v2809, %v2855
    %v2862 = vsel %vm613, %v2856, %v2857
    %v2863 = vsel %vm615, %v2861, %v2862
    %v2864 = vrot.slane %v2863, 1
    %v2865 = vsel %vm607, %v2809, %v2855
    %v2866 = vsel %vm619, %v2856, %v2857
    %v2867 = vsel %vm621, %v2865, %v2866
    %v2868 = vrot.slane %v2867, 2
    %v2869 = vsel %vm613, %v2809, %v2855
    %v2870 = vsel %vm625, %v2856, %v2857
    %v2871 = vsel %vm627, %v2869, %v2870
    %v2872 = vrot.slane %v2871, 3
    %v2877 = vadd.f32 %v2772, %v2860
    %v2878 = vadd.f32 %v2774, %v2864
    %v2879 = vadd.f32 %v2776, %v2868
    %v2880 = vadd.f32 %v2778, %v2872
    %v2881 = vxor.u32 %v2877, 2147483648
    %v2882 = vxor.u32 %v2878, 2147483648
    %v2883 = vxor.u32 %v2879, 2147483648
    %v2884 = vxor.u32 %v2880, 2147483648
    %v2885 = vmul.f32 %v2881, 1.442695
    %v2886 = vpow.pop %v2885
    %v2887 = vmul.f32 %v2882, 1.442695
    %v2888 = vpow.pop %v2887
    %v2889 = vmul.f32 %v2883, 1.442695
    %v2890 = vpow.pop %v2889
    %v2891 = vmul.f32 %v2884, 1.442695
    %v2892 = vpow.pop %v2891
    %v2893 = vadd.f32 %v2886, 1.0
    %v2894 = vadd.f32 %v2888, 1.0
    %v2895 = vadd.f32 %v2890, 1.0
    %v2896 = vadd.f32 %v2892, 1.0
    %v2897 = vrcp.pop %v2893
    %v2898 = vmul.f32 %v2893, %v2897
    %v2899 = vsub.f32 1.0, %v2898
    %v2900 = vmul.f32 %v2897, %v2899
    %v2901 = vadd.f32 %v2897, %v2900
    %vm2902 = vweird.f32 %v2893
    %vm2903 = vweird.f32 %v2897
    %vm2904 = vmor %vm2902, %vm2903
    %v2905 = vsel %vm2904, %v2897, %v2901
    %v2906 = vand.u32 2147483647, %v2893
    %vm2907 = vcmp.eq.f32.partialorder %v2906, 8.507059e+37
    %v2908 = vand.u32 %v2893, 2147483648
    %v2909 = vor.u32 1.1754944e-38, %v2908
    %v2910 = vsel %vm2907, %v2909, %v2905
    %v2911 = vmul.f32 1.0, %v2910
    %v2912 = vrcp.pop %v2894
    %v2913 = vmul.f32 %v2894, %v2912
    %v2914 = vsub.f32 1.0, %v2913
    %v2915 = vmul.f32 %v2912, %v2914
    %v2916 = vadd.f32 %v2912, %v2915
    %vm2917 = vweird.f32 %v2894
    %vm2918 = vweird.f32 %v2912
    %vm2919 = vmor %vm2917, %vm2918
    %v2920 = vsel %vm2919, %v2912, %v2916
    %v2921 = vand.u32 2147483647, %v2894
    %vm2922 = vcmp.eq.f32.partialorder %v2921, 8.507059e+37
    %v2923 = vand.u32 %v2894, 2147483648
    %v2924 = vor.u32 1.1754944e-38, %v2923
    %v2925 = vsel %vm2922, %v2924, %v2920
    %v2926 = vmul.f32 1.0, %v2925
    %v2927 = vrcp.pop %v2895
    %v2928 = vmul.f32 %v2895, %v2927
    %v2929 = vsub.f32 1.0, %v2928
    %v2930 = vmul.f32 %v2927, %v2929
    %v2931 = vadd.f32 %v2927, %v2930
    %vm2932 = vweird.f32 %v2895
    %vm2933 = vweird.f32 %v2927
    %vm2934 = vmor %vm2932, %vm2933
    %v2935 = vsel %vm2934, %v2927, %v2931
    %v2936 = vand.u32 2147483647, %v2895
    %vm2937 = vcmp.eq.f32.partialorder %v2936, 8.507059e+37
    %v2938 = vand.u32 %v2895, 2147483648
    %v2939 = vor.u32 1.1754944e-38, %v2938
    %v2940 = vsel %vm2937, %v2939, %v2935
    %v2941 = vmul.f32 1.0, %v2940
    %v2942 = vrcp.pop %v2896
    %v2943 = vmul.f32 %v2896, %v2942
    %v2944 = vsub.f32 1.0, %v2943
    %v2945 = vmul.f32 %v2942, %v2944
    %v2946 = vadd.f32 %v2942, %v2945
    %vm2947 = vweird.f32 %v2896
    %vm2948 = vweird.f32 %v2942
    %vm2949 = vmor %vm2947, %vm2948
    %v2950 = vsel %vm2949, %v2942, %v2946
    %v2951 = vand.u32 2147483647, %v2896
    %vm2952 = vcmp.eq.f32.partialorder %v2951, 8.507059e+37
    %v2953 = vand.u32 %v2896, 2147483648
    %v2954 = vor.u32 1.1754944e-38, %v2953
    %v2955 = vsel %vm2952, %v2954, %v2950
    %v2956 = vmul.f32 1.0, %v2955
    %v2961 = vrot.slane %v2877, 1
    %v2962 = vrot.slane %v2878, 1
    %v2963 = vrot.slane %v2879, 1
    %v2964 = vrot.slane %v2880, 1
    %v2969 = vxor.u32 %v2961, 2147483648
    %v2970 = vxor.u32 %v2962, 2147483648
    %v2971 = vxor.u32 %v2963, 2147483648
    %v2972 = vxor.u32 %v2964, 2147483648
    %v2973 = vmul.f32 %v2969, 1.442695
    %v2974 = vpow.pop %v2973
    %v2975 = vmul.f32 %v2970, 1.442695
    %v2976 = vpow.pop %v2975
    %v2977 = vmul.f32 %v2971, 1.442695
    %v2978 = vpow.pop %v2977
    %v2979 = vmul.f32 %v2972, 1.442695
    %v2980 = vpow.pop %v2979
    %v2981 = vadd.f32 %v2974, 1.0
    %v2982 = vadd.f32 %v2976, 1.0
    %v2983 = vadd.f32 %v2978, 1.0
    %v2984 = vadd.f32 %v2980, 1.0
    %v2985 = vrcp.pop %v2981
    %v2986 = vmul.f32 %v2981, %v2985
    %v2987 = vsub.f32 1.0, %v2986
    %v2988 = vmul.f32 %v2985, %v2987
    %v2989 = vadd.f32 %v2985, %v2988
    %vm2990 = vweird.f32 %v2981
    %vm2991 = vweird.f32 %v2985
    %vm2992 = vmor %vm2990, %vm2991
    %v2993 = vsel %vm2992, %v2985, %v2989
    %v2994 = vand.u32 2147483647, %v2981
    %vm2995 = vcmp.eq.f32.partialorder %v2994, 8.507059e+37
    %v2996 = vand.u32 %v2981, 2147483648
    %v2997 = vor.u32 1.1754944e-38, %v2996
    %v2998 = vsel %vm2995, %v2997, %v2993
    %v2999 = vmul.f32 1.0, %v2998
    %v3000 = vrcp.pop %v2982
    %v3001 = vmul.f32 %v2982, %v3000
    %v3002 = vsub.f32 1.0, %v3001
    %v3003 = vmul.f32 %v3000, %v3002
    %v3004 = vadd.f32 %v3000, %v3003
    %vm3005 = vweird.f32 %v2982
    %vm3006 = vweird.f32 %v3000
    %vm3007 = vmor %vm3005, %vm3006
    %v3008 = vsel %vm3007, %v3000, %v3004
    %v3009 = vand.u32 2147483647, %v2982
    %vm3010 = vcmp.eq.f32.partialorder %v3009, 8.507059e+37
    %v3011 = vand.u32 %v2982, 2147483648
    %v3012 = vor.u32 1.1754944e-38, %v3011
    %v3013 = vsel %vm3010, %v3012, %v3008
    %v3014 = vmul.f32 1.0, %v3013
    %v3015 = vrcp.pop %v2983
    %v3016 = vmul.f32 %v2983, %v3015
    %v3017 = vsub.f32 1.0, %v3016
    %v3018 = vmul.f32 %v3015, %v3017
    %v3019 = vadd.f32 %v3015, %v3018
    %vm3020 = vweird.f32 %v2983
    %vm3021 = vweird.f32 %v3015
    %vm3022 = vmor %vm3020, %vm3021
    %v3023 = vsel %vm3022, %v3015, %v3019
    %v3024 = vand.u32 2147483647, %v2983
    %vm3025 = vcmp.eq.f32.partialorder %v3024, 8.507059e+37
    %v3026 = vand.u32 %v2983, 2147483648
    %v3027 = vor.u32 1.1754944e-38, %v3026
    %v3028 = vsel %vm3025, %v3027, %v3023
    %v3029 = vmul.f32 1.0, %v3028
    %v3030 = vrcp.pop %v2984
    %v3031 = vmul.f32 %v2984, %v3030
    %v3032 = vsub.f32 1.0, %v3031
    %v3033 = vmul.f32 %v3030, %v3032
    %v3034 = vadd.f32 %v3030, %v3033
    %vm3035 = vweird.f32 %v2984
    %vm3036 = vweird.f32 %v3030
    %vm3037 = vmor %vm3035, %vm3036
    %v3038 = vsel %vm3037, %v3030, %v3034
    %v3039 = vand.u32 2147483647, %v2984
    %vm3040 = vcmp.eq.f32.partialorder %v3039, 8.507059e+37
    %v3041 = vand.u32 %v2984, 2147483648
    %v3042 = vor.u32 1.1754944e-38, %v3041
    %v3043 = vsel %vm3040, %v3042, %v3038
    %v3044 = vmul.f32 1.0, %v3043
    %v3045 = vrot.slane %v2877, 2
    %v3046 = vrot.slane %v2878, 2
    %v3047 = vrot.slane %v2879, 2
    %v3048 = vrot.slane %v2880, 2
    %v3053 = vtanh.pop %v3045
    %v3054 = vtanh.pop %v3046
    %v3055 = vtanh.pop %v3047
    %v3056 = vtanh.pop %v3048
    %v3057 = vrot.slane %v2877, 3
    %v3058 = vrot.slane %v2878, 3
    %v3059 = vrot.slane %v2879, 3
    %v3060 = vrot.slane %v2880, 3
    %v3065 = vxor.u32 %v3057, 2147483648
    %v3066 = vxor.u32 %v3058, 2147483648
    %v3067 = vxor.u32 %v3059, 2147483648
    %v3068 = vxor.u32 %v3060, 2147483648
    %v3069 = vmul.f32 %v3065, 1.442695
    %v3070 = vpow.pop %v3069
    %v3071 = vmul.f32 %v3066, 1.442695
    %v3072 = vpow.pop %v3071
    %v3073 = vmul.f32 %v3067, 1.442695
    %v3074 = vpow.pop %v3073
    %v3075 = vmul.f32 %v3068, 1.442695
    %v3076 = vpow.pop %v3075
    %v3077 = vadd.f32 %v3070, 1.0
    %v3078 = vadd.f32 %v3072, 1.0
    %v3079 = vadd.f32 %v3074, 1.0
    %v3080 = vadd.f32 %v3076, 1.0
    %v3081 = vrcp.pop %v3077
    %v3082 = vmul.f32 %v3077, %v3081
    %v3083 = vsub.f32 1.0, %v3082
    %v3084 = vmul.f32 %v3081, %v3083
    %v3085 = vadd.f32 %v3081, %v3084
    %vm3086 = vweird.f32 %v3077
    %vm3087 = vweird.f32 %v3081
    %vm3088 = vmor %vm3086, %vm3087
    %v3089 = vsel %vm3088, %v3081, %v3085
    %v3090 = vand.u32 2147483647, %v3077
    %vm3091 = vcmp.eq.f32.partialorder %v3090, 8.507059e+37
    %v3092 = vand.u32 %v3077, 2147483648
    %v3093 = vor.u32 1.1754944e-38, %v3092
    %v3094 = vsel %vm3091, %v3093, %v3089
    %v3095 = vmul.f32 1.0, %v3094
    %v3096 = vrcp.pop %v3078
    %v3097 = vmul.f32 %v3078, %v3096
    %v3098 = vsub.f32 1.0, %v3097
    %v3099 = vmul.f32 %v3096, %v3098
    %v3100 = vadd.f32 %v3096, %v3099
    %vm3101 = vweird.f32 %v3078
    %vm3102 = vweird.f32 %v3096
    %vm3103 = vmor %vm3101, %vm3102
    %v3104 = vsel %vm3103, %v3096, %v3100
    %v3105 = vand.u32 2147483647, %v3078
    %vm3106 = vcmp.eq.f32.partialorder %v3105, 8.507059e+37
    %v3107 = vand.u32 %v3078, 2147483648
    %v3108 = vor.u32 1.1754944e-38, %v3107
    %v3109 = vsel %vm3106, %v3108, %v3104
    %v3110 = vmul.f32 1.0, %v3109
    %v3111 = vrcp.pop %v3079
    %v3112 = vmul.f32 %v3079, %v3111
    %v3113 = vsub.f32 1.0, %v3112
    %v3114 = vmul.f32 %v3111, %v3113
    %v3115 = vadd.f32 %v3111, %v3114
    %vm3116 = vweird.f32 %v3079
    %vm3117 = vweird.f32 %v3111
    %vm3118 = vmor %vm3116, %vm3117
    %v3119 = vsel %vm3118, %v3111, %v3115
    %v3120 = vand.u32 2147483647, %v3079
    %vm3121 = vcmp.eq.f32.partialorder %v3120, 8.507059e+37
    %v3122 = vand.u32 %v3079, 2147483648
    %v3123 = vor.u32 1.1754944e-38, %v3122
    %v3124 = vsel %vm3121, %v3123, %v3119
    %v3125 = vmul.f32 1.0, %v3124
    %v3126 = vrcp.pop %v3080
    %v3127 = vmul.f32 %v3080, %v3126
    %v3128 = vsub.f32 1.0, %v3127
    %v3129 = vmul.f32 %v3126, %v3128
    %v3130 = vadd.f32 %v3126, %v3129
    %vm3131 = vweird.f32 %v3080
    %vm3132 = vweird.f32 %v3126
    %vm3133 = vmor %vm3131, %vm3132
    %v3134 = vsel %vm3133, %v3126, %v3130
    %v3135 = vand.u32 2147483647, %v3080
    %vm3136 = vcmp.eq.f32.partialorder %v3135, 8.507059e+37
    %v3137 = vand.u32 %v3080, 2147483648
    %v3138 = vor.u32 1.1754944e-38, %v3137
    %v3139 = vsel %vm3136, %v3138, %v3134
    %v3140 = vmul.f32 1.0, %v3139
    %v3141 = vmul.f32 %v2999, %v2700
    %v3142 = vmul.f32 %v3014, %v2701
    %v3143 = vmul.f32 %v3029, %v2702
    %v3144 = vmul.f32 %v3044, %v2703
    %v3145 = vmul.f32 %v2911, %v3053
    %v3146 = vmul.f32 %v2926, %v3054
    %v3147 = vmul.f32 %v2941, %v3055
    %v3148 = vmul.f32 %v2956, %v3056
    %v3149 = vadd.f32 %v3141, %v3145
    %v3150 = vadd.f32 %v3142, %v3146
    %v3151 = vadd.f32 %v3143, %v3147
    %v3152 = vadd.f32 %v3144, %v3148
    %v3153 = vtanh.pop %v3149
    %v3154 = vtanh.pop %v3150
    %v3155 = vtanh.pop %v3151
    %v3156 = vtanh.pop %v3152
    %v3157 = vmul.f32 %v3095, %v3153
    %v3158 = vmul.f32 %v3110, %v3154
    %v3159 = vmul.f32 %v3125, %v3155
    %v3160 = vmul.f32 %v3140, %v3156
    %v3161 = vld [vmem:[%s4 + $0x5] sm:$0x1]
    %v3162 = vld [vmem:[%s4 + $0xd] sm:$0x1]
    %v3163 = vld [vmem:[%s4 + $0x15] sm:$0x1]
    %v3164 = vld [vmem:[%s4 + $0x1d] sm:$0x1]
    %3166 = vset.pattern.permute.xlu0 0
    %3167 = vperm.xlu0 %3166, %v3161
    %v3168 = vpop.permute.xlu0 %3167
    %3171 = vset.pattern.permute.xlu0 0
    %3172 = vperm.xlu0 %3171, %v3162
    %v3173 = vpop.permute.xlu0 %3172
    %3176 = vset.pattern.permute.xlu0 0
    %3177 = vperm.xlu0 %3176, %v3163
    %v3178 = vpop.permute.xlu0 %3177
    %3181 = vset.pattern.permute.xlu0 0
    %3182 = vperm.xlu0 %3181, %v3164
    %v3183 = vpop.permute.xlu0 %3182
    %v3185 = vmul.f32 %v3157, %v3168
    %v3186 = vmul.f32 %v3158, %v3173
    %v3187 = vmul.f32 %v3159, %v3178
    %v3188 = vmul.f32 %v3160, %v3183
    %v3189 = vpack.c.bf16 %v3185, %v3185
    %v3190 = vpack.c.bf16 %v3186, %v3186
    %v3191 = vpack.c.bf16 %v3187, %v3187
    %v3192 = vpack.c.bf16 %v3188, %v3188
    %v3194 = vshll.u32 %v3189, 16
    %v3196 = vrot.slane %v3194, 6
    %v3198 = vshll.u32 %v3190, 16
    %v3200 = vrot.slane %v3198, 6
    %v3202 = vshll.u32 %v3191, 16
    %v3204 = vrot.slane %v3202, 6
    %v3206 = vshll.u32 %v3192, 16
    %v3208 = vrot.slane %v3206, 6
    %vm3213 = vsmask.f32 7946
    %vm3214 = vmand %vm2756, %vm3213
    %v3215 = vld [vmem:[%s5] sm:$0x4]
    %v3216 = vsel %vm3214, %v3196, %v3215
    %3217 = vst [vmem:[%s5] sm:$0x4] %v3216
    %v3218 = vld [vmem:[%s5 + $0x4] sm:$0x4]
    %v3219 = vsel %vm3214, %v3200, %v3218
    %3220 = vst [vmem:[%s5 + $0x4] sm:$0x4] %v3219
    %v3221 = vld [vmem:[%s5 + $0x8] sm:$0x4]
    %v3222 = vsel %vm3214, %v3204, %v3221
    %3223 = vst [vmem:[%s5 + $0x8] sm:$0x4] %v3222
    %v3224 = vld [vmem:[%s5 + $0xc] sm:$0x4]
    %v3225 = vsel %vm3214, %v3208, %v3224
    %3226 = vst [vmem:[%s5 + $0xc] sm:$0x4] %v3225
    %s3227 = scalar_lea.vmem [#allocation2], 6
    %v3228 = vld [vmem:[%s3227] ss:$8 sm:$0xf]
    %s3229 = scalar_lea.vmem [#allocation2], 38
    %v3230 = vld [vmem:[%s3229] ss:$8 sm:$0xf]
    %s3231 = scalar_lea.vmem [#allocation2], 70
    %v3232 = vld [vmem:[%s3231] ss:$8 sm:$0xf]
    %s3233 = scalar_lea.vmem [#allocation2], 102
    %v3234 = vld [vmem:[%s3233] ss:$8 sm:$0xf]
    %v3235 = vpack.c.bf16 %v3157, %v3157
    %v3236 = vpack.c.bf16 %v3158, %v3158
    %v3237 = vpack.c.bf16 %v3159, %v3159
    %v3238 = vpack.c.bf16 %v3160, %v3160
    %v3243 = vunpack.c.l.b16 %v3235
    %v3244 = vunpack.c.l.b16 %v3236
    %v3245 = vunpack.c.l.b16 %v3237
    %v3246 = vunpack.c.l.b16 %v3238
    %v3247 = vrot.slane %v3244, 7
    %v3248 = vsel %vm611, %v3247, %v3243
    %v3249 = vrot.slane %v3245, 6
    %v3250 = vsel %vm607, %v3249, %v3248
    %v3251 = vrot.slane %v3246, 5
    %v3252 = vsel %vm613, %v3251, %v3250
    %v3253 = vpack.c.b16 %v3252, %v3252
    %3255 = vmatpush.bf16.msra.mxu0 %v510
    %3256 = vmatpush.bf16.msra.mxu0 %v506
    %3257 = vmatpush.bf16.msra.mxu0 %v502
    %3258 = vmatpush.bf16.msra.mxu0 %v498
    %3259 = vmatpush.bf16.msra.mxu0 %v494
    %3260 = vmatpush.bf16.msra.mxu0 %v490
    %3261 = vmatpush.bf16.msra.mxu0 %v486
    %3262 = vmatpush.bf16.msra.mxu0 %v482
    %3263 = vmatmul.bf16.gmra.mxu0 %v3253
    %v3264 = vpop.f32.mrf.mxu0
    %v3265 = vadd.f32 0.0, %v3264
    %v3266 = vpop.f32.mrf.mxu0
    %3267 = vdwg.mxu0
    %3268 = vmatpush.bf16.msra.mxu0 %v511
    %3269 = vmatpush.bf16.msra.mxu0 %v507
    %3270 = vmatpush.bf16.msra.mxu0 %v503
    %3271 = vmatpush.bf16.msra.mxu0 %v499
    %3272 = vmatpush.bf16.msra.mxu0 %v495
    %3273 = vmatpush.bf16.msra.mxu0 %v491
    %3274 = vmatpush.bf16.msra.mxu0 %v487
    %3275 = vmatpush.bf16.msra.mxu0 %v483
    %3276 = vmatmul.bf16.gmra.mxu0 %v3253
    %v3277 = vpop.f32.mrf.mxu0
    %v3278 = vadd.f32 0.0, %v3277
    %v3279 = vpop.f32.mrf.mxu0
    %3280 = vdwg.mxu0
    %3281 = vmatpush.bf16.msra.mxu0 %v512
    %3282 = vmatpush.bf16.msra.mxu0 %v508
    %3283 = vmatpush.bf16.msra.mxu0 %v504
    %3284 = vmatpush.bf16.msra.mxu0 %v500
    %3285 = vmatpush.bf16.msra.mxu0 %v496
    %3286 = vmatpush.bf16.msra.mxu0 %v492
    %3287 = vmatpush.bf16.msra.mxu0 %v488
    %3288 = vmatpush.bf16.msra.mxu0 %v484
    %3289 = vmatmul.bf16.gmra.mxu0 %v3253
    %v3290 = vpop.f32.mrf.mxu0
    %v3291 = vadd.f32 0.0, %v3290
    %v3292 = vpop.f32.mrf.mxu0
    %3293 = vdwg.mxu0
    %3294 = vmatpush.bf16.msra.mxu0 %v513
    %3295 = vmatpush.bf16.msra.mxu0 %v509
    %3296 = vmatpush.bf16.msra.mxu0 %v505
    %3297 = vmatpush.bf16.msra.mxu0 %v501
    %3298 = vmatpush.bf16.msra.mxu0 %v497
    %3299 = vmatpush.bf16.msra.mxu0 %v493
    %3300 = vmatpush.bf16.msra.mxu0 %v489
    %3301 = vmatpush.bf16.msra.mxu0 %v485
    %3302 = vmatmul.bf16.gmra.mxu0 %v3253
    %v3303 = vpop.f32.mrf.mxu0
    %v3304 = vadd.f32 0.0, %v3303
    %v3305 = vpop.f32.mrf.mxu0
    %3306 = vdwg.mxu0
    %v3311 = vrot.slane %v3278, 7
    %v3312 = vrot.slane %v3291, 6
    %v3313 = vrot.slane %v3304, 5
    %v3314 = vsel %vm605, %v3265, %v3311
    %v3315 = vsel %vm607, %v3312, %v3313
    %v3316 = vsel %vm609, %v3314, %v3315
    %v3317 = vsel %vm611, %v3265, %v3311
    %v3318 = vsel %vm613, %v3312, %v3313
    %v3319 = vsel %vm615, %v3317, %v3318
    %v3320 = vrot.slane %v3319, 1
    %v3321 = vsel %vm607, %v3265, %v3311
    %v3322 = vsel %vm619, %v3312, %v3313
    %v3323 = vsel %vm621, %v3321, %v3322
    %v3324 = vrot.slane %v3323, 2
    %v3325 = vsel %vm613, %v3265, %v3311
    %v3326 = vsel %vm625, %v3312, %v3313
    %v3327 = vsel %vm627, %v3325, %v3326
    %v3328 = vrot.slane %v3327, 3
    %v3333 = vadd.f32 %v3228, %v3316
    %v3334 = vadd.f32 %v3230, %v3320
    %v3335 = vadd.f32 %v3232, %v3324
    %v3336 = vadd.f32 %v3234, %v3328
    %v3337 = vxor.u32 %v3333, 2147483648
    %v3338 = vxor.u32 %v3334, 2147483648
    %v3339 = vxor.u32 %v3335, 2147483648
    %v3340 = vxor.u32 %v3336, 2147483648
    %v3341 = vmul.f32 %v3337, 1.442695
    %v3342 = vpow.pop %v3341
    %v3343 = vmul.f32 %v3338, 1.442695
    %v3344 = vpow.pop %v3343
    %v3345 = vmul.f32 %v3339, 1.442695
    %v3346 = vpow.pop %v3345
    %v3347 = vmul.f32 %v3340, 1.442695
    %v3348 = vpow.pop %v3347
    %v3349 = vadd.f32 %v3342, 1.0
    %v3350 = vadd.f32 %v3344, 1.0
    %v3351 = vadd.f32 %v3346, 1.0
    %v3352 = vadd.f32 %v3348, 1.0
    %v3353 = vrcp.pop %v3349
    %v3354 = vmul.f32 %v3349, %v3353
    %v3355 = vsub.f32 1.0, %v3354
    %v3356 = vmul.f32 %v3353, %v3355
    %v3357 = vadd.f32 %v3353, %v3356
    %vm3358 = vweird.f32 %v3349
    %vm3359 = vweird.f32 %v3353
    %vm3360 = vmor %vm3358, %vm3359
    %v3361 = vsel %vm3360, %v3353, %v3357
    %v3362 = vand.u32 2147483647, %v3349
    %vm3363 = vcmp.eq.f32.partialorder %v3362, 8.507059e+37
    %v3364 = vand.u32 %v3349, 2147483648
    %v3365 = vor.u32 1.1754944e-38, %v3364
    %v3366 = vsel %vm3363, %v3365, %v3361
    %v3367 = vmul.f32 1.0, %v3366
    %v3368 = vrcp.pop %v3350
    %v3369 = vmul.f32 %v3350, %v3368
    %v3370 = vsub.f32 1.0, %v3369
    %v3371 = vmul.f32 %v3368, %v3370
    %v3372 = vadd.f32 %v3368, %v3371
    %vm3373 = vweird.f32 %v3350
    %vm3374 = vweird.f32 %v3368
    %vm3375 = vmor %vm3373, %vm3374
    %v3376 = vsel %vm3375, %v3368, %v3372
    %v3377 = vand.u32 2147483647, %v3350
    %vm3378 = vcmp.eq.f32.partialorder %v3377, 8.507059e+37
    %v3379 = vand.u32 %v3350, 2147483648
    %v3380 = vor.u32 1.1754944e-38, %v3379
    %v3381 = vsel %vm3378, %v3380, %v3376
    %v3382 = vmul.f32 1.0, %v3381
    %v3383 = vrcp.pop %v3351
    %v3384 = vmul.f32 %v3351, %v3383
    %v3385 = vsub.f32 1.0, %v3384
    %v3386 = vmul.f32 %v3383, %v3385
    %v3387 = vadd.f32 %v3383, %v3386
    %vm3388 = vweird.f32 %v3351
    %vm3389 = vweird.f32 %v3383
    %vm3390 = vmor %vm3388, %vm3389
    %v3391 = vsel %vm3390, %v3383, %v3387
    %v3392 = vand.u32 2147483647, %v3351
    %vm3393 = vcmp.eq.f32.partialorder %v3392, 8.507059e+37
    %v3394 = vand.u32 %v3351, 2147483648
    %v3395 = vor.u32 1.1754944e-38, %v3394
    %v3396 = vsel %vm3393, %v3395, %v3391
    %v3397 = vmul.f32 1.0, %v3396
    %v3398 = vrcp.pop %v3352
    %v3399 = vmul.f32 %v3352, %v3398
    %v3400 = vsub.f32 1.0, %v3399
    %v3401 = vmul.f32 %v3398, %v3400
    %v3402 = vadd.f32 %v3398, %v3401
    %vm3403 = vweird.f32 %v3352
    %vm3404 = vweird.f32 %v3398
    %vm3405 = vmor %vm3403, %vm3404
    %v3406 = vsel %vm3405, %v3398, %v3402
    %v3407 = vand.u32 2147483647, %v3352
    %vm3408 = vcmp.eq.f32.partialorder %v3407, 8.507059e+37
    %v3409 = vand.u32 %v3352, 2147483648
    %v3410 = vor.u32 1.1754944e-38, %v3409
    %v3411 = vsel %vm3408, %v3410, %v3406
    %v3412 = vmul.f32 1.0, %v3411
    %v3417 = vrot.slane %v3333, 1
    %v3418 = vrot.slane %v3334, 1
    %v3419 = vrot.slane %v3335, 1
    %v3420 = vrot.slane %v3336, 1
    %v3425 = vxor.u32 %v3417, 2147483648
    %v3426 = vxor.u32 %v3418, 2147483648
    %v3427 = vxor.u32 %v3419, 2147483648
    %v3428 = vxor.u32 %v3420, 2147483648
    %v3429 = vmul.f32 %v3425, 1.442695
    %v3430 = vpow.pop %v3429
    %v3431 = vmul.f32 %v3426, 1.442695
    %v3432 = vpow.pop %v3431
    %v3433 = vmul.f32 %v3427, 1.442695
    %v3434 = vpow.pop %v3433
    %v3435 = vmul.f32 %v3428, 1.442695
    %v3436 = vpow.pop %v3435
    %v3437 = vadd.f32 %v3430, 1.0
    %v3438 = vadd.f32 %v3432, 1.0
    %v3439 = vadd.f32 %v3434, 1.0
    %v3440 = vadd.f32 %v3436, 1.0
    %v3441 = vrcp.pop %v3437
    %v3442 = vmul.f32 %v3437, %v3441
    %v3443 = vsub.f32 1.0, %v3442
    %v3444 = vmul.f32 %v3441, %v3443
    %v3445 = vadd.f32 %v3441, %v3444
    %vm3446 = vweird.f32 %v3437
    %vm3447 = vweird.f32 %v3441
    %vm3448 = vmor %vm3446, %vm3447
    %v3449 = vsel %vm3448, %v3441, %v3445
    %v3450 = vand.u32 2147483647, %v3437
    %vm3451 = vcmp.eq.f32.partialorder %v3450, 8.507059e+37
    %v3452 = vand.u32 %v3437, 2147483648
    %v3453 = vor.u32 1.1754944e-38, %v3452
    %v3454 = vsel %vm3451, %v3453, %v3449
    %v3455 = vmul.f32 1.0, %v3454
    %v3456 = vrcp.pop %v3438
    %v3457 = vmul.f32 %v3438, %v3456
    %v3458 = vsub.f32 1.0, %v3457
    %v3459 = vmul.f32 %v3456, %v3458
    %v3460 = vadd.f32 %v3456, %v3459
    %vm3461 = vweird.f32 %v3438
    %vm3462 = vweird.f32 %v3456
    %vm3463 = vmor %vm3461, %vm3462
    %v3464 = vsel %vm3463, %v3456, %v3460
    %v3465 = vand.u32 2147483647, %v3438
    %vm3466 = vcmp.eq.f32.partialorder %v3465, 8.507059e+37
    %v3467 = vand.u32 %v3438, 2147483648
    %v3468 = vor.u32 1.1754944e-38, %v3467
    %v3469 = vsel %vm3466, %v3468, %v3464
    %v3470 = vmul.f32 1.0, %v3469
    %v3471 = vrcp.pop %v3439
    %v3472 = vmul.f32 %v3439, %v3471
    %v3473 = vsub.f32 1.0, %v3472
    %v3474 = vmul.f32 %v3471, %v3473
    %v3475 = vadd.f32 %v3471, %v3474
    %vm3476 = vweird.f32 %v3439
    %vm3477 = vweird.f32 %v3471
    %vm3478 = vmor %vm3476, %vm3477
    %v3479 = vsel %vm3478, %v3471, %v3475
    %v3480 = vand.u32 2147483647, %v3439
    %vm3481 = vcmp.eq.f32.partialorder %v3480, 8.507059e+37
    %v3482 = vand.u32 %v3439, 2147483648
    %v3483 = vor.u32 1.1754944e-38, %v3482
    %v3484 = vsel %vm3481, %v3483, %v3479
    %v3485 = vmul.f32 1.0, %v3484
    %v3486 = vrcp.pop %v3440
    %v3487 = vmul.f32 %v3440, %v3486
    %v3488 = vsub.f32 1.0, %v3487
    %v3489 = vmul.f32 %v3486, %v3488
    %v3490 = vadd.f32 %v3486, %v3489
    %vm3491 = vweird.f32 %v3440
    %vm3492 = vweird.f32 %v3486
    %vm3493 = vmor %vm3491, %vm3492
    %v3494 = vsel %vm3493, %v3486, %v3490
    %v3495 = vand.u32 2147483647, %v3440
    %vm3496 = vcmp.eq.f32.partialorder %v3495, 8.507059e+37
    %v3497 = vand.u32 %v3440, 2147483648
    %v3498 = vor.u32 1.1754944e-38, %v3497
    %v3499 = vsel %vm3496, %v3498, %v3494
    %v3500 = vmul.f32 1.0, %v3499
    %v3501 = vrot.slane %v3333, 2
    %v3502 = vrot.slane %v3334, 2
    %v3503 = vrot.slane %v3335, 2
    %v3504 = vrot.slane %v3336, 2
    %v3509 = vtanh.pop %v3501
    %v3510 = vtanh.pop %v3502
    %v3511 = vtanh.pop %v3503
    %v3512 = vtanh.pop %v3504
    %v3513 = vrot.slane %v3333, 3
    %v3514 = vrot.slane %v3334, 3
    %v3515 = vrot.slane %v3335, 3
    %v3516 = vrot.slane %v3336, 3
    %v3521 = vxor.u32 %v3513, 2147483648
    %v3522 = vxor.u32 %v3514, 2147483648
    %v3523 = vxor.u32 %v3515, 2147483648
    %v3524 = vxor.u32 %v3516, 2147483648
    %v3525 = vmul.f32 %v3521, 1.442695
    %v3526 = vpow.pop %v3525
    %v3527 = vmul.f32 %v3522, 1.442695
    %v3528 = vpow.pop %v3527
    %v3529 = vmul.f32 %v3523, 1.442695
    %v3530 = vpow.pop %v3529
    %v3531 = vmul.f32 %v3524, 1.442695
    %v3532 = vpow.pop %v3531
    %v3533 = vadd.f32 %v3526, 1.0
    %v3534 = vadd.f32 %v3528, 1.0
    %v3535 = vadd.f32 %v3530, 1.0
    %v3536 = vadd.f32 %v3532, 1.0
    %v3537 = vrcp.pop %v3533
    %v3538 = vmul.f32 %v3533, %v3537
    %v3539 = vsub.f32 1.0, %v3538
    %v3540 = vmul.f32 %v3537, %v3539
    %v3541 = vadd.f32 %v3537, %v3540
    %vm3542 = vweird.f32 %v3533
    %vm3543 = vweird.f32 %v3537
    %vm3544 = vmor %vm3542, %vm3543
    %v3545 = vsel %vm3544, %v3537, %v3541
    %v3546 = vand.u32 2147483647, %v3533
    %vm3547 = vcmp.eq.f32.partialorder %v3546, 8.507059e+37
    %v3548 = vand.u32 %v3533, 2147483648
    %v3549 = vor.u32 1.1754944e-38, %v3548
    %v3550 = vsel %vm3547, %v3549, %v3545
    %v3551 = vmul.f32 1.0, %v3550
    %v3552 = vrcp.pop %v3534
    %v3553 = vmul.f32 %v3534, %v3552
    %v3554 = vsub.f32 1.0, %v3553
    %v3555 = vmul.f32 %v3552, %v3554
    %v3556 = vadd.f32 %v3552, %v3555
    %vm3557 = vweird.f32 %v3534
    %vm3558 = vweird.f32 %v3552
    %vm3559 = vmor %vm3557, %vm3558
    %v3560 = vsel %vm3559, %v3552, %v3556
    %v3561 = vand.u32 2147483647, %v3534
    %vm3562 = vcmp.eq.f32.partialorder %v3561, 8.507059e+37
    %v3563 = vand.u32 %v3534, 2147483648
    %v3564 = vor.u32 1.1754944e-38, %v3563
    %v3565 = vsel %vm3562, %v3564, %v3560
    %v3566 = vmul.f32 1.0, %v3565
    %v3567 = vrcp.pop %v3535
    %v3568 = vmul.f32 %v3535, %v3567
    %v3569 = vsub.f32 1.0, %v3568
    %v3570 = vmul.f32 %v3567, %v3569
    %v3571 = vadd.f32 %v3567, %v3570
    %vm3572 = vweird.f32 %v3535
    %vm3573 = vweird.f32 %v3567
    %vm3574 = vmor %vm3572, %vm3573
    %v3575 = vsel %vm3574, %v3567, %v3571
    %v3576 = vand.u32 2147483647, %v3535
    %vm3577 = vcmp.eq.f32.partialorder %v3576, 8.507059e+37
    %v3578 = vand.u32 %v3535, 2147483648
    %v3579 = vor.u32 1.1754944e-38, %v3578
    %v3580 = vsel %vm3577, %v3579, %v3575
    %v3581 = vmul.f32 1.0, %v3580
    %v3582 = vrcp.pop %v3536
    %v3583 = vmul.f32 %v3536, %v3582
    %v3584 = vsub.f32 1.0, %v3583
    %v3585 = vmul.f32 %v3582, %v3584
    %v3586 = vadd.f32 %v3582, %v3585
    %vm3587 = vweird.f32 %v3536
    %vm3588 = vweird.f32 %v3582
    %vm3589 = vmor %vm3587, %vm3588
    %v3590 = vsel %vm3589, %v3582, %v3586
    %v3591 = vand.u32 2147483647, %v3536
    %vm3592 = vcmp.eq.f32.partialorder %v3591, 8.507059e+37
    %v3593 = vand.u32 %v3536, 2147483648
    %v3594 = vor.u32 1.1754944e-38, %v3593
    %v3595 = vsel %vm3592, %v3594, %v3590
    %v3596 = vmul.f32 1.0, %v3595
    %v3597 = vmul.f32 %v3455, %v3149
    %v3598 = vmul.f32 %v3470, %v3150
    %v3599 = vmul.f32 %v3485, %v3151
    %v3600 = vmul.f32 %v3500, %v3152
    %v3601 = vmul.f32 %v3367, %v3509
    %v3602 = vmul.f32 %v3382, %v3510
    %v3603 = vmul.f32 %v3397, %v3511
    %v3604 = vmul.f32 %v3412, %v3512
    %v3605 = vadd.f32 %v3597, %v3601
    %v3606 = vadd.f32 %v3598, %v3602
    %v3607 = vadd.f32 %v3599, %v3603
    %v3608 = vadd.f32 %v3600, %v3604
    %v3609 = vtanh.pop %v3605
    %v3610 = vtanh.pop %v3606
    %v3611 = vtanh.pop %v3607
    %v3612 = vtanh.pop %v3608
    %v3613 = vmul.f32 %v3551, %v3609
    %v3614 = vmul.f32 %v3566, %v3610
    %v3615 = vmul.f32 %v3581, %v3611
    %v3616 = vmul.f32 %v3596, %v3612
    %v3617 = vld [vmem:[%s4 + $0x6] sm:$0x1]
    %v3618 = vld [vmem:[%s4 + $0xe] sm:$0x1]
    %v3619 = vld [vmem:[%s4 + $0x16] sm:$0x1]
    %v3620 = vld [vmem:[%s4 + $0x1e] sm:$0x1]
    %3622 = vset.pattern.permute.xlu0 0
    %3623 = vperm.xlu0 %3622, %v3617
    %v3624 = vpop.permute.xlu0 %3623
    %3627 = vset.pattern.permute.xlu0 0
    %3628 = vperm.xlu0 %3627, %v3618
    %v3629 = vpop.permute.xlu0 %3628
    %3632 = vset.pattern.permute.xlu0 0
    %3633 = vperm.xlu0 %3632, %v3619
    %v3634 = vpop.permute.xlu0 %3633
    %3637 = vset.pattern.permute.xlu0 0
    %3638 = vperm.xlu0 %3637, %v3620
    %v3639 = vpop.permute.xlu0 %3638
    %v3641 = vmul.f32 %v3613, %v3624
    %v3642 = vmul.f32 %v3614, %v3629
    %v3643 = vmul.f32 %v3615, %v3634
    %v3644 = vmul.f32 %v3616, %v3639
    %v3645 = vpack.c.bf16 %v3641, %v3641
    %v3646 = vpack.c.bf16 %v3642, %v3642
    %v3647 = vpack.c.bf16 %v3643, %v3643
    %v3648 = vpack.c.bf16 %v3644, %v3644
    %v3653 = vrot.slane %v3645, 5
    %v3654 = vrot.slane %v3646, 5
    %v3655 = vrot.slane %v3647, 5
    %v3656 = vrot.slane %v3648, 5
    %vm3661 = vcmask 1043459
    %vm3662 = vsmask.f32 3328
    %vm3663 = vmand %vm3661, %vm3662
    %v3664 = vld [vmem:[%s5] sm:$0x8]
    %v3665 = vsel %vm3663, %v3653, %v3664
    %3666 = vst [vmem:[%s5] sm:$0x8] %v3665
    %v3667 = vld [vmem:[%s5 + $0x4] sm:$0x8]
    %v3668 = vsel %vm3663, %v3654, %v3667
    %3669 = vst [vmem:[%s5 + $0x4] sm:$0x8] %v3668
    %v3670 = vld [vmem:[%s5 + $0x8] sm:$0x8]
    %v3671 = vsel %vm3663, %v3655, %v3670
    %3672 = vst [vmem:[%s5 + $0x8] sm:$0x8] %v3671
    %v3673 = vld [vmem:[%s5 + $0xc] sm:$0x8]
    %v3674 = vsel %vm3663, %v3656, %v3673
    %3675 = vst [vmem:[%s5 + $0xc] sm:$0x8] %v3674
    %s3676 = scalar_lea.vmem [#allocation2], 7
    %v3677 = vld [vmem:[%s3676] ss:$8 sm:$0xf]
    %s3678 = scalar_lea.vmem [#allocation2], 39
    %v3679 = vld [vmem:[%s3678] ss:$8 sm:$0xf]
    %s3680 = scalar_lea.vmem [#allocation2], 71
    %v3681 = vld [vmem:[%s3680] ss:$8 sm:$0xf]
    %s3682 = scalar_lea.vmem [#allocation2], 103
    %v3683 = vld [vmem:[%s3682] ss:$8 sm:$0xf]
    %v3684 = vpack.c.bf16 %v3613, %v3613
    %v3685 = vpack.c.bf16 %v3614, %v3614
    %v3686 = vpack.c.bf16 %v3615, %v3615
    %v3687 = vpack.c.bf16 %v3616, %v3616
    %v3692 = vunpack.c.l.b16 %v3684
    %v3693 = vunpack.c.l.b16 %v3685
    %v3694 = vunpack.c.l.b16 %v3686
    %v3695 = vunpack.c.l.b16 %v3687
    %v3696 = vrot.slane %v3693, 7
    %v3697 = vsel %vm611, %v3696, %v3692
    %v3698 = vrot.slane %v3694, 6
    %v3699 = vsel %vm607, %v3698, %v3697
    %v3700 = vrot.slane %v3695, 5
    %v3701 = vsel %vm613, %v3700, %v3699
    %v3702 = vpack.c.b16 %v3701, %v3701
    %3704 = vmatpush.bf16.msra.mxu0 %v510
    %3705 = vmatpush.bf16.msra.mxu0 %v506
    %3706 = vmatpush.bf16.msra.mxu0 %v502
    %3707 = vmatpush.bf16.msra.mxu0 %v498
    %3708 = vmatpush.bf16.msra.mxu0 %v494
    %3709 = vmatpush.bf16.msra.mxu0 %v490
    %3710 = vmatpush.bf16.msra.mxu0 %v486
    %3711 = vmatpush.bf16.msra.mxu0 %v482
    %3712 = vmatmul.bf16.gmra.mxu0 %v3702
    %v3713 = vpop.f32.mrf.mxu0
    %v3714 = vadd.f32 0.0, %v3713
    %v3715 = vpop.f32.mrf.mxu0
    %3716 = vdwg.mxu0
    %3717 = vmatpush.bf16.msra.mxu0 %v511
    %3718 = vmatpush.bf16.msra.mxu0 %v507
    %3719 = vmatpush.bf16.msra.mxu0 %v503
    %3720 = vmatpush.bf16.msra.mxu0 %v499
    %3721 = vmatpush.bf16.msra.mxu0 %v495
    %3722 = vmatpush.bf16.msra.mxu0 %v491
    %3723 = vmatpush.bf16.msra.mxu0 %v487
    %3724 = vmatpush.bf16.msra.mxu0 %v483
    %3725 = vmatmul.bf16.gmra.mxu0 %v3702
    %v3726 = vpop.f32.mrf.mxu0
    %v3727 = vadd.f32 0.0, %v3726
    %v3728 = vpop.f32.mrf.mxu0
    %3729 = vdwg.mxu0
    %3730 = vmatpush.bf16.msra.mxu0 %v512
    %3731 = vmatpush.bf16.msra.mxu0 %v508
    %3732 = vmatpush.bf16.msra.mxu0 %v504
    %3733 = vmatpush.bf16.msra.mxu0 %v500
    %3734 = vmatpush.bf16.msra.mxu0 %v496
    %3735 = vmatpush.bf16.msra.mxu0 %v492
    %3736 = vmatpush.bf16.msra.mxu0 %v488
    %3737 = vmatpush.bf16.msra.mxu0 %v484
    %3738 = vmatmul.bf16.gmra.mxu0 %v3702
    %v3739 = vpop.f32.mrf.mxu0
    %v3740 = vadd.f32 0.0, %v3739
    %v3741 = vpop.f32.mrf.mxu0
    %3742 = vdwg.mxu0
    %3743 = vmatpush.bf16.msra.mxu0 %v513
    %3744 = vmatpush.bf16.msra.mxu0 %v509
    %3745 = vmatpush.bf16.msra.mxu0 %v505
    %3746 = vmatpush.bf16.msra.mxu0 %v501
    %3747 = vmatpush.bf16.msra.mxu0 %v497
    %3748 = vmatpush.bf16.msra.mxu0 %v493
    %3749 = vmatpush.bf16.msra.mxu0 %v489
    %3750 = vmatpush.bf16.msra.mxu0 %v485
    %3751 = vmatmul.bf16.gmra.mxu0 %v3702
    %v3752 = vpop.f32.mrf.mxu0
    %v3753 = vadd.f32 0.0, %v3752
    %v3754 = vpop.f32.mrf.mxu0
    %3755 = vdwg.mxu0
    %v3760 = vrot.slane %v3727, 7
    %v3761 = vrot.slane %v3740, 6
    %v3762 = vrot.slane %v3753, 5
    %v3763 = vsel %vm605, %v3714, %v3760
    %v3764 = vsel %vm607, %v3761, %v3762
    %v3765 = vsel %vm609, %v3763, %v3764
    %v3766 = vsel %vm611, %v3714, %v3760
    %v3767 = vsel %vm613, %v3761, %v3762
    %v3768 = vsel %vm615, %v3766, %v3767
    %v3769 = vrot.slane %v3768, 1
    %v3770 = vsel %vm607, %v3714, %v3760
    %v3771 = vsel %vm619, %v3761, %v3762
    %v3772 = vsel %vm621, %v3770, %v3771
    %v3773 = vrot.slane %v3772, 2
    %v3774 = vsel %vm613, %v3714, %v3760
    %v3775 = vsel %vm625, %v3761, %v3762
    %v3776 = vsel %vm627, %v3774, %v3775
    %v3777 = vrot.slane %v3776, 3
    %v3782 = vadd.f32 %v3677, %v3765
    %v3783 = vadd.f32 %v3679, %v3769
    %v3784 = vadd.f32 %v3681, %v3773
    %v3785 = vadd.f32 %v3683, %v3777
    %v3786 = vxor.u32 %v3782, 2147483648
    %v3787 = vxor.u32 %v3783, 2147483648
    %v3788 = vxor.u32 %v3784, 2147483648
    %v3789 = vxor.u32 %v3785, 2147483648
    %v3790 = vmul.f32 %v3786, 1.442695
    %v3791 = vpow.pop %v3790
    %v3792 = vmul.f32 %v3787, 1.442695
    %v3793 = vpow.pop %v3792
    %v3794 = vmul.f32 %v3788, 1.442695
    %v3795 = vpow.pop %v3794
    %v3796 = vmul.f32 %v3789, 1.442695
    %v3797 = vpow.pop %v3796
    %v3798 = vadd.f32 %v3791, 1.0
    %v3799 = vadd.f32 %v3793, 1.0
    %v3800 = vadd.f32 %v3795, 1.0
    %v3801 = vadd.f32 %v3797, 1.0
    %v3802 = vrcp.pop %v3798
    %v3803 = vmul.f32 %v3798, %v3802
    %v3804 = vsub.f32 1.0, %v3803
    %v3805 = vmul.f32 %v3802, %v3804
    %v3806 = vadd.f32 %v3802, %v3805
    %vm3807 = vweird.f32 %v3798
    %vm3808 = vweird.f32 %v3802
    %vm3809 = vmor %vm3807, %vm3808
    %v3810 = vsel %vm3809, %v3802, %v3806
    %v3811 = vand.u32 2147483647, %v3798
    %vm3812 = vcmp.eq.f32.partialorder %v3811, 8.507059e+37
    %v3813 = vand.u32 %v3798, 2147483648
    %v3814 = vor.u32 1.1754944e-38, %v3813
    %v3815 = vsel %vm3812, %v3814, %v3810
    %v3816 = vmul.f32 1.0, %v3815
    %v3817 = vrcp.pop %v3799
    %v3818 = vmul.f32 %v3799, %v3817
    %v3819 = vsub.f32 1.0, %v3818
    %v3820 = vmul.f32 %v3817, %v3819
    %v3821 = vadd.f32 %v3817, %v3820
    %vm3822 = vweird.f32 %v3799
    %vm3823 = vweird.f32 %v3817
    %vm3824 = vmor %vm3822, %vm3823
    %v3825 = vsel %vm3824, %v3817, %v3821
    %v3826 = vand.u32 2147483647, %v3799
    %vm3827 = vcmp.eq.f32.partialorder %v3826, 8.507059e+37
    %v3828 = vand.u32 %v3799, 2147483648
    %v3829 = vor.u32 1.1754944e-38, %v3828
    %v3830 = vsel %vm3827, %v3829, %v3825
    %v3831 = vmul.f32 1.0, %v3830
    %v3832 = vrcp.pop %v3800
    %v3833 = vmul.f32 %v3800, %v3832
    %v3834 = vsub.f32 1.0, %v3833
    %v3835 = vmul.f32 %v3832, %v3834
    %v3836 = vadd.f32 %v3832, %v3835
    %vm3837 = vweird.f32 %v3800
    %vm3838 = vweird.f32 %v3832
    %vm3839 = vmor %vm3837, %vm3838
    %v3840 = vsel %vm3839, %v3832, %v3836
    %v3841 = vand.u32 2147483647, %v3800
    %vm3842 = vcmp.eq.f32.partialorder %v3841, 8.507059e+37
    %v3843 = vand.u32 %v3800, 2147483648
    %v3844 = vor.u32 1.1754944e-38, %v3843
    %v3845 = vsel %vm3842, %v3844, %v3840
    %v3846 = vmul.f32 1.0, %v3845
    %v3847 = vrcp.pop %v3801
    %v3848 = vmul.f32 %v3801, %v3847
    %v3849 = vsub.f32 1.0, %v3848
    %v3850 = vmul.f32 %v3847, %v3849
    %v3851 = vadd.f32 %v3847, %v3850
    %vm3852 = vweird.f32 %v3801
    %vm3853 = vweird.f32 %v3847
    %vm3854 = vmor %vm3852, %vm3853
    %v3855 = vsel %vm3854, %v3847, %v3851
    %v3856 = vand.u32 2147483647, %v3801
    %vm3857 = vcmp.eq.f32.partialorder %v3856, 8.507059e+37
    %v3858 = vand.u32 %v3801, 2147483648
    %v3859 = vor.u32 1.1754944e-38, %v3858
    %v3860 = vsel %vm3857, %v3859, %v3855
    %v3861 = vmul.f32 1.0, %v3860
    %v3866 = vrot.slane %v3782, 1
    %v3867 = vrot.slane %v3783, 1
    %v3868 = vrot.slane %v3784, 1
    %v3869 = vrot.slane %v3785, 1
    %v3874 = vxor.u32 %v3866, 2147483648
    %v3875 = vxor.u32 %v3867, 2147483648
    %v3876 = vxor.u32 %v3868, 2147483648
    %v3877 = vxor.u32 %v3869, 2147483648
    %v3878 = vmul.f32 %v3874, 1.442695
    %v3879 = vpow.pop %v3878
    %v3880 = vmul.f32 %v3875, 1.442695
    %v3881 = vpow.pop %v3880
    %v3882 = vmul.f32 %v3876, 1.442695
    %v3883 = vpow.pop %v3882
    %v3884 = vmul.f32 %v3877, 1.442695
    %v3885 = vpow.pop %v3884
    %v3886 = vadd.f32 %v3879, 1.0
    %v3887 = vadd.f32 %v3881, 1.0
    %v3888 = vadd.f32 %v3883, 1.0
    %v3889 = vadd.f32 %v3885, 1.0
    %v3890 = vrcp.pop %v3886
    %v3891 = vmul.f32 %v3886, %v3890
    %v3892 = vsub.f32 1.0, %v3891
    %v3893 = vmul.f32 %v3890, %v3892
    %v3894 = vadd.f32 %v3890, %v3893
    %vm3895 = vweird.f32 %v3886
    %vm3896 = vweird.f32 %v3890
    %vm3897 = vmor %vm3895, %vm3896
    %v3898 = vsel %vm3897, %v3890, %v3894
    %v3899 = vand.u32 2147483647, %v3886
    %vm3900 = vcmp.eq.f32.partialorder %v3899, 8.507059e+37
    %v3901 = vand.u32 %v3886, 2147483648
    %v3902 = vor.u32 1.1754944e-38, %v3901
    %v3903 = vsel %vm3900, %v3902, %v3898
    %v3904 = vmul.f32 1.0, %v3903
    %v3905 = vrcp.pop %v3887
    %v3906 = vmul.f32 %v3887, %v3905
    %v3907 = vsub.f32 1.0, %v3906
    %v3908 = vmul.f32 %v3905, %v3907
    %v3909 = vadd.f32 %v3905, %v3908
    %vm3910 = vweird.f32 %v3887
    %vm3911 = vweird.f32 %v3905
    %vm3912 = vmor %vm3910, %vm3911
    %v3913 = vsel %vm3912, %v3905, %v3909
    %v3914 = vand.u32 2147483647, %v3887
    %vm3915 = vcmp.eq.f32.partialorder %v3914, 8.507059e+37
    %v3916 = vand.u32 %v3887, 2147483648
    %v3917 = vor.u32 1.1754944e-38, %v3916
    %v3918 = vsel %vm3915, %v3917, %v3913
    %v3919 = vmul.f32 1.0, %v3918
    %v3920 = vrcp.pop %v3888
    %v3921 = vmul.f32 %v3888, %v3920
    %v3922 = vsub.f32 1.0, %v3921
    %v3923 = vmul.f32 %v3920, %v3922
    %v3924 = vadd.f32 %v3920, %v3923
    %vm3925 = vweird.f32 %v3888
    %vm3926 = vweird.f32 %v3920
    %vm3927 = vmor %vm3925, %vm3926
    %v3928 = vsel %vm3927, %v3920, %v3924
    %v3929 = vand.u32 2147483647, %v3888
    %vm3930 = vcmp.eq.f32.partialorder %v3929, 8.507059e+37
    %v3931 = vand.u32 %v3888, 2147483648
    %v3932 = vor.u32 1.1754944e-38, %v3931
    %v3933 = vsel %vm3930, %v3932, %v3928
    %v3934 = vmul.f32 1.0, %v3933
    %v3935 = vrcp.pop %v3889
    %v3936 = vmul.f32 %v3889, %v3935
    %v3937 = vsub.f32 1.0, %v3936
    %v3938 = vmul.f32 %v3935, %v3937
    %v3939 = vadd.f32 %v3935, %v3938
    %vm3940 = vweird.f32 %v3889
    %vm3941 = vweird.f32 %v3935
    %vm3942 = vmor %vm3940, %vm3941
    %v3943 = vsel %vm3942, %v3935, %v3939
    %v3944 = vand.u32 2147483647, %v3889
    %vm3945 = vcmp.eq.f32.partialorder %v3944, 8.507059e+37
    %v3946 = vand.u32 %v3889, 2147483648
    %v3947 = vor.u32 1.1754944e-38, %v3946
    %v3948 = vsel %vm3945, %v3947, %v3943
    %v3949 = vmul.f32 1.0, %v3948
    %v3950 = vrot.slane %v3782, 2
    %v3951 = vrot.slane %v3783, 2
    %v3952 = vrot.slane %v3784, 2
    %v3953 = vrot.slane %v3785, 2
    %v3958 = vtanh.pop %v3950
    %v3959 = vtanh.pop %v3951
    %v3960 = vtanh.pop %v3952
    %v3961 = vtanh.pop %v3953
    %v3962 = vrot.slane %v3782, 3
    %v3963 = vrot.slane %v3783, 3
    %v3964 = vrot.slane %v3784, 3
    %v3965 = vrot.slane %v3785, 3
    %v3970 = vxor.u32 %v3962, 2147483648
    %v3971 = vxor.u32 %v3963, 2147483648
    %v3972 = vxor.u32 %v3964, 2147483648
    %v3973 = vxor.u32 %v3965, 2147483648
    %v3974 = vmul.f32 %v3970, 1.442695
    %v3975 = vpow.pop %v3974
    %v3976 = vmul.f32 %v3971, 1.442695
    %v3977 = vpow.pop %v3976
    %v3978 = vmul.f32 %v3972, 1.442695
    %v3979 = vpow.pop %v3978
    %v3980 = vmul.f32 %v3973, 1.442695
    %v3981 = vpow.pop %v3980
    %v3982 = vadd.f32 %v3975, 1.0
    %v3983 = vadd.f32 %v3977, 1.0
    %v3984 = vadd.f32 %v3979, 1.0
    %v3985 = vadd.f32 %v3981, 1.0
    %v3986 = vrcp.pop %v3982
    %v3987 = vmul.f32 %v3982, %v3986
    %v3988 = vsub.f32 1.0, %v3987
    %v3989 = vmul.f32 %v3986, %v3988
    %v3990 = vadd.f32 %v3986, %v3989
    %vm3991 = vweird.f32 %v3982
    %vm3992 = vweird.f32 %v3986
    %vm3993 = vmor %vm3991, %vm3992
    %v3994 = vsel %vm3993, %v3986, %v3990
    %v3995 = vand.u32 2147483647, %v3982
    %vm3996 = vcmp.eq.f32.partialorder %v3995, 8.507059e+37
    %v3997 = vand.u32 %v3982, 2147483648
    %v3998 = vor.u32 1.1754944e-38, %v3997
    %v3999 = vsel %vm3996, %v3998, %v3994
    %v4000 = vmul.f32 1.0, %v3999
    %v4001 = vrcp.pop %v3983
    %v4002 = vmul.f32 %v3983, %v4001
    %v4003 = vsub.f32 1.0, %v4002
    %v4004 = vmul.f32 %v4001, %v4003
    %v4005 = vadd.f32 %v4001, %v4004
    %vm4006 = vweird.f32 %v3983
    %vm4007 = vweird.f32 %v4001
    %vm4008 = vmor %vm4006, %vm4007
    %v4009 = vsel %vm4008, %v4001, %v4005
    %v4010 = vand.u32 2147483647, %v3983
    %vm4011 = vcmp.eq.f32.partialorder %v4010, 8.507059e+37
    %v4012 = vand.u32 %v3983, 2147483648
    %v4013 = vor.u32 1.1754944e-38, %v4012
    %v4014 = vsel %vm4011, %v4013, %v4009
    %v4015 = vmul.f32 1.0, %v4014
    %v4016 = vrcp.pop %v3984
    %v4017 = vmul.f32 %v3984, %v4016
    %v4018 = vsub.f32 1.0, %v4017
    %v4019 = vmul.f32 %v4016, %v4018
    %v4020 = vadd.f32 %v4016, %v4019
    %vm4021 = vweird.f32 %v3984
    %vm4022 = vweird.f32 %v4016
    %vm4023 = vmor %vm4021, %vm4022
    %v4024 = vsel %vm4023, %v4016, %v4020
    %v4025 = vand.u32 2147483647, %v3984
    %vm4026 = vcmp.eq.f32.partialorder %v4025, 8.507059e+37
    %v4027 = vand.u32 %v3984, 2147483648
    %v4028 = vor.u32 1.1754944e-38, %v4027
    %v4029 = vsel %vm4026, %v4028, %v4024
    %v4030 = vmul.f32 1.0, %v4029
    %v4031 = vrcp.pop %v3985
    %v4032 = vmul.f32 %v3985, %v4031
    %v4033 = vsub.f32 1.0, %v4032
    %v4034 = vmul.f32 %v4031, %v4033
    %v4035 = vadd.f32 %v4031, %v4034
    %vm4036 = vweird.f32 %v3985
    %vm4037 = vweird.f32 %v4031
    %vm4038 = vmor %vm4036, %vm4037
    %v4039 = vsel %vm4038, %v4031, %v4035
    %v4040 = vand.u32 2147483647, %v3985
    %vm4041 = vcmp.eq.f32.partialorder %v4040, 8.507059e+37
    %v4042 = vand.u32 %v3985, 2147483648
    %v4043 = vor.u32 1.1754944e-38, %v4042
    %v4044 = vsel %vm4041, %v4043, %v4039
    %v4045 = vmul.f32 1.0, %v4044
    %v4046 = vmul.f32 %v3904, %v3605
    %v4047 = vmul.f32 %v3919, %v3606
    %v4048 = vmul.f32 %v3934, %v3607
    %v4049 = vmul.f32 %v3949, %v3608
    %v4050 = vmul.f32 %v3816, %v3958
    %v4051 = vmul.f32 %v3831, %v3959
    %v4052 = vmul.f32 %v3846, %v3960
    %v4053 = vmul.f32 %v3861, %v3961
    %v4054 = vadd.f32 %v4046, %v4050
    %v4055 = vadd.f32 %v4047, %v4051
    %v4056 = vadd.f32 %v4048, %v4052
    %v4057 = vadd.f32 %v4049, %v4053
    %v4058 = vtanh.pop %v4054
    %v4059 = vtanh.pop %v4055
    %v4060 = vtanh.pop %v4056
    %v4061 = vtanh.pop %v4057
    %v4062 = vmul.f32 %v4000, %v4058
    %v4063 = vmul.f32 %v4015, %v4059
    %v4064 = vmul.f32 %v4030, %v4060
    %v4065 = vmul.f32 %v4045, %v4061
    %v4066 = vld [vmem:[%s4 + $0x7] sm:$0x1]
    %v4067 = vld [vmem:[%s4 + $0xf] sm:$0x1]
    %v4068 = vld [vmem:[%s4 + $0x17] sm:$0x1]
    %v4069 = vld [vmem:[%s4 + $0x1f] sm:$0x1]
    %4071 = vset.pattern.permute.xlu0 0
    %4072 = vperm.xlu0 %4071, %v4066
    %v4073 = vpop.permute.xlu0 %4072
    %4076 = vset.pattern.permute.xlu0 0
    %4077 = vperm.xlu0 %4076, %v4067
    %v4078 = vpop.permute.xlu0 %4077
    %4081 = vset.pattern.permute.xlu0 0
    %4082 = vperm.xlu0 %4081, %v4068
    %v4083 = vpop.permute.xlu0 %4082
    %4086 = vset.pattern.permute.xlu0 0
    %4087 = vperm.xlu0 %4086, %v4069
    %v4088 = vpop.permute.xlu0 %4087
    %v4090 = vmul.f32 %v4062, %v4073
    %v4091 = vmul.f32 %v4063, %v4078
    %v4092 = vmul.f32 %v4064, %v4083
    %v4093 = vmul.f32 %v4065, %v4088
    %v4094 = vpack.c.bf16 %v4090, %v4090
    %v4095 = vpack.c.bf16 %v4091, %v4091
    %v4096 = vpack.c.bf16 %v4092, %v4092
    %v4097 = vpack.c.bf16 %v4093, %v4093
    %v4099 = vshll.u32 %v4094, 16
    %v4101 = vrot.slane %v4099, 5
    %v4103 = vshll.u32 %v4095, 16
    %v4105 = vrot.slane %v4103, 5
    %v4107 = vshll.u32 %v4096, 16
    %v4109 = vrot.slane %v4107, 5
    %v4111 = vshll.u32 %v4097, 16
    %v4113 = vrot.slane %v4111, 5
    %vm4118 = vsmask.f32 7950
    %vm4119 = vmand %vm3661, %vm4118
    %v4120 = vld [vmem:[%s5] sm:$0x8]
    %v4121 = vsel %vm4119, %v4101, %v4120
    %4122 = vst [vmem:[%s5] sm:$0x8] %v4121
    %v4123 = vld [vmem:[%s5 + $0x4] sm:$0x8]
    %v4124 = vsel %vm4119, %v4105, %v4123
    %4125 = vst [vmem:[%s5 + $0x4] sm:$0x8] %v4124
    %v4126 = vld [vmem:[%s5 + $0x8] sm:$0x8]
    %v4127 = vsel %vm4119, %v4109, %v4126
    %4128 = vst [vmem:[%s5 + $0x8] sm:$0x8] %v4127
    %v4129 = vld [vmem:[%s5 + $0xc] sm:$0x8]
    %v4130 = vsel %vm4119, %v4113, %v4129
    %4131 = vst [vmem:[%s5 + $0xc] sm:$0x8] %v4130
    // Predicated region
    $region26: #{esim_forward.8} parent=1 // pred_check
      _
    $region27: #{esim_forward.8} parent=1 // pred_check_branch
      %4133 = sbr.rel (0) target = $region29
    $region28: #{esim_forward.8} parent=1 // pred_region
      _
    $region29: #{esim_forward.8} parent=1 // pred_fallthru
      _
    // Predicated region
    $region30: #{esim_forward.8} parent=1 // pred_check
      _
    $region31: #{esim_forward.8} parent=1 // pred_check_branch
      %4135 = sbr.rel (0) target = $region33
    $region32: #{esim_forward.8} parent=1 // pred_region
      _
    $region33: #{esim_forward.8} parent=1 // pred_fallthru
      _
    %4136 = vsyncpa [#allocation4], 1

</llo_original>
